<compile_context>
chip_gen: v6e
topology: v6e:2x2x1
jax: 0.10.0
libtpu: 0.0.40
codegen_flags: <defaults>
</compile_context>

<pallas_src>
import functools

import jax
import jax.numpy as jnp
import numpy as np
from jax import lax
from jax.experimental import pallas as pl
from jax.experimental.pallas import tpu as pltpu


def _round_up(x, m):
    return (x + m - 1) // m * m


def _cdiv(a, b):
    return -(-a // b)


# --------------------------------------------------------------------------
# Padded gate layout.  PyTorch stores gates as (i, f, g, o); we store
# (i, f, o, g) so the three sigmoid gates form one contiguous 3*Hp slab and
# the tanh gate one Hp slab.  Each gate block sits at a 128-aligned (padded)
# offset; padded rows/cols are zero, so padded hidden units stay exactly 0.
# --------------------------------------------------------------------------
_GATE_SRC = (0, 1, 3, 2)   # dest block d  <-  source (PyTorch) gate block


def _pad_gate_mat(w, rows_pad, h, h_pad):
    """w: (rows, 4*h) in PyTorch gate order -> (rows_pad, 4*h_pad), (i,f,o,g)."""
    rows = w.shape[0]
    out = jnp.zeros((rows_pad, 4 * h_pad), w.dtype)
    for d, s in enumerate(_GATE_SRC):
        out = out.at[:rows, d * h_pad:d * h_pad + h].set(w[:, s * h:(s + 1) * h])
    return out


def _pad_gate_vec(b, h, h_pad):
    out = jnp.zeros((4 * h_pad,), b.dtype)
    for d, s in enumerate(_GATE_SRC):
        out = out.at[d * h_pad:d * h_pad + h].set(b[s * h:(s + 1) * h])
    return out


# --------------------------------------------------------------------------
# Generation-aware VMEM budgeting.
# --------------------------------------------------------------------------
def _vmem_budget_bytes():
    """~85% of this generation's physical VMEM (v5e/v6e 128MiB -> ~108MiB,
    v7x 64MiB -> ~54MiB); the remainder is headroom for Mosaic internals."""
    try:
        cap = int(pltpu.get_tpu_info().vmem_capacity_bytes)
    except Exception:
        cap = 64 * 1024 * 1024          # conservative (v7x-sized) fallback
    return int(cap * 0.85)


def _max_t_chunk(b_blk, ip, hp, item, gx_item, budget):
    """Largest time-chunk whose per-core VMEM working set fits `budget`.

    fixed:  resident weights + bias (single-buffered via pl.Buffered(1)),
            f32 h/c state scratch + final-state blocks, misc headroom.
    per-t:  double-buffered x / out tiles + one gates_x row.
    """
    fixed = ((ip + hp) * 4 * hp) * item + 4 * hp * 4      # W_ih, W_hh, bias
    fixed += 4 * b_blk * hp * 4                           # h/c scratch + outputs
    fixed += 6 * 1024 * 1024                              # Mosaic internal scratch
    per_t = b_blk * (2 * (ip + hp) * item + 4 * hp * gx_item)
    avail = budget - fixed
    if avail < per_t:
        return 1
    return int(avail // per_t)


def _detect_num_tensorcores():
    """Best-effort TensorCores-per-device (v7x: 2, v5e/v6e: 1)."""
    try:
        dev = jax.devices()[0]
        for attr in ("num_cores", "core_count"):
            val = getattr(dev, attr, None)
            if isinstance(val, int) and val >= 1:
                return min(val, 2)
    except Exception:
        pass
    return 1


def _num_batch_blocks(bp, num_cores):
    """Largest batch-block split <= num_cores keeping each block a multiple of 8."""
    n = max(1, int(num_cores))
    while n > 1 and bp % (8 * n):
        n -= 1
    return n


# --------------------------------------------------------------------------
# Kernel: one LSTM layer over one (batch-block, time-chunk) tile.
# --------------------------------------------------------------------------
def _lstm_chunk_kernel(x_ref, w_ih_ref, w_hh_ref, b_ref,
                       out_ref, h_out_ref, c_out_ref,
                       h_scr, c_scr, gx_ref,
                       *, seq_len, mask_tail, unroll):
    """Grid = (batch_block ['parallel'], time_chunk ['arbitrary']).

    x_ref:    (Tc, Bb, Ip)   chunk of time-major inputs (compute dtype)
    w_ih_ref: (Ip, 4*Hp)     input->hidden weights (transposed, padded, i,f,o,g)
    w_hh_ref: (Hp, 4*Hp)     hidden->hidden weights (transposed, padded)
    b_ref:    (1, 4*Hp)      combined bias (b_ih + b_hh), f32
    out_ref:  (Tc, Bb, Hp)   per-step hidden states (compute dtype)
    h_out/c_out: (Bb, Hp)    final state, f32 (written on the last time chunk)
    h_scr/c_scr: (Bb, Hp)    f32 running state, persists across time chunks
    gx_ref:   (Tc, Bb, 4*Hp) hoisted input projection (compute dtype)
    """
    tc, b_blk, ip = x_ref.shape
    hp = h_scr.shape[1]

    @pl.when(pl.program_id(1) == 0)
    def _init():
        h_scr[...] = jnp.zeros_like(h_scr)
        c_scr[...] = jnp.zeros_like(c_scr)

    # ---- Phase 1: hoisted input projection for the whole chunk ------------
    # One (Tc*Bb, Ip) x (Ip, 4Hp) MXU matmul instead of Tc tiny matmuls on the
    # serial critical path.  Bias added once here; stored in compute dtype.
    x2d = x_ref[...].reshape(tc * b_blk, ip)
    gx = jnp.dot(x2d, w_ih_ref[...], preferred_element_type=jnp.float32)
    gx_ref[...] = (gx.reshape(tc, b_blk, 4 * hp) + b_ref[...]).astype(gx_ref.dtype)

    if mask_tail:
        chunk_start = pl.program_id(1) * tc

    # ---- Phase 2: serial recurrence: only h @ W_hh + gate math per step ---
    def step(t, carry):
        h, c = carry
        gates = jnp.dot(h.astype(w_hh_ref.dtype), w_hh_ref[...],
                        preferred_element_type=jnp.float32)
        gates = gates + gx_ref[t].astype(jnp.float32)            # (Bb, 4Hp) f32
        # One sigmoid over the contiguous (i|f|o) slab, one tanh for g.
        sig = jax.nn.sigmoid(gates[:, :3 * hp])
        i_g = sig[:, 0 * hp:1 * hp]
        f_g = sig[:, 1 * hp:2 * hp]
        o_g = sig[:, 2 * hp:3 * hp]
        g_g = jnp.tanh(gates[:, 3 * hp:4 * hp])
        c_new = f_g * c + i_g * g_g
        h_new = o_g * jnp.tanh(c_new)
        if mask_tail:
            # Static branch: emitted only if T was padded.  With balanced
            # chunking only the last chunk can contain padded steps, and the
            # total padding is < n_chunks steps.
            valid = (chunk_start + t) < seq_len
            h_new = jnp.where(valid, h_new, h)
            c_new = jnp.where(valid, c_new, c)
        out_ref[t] = h_new.astype(out_ref.dtype)                 # lane-dense store
        return (h_new, c_new)

    carry = (h_scr[...], c_scr[...])
    if tc <= 32:
        # Short chunk: full unroll at trace time (LLO sees the whole chain).
        for t in range(tc):
            carry = step(t, carry)
    else:
        # Long chunk: partial unroll so MXU pop / EUP / VPU of step t overlap
        # with the matmul issue of step t+1.  `unroll` shrinks for large Hp
        # to bound vreg pressure.
        n_main = tc // unroll

        def body(k, carry):
            for u in range(unroll):
                carry = step(k * unroll + u, carry)
            return carry

        carry = lax.fori_loop(0, n_main, body, carry)
        for t in range(n_main * unroll, tc):
            carry = step(t, carry)

    h_fin, c_fin = carry
    h_scr[...] = h_fin
    c_scr[...] = c_fin

    @pl.when(pl.program_id(1) == pl.num_programs(1) - 1)
    def _finalize():
        h_out_ref[...] = h_scr[...]
        c_out_ref[...] = c_scr[...]


def lstm_layer(x, w_ih, w_hh, b, *, seq_len, t_chunk, n_batch_blocks,
               vmem_limit_bytes):
    """x: (T_pad, B_pad, I_pad) padded time-major input (compute dtype)."""
    t_pad, bp, ip = x.shape
    hp = w_hh.shape[0]
    assert t_pad % t_chunk == 0
    assert bp % (8 * n_batch_blocks) == 0
    n_chunks = t_pad // t_chunk
    b_blk = bp // n_batch_blocks
    mask_tail = (t_pad != seq_len)
    cd = x.dtype
    unroll = 4 if hp <= 512 else 2      # bound vreg pressure at large Hp

    kernel = functools.partial(_lstm_chunk_kernel, seq_len=seq_len,
                               mask_tail=mask_tail, unroll=unroll)

    out_shapes = (
        jax.ShapeDtypeStruct((t_pad, bp, hp), cd),
        jax.ShapeDtypeStruct((bp, hp), jnp.float32),
        jax.ShapeDtypeStruct((bp, hp), jnp.float32),
    )

    def run(single_buffered_weights):
        if single_buffered_weights:
            # Constant index_map -> a single resident VMEM copy suffices;
            # double-buffering weights would only waste VMEM budget.
            def resident(shape, imap):
                return pl.BlockSpec(shape, imap, pipeline_mode=pl.Buffered(1))
        else:
            def resident(shape, imap):
                return pl.BlockSpec(shape, imap)

        grid_spec = pltpu.PrefetchScalarGridSpec(
            num_scalar_prefetch=0,
            grid=(n_batch_blocks, n_chunks),
            in_specs=[
                pl.BlockSpec((t_chunk, b_blk, ip), lambda bb, t: (t, bb, 0)),
                resident((ip, 4 * hp), lambda bb, t: (0, 0)),     # W_ih (resident)
                resident((hp, 4 * hp), lambda bb, t: (0, 0)),     # W_hh (resident)
                resident((1, 4 * hp), lambda bb, t: (0, 0)),      # bias
            ],
            out_specs=(
                pl.BlockSpec((t_chunk, b_blk, hp), lambda bb, t: (t, bb, 0)),
                pl.BlockSpec((b_blk, hp), lambda bb, t: (bb, 0)), # final h
                pl.BlockSpec((b_blk, hp), lambda bb, t: (bb, 0)), # final c
            ),
            scratch_shapes=[
                pltpu.VMEM((b_blk, hp), jnp.float32),             # h state
                pltpu.VMEM((b_blk, hp), jnp.float32),             # c state
                pltpu.VMEM((t_chunk, b_blk, 4 * hp), cd),         # gates_x (compute dtype)
            ],
        )
        return pl.pallas_call(
            kernel,
            out_shape=out_shapes,
            grid_spec=grid_spec,
            compiler_params=pltpu.CompilerParams(
                dimension_semantics=("parallel", "arbitrary"),
                vmem_limit_bytes=int(vmem_limit_bytes)),
        )(x, w_ih, w_hh, b)

    try:
        return run(True)
    except Exception:
        # Fallback for jax/Mosaic builds without BlockSpec pipeline_mode
        # support; genuine kernel errors re-raise from here unchanged.
        return run(False)


# --------------------------------------------------------------------------
# Module wrapper
# --------------------------------------------------------------------------
class Seq2SeqEncoderPallas:
    """JAX/Pallas equivalent of the PyTorch Seq2SeqEncoder (eval, dropout=0)."""

    def __init__(self, vocab_size, embed_size, num_hiddens, num_layers, key,
                 compute_dtype=jnp.bfloat16, max_t_chunk=None, num_cores=None):
        self.embed_size = embed_size
        self.num_hiddens = num_hiddens
        self.num_layers = num_layers
        self.compute_dtype = compute_dtype
        self.max_t_chunk = max_t_chunk
        self.num_cores = (_detect_num_tensorcores() if num_cores is None
                          else max(1, int(num_cores)))

        keys = jax.random.split(key, 1 + 4 * num_layers)
        # nn.Embedding init: N(0, 1).  f32 master copy for the reference check,
        # compute-dtype copy used for the actual gather (halves HBM traffic).
        self.embedding = jax.random.normal(
            keys[0], (vocab_size, embed_size), jnp.float32)
        self.embedding_c = self.embedding.astype(compute_dtype)

        # nn.LSTM init: U(-1/sqrt(H), 1/sqrt(H))
        bound = 1.0 / float(np.sqrt(num_hiddens))
        h = num_hiddens
        hp = _round_up(h, 128)
        self.h_pad = hp
        self.e_pad = _round_up(embed_size, 128)

        self.ref_layers = []   # unpadded f32 params (pure-JAX reference)
        self.layers = []       # padded, compute-dtype params (kernel inputs)
        for l in range(num_layers):
            in_size = embed_size if l == 0 else num_hiddens
            ip = _round_up(in_size, 128)
            k = keys[1 + 4 * l: 1 + 4 * (l + 1)]
            w_ih = jax.random.uniform(k[0], (in_size, 4 * h),
                                      jnp.float32, -bound, bound)
            w_hh = jax.random.uniform(k[1], (h, 4 * h),
                                      jnp.float32, -bound, bound)
            b_ih = jax.random.uniform(k[2], (4 * h,), jnp.float32, -bound, bound)
            b_hh = jax.random.uniform(k[3], (4 * h,), jnp.float32, -bound, bound)
            bias = b_ih + b_hh
            self.ref_layers.append((w_ih, w_hh, bias.reshape(1, -1)))

            w_ih_p = _pad_gate_mat(w_ih, ip, h, hp).astype(compute_dtype)
            w_hh_p = _pad_gate_mat(w_hh, hp, h, hp).astype(compute_dtype)
            b_p = _pad_gate_vec(bias, h, hp).reshape(1, -1)   # bias stays f32
            self.layers.append((w_ih_p, w_hh_p, b_p))
        # TODO(synk): inter-layer dropout (training only; dropout=0 here) not applied.

    def _choose_chunking(self, T, b_blk):
        item = jnp.dtype(self.compute_dtype).itemsize
        budget = _vmem_budget_bytes()
        hp, ep = self.h_pad, self.e_pad
        # Most constrained layer (layer 0 has Ip=Ep, deeper layers Ip=Hp).
        tc = _max_t_chunk(b_blk, ep, hp, item, item, budget)
        if self.num_layers > 1:
            tc = min(tc, _max_t_chunk(b_blk, hp, hp, item, item, budget))
        tc = max(1, min(tc, T, 512))
        if self.max_t_chunk is not None:
            tc = max(1, min(tc, int(self.max_t_chunk)))
        # Balanced chunks: minimize tail padding (< n_chunks wasted steps).
        n_chunks = _cdiv(T, tc)
        tc = _cdiv(T, n_chunks)
        return tc, n_chunks * tc, budget

    def __call__(self, X):
        # X: (batch, seq) int32 token ids, same as the PyTorch forward input.
        B, T = X.shape
        hp, ep = self.h_pad, self.e_pad
        bp = _round_up(B, 8)
        n_bblk = _num_batch_blocks(bp, self.num_cores)
        tc, t_pad, vmem_budget = self._choose_chunking(T, bp // n_bblk)

        # Embedding gather emitted directly in time-major (T, B, E) layout and
        # in the compute dtype (no f32 intermediate + cast pass).
        # TODO(synk): fuse the gather into the first-layer kernel via
        # PrefetchScalarGridSpec + pl.Element row-gather.
        emb = self.embedding_c[X.T]                                # (T, B, E)
        x = jnp.pad(emb, ((0, t_pad - T), (0, bp - B),
                          (0, ep - self.embed_size)))

        hs, cs = [], []
        # TODO(synk): cross-call prefetch (P10) of layer l+1 weights while
        # layer l's recurrence runs, to hide the per-layer weight DMA bubble.
        for (w_ih, w_hh, b) in self.layers:
            x, h, c = lstm_layer(x, w_ih, w_hh, b, seq_len=T, t_chunk=tc,
                                 n_batch_blocks=n_bblk,
                                 vmem_limit_bytes=vmem_budget)
            hs.append(h[:B, :self.num_hiddens])
            cs.append(c[:B, :self.num_hiddens])

        out = x[:T, :B, :self.num_hiddens].astype(jnp.float32)    # (T, B, H)
        state = (jnp.stack(hs, 0), jnp.stack(cs, 0))               # (L, B, H)
        return out, state


# ----------------------- pure-JAX reference (sanity check) -----------------
def _ref_lstm_layer(x, w_ih, w_hh, b):
    T, B, _ = x.shape
    H = w_hh.shape[0]

    def step(carry, x_t):
        h, c = carry
        gates = x_t @ w_ih + h @ w_hh + b
        i = jax.nn.sigmoid(gates[:, :H])
        f = jax.nn.sigmoid(gates[:, H:2 * H])
        g = jnp.tanh(gates[:, 2 * H:3 * H])
        o = jax.nn.sigmoid(gates[:, 3 * H:])
        c = f * c + i * g
        h = o * jnp.tanh(c)
        return (h, c), h

    init = (jnp.zeros((B, H), jnp.float32), jnp.zeros((B, H), jnp.float32))
    (h, c), out = lax.scan(step, init, x)
    return out, h, c


def _ref_forward(enc, X):
    emb = enc.embedding[X]
    x = jnp.transpose(emb, (1, 0, 2))
    hs, cs = [], []
    for (w_ih, w_hh, b) in enc.ref_layers:
        x, h, c = _ref_lstm_layer(x, w_ih, w_hh, b)
        hs.append(h)
        cs.append(c)
    return x, (jnp.stack(hs, 0), jnp.stack(cs, 0))


if __name__ == "__main__":
    vocab_size, embed_size, num_hiddens, num_layers = 20, 16, 32, 2
    batch, seq = 4, 8

    key = jax.random.PRNGKey(0)
    k_params, k_tok1, k_tok2 = jax.random.split(key, 3)
    X = jax.random.randint(k_tok1, (batch, seq), 0, vocab_size,
                           dtype=jnp.int32)

    # --- f32 compute path: exact-semantics check vs. lax.scan reference ----
    enc_f32 = Seq2SeqEncoderPallas(vocab_size, embed_size, num_hiddens,
                                   num_layers, k_params,
                                   compute_dtype=jnp.float32)
    out32, (h32, c32) = enc_f32(X)
    out32 = jax.block_until_ready(out32)
    h32 = jax.block_until_ready(h32)
    c32 = jax.block_until_ready(c32)

    assert out32.shape == (seq, batch, num_hiddens)
    assert h32.shape == (num_layers, batch, num_hiddens)
    assert c32.shape == (num_layers, batch, num_hiddens)

    out_ref, (h_ref, c_ref) = _ref_forward(enc_f32, X)
    np.testing.assert_allclose(np.asarray(out32), np.asarray(out_ref),
                               rtol=1e-3, atol=1e-4)
    np.testing.assert_allclose(np.asarray(h32), np.asarray(h_ref),
                               rtol=1e-3, atol=1e-4)
    np.testing.assert_allclose(np.asarray(c32), np.asarray(c_ref),
                               rtol=1e-3, atol=1e-4)

    # --- multi-chunk + tail-mask path (forced small time-chunks, f32) ------
    seq_long = 70
    X2 = jax.random.randint(k_tok2, (batch, seq_long), 0, vocab_size,
                            dtype=jnp.int32)
    enc_chunk = Seq2SeqEncoderPallas(vocab_size, embed_size, num_hiddens,
                                     num_layers, k_params,
                                     compute_dtype=jnp.float32,
                                     max_t_chunk=24)   # 3 chunks, 2 masked steps
    out_ck, (h_ck, c_ck) = enc_chunk(X2)
    out_ck = jax.block_until_ready(out_ck)
    h_ck = jax.block_until_ready(h_ck)
    c_ck = jax.block_until_ready(c_ck)

    out_ref2, (h_ref2, c_ref2) = _ref_forward(enc_chunk, X2)
    np.testing.assert_allclose(np.asarray(out_ck), np.asarray(out_ref2),
                               rtol=1e-3, atol=1e-4)
    np.testing.assert_allclose(np.asarray(h_ck), np.asarray(h_ref2),
                               rtol=1e-3, atol=1e-4)
    np.testing.assert_allclose(np.asarray(c_ck), np.asarray(c_ref2),
                               rtol=1e-3, atol=1e-4)

    # --- bf16 compute path (performance config for v6e/v7x): loose check ---
    enc_bf16 = Seq2SeqEncoderPallas(vocab_size, embed_size, num_hiddens,
                                    num_layers, k_params,
                                    compute_dtype=jnp.bfloat16)
    out_bf, (h_bf, c_bf) = enc_bf16(X)
    out_bf = jax.block_until_ready(out_bf)
    h_bf = jax.block_until_ready(h_bf)
    c_bf = jax.block_until_ready(c_bf)

    assert out_bf.shape == (seq, batch, num_hiddens)
    assert h_bf.shape == (num_layers, batch, num_hiddens)
    assert c_bf.shape == (num_layers, batch, num_hiddens)

    np.testing.assert_allclose(np.asarray(out_bf), np.asarray(out_ref),
                               rtol=5e-2, atol=5e-2)
    np.testing.assert_allclose(np.asarray(h_bf), np.asarray(h_ref),
                               rtol=5e-2, atol=5e-2)

    print("KERNEL_OK")
</pallas_src>

<mosaic_0001>
module attributes {stable_mosaic.version = 11 : i64} {
  func.func @_lstm_chunk_kernel(%arg0: i32, %arg1: i32, %arg2: memref<8x8x128xf32, #tpu.memory_space<vmem>>, %arg3: memref<128x512xf32, #tpu.memory_space<vmem>>, %arg4: memref<128x512xf32, #tpu.memory_space<vmem>>, %arg5: memref<1x512xf32, #tpu.memory_space<vmem>>, %arg6: memref<8x8x128xf32, #tpu.memory_space<vmem>>, %arg7: memref<8x128xf32, #tpu.memory_space<vmem>>, %arg8: memref<8x128xf32, #tpu.memory_space<vmem>>, %arg9: memref<8x128xf32, #tpu.memory_space<vmem>>, %arg10: memref<8x128xf32, #tpu.memory_space<vmem>>, %arg11: memref<8x8x512xf32, #tpu.memory_space<vmem>>) attributes {dimension_semantics = [#tpu.dimension_semantics<parallel>, #tpu.dimension_semantics<arbitrary>], iteration_bounds = array<i64: 1, 1>, scalar_prefetch = 0 : i64, scratch_operands = 3 : i64, tpu.core_type = #tpu.core_type<tc>, window_params = [{transform_indices = @transform_0, window_bounds = array<i64: 8, 8, 128>}, {pipeline_mode = #tpu.pipeline_mode<synchronous>, transform_indices = @transform_1, window_bounds = array<i64: 128, 512>}, {pipeline_mode = #tpu.pipeline_mode<synchronous>, transform_indices = @transform_2, window_bounds = array<i64: 128, 512>}, {pipeline_mode = #tpu.pipeline_mode<synchronous>, transform_indices = @transform_3, window_bounds = array<i64: 1, 512>}, {transform_indices = @transform_4, window_bounds = array<i64: 8, 8, 128>}, {transform_indices = @transform_5, window_bounds = array<i64: 8, 128>}, {transform_indices = @transform_6, window_bounds = array<i64: 8, 128>}]} {
    %c0_i32 = arith.constant 0 : i32
    %0 = arith.cmpi eq, %arg1, %c0_i32 : i32
    %1 = arith.extui %0 : i1 to i32
    %c0_i32_0 = arith.constant 0 : i32
    %2 = arith.cmpi ne, %1, %c0_i32_0 : i32
    scf.if %2 {
      %cst_93 = arith.constant 0.000000e+00 : f32
      %212 = vector.broadcast %cst_93 : f32 to vector<8x128xf32>
      %c0_94 = arith.constant 0 : index
      %c0_95 = arith.constant 0 : index
      %213 = vector.load %arg9[%c0_94, %c0_95] : memref<8x128xf32, #tpu.memory_space<vmem>>, vector<8x128xf32>
      tpu.vector_store %arg9[%c0_94, %c0_95], %212 {strides = array<i32>} : memref<8x128xf32, #tpu.memory_space<vmem>>, vector<8x128xf32>,
      %cst_96 = arith.constant 0.000000e+00 : f32
      %214 = vector.broadcast %cst_96 : f32 to vector<8x128xf32>
      %c0_97 = arith.constant 0 : index
      %c0_98 = arith.constant 0 : index
      %215 = vector.load %arg10[%c0_97, %c0_98] : memref<8x128xf32, #tpu.memory_space<vmem>>, vector<8x128xf32>
      tpu.vector_store %arg10[%c0_97, %c0_98], %214 {strides = array<i32>} : memref<8x128xf32, #tpu.memory_space<vmem>>, vector<8x128xf32>,
    } else {
    }
    %c0 = arith.constant 0 : index
    %c0_1 = arith.constant 0 : index
    %c0_2 = arith.constant 0 : index
    %3 = vector.load %arg2[%c0, %c0_1, %c0_2] : memref<8x8x128xf32, #tpu.memory_space<vmem>>, vector<8x8x128xf32>
    %4 = vector.shape_cast %3 : vector<8x8x128xf32> to vector<64x128xf32>
    %c0_3 = arith.constant 0 : index
    %c0_4 = arith.constant 0 : index
    %5 = vector.load %arg3[%c0_3, %c0_4] : memref<128x512xf32, #tpu.memory_space<vmem>>, vector<128x512xf32>
    %cst = arith.constant dense<0.000000e+00> : vector<64x512xf32>
    %6 = tpu.matmul %4, %5, %cst {dimension_numbers = #tpu.dot_dimension_numbers<[1], [0], [0], [1], [0, 0, 1, 1], [], []>} : vector<64x128xf32>, vector<128x512xf32>, vector<64x512xf32> -> vector<64x512xf32>
    %7 = vector.shape_cast %6 : vector<64x512xf32> to vector<8x8x512xf32>
    %c0_5 = arith.constant 0 : index
    %c0_6 = arith.constant 0 : index
    %8 = vector.load %arg5[%c0_5, %c0_6] : memref<1x512xf32, #tpu.memory_space<vmem>>, vector<1x512xf32>
    %9 = vector.shape_cast %8 : vector<1x512xf32> to vector<1x1x512xf32>
    %10 = vector.broadcast %9 : vector<1x1x512xf32> to vector<8x8x512xf32>
    %11 = arith.addf %7, %10 : vector<8x8x512xf32>
    %c0_7 = arith.constant 0 : index
    %c0_8 = arith.constant 0 : index
    %c0_9 = arith.constant 0 : index
    %12 = vector.load %arg11[%c0_7, %c0_8, %c0_9] : memref<8x8x512xf32, #tpu.memory_space<vmem>>, vector<8x8x512xf32>
    tpu.vector_store %arg11[%c0_7, %c0_8, %c0_9], %11 {strides = array<i32>} : memref<8x8x512xf32, #tpu.memory_space<vmem>>, vector<8x8x512xf32>,
    %c0_10 = arith.constant 0 : index
    %c0_11 = arith.constant 0 : index
    %13 = vector.load %arg9[%c0_10, %c0_11] : memref<8x128xf32, #tpu.memory_space<vmem>>, vector<8x128xf32>
    %c0_12 = arith.constant 0 : index
    %c0_13 = arith.constant 0 : index
    %14 = vector.load %arg10[%c0_12, %c0_13] : memref<8x128xf32, #tpu.memory_space<vmem>>, vector<8x128xf32>
    %c0_14 = arith.constant 0 : index
    %c0_15 = arith.constant 0 : index
    %15 = vector.load %arg4[%c0_14, %c0_15] : memref<128x512xf32, #tpu.memory_space<vmem>>, vector<128x512xf32>
    %cst_16 = arith.constant dense<0.000000e+00> : vector<8x512xf32>
    %16 = tpu.matmul %13, %15, %cst_16 {dimension_numbers = #tpu.dot_dimension_numbers<[1], [0], [0], [1], [0, 0, 1, 1], [], []>} : vector<8x128xf32>, vector<128x512xf32>, vector<8x512xf32> -> vector<8x512xf32>
    %c0_17 = arith.constant 0 : index
    %c0_18 = arith.constant 0 : index
    %c0_19 = arith.constant 0 : index
    %17 = vector.load %arg11[%c0_17, %c0_18, %c0_19] : memref<8x8x512xf32, #tpu.memory_space<vmem>>, vector<1x8x512xf32>
    %18 = vector.shape_cast %17 : vector<1x8x512xf32> to vector<8x512xf32>
    %19 = arith.addf %16, %18 : vector<8x512xf32>
    %20 = vector.extract_strided_slice %19 {offsets = [0, 0], sizes = [8, 384], strides = [1, 1]} : vector<8x512xf32> to vector<8x384xf32>
    %21 = arith.negf %20 : vector<8x384xf32>
    %22 = math.exp %21 : vector<8x384xf32>
    %cst_20 = arith.constant 1.000000e+00 : f32
    %23 = vector.broadcast %cst_20 : f32 to vector<8x384xf32>
    %24 = arith.addf %23, %22 : vector<8x384xf32>
    %25 = arith.divf %23, %24 : vector<8x384xf32>
    %26 = vector.extract_strided_slice %25 {offsets = [0, 0], sizes = [8, 128], strides = [1, 1]} : vector<8x384xf32> to vector<8x128xf32>
    %27 = vector.extract_strided_slice %25 {offsets = [0, 128], sizes = [8, 128], strides = [1, 1]} : vector<8x384xf32> to vector<8x128xf32>
    %28 = vector.extract_strided_slice %25 {offsets = [0, 256], sizes = [8, 128], strides = [1, 1]} : vector<8x384xf32> to vector<8x128xf32>
    %29 = vector.extract_strided_slice %19 {offsets = [0, 384], sizes = [8, 128], strides = [1, 1]} : vector<8x512xf32> to vector<8x128xf32>
    %30 = math.tanh %29 : vector<8x128xf32>
    %31 = arith.mulf %27, %14 : vector<8x128xf32>
    %32 = arith.mulf %26, %30 : vector<8x128xf32>
    %33 = arith.addf %31, %32 : vector<8x128xf32>
    %34 = math.tanh %33 : vector<8x128xf32>
    %35 = arith.mulf %28, %34 : vector<8x128xf32>
    %c0_21 = arith.constant 0 : index
    %c0_22 = arith.constant 0 : index
    %c0_23 = arith.constant 0 : index
    %36 = vector.load %arg6[%c0_21, %c0_22, %c0_23] : memref<8x8x128xf32, #tpu.memory_space<vmem>>, vector<1x8x128xf32>
    %37 = vector.shape_cast %36 : vector<1x8x128xf32> to vector<8x128xf32>
    %38 = vector.shape_cast %35 : vector<8x128xf32> to vector<1x8x128xf32>
    tpu.vector_store %arg6[%c0_21, %c0_22, %c0_23], %38 {strides = array<i32>} : memref<8x8x128xf32, #tpu.memory_space<vmem>>, vector<1x8x128xf32>,
    %c0_24 = arith.constant 0 : index
    %c0_25 = arith.constant 0 : index
    %39 = vector.load %arg4[%c0_24, %c0_25] : memref<128x512xf32, #tpu.memory_space<vmem>>, vector<128x512xf32>
    %cst_26 = arith.constant dense<0.000000e+00> : vector<8x512xf32>
    %40 = tpu.matmul %35, %39, %cst_26 {dimension_numbers = #tpu.dot_dimension_numbers<[1], [0], [0], [1], [0, 0, 1, 1], [], []>} : vector<8x128xf32>, vector<128x512xf32>, vector<8x512xf32> -> vector<8x512xf32>
    %c1 = arith.constant 1 : index
    %c0_27 = arith.constant 0 : index
    %c0_28 = arith.constant 0 : index
    %41 = vector.load %arg11[%c1, %c0_27, %c0_28] : memref<8x8x512xf32, #tpu.memory_space<vmem>>, vector<1x8x512xf32>
    %42 = vector.shape_cast %41 : vector<1x8x512xf32> to vector<8x512xf32>
    %43 = arith.addf %40, %42 : vector<8x512xf32>
    %44 = vector.extract_strided_slice %43 {offsets = [0, 0], sizes = [8, 384], strides = [1, 1]} : vector<8x512xf32> to vector<8x384xf32>
    %45 = arith.negf %44 : vector<8x384xf32>
    %46 = math.exp %45 : vector<8x384xf32>
    %cst_29 = arith.constant 1.000000e+00 : f32
    %47 = vector.broadcast %cst_29 : f32 to vector<8x384xf32>
    %48 = arith.addf %47, %46 : vector<8x384xf32>
    %49 = arith.divf %47, %48 : vector<8x384xf32>
    %50 = vector.extract_strided_slice %49 {offsets = [0, 0], sizes = [8, 128], strides = [1, 1]} : vector<8x384xf32> to vector<8x128xf32>
    %51 = vector.extract_strided_slice %49 {offsets = [0, 128], sizes = [8, 128], strides = [1, 1]} : vector<8x384xf32> to vector<8x128xf32>
    %52 = vector.extract_strided_slice %49 {offsets = [0, 256], sizes = [8, 128], strides = [1, 1]} : vector<8x384xf32> to vector<8x128xf32>
    %53 = vector.extract_strided_slice %43 {offsets = [0, 384], sizes = [8, 128], strides = [1, 1]} : vector<8x512xf32> to vector<8x128xf32>
    %54 = math.tanh %53 : vector<8x128xf32>
    %55 = arith.mulf %51, %33 : vector<8x128xf32>
    %56 = arith.mulf %50, %54 : vector<8x128xf32>
    %57 = arith.addf %55, %56 : vector<8x128xf32>
    %58 = math.tanh %57 : vector<8x128xf32>
    %59 = arith.mulf %52, %58 : vector<8x128xf32>
    %c1_30 = arith.constant 1 : index
    %c0_31 = arith.constant 0 : index
    %c0_32 = arith.constant 0 : index
    %60 = vector.load %arg6[%c1_30, %c0_31, %c0_32] : memref<8x8x128xf32, #tpu.memory_space<vmem>>, vector<1x8x128xf32>
    %61 = vector.shape_cast %60 : vector<1x8x128xf32> to vector<8x128xf32>
    %62 = vector.shape_cast %59 : vector<8x128xf32> to vector<1x8x128xf32>
    tpu.vector_store %arg6[%c1_30, %c0_31, %c0_32], %62 {strides = array<i32>} : memref<8x8x128xf32, #tpu.memory_space<vmem>>, vector<1x8x128xf32>,
    %c0_33 = arith.constant 0 : index
    %c0_34 = arith.constant 0 : index
    %63 = vector.load %arg4[%c0_33, %c0_34] : memref<128x512xf32, #tpu.memory_space<vmem>>, vector<128x512xf32>
    %cst_35 = arith.constant dense<0.000000e+00> : vector<8x512xf32>
    %64 = tpu.matmul %59, %63, %cst_35 {dimension_numbers = #tpu.dot_dimension_numbers<[1], [0], [0], [1], [0, 0, 1, 1], [], []>} : vector<8x128xf32>, vector<128x512xf32>, vector<8x512xf32> -> vector<8x512xf32>
    %c2 = arith.constant 2 : index
    %c0_36 = arith.constant 0 : index
    %c0_37 = arith.constant 0 : index
    %65 = vector.load %arg11[%c2, %c0_36, %c0_37] : memref<8x8x512xf32, #tpu.memory_space<vmem>>, vector<1x8x512xf32>
    %66 = vector.shape_cast %65 : vector<1x8x512xf32> to vector<8x512xf32>
    %67 = arith.addf %64, %66 : vector<8x512xf32>
    %68 = vector.extract_strided_slice %67 {offsets = [0, 0], sizes = [8, 384], strides = [1, 1]} : vector<8x512xf32> to vector<8x384xf32>
    %69 = arith.negf %68 : vector<8x384xf32>
    %70 = math.exp %69 : vector<8x384xf32>
    %cst_38 = arith.constant 1.000000e+00 : f32
    %71 = vector.broadcast %cst_38 : f32 to vector<8x384xf32>
    %72 = arith.addf %71, %70 : vector<8x384xf32>
    %73 = arith.divf %71, %72 : vector<8x384xf32>
    %74 = vector.extract_strided_slice %73 {offsets = [0, 0], sizes = [8, 128], strides = [1, 1]} : vector<8x384xf32> to vector<8x128xf32>
    %75 = vector.extract_strided_slice %73 {offsets = [0, 128], sizes = [8, 128], strides = [1, 1]} : vector<8x384xf32> to vector<8x128xf32>
    %76 = vector.extract_strided_slice %73 {offsets = [0, 256], sizes = [8, 128], strides = [1, 1]} : vector<8x384xf32> to vector<8x128xf32>
    %77 = vector.extract_strided_slice %67 {offsets = [0, 384], sizes = [8, 128], strides = [1, 1]} : vector<8x512xf32> to vector<8x128xf32>
    %78 = math.tanh %77 : vector<8x128xf32>
    %79 = arith.mulf %75, %57 : vector<8x128xf32>
    %80 = arith.mulf %74, %78 : vector<8x128xf32>
    %81 = arith.addf %79, %80 : vector<8x128xf32>
    %82 = math.tanh %81 : vector<8x128xf32>
    %83 = arith.mulf %76, %82 : vector<8x128xf32>
    %c2_39 = arith.constant 2 : index
    %c0_40 = arith.constant 0 : index
    %c0_41 = arith.constant 0 : index
    %84 = vector.load %arg6[%c2_39, %c0_40, %c0_41] : memref<8x8x128xf32, #tpu.memory_space<vmem>>, vector<1x8x128xf32>
    %85 = vector.shape_cast %84 : vector<1x8x128xf32> to vector<8x128xf32>
    %86 = vector.shape_cast %83 : vector<8x128xf32> to vector<1x8x128xf32>
    tpu.vector_store %arg6[%c2_39, %c0_40, %c0_41], %86 {strides = array<i32>} : memref<8x8x128xf32, #tpu.memory_space<vmem>>, vector<1x8x128xf32>,
    %c0_42 = arith.constant 0 : index
    %c0_43 = arith.constant 0 : index
    %87 = vector.load %arg4[%c0_42, %c0_43] : memref<128x512xf32, #tpu.memory_space<vmem>>, vector<128x512xf32>
    %cst_44 = arith.constant dense<0.000000e+00> : vector<8x512xf32>
    %88 = tpu.matmul %83, %87, %cst_44 {dimension_numbers = #tpu.dot_dimension_numbers<[1], [0], [0], [1], [0, 0, 1, 1], [], []>} : vector<8x128xf32>, vector<128x512xf32>, vector<8x512xf32> -> vector<8x512xf32>
    %c3 = arith.constant 3 : index
    %c0_45 = arith.constant 0 : index
    %c0_46 = arith.constant 0 : index
    %89 = vector.load %arg11[%c3, %c0_45, %c0_46] : memref<8x8x512xf32, #tpu.memory_space<vmem>>, vector<1x8x512xf32>
    %90 = vector.shape_cast %89 : vector<1x8x512xf32> to vector<8x512xf32>
    %91 = arith.addf %88, %90 : vector<8x512xf32>
    %92 = vector.extract_strided_slice %91 {offsets = [0, 0], sizes = [8, 384], strides = [1, 1]} : vector<8x512xf32> to vector<8x384xf32>
    %93 = arith.negf %92 : vector<8x384xf32>
    %94 = math.exp %93 : vector<8x384xf32>
    %cst_47 = arith.constant 1.000000e+00 : f32
    %95 = vector.broadcast %cst_47 : f32 to vector<8x384xf32>
    %96 = arith.addf %95, %94 : vector<8x384xf32>
    %97 = arith.divf %95, %96 : vector<8x384xf32>
    %98 = vector.extract_strided_slice %97 {offsets = [0, 0], sizes = [8, 128], strides = [1, 1]} : vector<8x384xf32> to vector<8x128xf32>
    %99 = vector.extract_strided_slice %97 {offsets = [0, 128], sizes = [8, 128], strides = [1, 1]} : vector<8x384xf32> to vector<8x128xf32>
    %100 = vector.extract_strided_slice %97 {offsets = [0, 256], sizes = [8, 128], strides = [1, 1]} : vector<8x384xf32> to vector<8x128xf32>
    %101 = vector.extract_strided_slice %91 {offsets = [0, 384], sizes = [8, 128], strides = [1, 1]} : vector<8x512xf32> to vector<8x128xf32>
    %102 = math.tanh %101 : vector<8x128xf32>
    %103 = arith.mulf %99, %81 : vector<8x128xf32>
    %104 = arith.mulf %98, %102 : vector<8x128xf32>
    %105 = arith.addf %103, %104 : vector<8x128xf32>
    %106 = math.tanh %105 : vector<8x128xf32>
    %107 = arith.mulf %100, %106 : vector<8x128xf32>
    %c3_48 = arith.constant 3 : index
    %c0_49 = arith.constant 0 : index
    %c0_50 = arith.constant 0 : index
    %108 = vector.load %arg6[%c3_48, %c0_49, %c0_50] : memref<8x8x128xf32, #tpu.memory_space<vmem>>, vector<1x8x128xf32>
    %109 = vector.shape_cast %108 : vector<1x8x128xf32> to vector<8x128xf32>
    %110 = vector.shape_cast %107 : vector<8x128xf32> to vector<1x8x128xf32>
    tpu.vector_store %arg6[%c3_48, %c0_49, %c0_50], %110 {strides = array<i32>} : memref<8x8x128xf32, #tpu.memory_space<vmem>>, vector<1x8x128xf32>,
    %c0_51 = arith.constant 0 : index
    %c0_52 = arith.constant 0 : index
    %111 = vector.load %arg4[%c0_51, %c0_52] : memref<128x512xf32, #tpu.memory_space<vmem>>, vector<128x512xf32>
    %cst_53 = arith.constant dense<0.000000e+00> : vector<8x512xf32>
    %112 = tpu.matmul %107, %111, %cst_53 {dimension_numbers = #tpu.dot_dimension_numbers<[1], [0], [0], [1], [0, 0, 1, 1], [], []>} : vector<8x128xf32>, vector<128x512xf32>, vector<8x512xf32> -> vector<8x512xf32>
    %c4 = arith.constant 4 : index
    %c0_54 = arith.constant 0 : index
    %c0_55 = arith.constant 0 : index
    %113 = vector.load %arg11[%c4, %c0_54, %c0_55] : memref<8x8x512xf32, #tpu.memory_space<vmem>>, vector<1x8x512xf32>
    %114 = vector.shape_cast %113 : vector<1x8x512xf32> to vector<8x512xf32>
    %115 = arith.addf %112, %114 : vector<8x512xf32>
    %116 = vector.extract_strided_slice %115 {offsets = [0, 0], sizes = [8, 384], strides = [1, 1]} : vector<8x512xf32> to vector<8x384xf32>
    %117 = arith.negf %116 : vector<8x384xf32>
    %118 = math.exp %117 : vector<8x384xf32>
    %cst_56 = arith.constant 1.000000e+00 : f32
    %119 = vector.broadcast %cst_56 : f32 to vector<8x384xf32>
    %120 = arith.addf %119, %118 : vector<8x384xf32>
    %121 = arith.divf %119, %120 : vector<8x384xf32>
    %122 = vector.extract_strided_slice %121 {offsets = [0, 0], sizes = [8, 128], strides = [1, 1]} : vector<8x384xf32> to vector<8x128xf32>
    %123 = vector.extract_strided_slice %121 {offsets = [0, 128], sizes = [8, 128], strides = [1, 1]} : vector<8x384xf32> to vector<8x128xf32>
    %124 = vector.extract_strided_slice %121 {offsets = [0, 256], sizes = [8, 128], strides = [1, 1]} : vector<8x384xf32> to vector<8x128xf32>
    %125 = vector.extract_strided_slice %115 {offsets = [0, 384], sizes = [8, 128], strides = [1, 1]} : vector<8x512xf32> to vector<8x128xf32>
    %126 = math.tanh %125 : vector<8x128xf32>
    %127 = arith.mulf %123, %105 : vector<8x128xf32>
    %128 = arith.mulf %122, %126 : vector<8x128xf32>
    %129 = arith.addf %127, %128 : vector<8x128xf32>
    %130 = math.tanh %129 : vector<8x128xf32>
    %131 = arith.mulf %124, %130 : vector<8x128xf32>
    %c4_57 = arith.constant 4 : index
    %c0_58 = arith.constant 0 : index
    %c0_59 = arith.constant 0 : index
    %132 = vector.load %arg6[%c4_57, %c0_58, %c0_59] : memref<8x8x128xf32, #tpu.memory_space<vmem>>, vector<1x8x128xf32>
    %133 = vector.shape_cast %132 : vector<1x8x128xf32> to vector<8x128xf32>
    %134 = vector.shape_cast %131 : vector<8x128xf32> to vector<1x8x128xf32>
    tpu.vector_store %arg6[%c4_57, %c0_58, %c0_59], %134 {strides = array<i32>} : memref<8x8x128xf32, #tpu.memory_space<vmem>>, vector<1x8x128xf32>,
    %c0_60 = arith.constant 0 : index
    %c0_61 = arith.constant 0 : index
    %135 = vector.load %arg4[%c0_60, %c0_61] : memref<128x512xf32, #tpu.memory_space<vmem>>, vector<128x512xf32>
    %cst_62 = arith.constant dense<0.000000e+00> : vector<8x512xf32>
    %136 = tpu.matmul %131, %135, %cst_62 {dimension_numbers = #tpu.dot_dimension_numbers<[1], [0], [0], [1], [0, 0, 1, 1], [], []>} : vector<8x128xf32>, vector<128x512xf32>, vector<8x512xf32> -> vector<8x512xf32>
    %c5 = arith.constant 5 : index
    %c0_63 = arith.constant 0 : index
    %c0_64 = arith.constant 0 : index
    %137 = vector.load %arg11[%c5, %c0_63, %c0_64] : memref<8x8x512xf32, #tpu.memory_space<vmem>>, vector<1x8x512xf32>
    %138 = vector.shape_cast %137 : vector<1x8x512xf32> to vector<8x512xf32>
    %139 = arith.addf %136, %138 : vector<8x512xf32>
    %140 = vector.extract_strided_slice %139 {offsets = [0, 0], sizes = [8, 384], strides = [1, 1]} : vector<8x512xf32> to vector<8x384xf32>
    %141 = arith.negf %140 : vector<8x384xf32>
    %142 = math.exp %141 : vector<8x384xf32>
    %cst_65 = arith.constant 1.000000e+00 : f32
    %143 = vector.broadcast %cst_65 : f32 to vector<8x384xf32>
    %144 = arith.addf %143, %142 : vector<8x384xf32>
    %145 = arith.divf %143, %144 : vector<8x384xf32>
    %146 = vector.extract_strided_slice %145 {offsets = [0, 0], sizes = [8, 128], strides = [1, 1]} : vector<8x384xf32> to vector<8x128xf32>
    %147 = vector.extract_strided_slice %145 {offsets = [0, 128], sizes = [8, 128], strides = [1, 1]} : vector<8x384xf32> to vector<8x128xf32>
    %148 = vector.extract_strided_slice %145 {offsets = [0, 256], sizes = [8, 128], strides = [1, 1]} : vector<8x384xf32> to vector<8x128xf32>
    %149 = vector.extract_strided_slice %139 {offsets = [0, 384], sizes = [8, 128], strides = [1, 1]} : vector<8x512xf32> to vector<8x128xf32>
    %150 = math.tanh %149 : vector<8x128xf32>
    %151 = arith.mulf %147, %129 : vector<8x128xf32>
    %152 = arith.mulf %146, %150 : vector<8x128xf32>
    %153 = arith.addf %151, %152 : vector<8x128xf32>
    %154 = math.tanh %153 : vector<8x128xf32>
    %155 = arith.mulf %148, %154 : vector<8x128xf32>
    %c5_66 = arith.constant 5 : index
    %c0_67 = arith.constant 0 : index
    %c0_68 = arith.constant 0 : index
    %156 = vector.load %arg6[%c5_66, %c0_67, %c0_68] : memref<8x8x128xf32, #tpu.memory_space<vmem>>, vector<1x8x128xf32>
    %157 = vector.shape_cast %156 : vector<1x8x128xf32> to vector<8x128xf32>
    %158 = vector.shape_cast %155 : vector<8x128xf32> to vector<1x8x128xf32>
    tpu.vector_store %arg6[%c5_66, %c0_67, %c0_68], %158 {strides = array<i32>} : memref<8x8x128xf32, #tpu.memory_space<vmem>>, vector<1x8x128xf32>,
    %c0_69 = arith.constant 0 : index
    %c0_70 = arith.constant 0 : index
    %159 = vector.load %arg4[%c0_69, %c0_70] : memref<128x512xf32, #tpu.memory_space<vmem>>, vector<128x512xf32>
    %cst_71 = arith.constant dense<0.000000e+00> : vector<8x512xf32>
    %160 = tpu.matmul %155, %159, %cst_71 {dimension_numbers = #tpu.dot_dimension_numbers<[1], [0], [0], [1], [0, 0, 1, 1], [], []>} : vector<8x128xf32>, vector<128x512xf32>, vector<8x512xf32> -> vector<8x512xf32>
    %c6 = arith.constant 6 : index
    %c0_72 = arith.constant 0 : index
    %c0_73 = arith.constant 0 : index
    %161 = vector.load %arg11[%c6, %c0_72, %c0_73] : memref<8x8x512xf32, #tpu.memory_space<vmem>>, vector<1x8x512xf32>
    %162 = vector.shape_cast %161 : vector<1x8x512xf32> to vector<8x512xf32>
    %163 = arith.addf %160, %162 : vector<8x512xf32>
    %164 = vector.extract_strided_slice %163 {offsets = [0, 0], sizes = [8, 384], strides = [1, 1]} : vector<8x512xf32> to vector<8x384xf32>
    %165 = arith.negf %164 : vector<8x384xf32>
    %166 = math.exp %165 : vector<8x384xf32>
    %cst_74 = arith.constant 1.000000e+00 : f32
    %167 = vector.broadcast %cst_74 : f32 to vector<8x384xf32>
    %168 = arith.addf %167, %166 : vector<8x384xf32>
    %169 = arith.divf %167, %168 : vector<8x384xf32>
    %170 = vector.extract_strided_slice %169 {offsets = [0, 0], sizes = [8, 128], strides = [1, 1]} : vector<8x384xf32> to vector<8x128xf32>
    %171 = vector.extract_strided_slice %169 {offsets = [0, 128], sizes = [8, 128], strides = [1, 1]} : vector<8x384xf32> to vector<8x128xf32>
    %172 = vector.extract_strided_slice %169 {offsets = [0, 256], sizes = [8, 128], strides = [1, 1]} : vector<8x384xf32> to vector<8x128xf32>
    %173 = vector.extract_strided_slice %163 {offsets = [0, 384], sizes = [8, 128], strides = [1, 1]} : vector<8x512xf32> to vector<8x128xf32>
    %174 = math.tanh %173 : vector<8x128xf32>
    %175 = arith.mulf %171, %153 : vector<8x128xf32>
    %176 = arith.mulf %170, %174 : vector<8x128xf32>
    %177 = arith.addf %175, %176 : vector<8x128xf32>
    %178 = math.tanh %177 : vector<8x128xf32>
    %179 = arith.mulf %172, %178 : vector<8x128xf32>
    %c6_75 = arith.constant 6 : index
    %c0_76 = arith.constant 0 : index
    %c0_77 = arith.constant 0 : index
    %180 = vector.load %arg6[%c6_75, %c0_76, %c0_77] : memref<8x8x128xf32, #tpu.memory_space<vmem>>, vector<1x8x128xf32>
    %181 = vector.shape_cast %180 : vector<1x8x128xf32> to vector<8x128xf32>
    %182 = vector.shape_cast %179 : vector<8x128xf32> to vector<1x8x128xf32>
    tpu.vector_store %arg6[%c6_75, %c0_76, %c0_77], %182 {strides = array<i32>} : memref<8x8x128xf32, #tpu.memory_space<vmem>>, vector<1x8x128xf32>,
    %c0_78 = arith.constant 0 : index
    %c0_79 = arith.constant 0 : index
    %183 = vector.load %arg4[%c0_78, %c0_79] : memref<128x512xf32, #tpu.memory_space<vmem>>, vector<128x512xf32>
    %cst_80 = arith.constant dense<0.000000e+00> : vector<8x512xf32>
    %184 = tpu.matmul %179, %183, %cst_80 {dimension_numbers = #tpu.dot_dimension_numbers<[1], [0], [0], [1], [0, 0, 1, 1], [], []>} : vector<8x128xf32>, vector<128x512xf32>, vector<8x512xf32> -> vector<8x512xf32>
    %c7 = arith.constant 7 : index
    %c0_81 = arith.constant 0 : index
    %c0_82 = arith.constant 0 : index
    %185 = vector.load %arg11[%c7, %c0_81, %c0_82] : memref<8x8x512xf32, #tpu.memory_space<vmem>>, vector<1x8x512xf32>
    %186 = vector.shape_cast %185 : vector<1x8x512xf32> to vector<8x512xf32>
    %187 = arith.addf %184, %186 : vector<8x512xf32>
    %188 = vector.extract_strided_slice %187 {offsets = [0, 0], sizes = [8, 384], strides = [1, 1]} : vector<8x512xf32> to vector<8x384xf32>
    %189 = arith.negf %188 : vector<8x384xf32>
    %190 = math.exp %189 : vector<8x384xf32>
    %cst_83 = arith.constant 1.000000e+00 : f32
    %191 = vector.broadcast %cst_83 : f32 to vector<8x384xf32>
    %192 = arith.addf %191, %190 : vector<8x384xf32>
    %193 = arith.divf %191, %192 : vector<8x384xf32>
    %194 = vector.extract_strided_slice %193 {offsets = [0, 0], sizes = [8, 128], strides = [1, 1]} : vector<8x384xf32> to vector<8x128xf32>
    %195 = vector.extract_strided_slice %193 {offsets = [0, 128], sizes = [8, 128], strides = [1, 1]} : vector<8x384xf32> to vector<8x128xf32>
    %196 = vector.extract_strided_slice %193 {offsets = [0, 256], sizes = [8, 128], strides = [1, 1]} : vector<8x384xf32> to vector<8x128xf32>
    %197 = vector.extract_strided_slice %187 {offsets = [0, 384], sizes = [8, 128], strides = [1, 1]} : vector<8x512xf32> to vector<8x128xf32>
    %198 = math.tanh %197 : vector<8x128xf32>
    %199 = arith.mulf %195, %177 : vector<8x128xf32>
    %200 = arith.mulf %194, %198 : vector<8x128xf32>
    %201 = arith.addf %199, %200 : vector<8x128xf32>
    %202 = math.tanh %201 : vector<8x128xf32>
    %203 = arith.mulf %196, %202 : vector<8x128xf32>
    %c7_84 = arith.constant 7 : index
    %c0_85 = arith.constant 0 : index
    %c0_86 = arith.constant 0 : index
    %204 = vector.load %arg6[%c7_84, %c0_85, %c0_86] : memref<8x8x128xf32, #tpu.memory_space<vmem>>, vector<1x8x128xf32>
    %205 = vector.shape_cast %204 : vector<1x8x128xf32> to vector<8x128xf32>
    %206 = vector.shape_cast %203 : vector<8x128xf32> to vector<1x8x128xf32>
    tpu.vector_store %arg6[%c7_84, %c0_85, %c0_86], %206 {strides = array<i32>} : memref<8x8x128xf32, #tpu.memory_space<vmem>>, vector<1x8x128xf32>,
    %c0_87 = arith.constant 0 : index
    %c0_88 = arith.constant 0 : index
    %207 = vector.load %arg9[%c0_87, %c0_88] : memref<8x128xf32, #tpu.memory_space<vmem>>, vector<8x128xf32>
    tpu.vector_store %arg9[%c0_87, %c0_88], %203 {strides = array<i32>} : memref<8x128xf32, #tpu.memory_space<vmem>>, vector<8x128xf32>,
    %c0_89 = arith.constant 0 : index
    %c0_90 = arith.constant 0 : index
    %208 = vector.load %arg10[%c0_89, %c0_90] : memref<8x128xf32, #tpu.memory_space<vmem>>, vector<8x128xf32>
    tpu.vector_store %arg10[%c0_89, %c0_90], %201 {strides = array<i32>} : memref<8x128xf32, #tpu.memory_space<vmem>>, vector<8x128xf32>,
    %c0_i32_91 = arith.constant 0 : i32
    %209 = arith.cmpi eq, %arg1, %c0_i32_91 : i32
    %210 = arith.extui %209 : i1 to i32
    %c0_i32_92 = arith.constant 0 : i32
    %211 = arith.cmpi ne, %210, %c0_i32_92 : i32
    scf.if %211 {
      %c0_93 = arith.constant 0 : index
      %c0_94 = arith.constant 0 : index
      %212 = vector.load %arg9[%c0_93, %c0_94] : memref<8x128xf32, #tpu.memory_space<vmem>>, vector<8x128xf32>
      %c0_95 = arith.constant 0 : index
      %c0_96 = arith.constant 0 : index
      %213 = vector.load %arg7[%c0_95, %c0_96] : memref<8x128xf32, #tpu.memory_space<vmem>>, vector<8x128xf32>
      tpu.vector_store %arg7[%c0_95, %c0_96], %212 {strides = array<i32>} : memref<8x128xf32, #tpu.memory_space<vmem>>, vector<8x128xf32>,
      %c0_97 = arith.constant 0 : index
      %c0_98 = arith.constant 0 : index
      %214 = vector.load %arg10[%c0_97, %c0_98] : memref<8x128xf32, #tpu.memory_space<vmem>>, vector<8x128xf32>
      %c0_99 = arith.constant 0 : index
      %c0_100 = arith.constant 0 : index
      %215 = vector.load %arg8[%c0_99, %c0_100] : memref<8x128xf32, #tpu.memory_space<vmem>>, vector<8x128xf32>
      tpu.vector_store %arg8[%c0_99, %c0_100], %214 {strides = array<i32>} : memref<8x128xf32, #tpu.memory_space<vmem>>, vector<8x128xf32>,
    } else {
    }
    return
  }
  func.func @transform_0(%arg0: i32, %arg1: i32) -> (i32, i32, i32) {
    %c0_i32 = arith.constant 0 : i32
    %c0_i32_0 = arith.constant 0 : i32
    return %arg1, %arg0, %c0_i32 : i32, i32, i32
  }
  func.func @transform_1(%arg0: i32, %arg1: i32) -> (i32, i32) {
    %c0_i32 = arith.constant 0 : i32
    %c0_i32_0 = arith.constant 0 : i32
    %c0_i32_1 = arith.constant 0 : i32
    return %c0_i32, %c0_i32_0 : i32, i32
  }
  func.func @transform_2(%arg0: i32, %arg1: i32) -> (i32, i32) {
    %c0_i32 = arith.constant 0 : i32
    %c0_i32_0 = arith.constant 0 : i32
    %c0_i32_1 = arith.constant 0 : i32
    return %c0_i32, %c0_i32_0 : i32, i32
  }
  func.func @transform_3(%arg0: i32, %arg1: i32) -> (i32, i32) {
    %c0_i32 = arith.constant 0 : i32
    %c0_i32_0 = arith.constant 0 : i32
    %c0_i32_1 = arith.constant 0 : i32
    return %c0_i32, %c0_i32_0 : i32, i32
  }
  func.func @transform_4(%arg0: i32, %arg1: i32) -> (i32, i32, i32) {
    %c0_i32 = arith.constant 0 : i32
    %c0_i32_0 = arith.constant 0 : i32
    return %arg1, %arg0, %c0_i32 : i32, i32, i32
  }
  func.func @transform_5(%arg0: i32, %arg1: i32) -> (i32, i32) {
    %c0_i32 = arith.constant 0 : i32
    %c0_i32_0 = arith.constant 0 : i32
    return %arg0, %c0_i32 : i32, i32
  }
  func.func @transform_6(%arg0: i32, %arg1: i32) -> (i32, i32) {
    %c0_i32 = arith.constant 0 : i32
    %c0_i32_0 = arith.constant 0 : i32
    return %arg0, %c0_i32 : i32, i32
  }
}

module attributes {stable_mosaic.version = 11 : i64} {
  func.func @_lstm_chunk_kernel(%arg0: i32, %arg1: i32, %arg2: memref<8x8x128xf32, #tpu.memory_space<vmem>>, %arg3: memref<128x512xf32, #tpu.memory_space<vmem>>, %arg4: memref<128x512xf32, #tpu.memory_space<vmem>>, %arg5: memref<1x512xf32, #tpu.memory_space<vmem>>, %arg6: memref<8x8x128xf32, #tpu.memory_space<vmem>>, %arg7: memref<8x128xf32, #tpu.memory_space<vmem>>, %arg8: memref<8x128xf32, #tpu.memory_space<vmem>>, %arg9: memref<8x128xf32, #tpu.memory_space<vmem>>, %arg10: memref<8x128xf32, #tpu.memory_space<vmem>>, %arg11: memref<8x8x512xf32, #tpu.memory_space<vmem>>) attributes {dimension_semantics = [#tpu.dimension_semantics<parallel>, #tpu.dimension_semantics<arbitrary>], iteration_bounds = array<i64: 1, 1>, scalar_prefetch = 0 : i64, scratch_operands = 3 : i64, tpu.core_type = #tpu.core_type<tc>, window_params = [{transform_indices = @transform_0, window_bounds = array<i64: 8, 8, 128>}, {pipeline_mode = #tpu.pipeline_mode<synchronous>, transform_indices = @transform_1, window_bounds = array<i64: 128, 512>}, {pipeline_mode = #tpu.pipeline_mode<synchronous>, transform_indices = @transform_2, window_bounds = array<i64: 128, 512>}, {pipeline_mode = #tpu.pipeline_mode<synchronous>, transform_indices = @transform_3, window_bounds = array<i64: 1, 512>}, {transform_indices = @transform_4, window_bounds = array<i64: 8, 8, 128>}, {transform_indices = @transform_5, window_bounds = array<i64: 8, 128>}, {transform_indices = @transform_6, window_bounds = array<i64: 8, 128>}]} {
    %c0_i32 = arith.constant 0 : i32
    %0 = arith.cmpi eq, %arg1, %c0_i32 : i32
    %1 = arith.extui %0 : i1 to i32
    %c0_i32_0 = arith.constant 0 : i32
    %2 = arith.cmpi ne, %1, %c0_i32_0 : i32
    scf.if %2 {
      %cst_93 = arith.constant 0.000000e+00 : f32
      %212 = vector.broadcast %cst_93 : f32 to vector<8x128xf32>
      %c0_94 = arith.constant 0 : index
      %c0_95 = arith.constant 0 : index
      %213 = vector.load %arg9[%c0_94, %c0_95] : memref<8x128xf32, #tpu.memory_space<vmem>>, vector<8x128xf32>
      tpu.vector_store %arg9[%c0_94, %c0_95], %212 {strides = array<i32>} : memref<8x128xf32, #tpu.memory_space<vmem>>, vector<8x128xf32>,
      %cst_96 = arith.constant 0.000000e+00 : f32
      %214 = vector.broadcast %cst_96 : f32 to vector<8x128xf32>
      %c0_97 = arith.constant 0 : index
      %c0_98 = arith.constant 0 : index
      %215 = vector.load %arg10[%c0_97, %c0_98] : memref<8x128xf32, #tpu.memory_space<vmem>>, vector<8x128xf32>
      tpu.vector_store %arg10[%c0_97, %c0_98], %214 {strides = array<i32>} : memref<8x128xf32, #tpu.memory_space<vmem>>, vector<8x128xf32>,
    } else {
    }
    %c0 = arith.constant 0 : index
    %c0_1 = arith.constant 0 : index
    %c0_2 = arith.constant 0 : index
    %3 = vector.load %arg2[%c0, %c0_1, %c0_2] : memref<8x8x128xf32, #tpu.memory_space<vmem>>, vector<8x8x128xf32>
    %4 = vector.shape_cast %3 : vector<8x8x128xf32> to vector<64x128xf32>
    %c0_3 = arith.constant 0 : index
    %c0_4 = arith.constant 0 : index
    %5 = vector.load %arg3[%c0_3, %c0_4] : memref<128x512xf32, #tpu.memory_space<vmem>>, vector<128x512xf32>
    %cst = arith.constant dense<0.000000e+00> : vector<64x512xf32>
    %6 = tpu.matmul %4, %5, %cst {dimension_numbers = #tpu.dot_dimension_numbers<[1], [0], [0], [1], [0, 0, 1, 1], [], []>} : vector<64x128xf32>, vector<128x512xf32>, vector<64x512xf32> -> vector<64x512xf32>
    %7 = vector.shape_cast %6 : vector<64x512xf32> to vector<8x8x512xf32>
    %c0_5 = arith.constant 0 : index
    %c0_6 = arith.constant 0 : index
    %8 = vector.load %arg5[%c0_5, %c0_6] : memref<1x512xf32, #tpu.memory_space<vmem>>, vector<1x512xf32>
    %9 = vector.shape_cast %8 : vector<1x512xf32> to vector<1x1x512xf32>
    %10 = vector.broadcast %9 : vector<1x1x512xf32> to vector<8x8x512xf32>
    %11 = arith.addf %7, %10 : vector<8x8x512xf32>
    %c0_7 = arith.constant 0 : index
    %c0_8 = arith.constant 0 : index
    %c0_9 = arith.constant 0 : index
    %12 = vector.load %arg11[%c0_7, %c0_8, %c0_9] : memref<8x8x512xf32, #tpu.memory_space<vmem>>, vector<8x8x512xf32>
    tpu.vector_store %arg11[%c0_7, %c0_8, %c0_9], %11 {strides = array<i32>} : memref<8x8x512xf32, #tpu.memory_space<vmem>>, vector<8x8x512xf32>,
    %c0_10 = arith.constant 0 : index
    %c0_11 = arith.constant 0 : index
    %13 = vector.load %arg9[%c0_10, %c0_11] : memref<8x128xf32, #tpu.memory_space<vmem>>, vector<8x128xf32>
    %c0_12 = arith.constant 0 : index
    %c0_13 = arith.constant 0 : index
    %14 = vector.load %arg10[%c0_12, %c0_13] : memref<8x128xf32, #tpu.memory_space<vmem>>, vector<8x128xf32>
    %c0_14 = arith.constant 0 : index
    %c0_15 = arith.constant 0 : index
    %15 = vector.load %arg4[%c0_14, %c0_15] : memref<128x512xf32, #tpu.memory_space<vmem>>, vector<128x512xf32>
    %cst_16 = arith.constant dense<0.000000e+00> : vector<8x512xf32>
    %16 = tpu.matmul %13, %15, %cst_16 {dimension_numbers = #tpu.dot_dimension_numbers<[1], [0], [0], [1], [0, 0, 1, 1], [], []>} : vector<8x128xf32>, vector<128x512xf32>, vector<8x512xf32> -> vector<8x512xf32>
    %c0_17 = arith.constant 0 : index
    %c0_18 = arith.constant 0 : index
    %c0_19 = arith.constant 0 : index
    %17 = vector.load %arg11[%c0_17, %c0_18, %c0_19] : memref<8x8x512xf32, #tpu.memory_space<vmem>>, vector<1x8x512xf32>
    %18 = vector.shape_cast %17 : vector<1x8x512xf32> to vector<8x512xf32>
    %19 = arith.addf %16, %18 : vector<8x512xf32>
    %20 = vector.extract_strided_slice %19 {offsets = [0, 0], sizes = [8, 384], strides = [1, 1]} : vector<8x512xf32> to vector<8x384xf32>
    %21 = arith.negf %20 : vector<8x384xf32>
    %22 = math.exp %21 : vector<8x384xf32>
    %cst_20 = arith.constant 1.000000e+00 : f32
    %23 = vector.broadcast %cst_20 : f32 to vector<8x384xf32>
    %24 = arith.addf %23, %22 : vector<8x384xf32>
    %25 = arith.divf %23, %24 : vector<8x384xf32>
    %26 = vector.extract_strided_slice %25 {offsets = [0, 0], sizes = [8, 128], strides = [1, 1]} : vector<8x384xf32> to vector<8x128xf32>
    %27 = vector.extract_strided_slice %25 {offsets = [0, 128], sizes = [8, 128], strides = [1, 1]} : vector<8x384xf32> to vector<8x128xf32>
    %28 = vector.extract_strided_slice %25 {offsets = [0, 256], sizes = [8, 128], strides = [1, 1]} : vector<8x384xf32> to vector<8x128xf32>
    %29 = vector.extract_strided_slice %19 {offsets = [0, 384], sizes = [8, 128], strides = [1, 1]} : vector<8x512xf32> to vector<8x128xf32>
    %30 = math.tanh %29 : vector<8x128xf32>
    %31 = arith.mulf %27, %14 : vector<8x128xf32>
    %32 = arith.mulf %26, %30 : vector<8x128xf32>
    %33 = arith.addf %31, %32 : vector<8x128xf32>
    %34 = math.tanh %33 : vector<8x128xf32>
    %35 = arith.mulf %28, %34 : vector<8x128xf32>
    %c0_21 = arith.constant 0 : index
    %c0_22 = arith.constant 0 : index
    %c0_23 = arith.constant 0 : index
    %36 = vector.load %arg6[%c0_21, %c0_22, %c0_23] : memref<8x8x128xf32, #tpu.memory_space<vmem>>, vector<1x8x128xf32>
    %37 = vector.shape_cast %36 : vector<1x8x128xf32> to vector<8x128xf32>
    %38 = vector.shape_cast %35 : vector<8x128xf32> to vector<1x8x128xf32>
    tpu.vector_store %arg6[%c0_21, %c0_22, %c0_23], %38 {strides = array<i32>} : memref<8x8x128xf32, #tpu.memory_space<vmem>>, vector<1x8x128xf32>,
    %c0_24 = arith.constant 0 : index
    %c0_25 = arith.constant 0 : index
    %39 = vector.load %arg4[%c0_24, %c0_25] : memref<128x512xf32, #tpu.memory_space<vmem>>, vector<128x512xf32>
    %cst_26 = arith.constant dense<0.000000e+00> : vector<8x512xf32>
    %40 = tpu.matmul %35, %39, %cst_26 {dimension_numbers = #tpu.dot_dimension_numbers<[1], [0], [0], [1], [0, 0, 1, 1], [], []>} : vector<8x128xf32>, vector<128x512xf32>, vector<8x512xf32> -> vector<8x512xf32>
    %c1 = arith.constant 1 : index
    %c0_27 = arith.constant 0 : index
    %c0_28 = arith.constant 0 : index
    %41 = vector.load %arg11[%c1, %c0_27, %c0_28] : memref<8x8x512xf32, #tpu.memory_space<vmem>>, vector<1x8x512xf32>
    %42 = vector.shape_cast %41 : vector<1x8x512xf32> to vector<8x512xf32>
    %43 = arith.addf %40, %42 : vector<8x512xf32>
    %44 = vector.extract_strided_slice %43 {offsets = [0, 0], sizes = [8, 384], strides = [1, 1]} : vector<8x512xf32> to vector<8x384xf32>
    %45 = arith.negf %44 : vector<8x384xf32>
    %46 = math.exp %45 : vector<8x384xf32>
    %cst_29 = arith.constant 1.000000e+00 : f32
    %47 = vector.broadcast %cst_29 : f32 to vector<8x384xf32>
    %48 = arith.addf %47, %46 : vector<8x384xf32>
    %49 = arith.divf %47, %48 : vector<8x384xf32>
    %50 = vector.extract_strided_slice %49 {offsets = [0, 0], sizes = [8, 128], strides = [1, 1]} : vector<8x384xf32> to vector<8x128xf32>
    %51 = vector.extract_strided_slice %49 {offsets = [0, 128], sizes = [8, 128], strides = [1, 1]} : vector<8x384xf32> to vector<8x128xf32>
    %52 = vector.extract_strided_slice %49 {offsets = [0, 256], sizes = [8, 128], strides = [1, 1]} : vector<8x384xf32> to vector<8x128xf32>
    %53 = vector.extract_strided_slice %43 {offsets = [0, 384], sizes = [8, 128], strides = [1, 1]} : vector<8x512xf32> to vector<8x128xf32>
    %54 = math.tanh %53 : vector<8x128xf32>
    %55 = arith.mulf %51, %33 : vector<8x128xf32>
    %56 = arith.mulf %50, %54 : vector<8x128xf32>
    %57 = arith.addf %55, %56 : vector<8x128xf32>
    %58 = math.tanh %57 : vector<8x128xf32>
    %59 = arith.mulf %52, %58 : vector<8x128xf32>
    %c1_30 = arith.constant 1 : index
    %c0_31 = arith.constant 0 : index
    %c0_32 = arith.constant 0 : index
    %60 = vector.load %arg6[%c1_30, %c0_31, %c0_32] : memref<8x8x128xf32, #tpu.memory_space<vmem>>, vector<1x8x128xf32>
    %61 = vector.shape_cast %60 : vector<1x8x128xf32> to vector<8x128xf32>
    %62 = vector.shape_cast %59 : vector<8x128xf32> to vector<1x8x128xf32>
    tpu.vector_store %arg6[%c1_30, %c0_31, %c0_32], %62 {strides = array<i32>} : memref<8x8x128xf32, #tpu.memory_space<vmem>>, vector<1x8x128xf32>,
    %c0_33 = arith.constant 0 : index
    %c0_34 = arith.constant 0 : index
    %63 = vector.load %arg4[%c0_33, %c0_34] : memref<128x512xf32, #tpu.memory_space<vmem>>, vector<128x512xf32>
    %cst_35 = arith.constant dense<0.000000e+00> : vector<8x512xf32>
    %64 = tpu.matmul %59, %63, %cst_35 {dimension_numbers = #tpu.dot_dimension_numbers<[1], [0], [0], [1], [0, 0, 1, 1], [], []>} : vector<8x128xf32>, vector<128x512xf32>, vector<8x512xf32> -> vector<8x512xf32>
    %c2 = arith.constant 2 : index
    %c0_36 = arith.constant 0 : index
    %c0_37 = arith.constant 0 : index
    %65 = vector.load %arg11[%c2, %c0_36, %c0_37] : memref<8x8x512xf32, #tpu.memory_space<vmem>>, vector<1x8x512xf32>
    %66 = vector.shape_cast %65 : vector<1x8x512xf32> to vector<8x512xf32>
    %67 = arith.addf %64, %66 : vector<8x512xf32>
    %68 = vector.extract_strided_slice %67 {offsets = [0, 0], sizes = [8, 384], strides = [1, 1]} : vector<8x512xf32> to vector<8x384xf32>
    %69 = arith.negf %68 : vector<8x384xf32>
    %70 = math.exp %69 : vector<8x384xf32>
    %cst_38 = arith.constant 1.000000e+00 : f32
    %71 = vector.broadcast %cst_38 : f32 to vector<8x384xf32>
    %72 = arith.addf %71, %70 : vector<8x384xf32>
    %73 = arith.divf %71, %72 : vector<8x384xf32>
    %74 = vector.extract_strided_slice %73 {offsets = [0, 0], sizes = [8, 128], strides = [1, 1]} : vector<8x384xf32> to vector<8x128xf32>
    %75 = vector.extract_strided_slice %73 {offsets = [0, 128], sizes = [8, 128], strides = [1, 1]} : vector<8x384xf32> to vector<8x128xf32>
    %76 = vector.extract_strided_slice %73 {offsets = [0, 256], sizes = [8, 128], strides = [1, 1]} : vector<8x384xf32> to vector<8x128xf32>
    %77 = vector.extract_strided_slice %67 {offsets = [0, 384], sizes = [8, 128], strides = [1, 1]} : vector<8x512xf32> to vector<8x128xf32>
    %78 = math.tanh %77 : vector<8x128xf32>
    %79 = arith.mulf %75, %57 : vector<8x128xf32>
    %80 = arith.mulf %74, %78 : vector<8x128xf32>
    %81 = arith.addf %79, %80 : vector<8x128xf32>
    %82 = math.tanh %81 : vector<8x128xf32>
    %83 = arith.mulf %76, %82 : vector<8x128xf32>
    %c2_39 = arith.constant 2 : index
    %c0_40 = arith.constant 0 : index
    %c0_41 = arith.constant 0 : index
    %84 = vector.load %arg6[%c2_39, %c0_40, %c0_41] : memref<8x8x128xf32, #tpu.memory_space<vmem>>, vector<1x8x128xf32>
    %85 = vector.shape_cast %84 : vector<1x8x128xf32> to vector<8x128xf32>
    %86 = vector.shape_cast %83 : vector<8x128xf32> to vector<1x8x128xf32>
    tpu.vector_store %arg6[%c2_39, %c0_40, %c0_41], %86 {strides = array<i32>} : memref<8x8x128xf32, #tpu.memory_space<vmem>>, vector<1x8x128xf32>,
    %c0_42 = arith.constant 0 : index
    %c0_43 = arith.constant 0 : index
    %87 = vector.load %arg4[%c0_42, %c0_43] : memref<128x512xf32, #tpu.memory_space<vmem>>, vector<128x512xf32>
    %cst_44 = arith.constant dense<0.000000e+00> : vector<8x512xf32>
    %88 = tpu.matmul %83, %87, %cst_44 {dimension_numbers = #tpu.dot_dimension_numbers<[1], [0], [0], [1], [0, 0, 1, 1], [], []>} : vector<8x128xf32>, vector<128x512xf32>, vector<8x512xf32> -> vector<8x512xf32>
    %c3 = arith.constant 3 : index
    %c0_45 = arith.constant 0 : index
    %c0_46 = arith.constant 0 : index
    %89 = vector.load %arg11[%c3, %c0_45, %c0_46] : memref<8x8x512xf32, #tpu.memory_space<vmem>>, vector<1x8x512xf32>
    %90 = vector.shape_cast %89 : vector<1x8x512xf32> to vector<8x512xf32>
    %91 = arith.addf %88, %90 : vector<8x512xf32>
    %92 = vector.extract_strided_slice %91 {offsets = [0, 0], sizes = [8, 384], strides = [1, 1]} : vector<8x512xf32> to vector<8x384xf32>
    %93 = arith.negf %92 : vector<8x384xf32>
    %94 = math.exp %93 : vector<8x384xf32>
    %cst_47 = arith.constant 1.000000e+00 : f32
    %95 = vector.broadcast %cst_47 : f32 to vector<8x384xf32>
    %96 = arith.addf %95, %94 : vector<8x384xf32>
    %97 = arith.divf %95, %96 : vector<8x384xf32>
    %98 = vector.extract_strided_slice %97 {offsets = [0, 0], sizes = [8, 128], strides = [1, 1]} : vector<8x384xf32> to vector<8x128xf32>
    %99 = vector.extract_strided_slice %97 {offsets = [0, 128], sizes = [8, 128], strides = [1, 1]} : vector<8x384xf32> to vector<8x128xf32>
    %100 = vector.extract_strided_slice %97 {offsets = [0, 256], sizes = [8, 128], strides = [1, 1]} : vector<8x384xf32> to vector<8x128xf32>
    %101 = vector.extract_strided_slice %91 {offsets = [0, 384], sizes = [8, 128], strides = [1, 1]} : vector<8x512xf32> to vector<8x128xf32>
    %102 = math.tanh %101 : vector<8x128xf32>
    %103 = arith.mulf %99, %81 : vector<8x128xf32>
    %104 = arith.mulf %98, %102 : vector<8x128xf32>
    %105 = arith.addf %103, %104 : vector<8x128xf32>
    %106 = math.tanh %105 : vector<8x128xf32>
    %107 = arith.mulf %100, %106 : vector<8x128xf32>
    %c3_48 = arith.constant 3 : index
    %c0_49 = arith.constant 0 : index
    %c0_50 = arith.constant 0 : index
    %108 = vector.load %arg6[%c3_48, %c0_49, %c0_50] : memref<8x8x128xf32, #tpu.memory_space<vmem>>, vector<1x8x128xf32>
    %109 = vector.shape_cast %108 : vector<1x8x128xf32> to vector<8x128xf32>
    %110 = vector.shape_cast %107 : vector<8x128xf32> to vector<1x8x128xf32>
    tpu.vector_store %arg6[%c3_48, %c0_49, %c0_50], %110 {strides = array<i32>} : memref<8x8x128xf32, #tpu.memory_space<vmem>>, vector<1x8x128xf32>,
    %c0_51 = arith.constant 0 : index
    %c0_52 = arith.constant 0 : index
    %111 = vector.load %arg4[%c0_51, %c0_52] : memref<128x512xf32, #tpu.memory_space<vmem>>, vector<128x512xf32>
    %cst_53 = arith.constant dense<0.000000e+00> : vector<8x512xf32>
    %112 = tpu.matmul %107, %111, %cst_53 {dimension_numbers = #tpu.dot_dimension_numbers<[1], [0], [0], [1], [0, 0, 1, 1], [], []>} : vector<8x128xf32>, vector<128x512xf32>, vector<8x512xf32> -> vector<8x512xf32>
    %c4 = arith.constant 4 : index
    %c0_54 = arith.constant 0 : index
    %c0_55 = arith.constant 0 : index
    %113 = vector.load %arg11[%c4, %c0_54, %c0_55] : memref<8x8x512xf32, #tpu.memory_space<vmem>>, vector<1x8x512xf32>
    %114 = vector.shape_cast %113 : vector<1x8x512xf32> to vector<8x512xf32>
    %115 = arith.addf %112, %114 : vector<8x512xf32>
    %116 = vector.extract_strided_slice %115 {offsets = [0, 0], sizes = [8, 384], strides = [1, 1]} : vector<8x512xf32> to vector<8x384xf32>
    %117 = arith.negf %116 : vector<8x384xf32>
    %118 = math.exp %117 : vector<8x384xf32>
    %cst_56 = arith.constant 1.000000e+00 : f32
    %119 = vector.broadcast %cst_56 : f32 to vector<8x384xf32>
    %120 = arith.addf %119, %118 : vector<8x384xf32>
    %121 = arith.divf %119, %120 : vector<8x384xf32>
    %122 = vector.extract_strided_slice %121 {offsets = [0, 0], sizes = [8, 128], strides = [1, 1]} : vector<8x384xf32> to vector<8x128xf32>
    %123 = vector.extract_strided_slice %121 {offsets = [0, 128], sizes = [8, 128], strides = [1, 1]} : vector<8x384xf32> to vector<8x128xf32>
    %124 = vector.extract_strided_slice %121 {offsets = [0, 256], sizes = [8, 128], strides = [1, 1]} : vector<8x384xf32> to vector<8x128xf32>
    %125 = vector.extract_strided_slice %115 {offsets = [0, 384], sizes = [8, 128], strides = [1, 1]} : vector<8x512xf32> to vector<8x128xf32>
    %126 = math.tanh %125 : vector<8x128xf32>
    %127 = arith.mulf %123, %105 : vector<8x128xf32>
    %128 = arith.mulf %122, %126 : vector<8x128xf32>
    %129 = arith.addf %127, %128 : vector<8x128xf32>
    %130 = math.tanh %129 : vector<8x128xf32>
    %131 = arith.mulf %124, %130 : vector<8x128xf32>
    %c4_57 = arith.constant 4 : index
    %c0_58 = arith.constant 0 : index
    %c0_59 = arith.constant 0 : index
    %132 = vector.load %arg6[%c4_57, %c0_58, %c0_59] : memref<8x8x128xf32, #tpu.memory_space<vmem>>, vector<1x8x128xf32>
    %133 = vector.shape_cast %132 : vector<1x8x128xf32> to vector<8x128xf32>
    %134 = vector.shape_cast %131 : vector<8x128xf32> to vector<1x8x128xf32>
    tpu.vector_store %arg6[%c4_57, %c0_58, %c0_59], %134 {strides = array<i32>} : memref<8x8x128xf32, #tpu.memory_space<vmem>>, vector<1x8x128xf32>,
    %c0_60 = arith.constant 0 : index
    %c0_61 = arith.constant 0 : index
    %135 = vector.load %arg4[%c0_60, %c0_61] : memref<128x512xf32, #tpu.memory_space<vmem>>, vector<128x512xf32>
    %cst_62 = arith.constant dense<0.000000e+00> : vector<8x512xf32>
    %136 = tpu.matmul %131, %135, %cst_62 {dimension_numbers = #tpu.dot_dimension_numbers<[1], [0], [0], [1], [0, 0, 1, 1], [], []>} : vector<8x128xf32>, vector<128x512xf32>, vector<8x512xf32> -> vector<8x512xf32>
    %c5 = arith.constant 5 : index
    %c0_63 = arith.constant 0 : index
    %c0_64 = arith.constant 0 : index
    %137 = vector.load %arg11[%c5, %c0_63, %c0_64] : memref<8x8x512xf32, #tpu.memory_space<vmem>>, vector<1x8x512xf32>
    %138 = vector.shape_cast %137 : vector<1x8x512xf32> to vector<8x512xf32>
    %139 = arith.addf %136, %138 : vector<8x512xf32>
    %140 = vector.extract_strided_slice %139 {offsets = [0, 0], sizes = [8, 384], strides = [1, 1]} : vector<8x512xf32> to vector<8x384xf32>
    %141 = arith.negf %140 : vector<8x384xf32>
    %142 = math.exp %141 : vector<8x384xf32>
    %cst_65 = arith.constant 1.000000e+00 : f32
    %143 = vector.broadcast %cst_65 : f32 to vector<8x384xf32>
    %144 = arith.addf %143, %142 : vector<8x384xf32>
    %145 = arith.divf %143, %144 : vector<8x384xf32>
    %146 = vector.extract_strided_slice %145 {offsets = [0, 0], sizes = [8, 128], strides = [1, 1]} : vector<8x384xf32> to vector<8x128xf32>
    %147 = vector.extract_strided_slice %145 {offsets = [0, 128], sizes = [8, 128], strides = [1, 1]} : vector<8x384xf32> to vector<8x128xf32>
    %148 = vector.extract_strided_slice %145 {offsets = [0, 256], sizes = [8, 128], strides = [1, 1]} : vector<8x384xf32> to vector<8x128xf32>
    %149 = vector.extract_strided_slice %139 {offsets = [0, 384], sizes = [8, 128], strides = [1, 1]} : vector<8x512xf32> to vector<8x128xf32>
    %150 = math.tanh %149 : vector<8x128xf32>
    %151 = arith.mulf %147, %129 : vector<8x128xf32>
    %152 = arith.mulf %146, %150 : vector<8x128xf32>
    %153 = arith.addf %151, %152 : vector<8x128xf32>
    %154 = math.tanh %153 : vector<8x128xf32>
    %155 = arith.mulf %148, %154 : vector<8x128xf32>
    %c5_66 = arith.constant 5 : index
    %c0_67 = arith.constant 0 : index
    %c0_68 = arith.constant 0 : index
    %156 = vector.load %arg6[%c5_66, %c0_67, %c0_68] : memref<8x8x128xf32, #tpu.memory_space<vmem>>, vector<1x8x128xf32>
    %157 = vector.shape_cast %156 : vector<1x8x128xf32> to vector<8x128xf32>
    %158 = vector.shape_cast %155 : vector<8x128xf32> to vector<1x8x128xf32>
    tpu.vector_store %arg6[%c5_66, %c0_67, %c0_68], %158 {strides = array<i32>} : memref<8x8x128xf32, #tpu.memory_space<vmem>>, vector<1x8x128xf32>,
    %c0_69 = arith.constant 0 : index
    %c0_70 = arith.constant 0 : index
    %159 = vector.load %arg4[%c0_69, %c0_70] : memref<128x512xf32, #tpu.memory_space<vmem>>, vector<128x512xf32>
    %cst_71 = arith.constant dense<0.000000e+00> : vector<8x512xf32>
    %160 = tpu.matmul %155, %159, %cst_71 {dimension_numbers = #tpu.dot_dimension_numbers<[1], [0], [0], [1], [0, 0, 1, 1], [], []>} : vector<8x128xf32>, vector<128x512xf32>, vector<8x512xf32> -> vector<8x512xf32>
    %c6 = arith.constant 6 : index
    %c0_72 = arith.constant 0 : index
    %c0_73 = arith.constant 0 : index
    %161 = vector.load %arg11[%c6, %c0_72, %c0_73] : memref<8x8x512xf32, #tpu.memory_space<vmem>>, vector<1x8x512xf32>
    %162 = vector.shape_cast %161 : vector<1x8x512xf32> to vector<8x512xf32>
    %163 = arith.addf %160, %162 : vector<8x512xf32>
    %164 = vector.extract_strided_slice %163 {offsets = [0, 0], sizes = [8, 384], strides = [1, 1]} : vector<8x512xf32> to vector<8x384xf32>
    %165 = arith.negf %164 : vector<8x384xf32>
    %166 = math.exp %165 : vector<8x384xf32>
    %cst_74 = arith.constant 1.000000e+00 : f32
    %167 = vector.broadcast %cst_74 : f32 to vector<8x384xf32>
    %168 = arith.addf %167, %166 : vector<8x384xf32>
    %169 = arith.divf %167, %168 : vector<8x384xf32>
    %170 = vector.extract_strided_slice %169 {offsets = [0, 0], sizes = [8, 128], strides = [1, 1]} : vector<8x384xf32> to vector<8x128xf32>
    %171 = vector.extract_strided_slice %169 {offsets = [0, 128], sizes = [8, 128], strides = [1, 1]} : vector<8x384xf32> to vector<8x128xf32>
    %172 = vector.extract_strided_slice %169 {offsets = [0, 256], sizes = [8, 128], strides = [1, 1]} : vector<8x384xf32> to vector<8x128xf32>
    %173 = vector.extract_strided_slice %163 {offsets = [0, 384], sizes = [8, 128], strides = [1, 1]} : vector<8x512xf32> to vector<8x128xf32>
    %174 = math.tanh %173 : vector<8x128xf32>
    %175 = arith.mulf %171, %153 : vector<8x128xf32>
    %176 = arith.mulf %170, %174 : vector<8x128xf32>
    %177 = arith.addf %175, %176 : vector<8x128xf32>
    %178 = math.tanh %177 : vector<8x128xf32>
    %179 = arith.mulf %172, %178 : vector<8x128xf32>
    %c6_75 = arith.constant 6 : index
    %c0_76 = arith.constant 0 : index
    %c0_77 = arith.constant 0 : index
    %180 = vector.load %arg6[%c6_75, %c0_76, %c0_77] : memref<8x8x128xf32, #tpu.memory_space<vmem>>, vector<1x8x128xf32>
    %181 = vector.shape_cast %180 : vector<1x8x128xf32> to vector<8x128xf32>
    %182 = vector.shape_cast %179 : vector<8x128xf32> to vector<1x8x128xf32>
    tpu.vector_store %arg6[%c6_75, %c0_76, %c0_77], %182 {strides = array<i32>} : memref<8x8x128xf32, #tpu.memory_space<vmem>>, vector<1x8x128xf32>,
    %c0_78 = arith.constant 0 : index
    %c0_79 = arith.constant 0 : index
    %183 = vector.load %arg4[%c0_78, %c0_79] : memref<128x512xf32, #tpu.memory_space<vmem>>, vector<128x512xf32>
    %cst_80 = arith.constant dense<0.000000e+00> : vector<8x512xf32>
    %184 = tpu.matmul %179, %183, %cst_80 {dimension_numbers = #tpu.dot_dimension_numbers<[1], [0], [0], [1], [0, 0, 1, 1], [], []>} : vector<8x128xf32>, vector<128x512xf32>, vector<8x512xf32> -> vector<8x512xf32>
    %c7 = arith.constant 7 : index
    %c0_81 = arith.constant 0 : index
    %c0_82 = arith.constant 0 : index
    %185 = vector.load %arg11[%c7, %c0_81, %c0_82] : memref<8x8x512xf32, #tpu.memory_space<vmem>>, vector<1x8x512xf32>
    %186 = vector.shape_cast %185 : vector<1x8x512xf32> to vector<8x512xf32>
    %187 = arith.addf %184, %186 : vector<8x512xf32>
    %188 = vector.extract_strided_slice %187 {offsets = [0, 0], sizes = [8, 384], strides = [1, 1]} : vector<8x512xf32> to vector<8x384xf32>
    %189 = arith.negf %188 : vector<8x384xf32>
    %190 = math.exp %189 : vector<8x384xf32>
    %cst_83 = arith.constant 1.000000e+00 : f32
    %191 = vector.broadcast %cst_83 : f32 to vector<8x384xf32>
    %192 = arith.addf %191, %190 : vector<8x384xf32>
    %193 = arith.divf %191, %192 : vector<8x384xf32>
    %194 = vector.extract_strided_slice %193 {offsets = [0, 0], sizes = [8, 128], strides = [1, 1]} : vector<8x384xf32> to vector<8x128xf32>
    %195 = vector.extract_strided_slice %193 {offsets = [0, 128], sizes = [8, 128], strides = [1, 1]} : vector<8x384xf32> to vector<8x128xf32>
    %196 = vector.extract_strided_slice %193 {offsets = [0, 256], sizes = [8, 128], strides = [1, 1]} : vector<8x384xf32> to vector<8x128xf32>
    %197 = vector.extract_strided_slice %187 {offsets = [0, 384], sizes = [8, 128], strides = [1, 1]} : vector<8x512xf32> to vector<8x128xf32>
    %198 = math.tanh %197 : vector<8x128xf32>
    %199 = arith.mulf %195, %177 : vector<8x128xf32>
    %200 = arith.mulf %194, %198 : vector<8x128xf32>
    %201 = arith.addf %199, %200 : vector<8x128xf32>
    %202 = math.tanh %201 : vector<8x128xf32>
    %203 = arith.mulf %196, %202 : vector<8x128xf32>
    %c7_84 = arith.constant 7 : index
    %c0_85 = arith.constant 0 : index
    %c0_86 = arith.constant 0 : index
    %204 = vector.load %arg6[%c7_84, %c0_85, %c0_86] : memref<8x8x128xf32, #tpu.memory_space<vmem>>, vector<1x8x128xf32>
    %205 = vector.shape_cast %204 : vector<1x8x128xf32> to vector<8x128xf32>
    %206 = vector.shape_cast %203 : vector<8x128xf32> to vector<1x8x128xf32>
    tpu.vector_store %arg6[%c7_84, %c0_85, %c0_86], %206 {strides = array<i32>} : memref<8x8x128xf32, #tpu.memory_space<vmem>>, vector<1x8x128xf32>,
    %c0_87 = arith.constant 0 : index
    %c0_88 = arith.constant 0 : index
    %207 = vector.load %arg9[%c0_87, %c0_88] : memref<8x128xf32, #tpu.memory_space<vmem>>, vector<8x128xf32>
    tpu.vector_store %arg9[%c0_87, %c0_88], %203 {strides = array<i32>} : memref<8x128xf32, #tpu.memory_space<vmem>>, vector<8x128xf32>,
    %c0_89 = arith.constant 0 : index
    %c0_90 = arith.constant 0 : index
    %208 = vector.load %arg10[%c0_89, %c0_90] : memref<8x128xf32, #tpu.memory_space<vmem>>, vector<8x128xf32>
    tpu.vector_store %arg10[%c0_89, %c0_90], %201 {strides = array<i32>} : memref<8x128xf32, #tpu.memory_space<vmem>>, vector<8x128xf32>,
    %c0_i32_91 = arith.constant 0 : i32
    %209 = arith.cmpi eq, %arg1, %c0_i32_91 : i32
    %210 = arith.extui %209 : i1 to i32
    %c0_i32_92 = arith.constant 0 : i32
    %211 = arith.cmpi ne, %210, %c0_i32_92 : i32
    scf.if %211 {
      %c0_93 = arith.constant 0 : index
      %c0_94 = arith.constant 0 : index
      %212 = vector.load %arg9[%c0_93, %c0_94] : memref<8x128xf32, #tpu.memory_space<vmem>>, vector<8x128xf32>
      %c0_95 = arith.constant 0 : index
      %c0_96 = arith.constant 0 : index
      %213 = vector.load %arg7[%c0_95, %c0_96] : memref<8x128xf32, #tpu.memory_space<vmem>>, vector<8x128xf32>
      tpu.vector_store %arg7[%c0_95, %c0_96], %212 {strides = array<i32>} : memref<8x128xf32, #tpu.memory_space<vmem>>, vector<8x128xf32>,
      %c0_97 = arith.constant 0 : index
      %c0_98 = arith.constant 0 : index
      %214 = vector.load %arg10[%c0_97, %c0_98] : memref<8x128xf32, #tpu.memory_space<vmem>>, vector<8x128xf32>
      %c0_99 = arith.constant 0 : index
      %c0_100 = arith.constant 0 : index
      %215 = vector.load %arg8[%c0_99, %c0_100] : memref<8x128xf32, #tpu.memory_space<vmem>>, vector<8x128xf32>
      tpu.vector_store %arg8[%c0_99, %c0_100], %214 {strides = array<i32>} : memref<8x128xf32, #tpu.memory_space<vmem>>, vector<8x128xf32>,
    } else {
    }
    return
  }
  func.func @transform_0(%arg0: i32, %arg1: i32) -> (i32, i32, i32) {
    %c0_i32 = arith.constant 0 : i32
    %c0_i32_0 = arith.constant 0 : i32
    return %arg1, %arg0, %c0_i32 : i32, i32, i32
  }
  func.func @transform_1(%arg0: i32, %arg1: i32) -> (i32, i32) {
    %c0_i32 = arith.constant 0 : i32
    %c0_i32_0 = arith.constant 0 : i32
    %c0_i32_1 = arith.constant 0 : i32
    return %c0_i32, %c0_i32_0 : i32, i32
  }
  func.func @transform_2(%arg0: i32, %arg1: i32) -> (i32, i32) {
    %c0_i32 = arith.constant 0 : i32
    %c0_i32_0 = arith.constant 0 : i32
    %c0_i32_1 = arith.constant 0 : i32
    return %c0_i32, %c0_i32_0 : i32, i32
  }
  func.func @transform_3(%arg0: i32, %arg1: i32) -> (i32, i32) {
    %c0_i32 = arith.constant 0 : i32
    %c0_i32_0 = arith.constant 0 : i32
    %c0_i32_1 = arith.constant 0 : i32
    return %c0_i32, %c0_i32_0 : i32, i32
  }
  func.func @transform_4(%arg0: i32, %arg1: i32) -> (i32, i32, i32) {
    %c0_i32 = arith.constant 0 : i32
    %c0_i32_0 = arith.constant 0 : i32
    return %arg1, %arg0, %c0_i32 : i32, i32, i32
  }
  func.func @transform_5(%arg0: i32, %arg1: i32) -> (i32, i32) {
    %c0_i32 = arith.constant 0 : i32
    %c0_i32_0 = arith.constant 0 : i32
    return %arg0, %c0_i32 : i32, i32
  }
  func.func @transform_6(%arg0: i32, %arg1: i32) -> (i32, i32) {
    %c0_i32 = arith.constant 0 : i32
    %c0_i32_0 = arith.constant 0 : i32
    return %arg0, %c0_i32 : i32, i32
  }
}

</mosaic_0001>

<llo_original>
// kernel: tpu_custom_call.1
$region0: #{tpu_custom_call.1}
  #allocation0 [shape = 'u32[]', space=smem, size = 0x4, offset = 0x4, fixed_abs, tag = 'smem constant byte address 0x4 - core index']
  #allocation1 [shape = 'u32[144,128]{1,0:T(1,128)}', space=vmem, size = 0x12000, scoped, tag = 'internal scratch']
  #allocation2 [shape = 'f32[8,128]{1,0:T(8,128)}', space=vmem, size = 0x1000, scoped, tag = 'scratch operand']
  #allocation3 [shape = 'f32[8,128]{1,0:T(8,128)}', space=vmem, size = 0x1000, scoped, tag = 'scratch operand']
  #allocation4 [shape = 'f32[8,8,512]{2,1,0:T(8,128)}', space=vmem, size = 0x20000, scoped, tag = 'scratch operand']
  %s0 = inlined_call_operand.hbm [shape: f32[8,8,128], index: 0, kind: input, shape index: {}]
  %s1 = inlined_call_operand.hbm [shape: f32[128,512], index: 1, kind: input, shape index: {}]
  %s2 = inlined_call_operand.hbm [shape: f32[128,512], index: 2, kind: input, shape index: {}]
  %s3 = inlined_call_operand.vmem [shape: f32[1,512], index: 3, kind: input, shape index: {}]
  %s4 = inlined_call_operand.hbm [shape: f32[8,8,128], index: 4, kind: output, shape index: {0}]
  %s5 = inlined_call_operand.hbm [shape: f32[8,128], index: 5, kind: output, shape index: {1}]
  %s6 = inlined_call_operand.hbm [shape: f32[8,128], index: 6, kind: output, shape index: {2}]
  %7 = xla_tuple %s4, %s5, %s6
  %s8 = sld [smem:[#allocation0]]
  $region62: #{tpu_custom_call.1} parent=0
    _
  %s10 = ssub.s32 1, %s8
  %s11 = scalar_select 0, %s10, %s8
  $region1: #{tpu_custom_call.1} parent=0
    #allocation5 [shape = 'u8[32768]{0}', space=vmem, size = 0x8000, scoped, tag = 'input window, operand 0, single buffered']
    #allocation6 [shape = 's32[1]{0}', space=sflag, size = 0x4, scoped, tag = 'scoped memory for tpu_custom_call.1']
    #allocation7 [shape = 's32[1]{0}', space=sflag, size = 0x4, scoped, tag = 'scoped memory for tpu_custom_call.1']
    #allocation8 [shape = 'u8[262144]{0}', space=vmem, size = 0x40000, scoped, tag = 'input window, operand 1, single buffered']
    #allocation9 [shape = 's32[1]{0}', space=sflag, size = 0x4, scoped, tag = 'scoped memory for tpu_custom_call.1']
    #allocation10 [shape = 'u8[262144]{0}', space=vmem, size = 0x40000, scoped, tag = 'input window, operand 2, single buffered']
    #allocation11 [shape = 'u8[32768]{0}', space=vmem, size = 0x8000, scoped, tag = 'output window, operand 0, single buffered']
    #allocation12 [shape = 'u8[4096]{0}', space=vmem, size = 0x1000, scoped, tag = 'output window, operand 1, single buffered']
    #allocation13 [shape = 's32[1]{0}', space=sflag, size = 0x4, scoped, tag = 'scoped memory for tpu_custom_call.1']
    #allocation14 [shape = 'u8[4096]{0}', space=vmem, size = 0x1000, scoped, tag = 'output window, operand 2, single buffered']
    %12 = vsyncpa [#allocation6], 0
    %13 = vsyncpa [#allocation9], 0
    %14 = vsyncpa [#allocation7], 0
    %15 = vsyncpa [#allocation13], 0
    // Predicated region
    $region2: #{tpu_custom_call.1} parent=1 // pred_check
      _
    $region3: #{tpu_custom_call.1} parent=1 // pred_check_branch
      %17 = sbr.rel (0) target = $region5
    $region4: #{tpu_custom_call.1} parent=1 // pred_region
      %s19 = ssub.s32 1024, 1024
      %20 = vsyncadd [#allocation6], %s19
      %s21 = sshll.u32 [#allocation5], 4
      %s22 = int_to_ptr.vmem [resolvable:$true] %s21
      %27 = dma.hbm_to_vmem [thread:$0]  %s0, 1024, %s22, [#allocation6], 128, 128, 8
    $region5: #{tpu_custom_call.1} parent=1 // pred_fallthru
      _
    // Predicated region
    $region6: #{tpu_custom_call.1} parent=1 // pred_check
      _
    $region7: #{tpu_custom_call.1} parent=1 // pred_check_branch
      %29 = sbr.rel (0) target = $region9
    $region8: #{tpu_custom_call.1} parent=1 // pred_region
      %s31 = ssub.s32 8192, 8192
      %32 = vsyncadd [#allocation9], %s31
      %s33 = sshll.u32 [#allocation8], 4
      %s34 = int_to_ptr.vmem [resolvable:$true] %s33
      %39 = dma.hbm_to_vmem [thread:$0]  %s1, 8192, %s34, [#allocation9], 512, 512, 32
    $region9: #{tpu_custom_call.1} parent=1 // pred_fallthru
      _
    // Predicated region
    $region10: #{tpu_custom_call.1} parent=1 // pred_check
      _
    $region11: #{tpu_custom_call.1} parent=1 // pred_check_branch
      %41 = sbr.rel (0) target = $region13
    $region12: #{tpu_custom_call.1} parent=1 // pred_region
      %s43 = ssub.s32 8192, 8192
      %44 = vsyncadd [#allocation9], %s43
      %s45 = sshll.u32 [#allocation10], 4
      %s46 = int_to_ptr.vmem [resolvable:$true] %s45
      %51 = dma.hbm_to_vmem [thread:$0]  %s2, 8192, %s46, [#allocation9], 512, 512, 32
    $region13: #{tpu_custom_call.1} parent=1 // pred_fallthru
      _
    // Predicated region
    $region14: #{tpu_custom_call.1} parent=1 // pred_check
      _
    $region15: #{tpu_custom_call.1} parent=1 // pred_check_branch
      %53 = sbr.rel (0) target = $region17
    $region16: #{tpu_custom_call.1} parent=1 // pred_region
      _
    $region17: #{tpu_custom_call.1} parent=1 // pred_fallthru
      _
    // Predicated region
    $region18: #{tpu_custom_call.1} parent=1 // pred_check
      _
    $region19: #{tpu_custom_call.1} parent=1 // pred_check_branch
      %55 = sbr.rel (0) target = $region21
    $region20: #{tpu_custom_call.1} parent=1 // pred_region
      %56 = dma.done [#allocation6], 1024
    $region21: #{tpu_custom_call.1} parent=1 // pred_fallthru
      _
    // Predicated region
    $region22: #{tpu_custom_call.1} parent=1 // pred_check
      _
    $region23: #{tpu_custom_call.1} parent=1 // pred_check_branch
      %58 = sbr.rel (0) target = $region25
    $region24: #{tpu_custom_call.1} parent=1 // pred_region
      %59 = dma.done [#allocation9], 8192
    $region25: #{tpu_custom_call.1} parent=1 // pred_fallthru
      _
    // Predicated region
    $region26: #{tpu_custom_call.1} parent=1 // pred_check
      _
    $region27: #{tpu_custom_call.1} parent=1 // pred_check_branch
      %61 = sbr.rel (0) target = $region29
    $region28: #{tpu_custom_call.1} parent=1 // pred_region
      %62 = dma.done [#allocation9], 8192
    $region29: #{tpu_custom_call.1} parent=1 // pred_fallthru
      _
    %p63 = scmp.eq.s32.totalorder 0, 0
    // Predicated region
    $region30: #{tpu_custom_call.1} parent=1 // pred_check
      %p64 = pneg %p63
    $region31: #{tpu_custom_call.1} parent=1 // pred_check_branch
      %66 = sbr.rel (%p64) target = $region33
    $region32: #{tpu_custom_call.1} parent=1 // pred_region
      %67 = vst [vmem:[#allocation2] sm:$0xff] 0.0
      %68 = vst [vmem:[#allocation3] sm:$0xff] 0.0
    $region33: #{tpu_custom_call.1} parent=1 // pred_fallthru
      _
    %v69 = vld [vmem:[#allocation5] sm:$0xff]
    %v70 = vld [vmem:[#allocation5 + $0x8] sm:$0xff]
    %v71 = vld [vmem:[#allocation5 + $0x10] sm:$0xff]
    %v72 = vld [vmem:[#allocation5 + $0x18] sm:$0xff]
    %v73 = vld [vmem:[#allocation5 + $0x20] sm:$0xff]
    %v74 = vld [vmem:[#allocation5 + $0x28] sm:$0xff]
    %v75 = vld [vmem:[#allocation5 + $0x30] sm:$0xff]
    %v76 = vld [vmem:[#allocation5 + $0x38] sm:$0xff]
    %v77 = vld [vmem:[#allocation8] sm:$0xff]
    %v78 = vld [vmem:[#allocation8 + $0x8] sm:$0xff]
    %v79 = vld [vmem:[#allocation8 + $0x10] sm:$0xff]
    %v80 = vld [vmem:[#allocation8 + $0x18] sm:$0xff]
    %v81 = vld [vmem:[#allocation8 + $0x20] sm:$0xff]
    %v82 = vld [vmem:[#allocation8 + $0x28] sm:$0xff]
    %v83 = vld [vmem:[#allocation8 + $0x30] sm:$0xff]
    %v84 = vld [vmem:[#allocation8 + $0x38] sm:$0xff]
    %v85 = vld [vmem:[#allocation8 + $0x40] sm:$0xff]
    %v86 = vld [vmem:[#allocation8 + $0x48] sm:$0xff]
    %v87 = vld [vmem:[#allocation8 + $0x50] sm:$0xff]
    %v88 = vld [vmem:[#allocation8 + $0x58] sm:$0xff]
    %v89 = vld [vmem:[#allocation8 + $0x60] sm:$0xff]
    %v90 = vld [vmem:[#allocation8 + $0x68] sm:$0xff]
    %v91 = vld [vmem:[#allocation8 + $0x70] sm:$0xff]
    %v92 = vld [vmem:[#allocation8 + $0x78] sm:$0xff]
    %v93 = vld [vmem:[#allocation8 + $0x80] sm:$0xff]
    %v94 = vld [vmem:[#allocation8 + $0x88] sm:$0xff]
    %v95 = vld [vmem:[#allocation8 + $0x90] sm:$0xff]
    %v96 = vld [vmem:[#allocation8 + $0x98] sm:$0xff]
    %v97 = vld [vmem:[#allocation8 + $0xa0] sm:$0xff]
    %v98 = vld [vmem:[#allocation8 + $0xa8] sm:$0xff]
    %v99 = vld [vmem:[#allocation8 + $0xb0] sm:$0xff]
    %v100 = vld [vmem:[#allocation8 + $0xb8] sm:$0xff]
    %v101 = vld [vmem:[#allocation8 + $0xc0] sm:$0xff]
    %v102 = vld [vmem:[#allocation8 + $0xc8] sm:$0xff]
    %v103 = vld [vmem:[#allocation8 + $0xd0] sm:$0xff]
    %v104 = vld [vmem:[#allocation8 + $0xd8] sm:$0xff]
    %v105 = vld [vmem:[#allocation8 + $0xe0] sm:$0xff]
    %v106 = vld [vmem:[#allocation8 + $0xe8] sm:$0xff]
    %v107 = vld [vmem:[#allocation8 + $0xf0] sm:$0xff]
    %v108 = vld [vmem:[#allocation8 + $0xf8] sm:$0xff]
    %v109 = vld [vmem:[#allocation8 + $0x100] sm:$0xff]
    %v110 = vld [vmem:[#allocation8 + $0x108] sm:$0xff]
    %v111 = vld [vmem:[#allocation8 + $0x110] sm:$0xff]
    %v112 = vld [vmem:[#allocation8 + $0x118] sm:$0xff]
    %v113 = vld [vmem:[#allocation8 + $0x120] sm:$0xff]
    %v114 = vld [vmem:[#allocation8 + $0x128] sm:$0xff]
    %v115 = vld [vmem:[#allocation8 + $0x130] sm:$0xff]
    %v116 = vld [vmem:[#allocation8 + $0x138] sm:$0xff]
    %v117 = vld [vmem:[#allocation8 + $0x140] sm:$0xff]
    %v118 = vld [vmem:[#allocation8 + $0x148] sm:$0xff]
    %v119 = vld [vmem:[#allocation8 + $0x150] sm:$0xff]
    %v120 = vld [vmem:[#allocation8 + $0x158] sm:$0xff]
    %v121 = vld [vmem:[#allocation8 + $0x160] sm:$0xff]
    %v122 = vld [vmem:[#allocation8 + $0x168] sm:$0xff]
    %v123 = vld [vmem:[#allocation8 + $0x170] sm:$0xff]
    %v124 = vld [vmem:[#allocation8 + $0x178] sm:$0xff]
    %v125 = vld [vmem:[#allocation8 + $0x180] sm:$0xff]
    %v126 = vld [vmem:[#allocation8 + $0x188] sm:$0xff]
    %v127 = vld [vmem:[#allocation8 + $0x190] sm:$0xff]
    %v128 = vld [vmem:[#allocation8 + $0x198] sm:$0xff]
    %v129 = vld [vmem:[#allocation8 + $0x1a0] sm:$0xff]
    %v130 = vld [vmem:[#allocation8 + $0x1a8] sm:$0xff]
    %v131 = vld [vmem:[#allocation8 + $0x1b0] sm:$0xff]
    %v132 = vld [vmem:[#allocation8 + $0x1b8] sm:$0xff]
    %v133 = vld [vmem:[#allocation8 + $0x1c0] sm:$0xff]
    %v134 = vld [vmem:[#allocation8 + $0x1c8] sm:$0xff]
    %v135 = vld [vmem:[#allocation8 + $0x1d0] sm:$0xff]
    %v136 = vld [vmem:[#allocation8 + $0x1d8] sm:$0xff]
    %v137 = vld [vmem:[#allocation8 + $0x1e0] sm:$0xff]
    %v138 = vld [vmem:[#allocation8 + $0x1e8] sm:$0xff]
    %v139 = vld [vmem:[#allocation8 + $0x1f0] sm:$0xff]
    %v140 = vld [vmem:[#allocation8 + $0x1f8] sm:$0xff]
    %141 = vmatprep.subr.mxu0 %v138
    %142 = vmatpush1.msra.mxu0 %v137
    %143 = vmatprep.subr.mxu0 %v134
    %144 = vmatpush1.msra.mxu0 %v133
    %145 = vmatprep.subr.mxu0 %v130
    %146 = vmatpush1.msra.mxu0 %v129
    %147 = vmatprep.subr.mxu0 %v126
    %148 = vmatpush1.msra.mxu0 %v125
    %149 = vmatprep.subr.mxu0 %v122
    %150 = vmatpush1.msra.mxu0 %v121
    %151 = vmatprep.subr.mxu0 %v118
    %152 = vmatpush1.msra.mxu0 %v117
    %153 = vmatprep.subr.mxu0 %v114
    %154 = vmatpush1.msra.mxu0 %v113
    %155 = vmatprep.subr.mxu0 %v110
    %156 = vmatpush1.msra.mxu0 %v109
    %157 = vmatprep.subr.mxu0 %v106
    %158 = vmatpush1.msra.mxu0 %v105
    %159 = vmatprep.subr.mxu0 %v102
    %160 = vmatpush1.msra.mxu0 %v101
    %161 = vmatprep.subr.mxu0 %v98
    %162 = vmatpush1.msra.mxu0 %v97
    %163 = vmatprep.subr.mxu0 %v94
    %164 = vmatpush1.msra.mxu0 %v93
    %165 = vmatprep.subr.mxu0 %v90
    %166 = vmatpush1.msra.mxu0 %v89
    %167 = vmatprep.subr.mxu0 %v86
    %168 = vmatpush1.msra.mxu0 %v85
    %169 = vmatprep.subr.mxu0 %v82
    %170 = vmatpush1.msra.mxu0 %v81
    %171 = vmatprep.subr.mxu0 %v78
    %172 = vmatpush1.msra.mxu0 %v77
    %173 = vmatprep.subr.mxu0 0.0
    %174 = vmatpush2.msra.mxu0 0.0
    %175 = vmatprep.subr.mxu0 0.0
    %176 = vmatpush2.msra.mxu0 0.0
    %177 = vmatprep.subr.mxu0 0.0
    %178 = vmatpush2.msra.mxu0 0.0
    %179 = vmatprep.subr.mxu0 0.0
    %180 = vmatpush2.msra.mxu0 0.0
    %181 = vmatprep.subr.mxu0 0.0
    %182 = vmatpush2.msra.mxu0 0.0
    %183 = vmatprep.subr.mxu0 0.0
    %184 = vmatpush2.msra.mxu0 0.0
    %185 = vmatprep.subr.mxu0 0.0
    %186 = vmatpush2.msra.mxu0 0.0
    %187 = vmatprep.subr.mxu0 0.0
    %188 = vmatpush2.msra.mxu0 0.0
    %189 = vmatprep.subr.mxu0 0.0
    %190 = vmatpush2.msra.mxu0 0.0
    %191 = vmatprep.subr.mxu0 0.0
    %192 = vmatpush2.msra.mxu0 0.0
    %193 = vmatprep.subr.mxu0 0.0
    %194 = vmatpush2.msra.mxu0 0.0
    %195 = vmatprep.subr.mxu0 0.0
    %196 = vmatpush2.msra.mxu0 0.0
    %197 = vmatprep.subr.mxu0 0.0
    %198 = vmatpush2.msra.mxu0 0.0
    %199 = vmatprep.subr.mxu0 0.0
    %200 = vmatpush2.msra.mxu0 0.0
    %201 = vmatprep.subr.mxu0 0.0
    %202 = vmatpush2.msra.mxu0 0.0
    %203 = vmatprep.subr.mxu0 0.0
    %204 = vmatpush2.msra.mxu0 0.0
    %205 = vmatprep.mubr.f32.mxu0 0.0
    %206 = vmatmul.mubr.f32.gmra.mxu0 %v69
    %v207 = vpop.f32.mrf.mxu0
    %v208 = vadd.f32 0.0, %v207
    %v209 = vpop.f32.mrf.mxu0
    %v210 = vadd.f32 0.0, %v209
    %211 = vmatprep.mubr.f32.mxu0 0.0
    %212 = vmatmul.mubr.f32.gmra.mxu0 %v70
    %v213 = vpop.f32.mrf.mxu0
    %v214 = vadd.f32 0.0, %v213
    %v215 = vpop.f32.mrf.mxu0
    %v216 = vadd.f32 0.0, %v215
    %217 = vmatprep.mubr.f32.mxu0 0.0
    %218 = vmatmul.mubr.f32.gmra.mxu0 %v71
    %v219 = vpop.f32.mrf.mxu0
    %v220 = vadd.f32 0.0, %v219
    %v221 = vpop.f32.mrf.mxu0
    %v222 = vadd.f32 0.0, %v221
    %223 = vmatprep.mubr.f32.mxu0 0.0
    %224 = vmatmul.mubr.f32.gmra.mxu0 %v72
    %v225 = vpop.f32.mrf.mxu0
    %v226 = vadd.f32 0.0, %v225
    %v227 = vpop.f32.mrf.mxu0
    %v228 = vadd.f32 0.0, %v227
    %229 = vmatprep.mubr.f32.mxu0 0.0
    %230 = vmatmul.mubr.f32.gmra.mxu0 %v73
    %v231 = vpop.f32.mrf.mxu0
    %v232 = vadd.f32 0.0, %v231
    %v233 = vpop.f32.mrf.mxu0
    %v234 = vadd.f32 0.0, %v233
    %235 = vmatprep.mubr.f32.mxu0 0.0
    %236 = vmatmul.mubr.f32.gmra.mxu0 %v74
    %v237 = vpop.f32.mrf.mxu0
    %v238 = vadd.f32 0.0, %v237
    %v239 = vpop.f32.mrf.mxu0
    %v240 = vadd.f32 0.0, %v239
    %241 = vmatprep.mubr.f32.mxu0 0.0
    %242 = vmatmul.mubr.f32.gmra.mxu0 %v75
    %v243 = vpop.f32.mrf.mxu0
    %v244 = vadd.f32 0.0, %v243
    %v245 = vpop.f32.mrf.mxu0
    %v246 = vadd.f32 0.0, %v245
    %247 = vmatprep.mubr.f32.mxu0 0.0
    %248 = vmatmul.mubr.f32.gmra.mxu0 %v76
    %v249 = vpop.f32.mrf.mxu0
    %v250 = vadd.f32 0.0, %v249
    %v251 = vpop.f32.mrf.mxu0
    %v252 = vadd.f32 0.0, %v251
    %253 = vdwg.mxu0
    %254 = vmatprep.subr.mxu0 %v140
    %255 = vmatpush1.msra.mxu0 %v139
    %256 = vmatprep.subr.mxu0 %v136
    %257 = vmatpush1.msra.mxu0 %v135
    %258 = vmatprep.subr.mxu0 %v132
    %259 = vmatpush1.msra.mxu0 %v131
    %260 = vmatprep.subr.mxu0 %v128
    %261 = vmatpush1.msra.mxu0 %v127
    %262 = vmatprep.subr.mxu0 %v124
    %263 = vmatpush1.msra.mxu0 %v123
    %264 = vmatprep.subr.mxu0 %v120
    %265 = vmatpush1.msra.mxu0 %v119
    %266 = vmatprep.subr.mxu0 %v116
    %267 = vmatpush1.msra.mxu0 %v115
    %268 = vmatprep.subr.mxu0 %v112
    %269 = vmatpush1.msra.mxu0 %v111
    %270 = vmatprep.subr.mxu0 %v108
    %271 = vmatpush1.msra.mxu0 %v107
    %272 = vmatprep.subr.mxu0 %v104
    %273 = vmatpush1.msra.mxu0 %v103
    %274 = vmatprep.subr.mxu0 %v100
    %275 = vmatpush1.msra.mxu0 %v99
    %276 = vmatprep.subr.mxu0 %v96
    %277 = vmatpush1.msra.mxu0 %v95
    %278 = vmatprep.subr.mxu0 %v92
    %279 = vmatpush1.msra.mxu0 %v91
    %280 = vmatprep.subr.mxu0 %v88
    %281 = vmatpush1.msra.mxu0 %v87
    %282 = vmatprep.subr.mxu0 %v84
    %283 = vmatpush1.msra.mxu0 %v83
    %284 = vmatprep.subr.mxu0 %v80
    %285 = vmatpush1.msra.mxu0 %v79
    %286 = vmatprep.subr.mxu0 0.0
    %287 = vmatpush2.msra.mxu0 0.0
    %288 = vmatprep.subr.mxu0 0.0
    %289 = vmatpush2.msra.mxu0 0.0
    %290 = vmatprep.subr.mxu0 0.0
    %291 = vmatpush2.msra.mxu0 0.0
    %292 = vmatprep.subr.mxu0 0.0
    %293 = vmatpush2.msra.mxu0 0.0
    %294 = vmatprep.subr.mxu0 0.0
    %295 = vmatpush2.msra.mxu0 0.0
    %296 = vmatprep.subr.mxu0 0.0
    %297 = vmatpush2.msra.mxu0 0.0
    %298 = vmatprep.subr.mxu0 0.0
    %299 = vmatpush2.msra.mxu0 0.0
    %300 = vmatprep.subr.mxu0 0.0
    %301 = vmatpush2.msra.mxu0 0.0
    %302 = vmatprep.subr.mxu0 0.0
    %303 = vmatpush2.msra.mxu0 0.0
    %304 = vmatprep.subr.mxu0 0.0
    %305 = vmatpush2.msra.mxu0 0.0
    %306 = vmatprep.subr.mxu0 0.0
    %307 = vmatpush2.msra.mxu0 0.0
    %308 = vmatprep.subr.mxu0 0.0
    %309 = vmatpush2.msra.mxu0 0.0
    %310 = vmatprep.subr.mxu0 0.0
    %311 = vmatpush2.msra.mxu0 0.0
    %312 = vmatprep.subr.mxu0 0.0
    %313 = vmatpush2.msra.mxu0 0.0
    %314 = vmatprep.subr.mxu0 0.0
    %315 = vmatpush2.msra.mxu0 0.0
    %316 = vmatprep.subr.mxu0 0.0
    %317 = vmatpush2.msra.mxu0 0.0
    %318 = vmatprep.mubr.f32.mxu0 0.0
    %319 = vmatmul.mubr.f32.gmra.mxu0 %v69
    %v320 = vpop.f32.mrf.mxu0
    %v321 = vadd.f32 0.0, %v320
    %v322 = vpop.f32.mrf.mxu0
    %v323 = vadd.f32 0.0, %v322
    %324 = vmatprep.mubr.f32.mxu0 0.0
    %325 = vmatmul.mubr.f32.gmra.mxu0 %v70
    %v326 = vpop.f32.mrf.mxu0
    %v327 = vadd.f32 0.0, %v326
    %v328 = vpop.f32.mrf.mxu0
    %v329 = vadd.f32 0.0, %v328
    %330 = vmatprep.mubr.f32.mxu0 0.0
    %331 = vmatmul.mubr.f32.gmra.mxu0 %v71
    %v332 = vpop.f32.mrf.mxu0
    %v333 = vadd.f32 0.0, %v332
    %v334 = vpop.f32.mrf.mxu0
    %v335 = vadd.f32 0.0, %v334
    %336 = vmatprep.mubr.f32.mxu0 0.0
    %337 = vmatmul.mubr.f32.gmra.mxu0 %v72
    %v338 = vpop.f32.mrf.mxu0
    %v339 = vadd.f32 0.0, %v338
    %v340 = vpop.f32.mrf.mxu0
    %v341 = vadd.f32 0.0, %v340
    %342 = vmatprep.mubr.f32.mxu0 0.0
    %343 = vmatmul.mubr.f32.gmra.mxu0 %v73
    %v344 = vpop.f32.mrf.mxu0
    %v345 = vadd.f32 0.0, %v344
    %v346 = vpop.f32.mrf.mxu0
    %v347 = vadd.f32 0.0, %v346
    %348 = vmatprep.mubr.f32.mxu0 0.0
    %349 = vmatmul.mubr.f32.gmra.mxu0 %v74
    %v350 = vpop.f32.mrf.mxu0
    %v351 = vadd.f32 0.0, %v350
    %v352 = vpop.f32.mrf.mxu0
    %v353 = vadd.f32 0.0, %v352
    %354 = vmatprep.mubr.f32.mxu0 0.0
    %355 = vmatmul.mubr.f32.gmra.mxu0 %v75
    %v356 = vpop.f32.mrf.mxu0
    %v357 = vadd.f32 0.0, %v356
    %v358 = vpop.f32.mrf.mxu0
    %v359 = vadd.f32 0.0, %v358
    %360 = vmatprep.mubr.f32.mxu0 0.0
    %361 = vmatmul.mubr.f32.gmra.mxu0 %v76
    %v362 = vpop.f32.mrf.mxu0
    %v363 = vadd.f32 0.0, %v362
    %v364 = vpop.f32.mrf.mxu0
    %v365 = vadd.f32 0.0, %v364
    %366 = vdwg.mxu0
    %v367 = vld [vmem:[%s3] sm:$0xf]
    %v369 = vlaneseq
    %v370 = vshrl.u32 %v369, 7
    %v371 = vsub.s32 0, %v370
    %v372 = vrot.slane %v367, %v371
    %v373 = vlaneseq
    %v374 = vshrl.u32 %v373, 7
    %v375 = vsub.s32 1, %v374
    %v376 = vrot.slane %v367, %v375
    %v377 = vlaneseq
    %v378 = vshrl.u32 %v377, 7
    %v379 = vsub.s32 2, %v378
    %v380 = vrot.slane %v367, %v379
    %v381 = vlaneseq
    %v382 = vshrl.u32 %v381, 7
    %v383 = vsub.s32 3, %v382
    %v384 = vrot.slane %v367, %v383
    %v389 = vadd.f32 %v208, %v372
    %v390 = vadd.f32 %v210, %v376
    %v391 = vadd.f32 %v321, %v380
    %v392 = vadd.f32 %v323, %v384
    %v393 = vadd.f32 %v214, %v372
    %v394 = vadd.f32 %v216, %v376
    %v395 = vadd.f32 %v327, %v380
    %v396 = vadd.f32 %v329, %v384
    %v397 = vadd.f32 %v220, %v372
    %v398 = vadd.f32 %v222, %v376
    %v399 = vadd.f32 %v333, %v380
    %v400 = vadd.f32 %v335, %v384
    %v401 = vadd.f32 %v226, %v372
    %v402 = vadd.f32 %v228, %v376
    %v403 = vadd.f32 %v339, %v380
    %v404 = vadd.f32 %v341, %v384
    %v405 = vadd.f32 %v232, %v372
    %v406 = vadd.f32 %v234, %v376
    %v407 = vadd.f32 %v345, %v380
    %v408 = vadd.f32 %v347, %v384
    %v409 = vadd.f32 %v238, %v372
    %v410 = vadd.f32 %v240, %v376
    %v411 = vadd.f32 %v351, %v380
    %v412 = vadd.f32 %v353, %v384
    %v413 = vadd.f32 %v244, %v372
    %v414 = vadd.f32 %v246, %v376
    %v415 = vadd.f32 %v357, %v380
    %v416 = vadd.f32 %v359, %v384
    %v417 = vadd.f32 %v250, %v372
    %v418 = vadd.f32 %v252, %v376
    %v419 = vadd.f32 %v363, %v380
    %v420 = vadd.f32 %v365, %v384
    %421 = vst [vmem:[#allocation4] sm:$0xff] %v389
    %422 = vst [vmem:[#allocation4 + $0x8] sm:$0xff] %v390
    %423 = vst [vmem:[#allocation4 + $0x10] sm:$0xff] %v391
    %424 = vst [vmem:[#allocation4 + $0x18] sm:$0xff] %v392
    %425 = vst [vmem:[#allocation4 + $0x20] sm:$0xff] %v393
    %426 = vst [vmem:[#allocation4 + $0x28] sm:$0xff] %v394
    %427 = vst [vmem:[#allocation4 + $0x30] sm:$0xff] %v395
    %428 = vst [vmem:[#allocation4 + $0x38] sm:$0xff] %v396
    %429 = vst [vmem:[#allocation4 + $0x40] sm:$0xff] %v397
    %430 = vst [vmem:[#allocation4 + $0x48] sm:$0xff] %v398
    %431 = vst [vmem:[#allocation4 + $0x50] sm:$0xff] %v399
    %432 = vst [vmem:[#allocation4 + $0x58] sm:$0xff] %v400
    %433 = vst [vmem:[#allocation4 + $0x60] sm:$0xff] %v401
    %434 = vst [vmem:[#allocation4 + $0x68] sm:$0xff] %v402
    %435 = vst [vmem:[#allocation4 + $0x70] sm:$0xff] %v403
    %436 = vst [vmem:[#allocation4 + $0x78] sm:$0xff] %v404
    %437 = vst [vmem:[#allocation4 + $0x80] sm:$0xff] %v405
    %438 = vst [vmem:[#allocation4 + $0x88] sm:$0xff] %v406
    %439 = vst [vmem:[#allocation4 + $0x90] sm:$0xff] %v407
    %440 = vst [vmem:[#allocation4 + $0x98] sm:$0xff] %v408
    %441 = vst [vmem:[#allocation4 + $0xa0] sm:$0xff] %v409
    %442 = vst [vmem:[#allocation4 + $0xa8] sm:$0xff] %v410
    %443 = vst [vmem:[#allocation4 + $0xb0] sm:$0xff] %v411
    %444 = vst [vmem:[#allocation4 + $0xb8] sm:$0xff] %v412
    %445 = vst [vmem:[#allocation4 + $0xc0] sm:$0xff] %v413
    %446 = vst [vmem:[#allocation4 + $0xc8] sm:$0xff] %v414
    %447 = vst [vmem:[#allocation4 + $0xd0] sm:$0xff] %v415
    %448 = vst [vmem:[#allocation4 + $0xd8] sm:$0xff] %v416
    %449 = vst [vmem:[#allocation4 + $0xe0] sm:$0xff] %v417
    %450 = vst [vmem:[#allocation4 + $0xe8] sm:$0xff] %v418
    %451 = vst [vmem:[#allocation4 + $0xf0] sm:$0xff] %v419
    %452 = vst [vmem:[#allocation4 + $0xf8] sm:$0xff] %v420
    %v453 = vld [vmem:[#allocation2] sm:$0xff]
    %v454 = vld [vmem:[#allocation3] sm:$0xff]
    %v455 = vld [vmem:[#allocation10] sm:$0xff]
    %v456 = vld [vmem:[#allocation10 + $0x8] sm:$0xff]
    %v457 = vld [vmem:[#allocation10 + $0x10] sm:$0xff]
    %v458 = vld [vmem:[#allocation10 + $0x18] sm:$0xff]
    %v459 = vld [vmem:[#allocation10 + $0x20] sm:$0xff]
    %v460 = vld [vmem:[#allocation10 + $0x28] sm:$0xff]
    %v461 = vld [vmem:[#allocation10 + $0x30] sm:$0xff]
    %v462 = vld [vmem:[#allocation10 + $0x38] sm:$0xff]
    %v463 = vld [vmem:[#allocation10 + $0x40] sm:$0xff]
    %v464 = vld [vmem:[#allocation10 + $0x48] sm:$0xff]
    %v465 = vld [vmem:[#allocation10 + $0x50] sm:$0xff]
    %v466 = vld [vmem:[#allocation10 + $0x58] sm:$0xff]
    %v467 = vld [vmem:[#allocation10 + $0x60] sm:$0xff]
    %v468 = vld [vmem:[#allocation10 + $0x68] sm:$0xff]
    %v469 = vld [vmem:[#allocation10 + $0x70] sm:$0xff]
    %v470 = vld [vmem:[#allocation10 + $0x78] sm:$0xff]
    %v471 = vld [vmem:[#allocation10 + $0x80] sm:$0xff]
    %v472 = vld [vmem:[#allocation10 + $0x88] sm:$0xff]
    %v473 = vld [vmem:[#allocation10 + $0x90] sm:$0xff]
    %v474 = vld [vmem:[#allocation10 + $0x98] sm:$0xff]
    %v475 = vld [vmem:[#allocation10 + $0xa0] sm:$0xff]
    %v476 = vld [vmem:[#allocation10 + $0xa8] sm:$0xff]
    %v477 = vld [vmem:[#allocation10 + $0xb0] sm:$0xff]
    %v478 = vld [vmem:[#allocation10 + $0xb8] sm:$0xff]
    %v479 = vld [vmem:[#allocation10 + $0xc0] sm:$0xff]
    %v480 = vld [vmem:[#allocation10 + $0xc8] sm:$0xff]
    %v481 = vld [vmem:[#allocation10 + $0xd0] sm:$0xff]
    %v482 = vld [vmem:[#allocation10 + $0xd8] sm:$0xff]
    %v483 = vld [vmem:[#allocation10 + $0xe0] sm:$0xff]
    %v484 = vld [vmem:[#allocation10 + $0xe8] sm:$0xff]
    %v485 = vld [vmem:[#allocation10 + $0xf0] sm:$0xff]
    %v486 = vld [vmem:[#allocation10 + $0xf8] sm:$0xff]
    %v487 = vld [vmem:[#allocation10 + $0x100] sm:$0xff]
    %v488 = vld [vmem:[#allocation10 + $0x108] sm:$0xff]
    %v489 = vld [vmem:[#allocation10 + $0x110] sm:$0xff]
    %v490 = vld [vmem:[#allocation10 + $0x118] sm:$0xff]
    %v491 = vld [vmem:[#allocation10 + $0x120] sm:$0xff]
    %v492 = vld [vmem:[#allocation10 + $0x128] sm:$0xff]
    %v493 = vld [vmem:[#allocation10 + $0x130] sm:$0xff]
    %v494 = vld [vmem:[#allocation10 + $0x138] sm:$0xff]
    %v495 = vld [vmem:[#allocation10 + $0x140] sm:$0xff]
    %v496 = vld [vmem:[#allocation10 + $0x148] sm:$0xff]
    %v497 = vld [vmem:[#allocation10 + $0x150] sm:$0xff]
    %v498 = vld [vmem:[#allocation10 + $0x158] sm:$0xff]
    %v499 = vld [vmem:[#allocation10 + $0x160] sm:$0xff]
    %v500 = vld [vmem:[#allocation10 + $0x168] sm:$0xff]
    %v501 = vld [vmem:[#allocation10 + $0x170] sm:$0xff]
    %v502 = vld [vmem:[#allocation10 + $0x178] sm:$0xff]
    %v503 = vld [vmem:[#allocation10 + $0x180] sm:$0xff]
    %v504 = vld [vmem:[#allocation10 + $0x188] sm:$0xff]
    %v505 = vld [vmem:[#allocation10 + $0x190] sm:$0xff]
    %v506 = vld [vmem:[#allocation10 + $0x198] sm:$0xff]
    %v507 = vld [vmem:[#allocation10 + $0x1a0] sm:$0xff]
    %v508 = vld [vmem:[#allocation10 + $0x1a8] sm:$0xff]
    %v509 = vld [vmem:[#allocation10 + $0x1b0] sm:$0xff]
    %v510 = vld [vmem:[#allocation10 + $0x1b8] sm:$0xff]
    %v511 = vld [vmem:[#allocation10 + $0x1c0] sm:$0xff]
    %v512 = vld [vmem:[#allocation10 + $0x1c8] sm:$0xff]
    %v513 = vld [vmem:[#allocation10 + $0x1d0] sm:$0xff]
    %v514 = vld [vmem:[#allocation10 + $0x1d8] sm:$0xff]
    %v515 = vld [vmem:[#allocation10 + $0x1e0] sm:$0xff]
    %v516 = vld [vmem:[#allocation10 + $0x1e8] sm:$0xff]
    %v517 = vld [vmem:[#allocation10 + $0x1f0] sm:$0xff]
    %v518 = vld [vmem:[#allocation10 + $0x1f8] sm:$0xff]
    %v519 = vld [vmem:[#allocation4] sm:$0xff]
    %v520 = vld [vmem:[#allocation4 + $0x8] sm:$0xff]
    %v521 = vld [vmem:[#allocation4 + $0x10] sm:$0xff]
    %v522 = vld [vmem:[#allocation4 + $0x18] sm:$0xff]
    %523 = vmatprep.subr.mxu0 %v516
    %524 = vmatpush1.msra.mxu0 %v515
    %525 = vmatprep.subr.mxu0 %v512
    %526 = vmatpush1.msra.mxu0 %v511
    %527 = vmatprep.subr.mxu0 %v508
    %528 = vmatpush1.msra.mxu0 %v507
    %529 = vmatprep.subr.mxu0 %v504
    %530 = vmatpush1.msra.mxu0 %v503
    %531 = vmatprep.subr.mxu0 %v500
    %532 = vmatpush1.msra.mxu0 %v499
    %533 = vmatprep.subr.mxu0 %v496
    %534 = vmatpush1.msra.mxu0 %v495
    %535 = vmatprep.subr.mxu0 %v492
    %536 = vmatpush1.msra.mxu0 %v491
    %537 = vmatprep.subr.mxu0 %v488
    %538 = vmatpush1.msra.mxu0 %v487
    %539 = vmatprep.subr.mxu0 %v484
    %540 = vmatpush1.msra.mxu0 %v483
    %541 = vmatprep.subr.mxu0 %v480
    %542 = vmatpush1.msra.mxu0 %v479
    %543 = vmatprep.subr.mxu0 %v476
    %544 = vmatpush1.msra.mxu0 %v475
    %545 = vmatprep.subr.mxu0 %v472
    %546 = vmatpush1.msra.mxu0 %v471
    %547 = vmatprep.subr.mxu0 %v468
    %548 = vmatpush1.msra.mxu0 %v467
    %549 = vmatprep.subr.mxu0 %v464
    %550 = vmatpush1.msra.mxu0 %v463
    %551 = vmatprep.subr.mxu0 %v460
    %552 = vmatpush1.msra.mxu0 %v459
    %553 = vmatprep.subr.mxu0 %v456
    %554 = vmatpush1.msra.mxu0 %v455
    %555 = vmatprep.subr.mxu0 0.0
    %556 = vmatpush2.msra.mxu0 0.0
    %557 = vmatprep.subr.mxu0 0.0
    %558 = vmatpush2.msra.mxu0 0.0
    %559 = vmatprep.subr.mxu0 0.0
    %560 = vmatpush2.msra.mxu0 0.0
    %561 = vmatprep.subr.mxu0 0.0
    %562 = vmatpush2.msra.mxu0 0.0
    %563 = vmatprep.subr.mxu0 0.0
    %564 = vmatpush2.msra.mxu0 0.0
    %565 = vmatprep.subr.mxu0 0.0
    %566 = vmatpush2.msra.mxu0 0.0
    %567 = vmatprep.subr.mxu0 0.0
    %568 = vmatpush2.msra.mxu0 0.0
    %569 = vmatprep.subr.mxu0 0.0
    %570 = vmatpush2.msra.mxu0 0.0
    %571 = vmatprep.subr.mxu0 0.0
    %572 = vmatpush2.msra.mxu0 0.0
    %573 = vmatprep.subr.mxu0 0.0
    %574 = vmatpush2.msra.mxu0 0.0
    %575 = vmatprep.subr.mxu0 0.0
    %576 = vmatpush2.msra.mxu0 0.0
    %577 = vmatprep.subr.mxu0 0.0
    %578 = vmatpush2.msra.mxu0 0.0
    %579 = vmatprep.subr.mxu0 0.0
    %580 = vmatpush2.msra.mxu0 0.0
    %581 = vmatprep.subr.mxu0 0.0
    %582 = vmatpush2.msra.mxu0 0.0
    %583 = vmatprep.subr.mxu0 0.0
    %584 = vmatpush2.msra.mxu0 0.0
    %585 = vmatprep.subr.mxu0 0.0
    %586 = vmatpush2.msra.mxu0 0.0
    %587 = vmatprep.mubr.f32.mxu0 0.0
    %588 = vmatmul.mubr.f32.gmra.mxu0 %v453
    %v589 = vpop.f32.mrf.mxu0
    %v590 = vadd.f32 %v519, %v589
    %v591 = vpop.f32.mrf.mxu0
    %v592 = vadd.f32 %v520, %v591
    %593 = vdwg.mxu0
    %594 = vmatprep.subr.mxu0 %v518
    %595 = vmatpush1.msra.mxu0 %v517
    %596 = vmatprep.subr.mxu0 %v514
    %597 = vmatpush1.msra.mxu0 %v513
    %598 = vmatprep.subr.mxu0 %v510
    %599 = vmatpush1.msra.mxu0 %v509
    %600 = vmatprep.subr.mxu0 %v506
    %601 = vmatpush1.msra.mxu0 %v505
    %602 = vmatprep.subr.mxu0 %v502
    %603 = vmatpush1.msra.mxu0 %v501
    %604 = vmatprep.subr.mxu0 %v498
    %605 = vmatpush1.msra.mxu0 %v497
    %606 = vmatprep.subr.mxu0 %v494
    %607 = vmatpush1.msra.mxu0 %v493
    %608 = vmatprep.subr.mxu0 %v490
    %609 = vmatpush1.msra.mxu0 %v489
    %610 = vmatprep.subr.mxu0 %v486
    %611 = vmatpush1.msra.mxu0 %v485
    %612 = vmatprep.subr.mxu0 %v482
    %613 = vmatpush1.msra.mxu0 %v481
    %614 = vmatprep.subr.mxu0 %v478
    %615 = vmatpush1.msra.mxu0 %v477
    %616 = vmatprep.subr.mxu0 %v474
    %617 = vmatpush1.msra.mxu0 %v473
    %618 = vmatprep.subr.mxu0 %v470
    %619 = vmatpush1.msra.mxu0 %v469
    %620 = vmatprep.subr.mxu0 %v466
    %621 = vmatpush1.msra.mxu0 %v465
    %622 = vmatprep.subr.mxu0 %v462
    %623 = vmatpush1.msra.mxu0 %v461
    %624 = vmatprep.subr.mxu0 %v458
    %625 = vmatpush1.msra.mxu0 %v457
    %626 = vmatprep.subr.mxu0 0.0
    %627 = vmatpush2.msra.mxu0 0.0
    %628 = vmatprep.subr.mxu0 0.0
    %629 = vmatpush2.msra.mxu0 0.0
    %630 = vmatprep.subr.mxu0 0.0
    %631 = vmatpush2.msra.mxu0 0.0
    %632 = vmatprep.subr.mxu0 0.0
    %633 = vmatpush2.msra.mxu0 0.0
    %634 = vmatprep.subr.mxu0 0.0
    %635 = vmatpush2.msra.mxu0 0.0
    %636 = vmatprep.subr.mxu0 0.0
    %637 = vmatpush2.msra.mxu0 0.0
    %638 = vmatprep.subr.mxu0 0.0
    %639 = vmatpush2.msra.mxu0 0.0
    %640 = vmatprep.subr.mxu0 0.0
    %641 = vmatpush2.msra.mxu0 0.0
    %642 = vmatprep.subr.mxu0 0.0
    %643 = vmatpush2.msra.mxu0 0.0
    %644 = vmatprep.subr.mxu0 0.0
    %645 = vmatpush2.msra.mxu0 0.0
    %646 = vmatprep.subr.mxu0 0.0
    %647 = vmatpush2.msra.mxu0 0.0
    %648 = vmatprep.subr.mxu0 0.0
    %649 = vmatpush2.msra.mxu0 0.0
    %650 = vmatprep.subr.mxu0 0.0
    %651 = vmatpush2.msra.mxu0 0.0
    %652 = vmatprep.subr.mxu0 0.0
    %653 = vmatpush2.msra.mxu0 0.0
    %654 = vmatprep.subr.mxu0 0.0
    %655 = vmatpush2.msra.mxu0 0.0
    %656 = vmatprep.subr.mxu0 0.0
    %657 = vmatpush2.msra.mxu0 0.0
    %658 = vmatprep.mubr.f32.mxu0 0.0
    %659 = vmatmul.mubr.f32.gmra.mxu0 %v453
    %v660 = vpop.f32.mrf.mxu0
    %v661 = vadd.f32 %v521, %v660
    %v662 = vpop.f32.mrf.mxu0
    %v663 = vadd.f32 %v522, %v662
    %664 = vdwg.mxu0
    %v665 = vxor.u32 %v590, 2147483648
    %v666 = vxor.u32 %v592, 2147483648
    %v667 = vxor.u32 %v661, 2147483648
    %v668 = vmul.f32 %v665, 1.442695
    %v669 = vpow.pop %v668
    %v670 = vmul.f32 %v666, 1.442695
    %v671 = vpow.pop %v670
    %v672 = vmul.f32 %v667, 1.442695
    %v673 = vpow.pop %v672
    %v674 = vadd.f32 %v669, 1.0
    %v675 = vadd.f32 %v671, 1.0
    %v676 = vadd.f32 %v673, 1.0
    %v677 = vrcp.pop %v674
    %v678 = vmul.f32 1.0, %v677
    %v679 = vrcp.pop %v675
    %v680 = vmul.f32 1.0, %v679
    %v681 = vrcp.pop %v676
    %v682 = vmul.f32 1.0, %v681
    %v683 = vtanh.pop %v663
    %v684 = vmul.f32 %v680, %v454
    %v685 = vmul.f32 %v678, %v683
    %v686 = vadd.f32 %v684, %v685
    %v687 = vtanh.pop %v686
    %v688 = vmul.f32 %v682, %v687
    %689 = vst [vmem:[#allocation11] sm:$0xff] %v688
    %v690 = vld [vmem:[#allocation10] sm:$0xff]
    %v691 = vld [vmem:[#allocation10 + $0x8] sm:$0xff]
    %v692 = vld [vmem:[#allocation10 + $0x10] sm:$0xff]
    %v693 = vld [vmem:[#allocation10 + $0x18] sm:$0xff]
    %v694 = vld [vmem:[#allocation10 + $0x20] sm:$0xff]
    %v695 = vld [vmem:[#allocation10 + $0x28] sm:$0xff]
    %v696 = vld [vmem:[#allocation10 + $0x30] sm:$0xff]
    %v697 = vld [vmem:[#allocation10 + $0x38] sm:$0xff]
    %v698 = vld [vmem:[#allocation10 + $0x40] sm:$0xff]
    %v699 = vld [vmem:[#allocation10 + $0x48] sm:$0xff]
    %v700 = vld [vmem:[#allocation10 + $0x50] sm:$0xff]
    %v701 = vld [vmem:[#allocation10 + $0x58] sm:$0xff]
    %v702 = vld [vmem:[#allocation10 + $0x60] sm:$0xff]
    %v703 = vld [vmem:[#allocation10 + $0x68] sm:$0xff]
    %v704 = vld [vmem:[#allocation10 + $0x70] sm:$0xff]
    %v705 = vld [vmem:[#allocation10 + $0x78] sm:$0xff]
    %v706 = vld [vmem:[#allocation10 + $0x80] sm:$0xff]
    %v707 = vld [vmem:[#allocation10 + $0x88] sm:$0xff]
    %v708 = vld [vmem:[#allocation10 + $0x90] sm:$0xff]
    %v709 = vld [vmem:[#allocation10 + $0x98] sm:$0xff]
    %v710 = vld [vmem:[#allocation10 + $0xa0] sm:$0xff]
    %v711 = vld [vmem:[#allocation10 + $0xa8] sm:$0xff]
    %v712 = vld [vmem:[#allocation10 + $0xb0] sm:$0xff]
    %v713 = vld [vmem:[#allocation10 + $0xb8] sm:$0xff]
    %v714 = vld [vmem:[#allocation10 + $0xc0] sm:$0xff]
    %v715 = vld [vmem:[#allocation10 + $0xc8] sm:$0xff]
    %v716 = vld [vmem:[#allocation10 + $0xd0] sm:$0xff]
    %v717 = vld [vmem:[#allocation10 + $0xd8] sm:$0xff]
    %v718 = vld [vmem:[#allocation10 + $0xe0] sm:$0xff]
    %v719 = vld [vmem:[#allocation10 + $0xe8] sm:$0xff]
    %v720 = vld [vmem:[#allocation10 + $0xf0] sm:$0xff]
    %v721 = vld [vmem:[#allocation10 + $0xf8] sm:$0xff]
    %v722 = vld [vmem:[#allocation10 + $0x100] sm:$0xff]
    %v723 = vld [vmem:[#allocation10 + $0x108] sm:$0xff]
    %v724 = vld [vmem:[#allocation10 + $0x110] sm:$0xff]
    %v725 = vld [vmem:[#allocation10 + $0x118] sm:$0xff]
    %v726 = vld [vmem:[#allocation10 + $0x120] sm:$0xff]
    %v727 = vld [vmem:[#allocation10 + $0x128] sm:$0xff]
    %v728 = vld [vmem:[#allocation10 + $0x130] sm:$0xff]
    %v729 = vld [vmem:[#allocation10 + $0x138] sm:$0xff]
    %v730 = vld [vmem:[#allocation10 + $0x140] sm:$0xff]
    %v731 = vld [vmem:[#allocation10 + $0x148] sm:$0xff]
    %v732 = vld [vmem:[#allocation10 + $0x150] sm:$0xff]
    %v733 = vld [vmem:[#allocation10 + $0x158] sm:$0xff]
    %v734 = vld [vmem:[#allocation10 + $0x160] sm:$0xff]
    %v735 = vld [vmem:[#allocation10 + $0x168] sm:$0xff]
    %v736 = vld [vmem:[#allocation10 + $0x170] sm:$0xff]
    %v737 = vld [vmem:[#allocation10 + $0x178] sm:$0xff]
    %v738 = vld [vmem:[#allocation10 + $0x180] sm:$0xff]
    %v739 = vld [vmem:[#allocation10 + $0x188] sm:$0xff]
    %v740 = vld [vmem:[#allocation10 + $0x190] sm:$0xff]
    %v741 = vld [vmem:[#allocation10 + $0x198] sm:$0xff]
    %v742 = vld [vmem:[#allocation10 + $0x1a0] sm:$0xff]
    %v743 = vld [vmem:[#allocation10 + $0x1a8] sm:$0xff]
    %v744 = vld [vmem:[#allocation10 + $0x1b0] sm:$0xff]
    %v745 = vld [vmem:[#allocation10 + $0x1b8] sm:$0xff]
    %v746 = vld [vmem:[#allocation10 + $0x1c0] sm:$0xff]
    %v747 = vld [vmem:[#allocation10 + $0x1c8] sm:$0xff]
    %v748 = vld [vmem:[#allocation10 + $0x1d0] sm:$0xff]
    %v749 = vld [vmem:[#allocation10 + $0x1d8] sm:$0xff]
    %v750 = vld [vmem:[#allocation10 + $0x1e0] sm:$0xff]
    %v751 = vld [vmem:[#allocation10 + $0x1e8] sm:$0xff]
    %v752 = vld [vmem:[#allocation10 + $0x1f0] sm:$0xff]
    %v753 = vld [vmem:[#allocation10 + $0x1f8] sm:$0xff]
    %s754 = scalar_lea.vmem [#allocation4], 32
    %v755 = vld [vmem:[%s754] sm:$0xff]
    %v756 = vld [vmem:[%s754 + $0x8] sm:$0xff]
    %v757 = vld [vmem:[%s754 + $0x10] sm:$0xff]
    %v758 = vld [vmem:[%s754 + $0x18] sm:$0xff]
    %759 = vmatprep.subr.mxu0 %v751
    %760 = vmatpush1.msra.mxu0 %v750
    %761 = vmatprep.subr.mxu0 %v747
    %762 = vmatpush1.msra.mxu0 %v746
    %763 = vmatprep.subr.mxu0 %v743
    %764 = vmatpush1.msra.mxu0 %v742
    %765 = vmatprep.subr.mxu0 %v739
    %766 = vmatpush1.msra.mxu0 %v738
    %767 = vmatprep.subr.mxu0 %v735
    %768 = vmatpush1.msra.mxu0 %v734
    %769 = vmatprep.subr.mxu0 %v731
    %770 = vmatpush1.msra.mxu0 %v730
    %771 = vmatprep.subr.mxu0 %v727
    %772 = vmatpush1.msra.mxu0 %v726
    %773 = vmatprep.subr.mxu0 %v723
    %774 = vmatpush1.msra.mxu0 %v722
    %775 = vmatprep.subr.mxu0 %v719
    %776 = vmatpush1.msra.mxu0 %v718
    %777 = vmatprep.subr.mxu0 %v715
    %778 = vmatpush1.msra.mxu0 %v714
    %779 = vmatprep.subr.mxu0 %v711
    %780 = vmatpush1.msra.mxu0 %v710
    %781 = vmatprep.subr.mxu0 %v707
    %782 = vmatpush1.msra.mxu0 %v706
    %783 = vmatprep.subr.mxu0 %v703
    %784 = vmatpush1.msra.mxu0 %v702
    %785 = vmatprep.subr.mxu0 %v699
    %786 = vmatpush1.msra.mxu0 %v698
    %787 = vmatprep.subr.mxu0 %v695
    %788 = vmatpush1.msra.mxu0 %v694
    %789 = vmatprep.subr.mxu0 %v691
    %790 = vmatpush1.msra.mxu0 %v690
    %791 = vmatprep.subr.mxu0 0.0
    %792 = vmatpush2.msra.mxu0 0.0
    %793 = vmatprep.subr.mxu0 0.0
    %794 = vmatpush2.msra.mxu0 0.0
    %795 = vmatprep.subr.mxu0 0.0
    %796 = vmatpush2.msra.mxu0 0.0
    %797 = vmatprep.subr.mxu0 0.0
    %798 = vmatpush2.msra.mxu0 0.0
    %799 = vmatprep.subr.mxu0 0.0
    %800 = vmatpush2.msra.mxu0 0.0
    %801 = vmatprep.subr.mxu0 0.0
    %802 = vmatpush2.msra.mxu0 0.0
    %803 = vmatprep.subr.mxu0 0.0
    %804 = vmatpush2.msra.mxu0 0.0
    %805 = vmatprep.subr.mxu0 0.0
    %806 = vmatpush2.msra.mxu0 0.0
    %807 = vmatprep.subr.mxu0 0.0
    %808 = vmatpush2.msra.mxu0 0.0
    %809 = vmatprep.subr.mxu0 0.0
    %810 = vmatpush2.msra.mxu0 0.0
    %811 = vmatprep.subr.mxu0 0.0
    %812 = vmatpush2.msra.mxu0 0.0
    %813 = vmatprep.subr.mxu0 0.0
    %814 = vmatpush2.msra.mxu0 0.0
    %815 = vmatprep.subr.mxu0 0.0
    %816 = vmatpush2.msra.mxu0 0.0
    %817 = vmatprep.subr.mxu0 0.0
    %818 = vmatpush2.msra.mxu0 0.0
    %819 = vmatprep.subr.mxu0 0.0
    %820 = vmatpush2.msra.mxu0 0.0
    %821 = vmatprep.subr.mxu0 0.0
    %822 = vmatpush2.msra.mxu0 0.0
    %823 = vmatprep.mubr.f32.mxu0 0.0
    %824 = vmatmul.mubr.f32.gmra.mxu0 %v688
    %v825 = vpop.f32.mrf.mxu0
    %v826 = vadd.f32 %v755, %v825
    %v827 = vpop.f32.mrf.mxu0
    %v828 = vadd.f32 %v756, %v827
    %829 = vdwg.mxu0
    %830 = vmatprep.subr.mxu0 %v753
    %831 = vmatpush1.msra.mxu0 %v752
    %832 = vmatprep.subr.mxu0 %v749
    %833 = vmatpush1.msra.mxu0 %v748
    %834 = vmatprep.subr.mxu0 %v745
    %835 = vmatpush1.msra.mxu0 %v744
    %836 = vmatprep.subr.mxu0 %v741
    %837 = vmatpush1.msra.mxu0 %v740
    %838 = vmatprep.subr.mxu0 %v737
    %839 = vmatpush1.msra.mxu0 %v736
    %840 = vmatprep.subr.mxu0 %v733
    %841 = vmatpush1.msra.mxu0 %v732
    %842 = vmatprep.subr.mxu0 %v729
    %843 = vmatpush1.msra.mxu0 %v728
    %844 = vmatprep.subr.mxu0 %v725
    %845 = vmatpush1.msra.mxu0 %v724
    %846 = vmatprep.subr.mxu0 %v721
    %847 = vmatpush1.msra.mxu0 %v720
    %848 = vmatprep.subr.mxu0 %v717
    %849 = vmatpush1.msra.mxu0 %v716
    %850 = vmatprep.subr.mxu0 %v713
    %851 = vmatpush1.msra.mxu0 %v712
    %852 = vmatprep.subr.mxu0 %v709
    %853 = vmatpush1.msra.mxu0 %v708
    %854 = vmatprep.subr.mxu0 %v705
    %855 = vmatpush1.msra.mxu0 %v704
    %856 = vmatprep.subr.mxu0 %v701
    %857 = vmatpush1.msra.mxu0 %v700
    %858 = vmatprep.subr.mxu0 %v697
    %859 = vmatpush1.msra.mxu0 %v696
    %860 = vmatprep.subr.mxu0 %v693
    %861 = vmatpush1.msra.mxu0 %v692
    %862 = vmatprep.subr.mxu0 0.0
    %863 = vmatpush2.msra.mxu0 0.0
    %864 = vmatprep.subr.mxu0 0.0
    %865 = vmatpush2.msra.mxu0 0.0
    %866 = vmatprep.subr.mxu0 0.0
    %867 = vmatpush2.msra.mxu0 0.0
    %868 = vmatprep.subr.mxu0 0.0
    %869 = vmatpush2.msra.mxu0 0.0
    %870 = vmatprep.subr.mxu0 0.0
    %871 = vmatpush2.msra.mxu0 0.0
    %872 = vmatprep.subr.mxu0 0.0
    %873 = vmatpush2.msra.mxu0 0.0
    %874 = vmatprep.subr.mxu0 0.0
    %875 = vmatpush2.msra.mxu0 0.0
    %876 = vmatprep.subr.mxu0 0.0
    %877 = vmatpush2.msra.mxu0 0.0
    %878 = vmatprep.subr.mxu0 0.0
    %879 = vmatpush2.msra.mxu0 0.0
    %880 = vmatprep.subr.mxu0 0.0
    %881 = vmatpush2.msra.mxu0 0.0
    %882 = vmatprep.subr.mxu0 0.0
    %883 = vmatpush2.msra.mxu0 0.0
    %884 = vmatprep.subr.mxu0 0.0
    %885 = vmatpush2.msra.mxu0 0.0
    %886 = vmatprep.subr.mxu0 0.0
    %887 = vmatpush2.msra.mxu0 0.0
    %888 = vmatprep.subr.mxu0 0.0
    %889 = vmatpush2.msra.mxu0 0.0
    %890 = vmatprep.subr.mxu0 0.0
    %891 = vmatpush2.msra.mxu0 0.0
    %892 = vmatprep.subr.mxu0 0.0
    %893 = vmatpush2.msra.mxu0 0.0
    %894 = vmatprep.mubr.f32.mxu0 0.0
    %895 = vmatmul.mubr.f32.gmra.mxu0 %v688
    %v896 = vpop.f32.mrf.mxu0
    %v897 = vadd.f32 %v757, %v896
    %v898 = vpop.f32.mrf.mxu0
    %v899 = vadd.f32 %v758, %v898
    %900 = vdwg.mxu0
    %v901 = vxor.u32 %v826, 2147483648
    %v902 = vxor.u32 %v828, 2147483648
    %v903 = vxor.u32 %v897, 2147483648
    %v904 = vmul.f32 %v901, 1.442695
    %v905 = vpow.pop %v904
    %v906 = vmul.f32 %v902, 1.442695
    %v907 = vpow.pop %v906
    %v908 = vmul.f32 %v903, 1.442695
    %v909 = vpow.pop %v908
    %v910 = vadd.f32 %v905, 1.0
    %v911 = vadd.f32 %v907, 1.0
    %v912 = vadd.f32 %v909, 1.0
    %v913 = vrcp.pop %v910
    %v914 = vmul.f32 1.0, %v913
    %v915 = vrcp.pop %v911
    %v916 = vmul.f32 1.0, %v915
    %v917 = vrcp.pop %v912
    %v918 = vmul.f32 1.0, %v917
    %v919 = vtanh.pop %v899
    %v920 = vmul.f32 %v916, %v686
    %v921 = vmul.f32 %v914, %v919
    %v922 = vadd.f32 %v920, %v921
    %v923 = vtanh.pop %v922
    %v924 = vmul.f32 %v918, %v923
    %s925 = scalar_lea.vmem [#allocation11], 8
    %926 = vst [vmem:[%s925] sm:$0xff] %v924
    %v927 = vld [vmem:[#allocation10] sm:$0xff]
    %v928 = vld [vmem:[#allocation10 + $0x8] sm:$0xff]
    %v929 = vld [vmem:[#allocation10 + $0x10] sm:$0xff]
    %v930 = vld [vmem:[#allocation10 + $0x18] sm:$0xff]
    %v931 = vld [vmem:[#allocation10 + $0x20] sm:$0xff]
    %v932 = vld [vmem:[#allocation10 + $0x28] sm:$0xff]
    %v933 = vld [vmem:[#allocation10 + $0x30] sm:$0xff]
    %v934 = vld [vmem:[#allocation10 + $0x38] sm:$0xff]
    %v935 = vld [vmem:[#allocation10 + $0x40] sm:$0xff]
    %v936 = vld [vmem:[#allocation10 + $0x48] sm:$0xff]
    %v937 = vld [vmem:[#allocation10 + $0x50] sm:$0xff]
    %v938 = vld [vmem:[#allocation10 + $0x58] sm:$0xff]
    %v939 = vld [vmem:[#allocation10 + $0x60] sm:$0xff]
    %v940 = vld [vmem:[#allocation10 + $0x68] sm:$0xff]
    %v941 = vld [vmem:[#allocation10 + $0x70] sm:$0xff]
    %v942 = vld [vmem:[#allocation10 + $0x78] sm:$0xff]
    %v943 = vld [vmem:[#allocation10 + $0x80] sm:$0xff]
    %v944 = vld [vmem:[#allocation10 + $0x88] sm:$0xff]
    %v945 = vld [vmem:[#allocation10 + $0x90] sm:$0xff]
    %v946 = vld [vmem:[#allocation10 + $0x98] sm:$0xff]
    %v947 = vld [vmem:[#allocation10 + $0xa0] sm:$0xff]
    %v948 = vld [vmem:[#allocation10 + $0xa8] sm:$0xff]
    %v949 = vld [vmem:[#allocation10 + $0xb0] sm:$0xff]
    %v950 = vld [vmem:[#allocation10 + $0xb8] sm:$0xff]
    %v951 = vld [vmem:[#allocation10 + $0xc0] sm:$0xff]
    %v952 = vld [vmem:[#allocation10 + $0xc8] sm:$0xff]
    %v953 = vld [vmem:[#allocation10 + $0xd0] sm:$0xff]
    %v954 = vld [vmem:[#allocation10 + $0xd8] sm:$0xff]
    %v955 = vld [vmem:[#allocation10 + $0xe0] sm:$0xff]
    %v956 = vld [vmem:[#allocation10 + $0xe8] sm:$0xff]
    %v957 = vld [vmem:[#allocation10 + $0xf0] sm:$0xff]
    %v958 = vld [vmem:[#allocation10 + $0xf8] sm:$0xff]
    %v959 = vld [vmem:[#allocation10 + $0x100] sm:$0xff]
    %v960 = vld [vmem:[#allocation10 + $0x108] sm:$0xff]
    %v961 = vld [vmem:[#allocation10 + $0x110] sm:$0xff]
    %v962 = vld [vmem:[#allocation10 + $0x118] sm:$0xff]
    %v963 = vld [vmem:[#allocation10 + $0x120] sm:$0xff]
    %v964 = vld [vmem:[#allocation10 + $0x128] sm:$0xff]
    %v965 = vld [vmem:[#allocation10 + $0x130] sm:$0xff]
    %v966 = vld [vmem:[#allocation10 + $0x138] sm:$0xff]
    %v967 = vld [vmem:[#allocation10 + $0x140] sm:$0xff]
    %v968 = vld [vmem:[#allocation10 + $0x148] sm:$0xff]
    %v969 = vld [vmem:[#allocation10 + $0x150] sm:$0xff]
    %v970 = vld [vmem:[#allocation10 + $0x158] sm:$0xff]
    %v971 = vld [vmem:[#allocation10 + $0x160] sm:$0xff]
    %v972 = vld [vmem:[#allocation10 + $0x168] sm:$0xff]
    %v973 = vld [vmem:[#allocation10 + $0x170] sm:$0xff]
    %v974 = vld [vmem:[#allocation10 + $0x178] sm:$0xff]
    %v975 = vld [vmem:[#allocation10 + $0x180] sm:$0xff]
    %v976 = vld [vmem:[#allocation10 + $0x188] sm:$0xff]
    %v977 = vld [vmem:[#allocation10 + $0x190] sm:$0xff]
    %v978 = vld [vmem:[#allocation10 + $0x198] sm:$0xff]
    %v979 = vld [vmem:[#allocation10 + $0x1a0] sm:$0xff]
    %v980 = vld [vmem:[#allocation10 + $0x1a8] sm:$0xff]
    %v981 = vld [vmem:[#allocation10 + $0x1b0] sm:$0xff]
    %v982 = vld [vmem:[#allocation10 + $0x1b8] sm:$0xff]
    %v983 = vld [vmem:[#allocation10 + $0x1c0] sm:$0xff]
    %v984 = vld [vmem:[#allocation10 + $0x1c8] sm:$0xff]
    %v985 = vld [vmem:[#allocation10 + $0x1d0] sm:$0xff]
    %v986 = vld [vmem:[#allocation10 + $0x1d8] sm:$0xff]
    %v987 = vld [vmem:[#allocation10 + $0x1e0] sm:$0xff]
    %v988 = vld [vmem:[#allocation10 + $0x1e8] sm:$0xff]
    %v989 = vld [vmem:[#allocation10 + $0x1f0] sm:$0xff]
    %v990 = vld [vmem:[#allocation10 + $0x1f8] sm:$0xff]
    %s991 = scalar_lea.vmem [#allocation4], 64
    %v992 = vld [vmem:[%s991] sm:$0xff]
    %v993 = vld [vmem:[%s991 + $0x8] sm:$0xff]
    %v994 = vld [vmem:[%s991 + $0x10] sm:$0xff]
    %v995 = vld [vmem:[%s991 + $0x18] sm:$0xff]
    %996 = vmatprep.subr.mxu0 %v988
    %997 = vmatpush1.msra.mxu0 %v987
    %998 = vmatprep.subr.mxu0 %v984
    %999 = vmatpush1.msra.mxu0 %v983
    %1000 = vmatprep.subr.mxu0 %v980
    %1001 = vmatpush1.msra.mxu0 %v979
    %1002 = vmatprep.subr.mxu0 %v976
    %1003 = vmatpush1.msra.mxu0 %v975
    %1004 = vmatprep.subr.mxu0 %v972
    %1005 = vmatpush1.msra.mxu0 %v971
    %1006 = vmatprep.subr.mxu0 %v968
    %1007 = vmatpush1.msra.mxu0 %v967
    %1008 = vmatprep.subr.mxu0 %v964
    %1009 = vmatpush1.msra.mxu0 %v963
    %1010 = vmatprep.subr.mxu0 %v960
    %1011 = vmatpush1.msra.mxu0 %v959
    %1012 = vmatprep.subr.mxu0 %v956
    %1013 = vmatpush1.msra.mxu0 %v955
    %1014 = vmatprep.subr.mxu0 %v952
    %1015 = vmatpush1.msra.mxu0 %v951
    %1016 = vmatprep.subr.mxu0 %v948
    %1017 = vmatpush1.msra.mxu0 %v947
    %1018 = vmatprep.subr.mxu0 %v944
    %1019 = vmatpush1.msra.mxu0 %v943
    %1020 = vmatprep.subr.mxu0 %v940
    %1021 = vmatpush1.msra.mxu0 %v939
    %1022 = vmatprep.subr.mxu0 %v936
    %1023 = vmatpush1.msra.mxu0 %v935
    %1024 = vmatprep.subr.mxu0 %v932
    %1025 = vmatpush1.msra.mxu0 %v931
    %1026 = vmatprep.subr.mxu0 %v928
    %1027 = vmatpush1.msra.mxu0 %v927
    %1028 = vmatprep.subr.mxu0 0.0
    %1029 = vmatpush2.msra.mxu0 0.0
    %1030 = vmatprep.subr.mxu0 0.0
    %1031 = vmatpush2.msra.mxu0 0.0
    %1032 = vmatprep.subr.mxu0 0.0
    %1033 = vmatpush2.msra.mxu0 0.0
    %1034 = vmatprep.subr.mxu0 0.0
    %1035 = vmatpush2.msra.mxu0 0.0
    %1036 = vmatprep.subr.mxu0 0.0
    %1037 = vmatpush2.msra.mxu0 0.0
    %1038 = vmatprep.subr.mxu0 0.0
    %1039 = vmatpush2.msra.mxu0 0.0
    %1040 = vmatprep.subr.mxu0 0.0
    %1041 = vmatpush2.msra.mxu0 0.0
    %1042 = vmatprep.subr.mxu0 0.0
    %1043 = vmatpush2.msra.mxu0 0.0
    %1044 = vmatprep.subr.mxu0 0.0
    %1045 = vmatpush2.msra.mxu0 0.0
    %1046 = vmatprep.subr.mxu0 0.0
    %1047 = vmatpush2.msra.mxu0 0.0
    %1048 = vmatprep.subr.mxu0 0.0
    %1049 = vmatpush2.msra.mxu0 0.0
    %1050 = vmatprep.subr.mxu0 0.0
    %1051 = vmatpush2.msra.mxu0 0.0
    %1052 = vmatprep.subr.mxu0 0.0
    %1053 = vmatpush2.msra.mxu0 0.0
    %1054 = vmatprep.subr.mxu0 0.0
    %1055 = vmatpush2.msra.mxu0 0.0
    %1056 = vmatprep.subr.mxu0 0.0
    %1057 = vmatpush2.msra.mxu0 0.0
    %1058 = vmatprep.subr.mxu0 0.0
    %1059 = vmatpush2.msra.mxu0 0.0
    %1060 = vmatprep.mubr.f32.mxu0 0.0
    %1061 = vmatmul.mubr.f32.gmra.mxu0 %v924
    %v1062 = vpop.f32.mrf.mxu0
    %v1063 = vadd.f32 %v992, %v1062
    %v1064 = vpop.f32.mrf.mxu0
    %v1065 = vadd.f32 %v993, %v1064
    %1066 = vdwg.mxu0
    %1067 = vmatprep.subr.mxu0 %v990
    %1068 = vmatpush1.msra.mxu0 %v989
    %1069 = vmatprep.subr.mxu0 %v986
    %1070 = vmatpush1.msra.mxu0 %v985
    %1071 = vmatprep.subr.mxu0 %v982
    %1072 = vmatpush1.msra.mxu0 %v981
    %1073 = vmatprep.subr.mxu0 %v978
    %1074 = vmatpush1.msra.mxu0 %v977
    %1075 = vmatprep.subr.mxu0 %v974
    %1076 = vmatpush1.msra.mxu0 %v973
    %1077 = vmatprep.subr.mxu0 %v970
    %1078 = vmatpush1.msra.mxu0 %v969
    %1079 = vmatprep.subr.mxu0 %v966
    %1080 = vmatpush1.msra.mxu0 %v965
    %1081 = vmatprep.subr.mxu0 %v962
    %1082 = vmatpush1.msra.mxu0 %v961
    %1083 = vmatprep.subr.mxu0 %v958
    %1084 = vmatpush1.msra.mxu0 %v957
    %1085 = vmatprep.subr.mxu0 %v954
    %1086 = vmatpush1.msra.mxu0 %v953
    %1087 = vmatprep.subr.mxu0 %v950
    %1088 = vmatpush1.msra.mxu0 %v949
    %1089 = vmatprep.subr.mxu0 %v946
    %1090 = vmatpush1.msra.mxu0 %v945
    %1091 = vmatprep.subr.mxu0 %v942
    %1092 = vmatpush1.msra.mxu0 %v941
    %1093 = vmatprep.subr.mxu0 %v938
    %1094 = vmatpush1.msra.mxu0 %v937
    %1095 = vmatprep.subr.mxu0 %v934
    %1096 = vmatpush1.msra.mxu0 %v933
    %1097 = vmatprep.subr.mxu0 %v930
    %1098 = vmatpush1.msra.mxu0 %v929
    %1099 = vmatprep.subr.mxu0 0.0
    %1100 = vmatpush2.msra.mxu0 0.0
    %1101 = vmatprep.subr.mxu0 0.0
    %1102 = vmatpush2.msra.mxu0 0.0
    %1103 = vmatprep.subr.mxu0 0.0
    %1104 = vmatpush2.msra.mxu0 0.0
    %1105 = vmatprep.subr.mxu0 0.0
    %1106 = vmatpush2.msra.mxu0 0.0
    %1107 = vmatprep.subr.mxu0 0.0
    %1108 = vmatpush2.msra.mxu0 0.0
    %1109 = vmatprep.subr.mxu0 0.0
    %1110 = vmatpush2.msra.mxu0 0.0
    %1111 = vmatprep.subr.mxu0 0.0
    %1112 = vmatpush2.msra.mxu0 0.0
    %1113 = vmatprep.subr.mxu0 0.0
    %1114 = vmatpush2.msra.mxu0 0.0
    %1115 = vmatprep.subr.mxu0 0.0
    %1116 = vmatpush2.msra.mxu0 0.0
    %1117 = vmatprep.subr.mxu0 0.0
    %1118 = vmatpush2.msra.mxu0 0.0
    %1119 = vmatprep.subr.mxu0 0.0
    %1120 = vmatpush2.msra.mxu0 0.0
    %1121 = vmatprep.subr.mxu0 0.0
    %1122 = vmatpush2.msra.mxu0 0.0
    %1123 = vmatprep.subr.mxu0 0.0
    %1124 = vmatpush2.msra.mxu0 0.0
    %1125 = vmatprep.subr.mxu0 0.0
    %1126 = vmatpush2.msra.mxu0 0.0
    %1127 = vmatprep.subr.mxu0 0.0
    %1128 = vmatpush2.msra.mxu0 0.0
    %1129 = vmatprep.subr.mxu0 0.0
    %1130 = vmatpush2.msra.mxu0 0.0
    %1131 = vmatprep.mubr.f32.mxu0 0.0
    %1132 = vmatmul.mubr.f32.gmra.mxu0 %v924
    %v1133 = vpop.f32.mrf.mxu0
    %v1134 = vadd.f32 %v994, %v1133
    %v1135 = vpop.f32.mrf.mxu0
    %v1136 = vadd.f32 %v995, %v1135
    %1137 = vdwg.mxu0
    %v1138 = vxor.u32 %v1063, 2147483648
    %v1139 = vxor.u32 %v1065, 2147483648
    %v1140 = vxor.u32 %v1134, 2147483648
    %v1141 = vmul.f32 %v1138, 1.442695
    %v1142 = vpow.pop %v1141
    %v1143 = vmul.f32 %v1139, 1.442695
    %v1144 = vpow.pop %v1143
    %v1145 = vmul.f32 %v1140, 1.442695
    %v1146 = vpow.pop %v1145
    %v1147 = vadd.f32 %v1142, 1.0
    %v1148 = vadd.f32 %v1144, 1.0
    %v1149 = vadd.f32 %v1146, 1.0
    %v1150 = vrcp.pop %v1147
    %v1151 = vmul.f32 1.0, %v1150
    %v1152 = vrcp.pop %v1148
    %v1153 = vmul.f32 1.0, %v1152
    %v1154 = vrcp.pop %v1149
    %v1155 = vmul.f32 1.0, %v1154
    %v1156 = vtanh.pop %v1136
    %v1157 = vmul.f32 %v1153, %v922
    %v1158 = vmul.f32 %v1151, %v1156
    %v1159 = vadd.f32 %v1157, %v1158
    %v1160 = vtanh.pop %v1159
    %v1161 = vmul.f32 %v1155, %v1160
    %s1162 = scalar_lea.vmem [#allocation11], 16
    %1163 = vst [vmem:[%s1162] sm:$0xff] %v1161
    %v1164 = vld [vmem:[#allocation10] sm:$0xff]
    %v1165 = vld [vmem:[#allocation10 + $0x8] sm:$0xff]
    %v1166 = vld [vmem:[#allocation10 + $0x10] sm:$0xff]
    %v1167 = vld [vmem:[#allocation10 + $0x18] sm:$0xff]
    %v1168 = vld [vmem:[#allocation10 + $0x20] sm:$0xff]
    %v1169 = vld [vmem:[#allocation10 + $0x28] sm:$0xff]
    %v1170 = vld [vmem:[#allocation10 + $0x30] sm:$0xff]
    %v1171 = vld [vmem:[#allocation10 + $0x38] sm:$0xff]
    %v1172 = vld [vmem:[#allocation10 + $0x40] sm:$0xff]
    %v1173 = vld [vmem:[#allocation10 + $0x48] sm:$0xff]
    %v1174 = vld [vmem:[#allocation10 + $0x50] sm:$0xff]
    %v1175 = vld [vmem:[#allocation10 + $0x58] sm:$0xff]
    %v1176 = vld [vmem:[#allocation10 + $0x60] sm:$0xff]
    %v1177 = vld [vmem:[#allocation10 + $0x68] sm:$0xff]
    %v1178 = vld [vmem:[#allocation10 + $0x70] sm:$0xff]
    %v1179 = vld [vmem:[#allocation10 + $0x78] sm:$0xff]
    %v1180 = vld [vmem:[#allocation10 + $0x80] sm:$0xff]
    %v1181 = vld [vmem:[#allocation10 + $0x88] sm:$0xff]
    %v1182 = vld [vmem:[#allocation10 + $0x90] sm:$0xff]
    %v1183 = vld [vmem:[#allocation10 + $0x98] sm:$0xff]
    %v1184 = vld [vmem:[#allocation10 + $0xa0] sm:$0xff]
    %v1185 = vld [vmem:[#allocation10 + $0xa8] sm:$0xff]
    %v1186 = vld [vmem:[#allocation10 + $0xb0] sm:$0xff]
    %v1187 = vld [vmem:[#allocation10 + $0xb8] sm:$0xff]
    %v1188 = vld [vmem:[#allocation10 + $0xc0] sm:$0xff]
    %v1189 = vld [vmem:[#allocation10 + $0xc8] sm:$0xff]
    %v1190 = vld [vmem:[#allocation10 + $0xd0] sm:$0xff]
    %v1191 = vld [vmem:[#allocation10 + $0xd8] sm:$0xff]
    %v1192 = vld [vmem:[#allocation10 + $0xe0] sm:$0xff]
    %v1193 = vld [vmem:[#allocation10 + $0xe8] sm:$0xff]
    %v1194 = vld [vmem:[#allocation10 + $0xf0] sm:$0xff]
    %v1195 = vld [vmem:[#allocation10 + $0xf8] sm:$0xff]
    %v1196 = vld [vmem:[#allocation10 + $0x100] sm:$0xff]
    %v1197 = vld [vmem:[#allocation10 + $0x108] sm:$0xff]
    %v1198 = vld [vmem:[#allocation10 + $0x110] sm:$0xff]
    %v1199 = vld [vmem:[#allocation10 + $0x118] sm:$0xff]
    %v1200 = vld [vmem:[#allocation10 + $0x120] sm:$0xff]
    %v1201 = vld [vmem:[#allocation10 + $0x128] sm:$0xff]
    %v1202 = vld [vmem:[#allocation10 + $0x130] sm:$0xff]
    %v1203 = vld [vmem:[#allocation10 + $0x138] sm:$0xff]
    %v1204 = vld [vmem:[#allocation10 + $0x140] sm:$0xff]
    %v1205 = vld [vmem:[#allocation10 + $0x148] sm:$0xff]
    %v1206 = vld [vmem:[#allocation10 + $0x150] sm:$0xff]
    %v1207 = vld [vmem:[#allocation10 + $0x158] sm:$0xff]
    %v1208 = vld [vmem:[#allocation10 + $0x160] sm:$0xff]
    %v1209 = vld [vmem:[#allocation10 + $0x168] sm:$0xff]
    %v1210 = vld [vmem:[#allocation10 + $0x170] sm:$0xff]
    %v1211 = vld [vmem:[#allocation10 + $0x178] sm:$0xff]
    %v1212 = vld [vmem:[#allocation10 + $0x180] sm:$0xff]
    %v1213 = vld [vmem:[#allocation10 + $0x188] sm:$0xff]
    %v1214 = vld [vmem:[#allocation10 + $0x190] sm:$0xff]
    %v1215 = vld [vmem:[#allocation10 + $0x198] sm:$0xff]
    %v1216 = vld [vmem:[#allocation10 + $0x1a0] sm:$0xff]
    %v1217 = vld [vmem:[#allocation10 + $0x1a8] sm:$0xff]
    %v1218 = vld [vmem:[#allocation10 + $0x1b0] sm:$0xff]
    %v1219 = vld [vmem:[#allocation10 + $0x1b8] sm:$0xff]
    %v1220 = vld [vmem:[#allocation10 + $0x1c0] sm:$0xff]
    %v1221 = vld [vmem:[#allocation10 + $0x1c8] sm:$0xff]
    %v1222 = vld [vmem:[#allocation10 + $0x1d0] sm:$0xff]
    %v1223 = vld [vmem:[#allocation10 + $0x1d8] sm:$0xff]
    %v1224 = vld [vmem:[#allocation10 + $0x1e0] sm:$0xff]
    %v1225 = vld [vmem:[#allocation10 + $0x1e8] sm:$0xff]
    %v1226 = vld [vmem:[#allocation10 + $0x1f0] sm:$0xff]
    %v1227 = vld [vmem:[#allocation10 + $0x1f8] sm:$0xff]
    %s1228 = scalar_lea.vmem [#allocation4], 96
    %v1229 = vld [vmem:[%s1228] sm:$0xff]
    %v1230 = vld [vmem:[%s1228 + $0x8] sm:$0xff]
    %v1231 = vld [vmem:[%s1228 + $0x10] sm:$0xff]
    %v1232 = vld [vmem:[%s1228 + $0x18] sm:$0xff]
    %1233 = vmatprep.subr.mxu0 %v1225
    %1234 = vmatpush1.msra.mxu0 %v1224
    %1235 = vmatprep.subr.mxu0 %v1221
    %1236 = vmatpush1.msra.mxu0 %v1220
    %1237 = vmatprep.subr.mxu0 %v1217
    %1238 = vmatpush1.msra.mxu0 %v1216
    %1239 = vmatprep.subr.mxu0 %v1213
    %1240 = vmatpush1.msra.mxu0 %v1212
    %1241 = vmatprep.subr.mxu0 %v1209
    %1242 = vmatpush1.msra.mxu0 %v1208
    %1243 = vmatprep.subr.mxu0 %v1205
    %1244 = vmatpush1.msra.mxu0 %v1204
    %1245 = vmatprep.subr.mxu0 %v1201
    %1246 = vmatpush1.msra.mxu0 %v1200
    %1247 = vmatprep.subr.mxu0 %v1197
    %1248 = vmatpush1.msra.mxu0 %v1196
    %1249 = vmatprep.subr.mxu0 %v1193
    %1250 = vmatpush1.msra.mxu0 %v1192
    %1251 = vmatprep.subr.mxu0 %v1189
    %1252 = vmatpush1.msra.mxu0 %v1188
    %1253 = vmatprep.subr.mxu0 %v1185
    %1254 = vmatpush1.msra.mxu0 %v1184
    %1255 = vmatprep.subr.mxu0 %v1181
    %1256 = vmatpush1.msra.mxu0 %v1180
    %1257 = vmatprep.subr.mxu0 %v1177
    %1258 = vmatpush1.msra.mxu0 %v1176
    %1259 = vmatprep.subr.mxu0 %v1173
    %1260 = vmatpush1.msra.mxu0 %v1172
    %1261 = vmatprep.subr.mxu0 %v1169
    %1262 = vmatpush1.msra.mxu0 %v1168
    %1263 = vmatprep.subr.mxu0 %v1165
    %1264 = vmatpush1.msra.mxu0 %v1164
    %1265 = vmatprep.subr.mxu0 0.0
    %1266 = vmatpush2.msra.mxu0 0.0
    %1267 = vmatprep.subr.mxu0 0.0
    %1268 = vmatpush2.msra.mxu0 0.0
    %1269 = vmatprep.subr.mxu0 0.0
    %1270 = vmatpush2.msra.mxu0 0.0
    %1271 = vmatprep.subr.mxu0 0.0
    %1272 = vmatpush2.msra.mxu0 0.0
    %1273 = vmatprep.subr.mxu0 0.0
    %1274 = vmatpush2.msra.mxu0 0.0
    %1275 = vmatprep.subr.mxu0 0.0
    %1276 = vmatpush2.msra.mxu0 0.0
    %1277 = vmatprep.subr.mxu0 0.0
    %1278 = vmatpush2.msra.mxu0 0.0
    %1279 = vmatprep.subr.mxu0 0.0
    %1280 = vmatpush2.msra.mxu0 0.0
    %1281 = vmatprep.subr.mxu0 0.0
    %1282 = vmatpush2.msra.mxu0 0.0
    %1283 = vmatprep.subr.mxu0 0.0
    %1284 = vmatpush2.msra.mxu0 0.0
    %1285 = vmatprep.subr.mxu0 0.0
    %1286 = vmatpush2.msra.mxu0 0.0
    %1287 = vmatprep.subr.mxu0 0.0
    %1288 = vmatpush2.msra.mxu0 0.0
    %1289 = vmatprep.subr.mxu0 0.0
    %1290 = vmatpush2.msra.mxu0 0.0
    %1291 = vmatprep.subr.mxu0 0.0
    %1292 = vmatpush2.msra.mxu0 0.0
    %1293 = vmatprep.subr.mxu0 0.0
    %1294 = vmatpush2.msra.mxu0 0.0
    %1295 = vmatprep.subr.mxu0 0.0
    %1296 = vmatpush2.msra.mxu0 0.0
    %1297 = vmatprep.mubr.f32.mxu0 0.0
    %1298 = vmatmul.mubr.f32.gmra.mxu0 %v1161
    %v1299 = vpop.f32.mrf.mxu0
    %v1300 = vadd.f32 %v1229, %v1299
    %v1301 = vpop.f32.mrf.mxu0
    %v1302 = vadd.f32 %v1230, %v1301
    %1303 = vdwg.mxu0
    %1304 = vmatprep.subr.mxu0 %v1227
    %1305 = vmatpush1.msra.mxu0 %v1226
    %1306 = vmatprep.subr.mxu0 %v1223
    %1307 = vmatpush1.msra.mxu0 %v1222
    %1308 = vmatprep.subr.mxu0 %v1219
    %1309 = vmatpush1.msra.mxu0 %v1218
    %1310 = vmatprep.subr.mxu0 %v1215
    %1311 = vmatpush1.msra.mxu0 %v1214
    %1312 = vmatprep.subr.mxu0 %v1211
    %1313 = vmatpush1.msra.mxu0 %v1210
    %1314 = vmatprep.subr.mxu0 %v1207
    %1315 = vmatpush1.msra.mxu0 %v1206
    %1316 = vmatprep.subr.mxu0 %v1203
    %1317 = vmatpush1.msra.mxu0 %v1202
    %1318 = vmatprep.subr.mxu0 %v1199
    %1319 = vmatpush1.msra.mxu0 %v1198
    %1320 = vmatprep.subr.mxu0 %v1195
    %1321 = vmatpush1.msra.mxu0 %v1194
    %1322 = vmatprep.subr.mxu0 %v1191
    %1323 = vmatpush1.msra.mxu0 %v1190
    %1324 = vmatprep.subr.mxu0 %v1187
    %1325 = vmatpush1.msra.mxu0 %v1186
    %1326 = vmatprep.subr.mxu0 %v1183
    %1327 = vmatpush1.msra.mxu0 %v1182
    %1328 = vmatprep.subr.mxu0 %v1179
    %1329 = vmatpush1.msra.mxu0 %v1178
    %1330 = vmatprep.subr.mxu0 %v1175
    %1331 = vmatpush1.msra.mxu0 %v1174
    %1332 = vmatprep.subr.mxu0 %v1171
    %1333 = vmatpush1.msra.mxu0 %v1170
    %1334 = vmatprep.subr.mxu0 %v1167
    %1335 = vmatpush1.msra.mxu0 %v1166
    %1336 = vmatprep.subr.mxu0 0.0
    %1337 = vmatpush2.msra.mxu0 0.0
    %1338 = vmatprep.subr.mxu0 0.0
    %1339 = vmatpush2.msra.mxu0 0.0
    %1340 = vmatprep.subr.mxu0 0.0
    %1341 = vmatpush2.msra.mxu0 0.0
    %1342 = vmatprep.subr.mxu0 0.0
    %1343 = vmatpush2.msra.mxu0 0.0
    %1344 = vmatprep.subr.mxu0 0.0
    %1345 = vmatpush2.msra.mxu0 0.0
    %1346 = vmatprep.subr.mxu0 0.0
    %1347 = vmatpush2.msra.mxu0 0.0
    %1348 = vmatprep.subr.mxu0 0.0
    %1349 = vmatpush2.msra.mxu0 0.0
    %1350 = vmatprep.subr.mxu0 0.0
    %1351 = vmatpush2.msra.mxu0 0.0
    %1352 = vmatprep.subr.mxu0 0.0
    %1353 = vmatpush2.msra.mxu0 0.0
    %1354 = vmatprep.subr.mxu0 0.0
    %1355 = vmatpush2.msra.mxu0 0.0
    %1356 = vmatprep.subr.mxu0 0.0
    %1357 = vmatpush2.msra.mxu0 0.0
    %1358 = vmatprep.subr.mxu0 0.0
    %1359 = vmatpush2.msra.mxu0 0.0
    %1360 = vmatprep.subr.mxu0 0.0
    %1361 = vmatpush2.msra.mxu0 0.0
    %1362 = vmatprep.subr.mxu0 0.0
    %1363 = vmatpush2.msra.mxu0 0.0
    %1364 = vmatprep.subr.mxu0 0.0
    %1365 = vmatpush2.msra.mxu0 0.0
    %1366 = vmatprep.subr.mxu0 0.0
    %1367 = vmatpush2.msra.mxu0 0.0
    %1368 = vmatprep.mubr.f32.mxu0 0.0
    %1369 = vmatmul.mubr.f32.gmra.mxu0 %v1161
    %v1370 = vpop.f32.mrf.mxu0
    %v1371 = vadd.f32 %v1231, %v1370
    %v1372 = vpop.f32.mrf.mxu0
    %v1373 = vadd.f32 %v1232, %v1372
    %1374 = vdwg.mxu0
    %v1375 = vxor.u32 %v1300, 2147483648
    %v1376 = vxor.u32 %v1302, 2147483648
    %v1377 = vxor.u32 %v1371, 2147483648
    %v1378 = vmul.f32 %v1375, 1.442695
    %v1379 = vpow.pop %v1378
    %v1380 = vmul.f32 %v1376, 1.442695
    %v1381 = vpow.pop %v1380
    %v1382 = vmul.f32 %v1377, 1.442695
    %v1383 = vpow.pop %v1382
    %v1384 = vadd.f32 %v1379, 1.0
    %v1385 = vadd.f32 %v1381, 1.0
    %v1386 = vadd.f32 %v1383, 1.0
    %v1387 = vrcp.pop %v1384
    %v1388 = vmul.f32 1.0, %v1387
    %v1389 = vrcp.pop %v1385
    %v1390 = vmul.f32 1.0, %v1389
    %v1391 = vrcp.pop %v1386
    %v1392 = vmul.f32 1.0, %v1391
    %v1393 = vtanh.pop %v1373
    %v1394 = vmul.f32 %v1390, %v1159
    %v1395 = vmul.f32 %v1388, %v1393
    %v1396 = vadd.f32 %v1394, %v1395
    %v1397 = vtanh.pop %v1396
    %v1398 = vmul.f32 %v1392, %v1397
    %s1399 = scalar_lea.vmem [#allocation11], 24
    %1400 = vst [vmem:[%s1399] sm:$0xff] %v1398
    %v1401 = vld [vmem:[#allocation10] sm:$0xff]
    %v1402 = vld [vmem:[#allocation10 + $0x8] sm:$0xff]
    %v1403 = vld [vmem:[#allocation10 + $0x10] sm:$0xff]
    %v1404 = vld [vmem:[#allocation10 + $0x18] sm:$0xff]
    %v1405 = vld [vmem:[#allocation10 + $0x20] sm:$0xff]
    %v1406 = vld [vmem:[#allocation10 + $0x28] sm:$0xff]
    %v1407 = vld [vmem:[#allocation10 + $0x30] sm:$0xff]
    %v1408 = vld [vmem:[#allocation10 + $0x38] sm:$0xff]
    %v1409 = vld [vmem:[#allocation10 + $0x40] sm:$0xff]
    %v1410 = vld [vmem:[#allocation10 + $0x48] sm:$0xff]
    %v1411 = vld [vmem:[#allocation10 + $0x50] sm:$0xff]
    %v1412 = vld [vmem:[#allocation10 + $0x58] sm:$0xff]
    %v1413 = vld [vmem:[#allocation10 + $0x60] sm:$0xff]
    %v1414 = vld [vmem:[#allocation10 + $0x68] sm:$0xff]
    %v1415 = vld [vmem:[#allocation10 + $0x70] sm:$0xff]
    %v1416 = vld [vmem:[#allocation10 + $0x78] sm:$0xff]
    %v1417 = vld [vmem:[#allocation10 + $0x80] sm:$0xff]
    %v1418 = vld [vmem:[#allocation10 + $0x88] sm:$0xff]
    %v1419 = vld [vmem:[#allocation10 + $0x90] sm:$0xff]
    %v1420 = vld [vmem:[#allocation10 + $0x98] sm:$0xff]
    %v1421 = vld [vmem:[#allocation10 + $0xa0] sm:$0xff]
    %v1422 = vld [vmem:[#allocation10 + $0xa8] sm:$0xff]
    %v1423 = vld [vmem:[#allocation10 + $0xb0] sm:$0xff]
    %v1424 = vld [vmem:[#allocation10 + $0xb8] sm:$0xff]
    %v1425 = vld [vmem:[#allocation10 + $0xc0] sm:$0xff]
    %v1426 = vld [vmem:[#allocation10 + $0xc8] sm:$0xff]
    %v1427 = vld [vmem:[#allocation10 + $0xd0] sm:$0xff]
    %v1428 = vld [vmem:[#allocation10 + $0xd8] sm:$0xff]
    %v1429 = vld [vmem:[#allocation10 + $0xe0] sm:$0xff]
    %v1430 = vld [vmem:[#allocation10 + $0xe8] sm:$0xff]
    %v1431 = vld [vmem:[#allocation10 + $0xf0] sm:$0xff]
    %v1432 = vld [vmem:[#allocation10 + $0xf8] sm:$0xff]
    %v1433 = vld [vmem:[#allocation10 + $0x100] sm:$0xff]
    %v1434 = vld [vmem:[#allocation10 + $0x108] sm:$0xff]
    %v1435 = vld [vmem:[#allocation10 + $0x110] sm:$0xff]
    %v1436 = vld [vmem:[#allocation10 + $0x118] sm:$0xff]
    %v1437 = vld [vmem:[#allocation10 + $0x120] sm:$0xff]
    %v1438 = vld [vmem:[#allocation10 + $0x128] sm:$0xff]
    %v1439 = vld [vmem:[#allocation10 + $0x130] sm:$0xff]
    %v1440 = vld [vmem:[#allocation10 + $0x138] sm:$0xff]
    %v1441 = vld [vmem:[#allocation10 + $0x140] sm:$0xff]
    %v1442 = vld [vmem:[#allocation10 + $0x148] sm:$0xff]
    %v1443 = vld [vmem:[#allocation10 + $0x150] sm:$0xff]
    %v1444 = vld [vmem:[#allocation10 + $0x158] sm:$0xff]
    %v1445 = vld [vmem:[#allocation10 + $0x160] sm:$0xff]
    %v1446 = vld [vmem:[#allocation10 + $0x168] sm:$0xff]
    %v1447 = vld [vmem:[#allocation10 + $0x170] sm:$0xff]
    %v1448 = vld [vmem:[#allocation10 + $0x178] sm:$0xff]
    %v1449 = vld [vmem:[#allocation10 + $0x180] sm:$0xff]
    %v1450 = vld [vmem:[#allocation10 + $0x188] sm:$0xff]
    %v1451 = vld [vmem:[#allocation10 + $0x190] sm:$0xff]
    %v1452 = vld [vmem:[#allocation10 + $0x198] sm:$0xff]
    %v1453 = vld [vmem:[#allocation10 + $0x1a0] sm:$0xff]
    %v1454 = vld [vmem:[#allocation10 + $0x1a8] sm:$0xff]
    %v1455 = vld [vmem:[#allocation10 + $0x1b0] sm:$0xff]
    %v1456 = vld [vmem:[#allocation10 + $0x1b8] sm:$0xff]
    %v1457 = vld [vmem:[#allocation10 + $0x1c0] sm:$0xff]
    %v1458 = vld [vmem:[#allocation10 + $0x1c8] sm:$0xff]
    %v1459 = vld [vmem:[#allocation10 + $0x1d0] sm:$0xff]
    %v1460 = vld [vmem:[#allocation10 + $0x1d8] sm:$0xff]
    %v1461 = vld [vmem:[#allocation10 + $0x1e0] sm:$0xff]
    %v1462 = vld [vmem:[#allocation10 + $0x1e8] sm:$0xff]
    %v1463 = vld [vmem:[#allocation10 + $0x1f0] sm:$0xff]
    %v1464 = vld [vmem:[#allocation10 + $0x1f8] sm:$0xff]
    %s1465 = scalar_lea.vmem [#allocation4], 128
    %v1466 = vld [vmem:[%s1465] sm:$0xff]
    %v1467 = vld [vmem:[%s1465 + $0x8] sm:$0xff]
    %v1468 = vld [vmem:[%s1465 + $0x10] sm:$0xff]
    %v1469 = vld [vmem:[%s1465 + $0x18] sm:$0xff]
    %1470 = vmatprep.subr.mxu0 %v1462
    %1471 = vmatpush1.msra.mxu0 %v1461
    %1472 = vmatprep.subr.mxu0 %v1458
    %1473 = vmatpush1.msra.mxu0 %v1457
    %1474 = vmatprep.subr.mxu0 %v1454
    %1475 = vmatpush1.msra.mxu0 %v1453
    %1476 = vmatprep.subr.mxu0 %v1450
    %1477 = vmatpush1.msra.mxu0 %v1449
    %1478 = vmatprep.subr.mxu0 %v1446
    %1479 = vmatpush1.msra.mxu0 %v1445
    %1480 = vmatprep.subr.mxu0 %v1442
    %1481 = vmatpush1.msra.mxu0 %v1441
    %1482 = vmatprep.subr.mxu0 %v1438
    %1483 = vmatpush1.msra.mxu0 %v1437
    %1484 = vmatprep.subr.mxu0 %v1434
    %1485 = vmatpush1.msra.mxu0 %v1433
    %1486 = vmatprep.subr.mxu0 %v1430
    %1487 = vmatpush1.msra.mxu0 %v1429
    %1488 = vmatprep.subr.mxu0 %v1426
    %1489 = vmatpush1.msra.mxu0 %v1425
    %1490 = vmatprep.subr.mxu0 %v1422
    %1491 = vmatpush1.msra.mxu0 %v1421
    %1492 = vmatprep.subr.mxu0 %v1418
    %1493 = vmatpush1.msra.mxu0 %v1417
    %1494 = vmatprep.subr.mxu0 %v1414
    %1495 = vmatpush1.msra.mxu0 %v1413
    %1496 = vmatprep.subr.mxu0 %v1410
    %1497 = vmatpush1.msra.mxu0 %v1409
    %1498 = vmatprep.subr.mxu0 %v1406
    %1499 = vmatpush1.msra.mxu0 %v1405
    %1500 = vmatprep.subr.mxu0 %v1402
    %1501 = vmatpush1.msra.mxu0 %v1401
    %1502 = vmatprep.subr.mxu0 0.0
    %1503 = vmatpush2.msra.mxu0 0.0
    %1504 = vmatprep.subr.mxu0 0.0
    %1505 = vmatpush2.msra.mxu0 0.0
    %1506 = vmatprep.subr.mxu0 0.0
    %1507 = vmatpush2.msra.mxu0 0.0
    %1508 = vmatprep.subr.mxu0 0.0
    %1509 = vmatpush2.msra.mxu0 0.0
    %1510 = vmatprep.subr.mxu0 0.0
    %1511 = vmatpush2.msra.mxu0 0.0
    %1512 = vmatprep.subr.mxu0 0.0
    %1513 = vmatpush2.msra.mxu0 0.0
    %1514 = vmatprep.subr.mxu0 0.0
    %1515 = vmatpush2.msra.mxu0 0.0
    %1516 = vmatprep.subr.mxu0 0.0
    %1517 = vmatpush2.msra.mxu0 0.0
    %1518 = vmatprep.subr.mxu0 0.0
    %1519 = vmatpush2.msra.mxu0 0.0
    %1520 = vmatprep.subr.mxu0 0.0
    %1521 = vmatpush2.msra.mxu0 0.0
    %1522 = vmatprep.subr.mxu0 0.0
    %1523 = vmatpush2.msra.mxu0 0.0
    %1524 = vmatprep.subr.mxu0 0.0
    %1525 = vmatpush2.msra.mxu0 0.0
    %1526 = vmatprep.subr.mxu0 0.0
    %1527 = vmatpush2.msra.mxu0 0.0
    %1528 = vmatprep.subr.mxu0 0.0
    %1529 = vmatpush2.msra.mxu0 0.0
    %1530 = vmatprep.subr.mxu0 0.0
    %1531 = vmatpush2.msra.mxu0 0.0
    %1532 = vmatprep.subr.mxu0 0.0
    %1533 = vmatpush2.msra.mxu0 0.0
    %1534 = vmatprep.mubr.f32.mxu0 0.0
    %1535 = vmatmul.mubr.f32.gmra.mxu0 %v1398
    %v1536 = vpop.f32.mrf.mxu0
    %v1537 = vadd.f32 %v1466, %v1536
    %v1538 = vpop.f32.mrf.mxu0
    %v1539 = vadd.f32 %v1467, %v1538
    %1540 = vdwg.mxu0
    %1541 = vmatprep.subr.mxu0 %v1464
    %1542 = vmatpush1.msra.mxu0 %v1463
    %1543 = vmatprep.subr.mxu0 %v1460
    %1544 = vmatpush1.msra.mxu0 %v1459
    %1545 = vmatprep.subr.mxu0 %v1456
    %1546 = vmatpush1.msra.mxu0 %v1455
    %1547 = vmatprep.subr.mxu0 %v1452
    %1548 = vmatpush1.msra.mxu0 %v1451
    %1549 = vmatprep.subr.mxu0 %v1448
    %1550 = vmatpush1.msra.mxu0 %v1447
    %1551 = vmatprep.subr.mxu0 %v1444
    %1552 = vmatpush1.msra.mxu0 %v1443
    %1553 = vmatprep.subr.mxu0 %v1440
    %1554 = vmatpush1.msra.mxu0 %v1439
    %1555 = vmatprep.subr.mxu0 %v1436
    %1556 = vmatpush1.msra.mxu0 %v1435
    %1557 = vmatprep.subr.mxu0 %v1432
    %1558 = vmatpush1.msra.mxu0 %v1431
    %1559 = vmatprep.subr.mxu0 %v1428
    %1560 = vmatpush1.msra.mxu0 %v1427
    %1561 = vmatprep.subr.mxu0 %v1424
    %1562 = vmatpush1.msra.mxu0 %v1423
    %1563 = vmatprep.subr.mxu0 %v1420
    %1564 = vmatpush1.msra.mxu0 %v1419
    %1565 = vmatprep.subr.mxu0 %v1416
    %1566 = vmatpush1.msra.mxu0 %v1415
    %1567 = vmatprep.subr.mxu0 %v1412
    %1568 = vmatpush1.msra.mxu0 %v1411
    %1569 = vmatprep.subr.mxu0 %v1408
    %1570 = vmatpush1.msra.mxu0 %v1407
    %1571 = vmatprep.subr.mxu0 %v1404
    %1572 = vmatpush1.msra.mxu0 %v1403
    %1573 = vmatprep.subr.mxu0 0.0
    %1574 = vmatpush2.msra.mxu0 0.0
    %1575 = vmatprep.subr.mxu0 0.0
    %1576 = vmatpush2.msra.mxu0 0.0
    %1577 = vmatprep.subr.mxu0 0.0
    %1578 = vmatpush2.msra.mxu0 0.0
    %1579 = vmatprep.subr.mxu0 0.0
    %1580 = vmatpush2.msra.mxu0 0.0
    %1581 = vmatprep.subr.mxu0 0.0
    %1582 = vmatpush2.msra.mxu0 0.0
    %1583 = vmatprep.subr.mxu0 0.0
    %1584 = vmatpush2.msra.mxu0 0.0
    %1585 = vmatprep.subr.mxu0 0.0
    %1586 = vmatpush2.msra.mxu0 0.0
    %1587 = vmatprep.subr.mxu0 0.0
    %1588 = vmatpush2.msra.mxu0 0.0
    %1589 = vmatprep.subr.mxu0 0.0
    %1590 = vmatpush2.msra.mxu0 0.0
    %1591 = vmatprep.subr.mxu0 0.0
    %1592 = vmatpush2.msra.mxu0 0.0
    %1593 = vmatprep.subr.mxu0 0.0
    %1594 = vmatpush2.msra.mxu0 0.0
    %1595 = vmatprep.subr.mxu0 0.0
    %1596 = vmatpush2.msra.mxu0 0.0
    %1597 = vmatprep.subr.mxu0 0.0
    %1598 = vmatpush2.msra.mxu0 0.0
    %1599 = vmatprep.subr.mxu0 0.0
    %1600 = vmatpush2.msra.mxu0 0.0
    %1601 = vmatprep.subr.mxu0 0.0
    %1602 = vmatpush2.msra.mxu0 0.0
    %1603 = vmatprep.subr.mxu0 0.0
    %1604 = vmatpush2.msra.mxu0 0.0
    %1605 = vmatprep.mubr.f32.mxu0 0.0
    %1606 = vmatmul.mubr.f32.gmra.mxu0 %v1398
    %v1607 = vpop.f32.mrf.mxu0
    %v1608 = vadd.f32 %v1468, %v1607
    %v1609 = vpop.f32.mrf.mxu0
    %v1610 = vadd.f32 %v1469, %v1609
    %1611 = vdwg.mxu0
    %v1612 = vxor.u32 %v1537, 2147483648
    %v1613 = vxor.u32 %v1539, 2147483648
    %v1614 = vxor.u32 %v1608, 2147483648
    %v1615 = vmul.f32 %v1612, 1.442695
    %v1616 = vpow.pop %v1615
    %v1617 = vmul.f32 %v1613, 1.442695
    %v1618 = vpow.pop %v1617
    %v1619 = vmul.f32 %v1614, 1.442695
    %v1620 = vpow.pop %v1619
    %v1621 = vadd.f32 %v1616, 1.0
    %v1622 = vadd.f32 %v1618, 1.0
    %v1623 = vadd.f32 %v1620, 1.0
    %v1624 = vrcp.pop %v1621
    %v1625 = vmul.f32 1.0, %v1624
    %v1626 = vrcp.pop %v1622
    %v1627 = vmul.f32 1.0, %v1626
    %v1628 = vrcp.pop %v1623
    %v1629 = vmul.f32 1.0, %v1628
    %v1630 = vtanh.pop %v1610
    %v1631 = vmul.f32 %v1627, %v1396
    %v1632 = vmul.f32 %v1625, %v1630
    %v1633 = vadd.f32 %v1631, %v1632
    %v1634 = vtanh.pop %v1633
    %v1635 = vmul.f32 %v1629, %v1634
    %s1636 = scalar_lea.vmem [#allocation11], 32
    %1637 = vst [vmem:[%s1636] sm:$0xff] %v1635
    %v1638 = vld [vmem:[#allocation10] sm:$0xff]
    %v1639 = vld [vmem:[#allocation10 + $0x8] sm:$0xff]
    %v1640 = vld [vmem:[#allocation10 + $0x10] sm:$0xff]
    %v1641 = vld [vmem:[#allocation10 + $0x18] sm:$0xff]
    %v1642 = vld [vmem:[#allocation10 + $0x20] sm:$0xff]
    %v1643 = vld [vmem:[#allocation10 + $0x28] sm:$0xff]
    %v1644 = vld [vmem:[#allocation10 + $0x30] sm:$0xff]
    %v1645 = vld [vmem:[#allocation10 + $0x38] sm:$0xff]
    %v1646 = vld [vmem:[#allocation10 + $0x40] sm:$0xff]
    %v1647 = vld [vmem:[#allocation10 + $0x48] sm:$0xff]
    %v1648 = vld [vmem:[#allocation10 + $0x50] sm:$0xff]
    %v1649 = vld [vmem:[#allocation10 + $0x58] sm:$0xff]
    %v1650 = vld [vmem:[#allocation10 + $0x60] sm:$0xff]
    %v1651 = vld [vmem:[#allocation10 + $0x68] sm:$0xff]
    %v1652 = vld [vmem:[#allocation10 + $0x70] sm:$0xff]
    %v1653 = vld [vmem:[#allocation10 + $0x78] sm:$0xff]
    %v1654 = vld [vmem:[#allocation10 + $0x80] sm:$0xff]
    %v1655 = vld [vmem:[#allocation10 + $0x88] sm:$0xff]
    %v1656 = vld [vmem:[#allocation10 + $0x90] sm:$0xff]
    %v1657 = vld [vmem:[#allocation10 + $0x98] sm:$0xff]
    %v1658 = vld [vmem:[#allocation10 + $0xa0] sm:$0xff]
    %v1659 = vld [vmem:[#allocation10 + $0xa8] sm:$0xff]
    %v1660 = vld [vmem:[#allocation10 + $0xb0] sm:$0xff]
    %v1661 = vld [vmem:[#allocation10 + $0xb8] sm:$0xff]
    %v1662 = vld [vmem:[#allocation10 + $0xc0] sm:$0xff]
    %v1663 = vld [vmem:[#allocation10 + $0xc8] sm:$0xff]
    %v1664 = vld [vmem:[#allocation10 + $0xd0] sm:$0xff]
    %v1665 = vld [vmem:[#allocation10 + $0xd8] sm:$0xff]
    %v1666 = vld [vmem:[#allocation10 + $0xe0] sm:$0xff]
    %v1667 = vld [vmem:[#allocation10 + $0xe8] sm:$0xff]
    %v1668 = vld [vmem:[#allocation10 + $0xf0] sm:$0xff]
    %v1669 = vld [vmem:[#allocation10 + $0xf8] sm:$0xff]
    %v1670 = vld [vmem:[#allocation10 + $0x100] sm:$0xff]
    %v1671 = vld [vmem:[#allocation10 + $0x108] sm:$0xff]
    %v1672 = vld [vmem:[#allocation10 + $0x110] sm:$0xff]
    %v1673 = vld [vmem:[#allocation10 + $0x118] sm:$0xff]
    %v1674 = vld [vmem:[#allocation10 + $0x120] sm:$0xff]
    %v1675 = vld [vmem:[#allocation10 + $0x128] sm:$0xff]
    %v1676 = vld [vmem:[#allocation10 + $0x130] sm:$0xff]
    %v1677 = vld [vmem:[#allocation10 + $0x138] sm:$0xff]
    %v1678 = vld [vmem:[#allocation10 + $0x140] sm:$0xff]
    %v1679 = vld [vmem:[#allocation10 + $0x148] sm:$0xff]
    %v1680 = vld [vmem:[#allocation10 + $0x150] sm:$0xff]
    %v1681 = vld [vmem:[#allocation10 + $0x158] sm:$0xff]
    %v1682 = vld [vmem:[#allocation10 + $0x160] sm:$0xff]
    %v1683 = vld [vmem:[#allocation10 + $0x168] sm:$0xff]
    %v1684 = vld [vmem:[#allocation10 + $0x170] sm:$0xff]
    %v1685 = vld [vmem:[#allocation10 + $0x178] sm:$0xff]
    %v1686 = vld [vmem:[#allocation10 + $0x180] sm:$0xff]
    %v1687 = vld [vmem:[#allocation10 + $0x188] sm:$0xff]
    %v1688 = vld [vmem:[#allocation10 + $0x190] sm:$0xff]
    %v1689 = vld [vmem:[#allocation10 + $0x198] sm:$0xff]
    %v1690 = vld [vmem:[#allocation10 + $0x1a0] sm:$0xff]
    %v1691 = vld [vmem:[#allocation10 + $0x1a8] sm:$0xff]
    %v1692 = vld [vmem:[#allocation10 + $0x1b0] sm:$0xff]
    %v1693 = vld [vmem:[#allocation10 + $0x1b8] sm:$0xff]
    %v1694 = vld [vmem:[#allocation10 + $0x1c0] sm:$0xff]
    %v1695 = vld [vmem:[#allocation10 + $0x1c8] sm:$0xff]
    %v1696 = vld [vmem:[#allocation10 + $0x1d0] sm:$0xff]
    %v1697 = vld [vmem:[#allocation10 + $0x1d8] sm:$0xff]
    %v1698 = vld [vmem:[#allocation10 + $0x1e0] sm:$0xff]
    %v1699 = vld [vmem:[#allocation10 + $0x1e8] sm:$0xff]
    %v1700 = vld [vmem:[#allocation10 + $0x1f0] sm:$0xff]
    %v1701 = vld [vmem:[#allocation10 + $0x1f8] sm:$0xff]
    %s1702 = scalar_lea.vmem [#allocation4], 160
    %v1703 = vld [vmem:[%s1702] sm:$0xff]
    %v1704 = vld [vmem:[%s1702 + $0x8] sm:$0xff]
    %v1705 = vld [vmem:[%s1702 + $0x10] sm:$0xff]
    %v1706 = vld [vmem:[%s1702 + $0x18] sm:$0xff]
    %1707 = vmatprep.subr.mxu0 %v1699
    %1708 = vmatpush1.msra.mxu0 %v1698
    %1709 = vmatprep.subr.mxu0 %v1695
    %1710 = vmatpush1.msra.mxu0 %v1694
    %1711 = vmatprep.subr.mxu0 %v1691
    %1712 = vmatpush1.msra.mxu0 %v1690
    %1713 = vmatprep.subr.mxu0 %v1687
    %1714 = vmatpush1.msra.mxu0 %v1686
    %1715 = vmatprep.subr.mxu0 %v1683
    %1716 = vmatpush1.msra.mxu0 %v1682
    %1717 = vmatprep.subr.mxu0 %v1679
    %1718 = vmatpush1.msra.mxu0 %v1678
    %1719 = vmatprep.subr.mxu0 %v1675
    %1720 = vmatpush1.msra.mxu0 %v1674
    %1721 = vmatprep.subr.mxu0 %v1671
    %1722 = vmatpush1.msra.mxu0 %v1670
    %1723 = vmatprep.subr.mxu0 %v1667
    %1724 = vmatpush1.msra.mxu0 %v1666
    %1725 = vmatprep.subr.mxu0 %v1663
    %1726 = vmatpush1.msra.mxu0 %v1662
    %1727 = vmatprep.subr.mxu0 %v1659
    %1728 = vmatpush1.msra.mxu0 %v1658
    %1729 = vmatprep.subr.mxu0 %v1655
    %1730 = vmatpush1.msra.mxu0 %v1654
    %1731 = vmatprep.subr.mxu0 %v1651
    %1732 = vmatpush1.msra.mxu0 %v1650
    %1733 = vmatprep.subr.mxu0 %v1647
    %1734 = vmatpush1.msra.mxu0 %v1646
    %1735 = vmatprep.subr.mxu0 %v1643
    %1736 = vmatpush1.msra.mxu0 %v1642
    %1737 = vmatprep.subr.mxu0 %v1639
    %1738 = vmatpush1.msra.mxu0 %v1638
    %1739 = vmatprep.subr.mxu0 0.0
    %1740 = vmatpush2.msra.mxu0 0.0
    %1741 = vmatprep.subr.mxu0 0.0
    %1742 = vmatpush2.msra.mxu0 0.0
    %1743 = vmatprep.subr.mxu0 0.0
    %1744 = vmatpush2.msra.mxu0 0.0
    %1745 = vmatprep.subr.mxu0 0.0
    %1746 = vmatpush2.msra.mxu0 0.0
    %1747 = vmatprep.subr.mxu0 0.0
    %1748 = vmatpush2.msra.mxu0 0.0
    %1749 = vmatprep.subr.mxu0 0.0
    %1750 = vmatpush2.msra.mxu0 0.0
    %1751 = vmatprep.subr.mxu0 0.0
    %1752 = vmatpush2.msra.mxu0 0.0
    %1753 = vmatprep.subr.mxu0 0.0
    %1754 = vmatpush2.msra.mxu0 0.0
    %1755 = vmatprep.subr.mxu0 0.0
    %1756 = vmatpush2.msra.mxu0 0.0
    %1757 = vmatprep.subr.mxu0 0.0
    %1758 = vmatpush2.msra.mxu0 0.0
    %1759 = vmatprep.subr.mxu0 0.0
    %1760 = vmatpush2.msra.mxu0 0.0
    %1761 = vmatprep.subr.mxu0 0.0
    %1762 = vmatpush2.msra.mxu0 0.0
    %1763 = vmatprep.subr.mxu0 0.0
    %1764 = vmatpush2.msra.mxu0 0.0
    %1765 = vmatprep.subr.mxu0 0.0
    %1766 = vmatpush2.msra.mxu0 0.0
    %1767 = vmatprep.subr.mxu0 0.0
    %1768 = vmatpush2.msra.mxu0 0.0
    %1769 = vmatprep.subr.mxu0 0.0
    %1770 = vmatpush2.msra.mxu0 0.0
    %1771 = vmatprep.mubr.f32.mxu0 0.0
    %1772 = vmatmul.mubr.f32.gmra.mxu0 %v1635
    %v1773 = vpop.f32.mrf.mxu0
    %v1774 = vadd.f32 %v1703, %v1773
    %v1775 = vpop.f32.mrf.mxu0
    %v1776 = vadd.f32 %v1704, %v1775
    %1777 = vdwg.mxu0
    %1778 = vmatprep.subr.mxu0 %v1701
    %1779 = vmatpush1.msra.mxu0 %v1700
    %1780 = vmatprep.subr.mxu0 %v1697
    %1781 = vmatpush1.msra.mxu0 %v1696
    %1782 = vmatprep.subr.mxu0 %v1693
    %1783 = vmatpush1.msra.mxu0 %v1692
    %1784 = vmatprep.subr.mxu0 %v1689
    %1785 = vmatpush1.msra.mxu0 %v1688
    %1786 = vmatprep.subr.mxu0 %v1685
    %1787 = vmatpush1.msra.mxu0 %v1684
    %1788 = vmatprep.subr.mxu0 %v1681
    %1789 = vmatpush1.msra.mxu0 %v1680
    %1790 = vmatprep.subr.mxu0 %v1677
    %1791 = vmatpush1.msra.mxu0 %v1676
    %1792 = vmatprep.subr.mxu0 %v1673
    %1793 = vmatpush1.msra.mxu0 %v1672
    %1794 = vmatprep.subr.mxu0 %v1669
    %1795 = vmatpush1.msra.mxu0 %v1668
    %1796 = vmatprep.subr.mxu0 %v1665
    %1797 = vmatpush1.msra.mxu0 %v1664
    %1798 = vmatprep.subr.mxu0 %v1661
    %1799 = vmatpush1.msra.mxu0 %v1660
    %1800 = vmatprep.subr.mxu0 %v1657
    %1801 = vmatpush1.msra.mxu0 %v1656
    %1802 = vmatprep.subr.mxu0 %v1653
    %1803 = vmatpush1.msra.mxu0 %v1652
    %1804 = vmatprep.subr.mxu0 %v1649
    %1805 = vmatpush1.msra.mxu0 %v1648
    %1806 = vmatprep.subr.mxu0 %v1645
    %1807 = vmatpush1.msra.mxu0 %v1644
    %1808 = vmatprep.subr.mxu0 %v1641
    %1809 = vmatpush1.msra.mxu0 %v1640
    %1810 = vmatprep.subr.mxu0 0.0
    %1811 = vmatpush2.msra.mxu0 0.0
    %1812 = vmatprep.subr.mxu0 0.0
    %1813 = vmatpush2.msra.mxu0 0.0
    %1814 = vmatprep.subr.mxu0 0.0
    %1815 = vmatpush2.msra.mxu0 0.0
    %1816 = vmatprep.subr.mxu0 0.0
    %1817 = vmatpush2.msra.mxu0 0.0
    %1818 = vmatprep.subr.mxu0 0.0
    %1819 = vmatpush2.msra.mxu0 0.0
    %1820 = vmatprep.subr.mxu0 0.0
    %1821 = vmatpush2.msra.mxu0 0.0
    %1822 = vmatprep.subr.mxu0 0.0
    %1823 = vmatpush2.msra.mxu0 0.0
    %1824 = vmatprep.subr.mxu0 0.0
    %1825 = vmatpush2.msra.mxu0 0.0
    %1826 = vmatprep.subr.mxu0 0.0
    %1827 = vmatpush2.msra.mxu0 0.0
    %1828 = vmatprep.subr.mxu0 0.0
    %1829 = vmatpush2.msra.mxu0 0.0
    %1830 = vmatprep.subr.mxu0 0.0
    %1831 = vmatpush2.msra.mxu0 0.0
    %1832 = vmatprep.subr.mxu0 0.0
    %1833 = vmatpush2.msra.mxu0 0.0
    %1834 = vmatprep.subr.mxu0 0.0
    %1835 = vmatpush2.msra.mxu0 0.0
    %1836 = vmatprep.subr.mxu0 0.0
    %1837 = vmatpush2.msra.mxu0 0.0
    %1838 = vmatprep.subr.mxu0 0.0
    %1839 = vmatpush2.msra.mxu0 0.0
    %1840 = vmatprep.subr.mxu0 0.0
    %1841 = vmatpush2.msra.mxu0 0.0
    %1842 = vmatprep.mubr.f32.mxu0 0.0
    %1843 = vmatmul.mubr.f32.gmra.mxu0 %v1635
    %v1844 = vpop.f32.mrf.mxu0
    %v1845 = vadd.f32 %v1705, %v1844
    %v1846 = vpop.f32.mrf.mxu0
    %v1847 = vadd.f32 %v1706, %v1846
    %1848 = vdwg.mxu0
    %v1849 = vxor.u32 %v1774, 2147483648
    %v1850 = vxor.u32 %v1776, 2147483648
    %v1851 = vxor.u32 %v1845, 2147483648
    %v1852 = vmul.f32 %v1849, 1.442695
    %v1853 = vpow.pop %v1852
    %v1854 = vmul.f32 %v1850, 1.442695
    %v1855 = vpow.pop %v1854
    %v1856 = vmul.f32 %v1851, 1.442695
    %v1857 = vpow.pop %v1856
    %v1858 = vadd.f32 %v1853, 1.0
    %v1859 = vadd.f32 %v1855, 1.0
    %v1860 = vadd.f32 %v1857, 1.0
    %v1861 = vrcp.pop %v1858
    %v1862 = vmul.f32 1.0, %v1861
    %v1863 = vrcp.pop %v1859
    %v1864 = vmul.f32 1.0, %v1863
    %v1865 = vrcp.pop %v1860
    %v1866 = vmul.f32 1.0, %v1865
    %v1867 = vtanh.pop %v1847
    %v1868 = vmul.f32 %v1864, %v1633
    %v1869 = vmul.f32 %v1862, %v1867
    %v1870 = vadd.f32 %v1868, %v1869
    %v1871 = vtanh.pop %v1870
    %v1872 = vmul.f32 %v1866, %v1871
    %s1873 = scalar_lea.vmem [#allocation11], 40
    %1874 = vst [vmem:[%s1873] sm:$0xff] %v1872
    %v1875 = vld [vmem:[#allocation10] sm:$0xff]
    %v1876 = vld [vmem:[#allocation10 + $0x8] sm:$0xff]
    %v1877 = vld [vmem:[#allocation10 + $0x10] sm:$0xff]
    %v1878 = vld [vmem:[#allocation10 + $0x18] sm:$0xff]
    %v1879 = vld [vmem:[#allocation10 + $0x20] sm:$0xff]
    %v1880 = vld [vmem:[#allocation10 + $0x28] sm:$0xff]
    %v1881 = vld [vmem:[#allocation10 + $0x30] sm:$0xff]
    %v1882 = vld [vmem:[#allocation10 + $0x38] sm:$0xff]
    %v1883 = vld [vmem:[#allocation10 + $0x40] sm:$0xff]
    %v1884 = vld [vmem:[#allocation10 + $0x48] sm:$0xff]
    %v1885 = vld [vmem:[#allocation10 + $0x50] sm:$0xff]
    %v1886 = vld [vmem:[#allocation10 + $0x58] sm:$0xff]
    %v1887 = vld [vmem:[#allocation10 + $0x60] sm:$0xff]
    %v1888 = vld [vmem:[#allocation10 + $0x68] sm:$0xff]
    %v1889 = vld [vmem:[#allocation10 + $0x70] sm:$0xff]
    %v1890 = vld [vmem:[#allocation10 + $0x78] sm:$0xff]
    %v1891 = vld [vmem:[#allocation10 + $0x80] sm:$0xff]
    %v1892 = vld [vmem:[#allocation10 + $0x88] sm:$0xff]
    %v1893 = vld [vmem:[#allocation10 + $0x90] sm:$0xff]
    %v1894 = vld [vmem:[#allocation10 + $0x98] sm:$0xff]
    %v1895 = vld [vmem:[#allocation10 + $0xa0] sm:$0xff]
    %v1896 = vld [vmem:[#allocation10 + $0xa8] sm:$0xff]
    %v1897 = vld [vmem:[#allocation10 + $0xb0] sm:$0xff]
    %v1898 = vld [vmem:[#allocation10 + $0xb8] sm:$0xff]
    %v1899 = vld [vmem:[#allocation10 + $0xc0] sm:$0xff]
    %v1900 = vld [vmem:[#allocation10 + $0xc8] sm:$0xff]
    %v1901 = vld [vmem:[#allocation10 + $0xd0] sm:$0xff]
    %v1902 = vld [vmem:[#allocation10 + $0xd8] sm:$0xff]
    %v1903 = vld [vmem:[#allocation10 + $0xe0] sm:$0xff]
    %v1904 = vld [vmem:[#allocation10 + $0xe8] sm:$0xff]
    %v1905 = vld [vmem:[#allocation10 + $0xf0] sm:$0xff]
    %v1906 = vld [vmem:[#allocation10 + $0xf8] sm:$0xff]
    %v1907 = vld [vmem:[#allocation10 + $0x100] sm:$0xff]
    %v1908 = vld [vmem:[#allocation10 + $0x108] sm:$0xff]
    %v1909 = vld [vmem:[#allocation10 + $0x110] sm:$0xff]
    %v1910 = vld [vmem:[#allocation10 + $0x118] sm:$0xff]
    %v1911 = vld [vmem:[#allocation10 + $0x120] sm:$0xff]
    %v1912 = vld [vmem:[#allocation10 + $0x128] sm:$0xff]
    %v1913 = vld [vmem:[#allocation10 + $0x130] sm:$0xff]
    %v1914 = vld [vmem:[#allocation10 + $0x138] sm:$0xff]
    %v1915 = vld [vmem:[#allocation10 + $0x140] sm:$0xff]
    %v1916 = vld [vmem:[#allocation10 + $0x148] sm:$0xff]
    %v1917 = vld [vmem:[#allocation10 + $0x150] sm:$0xff]
    %v1918 = vld [vmem:[#allocation10 + $0x158] sm:$0xff]
    %v1919 = vld [vmem:[#allocation10 + $0x160] sm:$0xff]
    %v1920 = vld [vmem:[#allocation10 + $0x168] sm:$0xff]
    %v1921 = vld [vmem:[#allocation10 + $0x170] sm:$0xff]
    %v1922 = vld [vmem:[#allocation10 + $0x178] sm:$0xff]
    %v1923 = vld [vmem:[#allocation10 + $0x180] sm:$0xff]
    %v1924 = vld [vmem:[#allocation10 + $0x188] sm:$0xff]
    %v1925 = vld [vmem:[#allocation10 + $0x190] sm:$0xff]
    %v1926 = vld [vmem:[#allocation10 + $0x198] sm:$0xff]
    %v1927 = vld [vmem:[#allocation10 + $0x1a0] sm:$0xff]
    %v1928 = vld [vmem:[#allocation10 + $0x1a8] sm:$0xff]
    %v1929 = vld [vmem:[#allocation10 + $0x1b0] sm:$0xff]
    %v1930 = vld [vmem:[#allocation10 + $0x1b8] sm:$0xff]
    %v1931 = vld [vmem:[#allocation10 + $0x1c0] sm:$0xff]
    %v1932 = vld [vmem:[#allocation10 + $0x1c8] sm:$0xff]
    %v1933 = vld [vmem:[#allocation10 + $0x1d0] sm:$0xff]
    %v1934 = vld [vmem:[#allocation10 + $0x1d8] sm:$0xff]
    %v1935 = vld [vmem:[#allocation10 + $0x1e0] sm:$0xff]
    %v1936 = vld [vmem:[#allocation10 + $0x1e8] sm:$0xff]
    %v1937 = vld [vmem:[#allocation10 + $0x1f0] sm:$0xff]
    %v1938 = vld [vmem:[#allocation10 + $0x1f8] sm:$0xff]
    %s1939 = scalar_lea.vmem [#allocation4], 192
    %v1940 = vld [vmem:[%s1939] sm:$0xff]
    %v1941 = vld [vmem:[%s1939 + $0x8] sm:$0xff]
    %v1942 = vld [vmem:[%s1939 + $0x10] sm:$0xff]
    %v1943 = vld [vmem:[%s1939 + $0x18] sm:$0xff]
    %1944 = vmatprep.subr.mxu0 %v1936
    %1945 = vmatpush1.msra.mxu0 %v1935
    %1946 = vmatprep.subr.mxu0 %v1932
    %1947 = vmatpush1.msra.mxu0 %v1931
    %1948 = vmatprep.subr.mxu0 %v1928
    %1949 = vmatpush1.msra.mxu0 %v1927
    %1950 = vmatprep.subr.mxu0 %v1924
    %1951 = vmatpush1.msra.mxu0 %v1923
    %1952 = vmatprep.subr.mxu0 %v1920
    %1953 = vmatpush1.msra.mxu0 %v1919
    %1954 = vmatprep.subr.mxu0 %v1916
    %1955 = vmatpush1.msra.mxu0 %v1915
    %1956 = vmatprep.subr.mxu0 %v1912
    %1957 = vmatpush1.msra.mxu0 %v1911
    %1958 = vmatprep.subr.mxu0 %v1908
    %1959 = vmatpush1.msra.mxu0 %v1907
    %1960 = vmatprep.subr.mxu0 %v1904
    %1961 = vmatpush1.msra.mxu0 %v1903
    %1962 = vmatprep.subr.mxu0 %v1900
    %1963 = vmatpush1.msra.mxu0 %v1899
    %1964 = vmatprep.subr.mxu0 %v1896
    %1965 = vmatpush1.msra.mxu0 %v1895
    %1966 = vmatprep.subr.mxu0 %v1892
    %1967 = vmatpush1.msra.mxu0 %v1891
    %1968 = vmatprep.subr.mxu0 %v1888
    %1969 = vmatpush1.msra.mxu0 %v1887
    %1970 = vmatprep.subr.mxu0 %v1884
    %1971 = vmatpush1.msra.mxu0 %v1883
    %1972 = vmatprep.subr.mxu0 %v1880
    %1973 = vmatpush1.msra.mxu0 %v1879
    %1974 = vmatprep.subr.mxu0 %v1876
    %1975 = vmatpush1.msra.mxu0 %v1875
    %1976 = vmatprep.subr.mxu0 0.0
    %1977 = vmatpush2.msra.mxu0 0.0
    %1978 = vmatprep.subr.mxu0 0.0
    %1979 = vmatpush2.msra.mxu0 0.0
    %1980 = vmatprep.subr.mxu0 0.0
    %1981 = vmatpush2.msra.mxu0 0.0
    %1982 = vmatprep.subr.mxu0 0.0
    %1983 = vmatpush2.msra.mxu0 0.0
    %1984 = vmatprep.subr.mxu0 0.0
    %1985 = vmatpush2.msra.mxu0 0.0
    %1986 = vmatprep.subr.mxu0 0.0
    %1987 = vmatpush2.msra.mxu0 0.0
    %1988 = vmatprep.subr.mxu0 0.0
    %1989 = vmatpush2.msra.mxu0 0.0
    %1990 = vmatprep.subr.mxu0 0.0
    %1991 = vmatpush2.msra.mxu0 0.0
    %1992 = vmatprep.subr.mxu0 0.0
    %1993 = vmatpush2.msra.mxu0 0.0
    %1994 = vmatprep.subr.mxu0 0.0
    %1995 = vmatpush2.msra.mxu0 0.0
    %1996 = vmatprep.subr.mxu0 0.0
    %1997 = vmatpush2.msra.mxu0 0.0
    %1998 = vmatprep.subr.mxu0 0.0
    %1999 = vmatpush2.msra.mxu0 0.0
    %2000 = vmatprep.subr.mxu0 0.0
    %2001 = vmatpush2.msra.mxu0 0.0
    %2002 = vmatprep.subr.mxu0 0.0
    %2003 = vmatpush2.msra.mxu0 0.0
    %2004 = vmatprep.subr.mxu0 0.0
    %2005 = vmatpush2.msra.mxu0 0.0
    %2006 = vmatprep.subr.mxu0 0.0
    %2007 = vmatpush2.msra.mxu0 0.0
    %2008 = vmatprep.mubr.f32.mxu0 0.0
    %2009 = vmatmul.mubr.f32.gmra.mxu0 %v1872
    %v2010 = vpop.f32.mrf.mxu0
    %v2011 = vadd.f32 %v1940, %v2010
    %v2012 = vpop.f32.mrf.mxu0
    %v2013 = vadd.f32 %v1941, %v2012
    %2014 = vdwg.mxu0
    %2015 = vmatprep.subr.mxu0 %v1938
    %2016 = vmatpush1.msra.mxu0 %v1937
    %2017 = vmatprep.subr.mxu0 %v1934
    %2018 = vmatpush1.msra.mxu0 %v1933
    %2019 = vmatprep.subr.mxu0 %v1930
    %2020 = vmatpush1.msra.mxu0 %v1929
    %2021 = vmatprep.subr.mxu0 %v1926
    %2022 = vmatpush1.msra.mxu0 %v1925
    %2023 = vmatprep.subr.mxu0 %v1922
    %2024 = vmatpush1.msra.mxu0 %v1921
    %2025 = vmatprep.subr.mxu0 %v1918
    %2026 = vmatpush1.msra.mxu0 %v1917
    %2027 = vmatprep.subr.mxu0 %v1914
    %2028 = vmatpush1.msra.mxu0 %v1913
    %2029 = vmatprep.subr.mxu0 %v1910
    %2030 = vmatpush1.msra.mxu0 %v1909
    %2031 = vmatprep.subr.mxu0 %v1906
    %2032 = vmatpush1.msra.mxu0 %v1905
    %2033 = vmatprep.subr.mxu0 %v1902
    %2034 = vmatpush1.msra.mxu0 %v1901
    %2035 = vmatprep.subr.mxu0 %v1898
    %2036 = vmatpush1.msra.mxu0 %v1897
    %2037 = vmatprep.subr.mxu0 %v1894
    %2038 = vmatpush1.msra.mxu0 %v1893
    %2039 = vmatprep.subr.mxu0 %v1890
    %2040 = vmatpush1.msra.mxu0 %v1889
    %2041 = vmatprep.subr.mxu0 %v1886
    %2042 = vmatpush1.msra.mxu0 %v1885
    %2043 = vmatprep.subr.mxu0 %v1882
    %2044 = vmatpush1.msra.mxu0 %v1881
    %2045 = vmatprep.subr.mxu0 %v1878
    %2046 = vmatpush1.msra.mxu0 %v1877
    %2047 = vmatprep.subr.mxu0 0.0
    %2048 = vmatpush2.msra.mxu0 0.0
    %2049 = vmatprep.subr.mxu0 0.0
    %2050 = vmatpush2.msra.mxu0 0.0
    %2051 = vmatprep.subr.mxu0 0.0
    %2052 = vmatpush2.msra.mxu0 0.0
    %2053 = vmatprep.subr.mxu0 0.0
    %2054 = vmatpush2.msra.mxu0 0.0
    %2055 = vmatprep.subr.mxu0 0.0
    %2056 = vmatpush2.msra.mxu0 0.0
    %2057 = vmatprep.subr.mxu0 0.0
    %2058 = vmatpush2.msra.mxu0 0.0
    %2059 = vmatprep.subr.mxu0 0.0
    %2060 = vmatpush2.msra.mxu0 0.0
    %2061 = vmatprep.subr.mxu0 0.0
    %2062 = vmatpush2.msra.mxu0 0.0
    %2063 = vmatprep.subr.mxu0 0.0
    %2064 = vmatpush2.msra.mxu0 0.0
    %2065 = vmatprep.subr.mxu0 0.0
    %2066 = vmatpush2.msra.mxu0 0.0
    %2067 = vmatprep.subr.mxu0 0.0
    %2068 = vmatpush2.msra.mxu0 0.0
    %2069 = vmatprep.subr.mxu0 0.0
    %2070 = vmatpush2.msra.mxu0 0.0
    %2071 = vmatprep.subr.mxu0 0.0
    %2072 = vmatpush2.msra.mxu0 0.0
    %2073 = vmatprep.subr.mxu0 0.0
    %2074 = vmatpush2.msra.mxu0 0.0
    %2075 = vmatprep.subr.mxu0 0.0
    %2076 = vmatpush2.msra.mxu0 0.0
    %2077 = vmatprep.subr.mxu0 0.0
    %2078 = vmatpush2.msra.mxu0 0.0
    %2079 = vmatprep.mubr.f32.mxu0 0.0
    %2080 = vmatmul.mubr.f32.gmra.mxu0 %v1872
    %v2081 = vpop.f32.mrf.mxu0
    %v2082 = vadd.f32 %v1942, %v2081
    %v2083 = vpop.f32.mrf.mxu0
    %v2084 = vadd.f32 %v1943, %v2083
    %2085 = vdwg.mxu0
    %v2086 = vxor.u32 %v2011, 2147483648
    %v2087 = vxor.u32 %v2013, 2147483648
    %v2088 = vxor.u32 %v2082, 2147483648
    %v2089 = vmul.f32 %v2086, 1.442695
    %v2090 = vpow.pop %v2089
    %v2091 = vmul.f32 %v2087, 1.442695
    %v2092 = vpow.pop %v2091
    %v2093 = vmul.f32 %v2088, 1.442695
    %v2094 = vpow.pop %v2093
    %v2095 = vadd.f32 %v2090, 1.0
    %v2096 = vadd.f32 %v2092, 1.0
    %v2097 = vadd.f32 %v2094, 1.0
    %v2098 = vrcp.pop %v2095
    %v2099 = vmul.f32 1.0, %v2098
    %v2100 = vrcp.pop %v2096
    %v2101 = vmul.f32 1.0, %v2100
    %v2102 = vrcp.pop %v2097
    %v2103 = vmul.f32 1.0, %v2102
    %v2104 = vtanh.pop %v2084
    %v2105 = vmul.f32 %v2101, %v1870
    %v2106 = vmul.f32 %v2099, %v2104
    %v2107 = vadd.f32 %v2105, %v2106
    %v2108 = vtanh.pop %v2107
    %v2109 = vmul.f32 %v2103, %v2108
    %s2110 = scalar_lea.vmem [#allocation11], 48
    %2111 = vst [vmem:[%s2110] sm:$0xff] %v2109
    %v2112 = vld [vmem:[#allocation10] sm:$0xff]
    %v2113 = vld [vmem:[#allocation10 + $0x8] sm:$0xff]
    %v2114 = vld [vmem:[#allocation10 + $0x10] sm:$0xff]
    %v2115 = vld [vmem:[#allocation10 + $0x18] sm:$0xff]
    %v2116 = vld [vmem:[#allocation10 + $0x20] sm:$0xff]
    %v2117 = vld [vmem:[#allocation10 + $0x28] sm:$0xff]
    %v2118 = vld [vmem:[#allocation10 + $0x30] sm:$0xff]
    %v2119 = vld [vmem:[#allocation10 + $0x38] sm:$0xff]
    %v2120 = vld [vmem:[#allocation10 + $0x40] sm:$0xff]
    %v2121 = vld [vmem:[#allocation10 + $0x48] sm:$0xff]
    %v2122 = vld [vmem:[#allocation10 + $0x50] sm:$0xff]
    %v2123 = vld [vmem:[#allocation10 + $0x58] sm:$0xff]
    %v2124 = vld [vmem:[#allocation10 + $0x60] sm:$0xff]
    %v2125 = vld [vmem:[#allocation10 + $0x68] sm:$0xff]
    %v2126 = vld [vmem:[#allocation10 + $0x70] sm:$0xff]
    %v2127 = vld [vmem:[#allocation10 + $0x78] sm:$0xff]
    %v2128 = vld [vmem:[#allocation10 + $0x80] sm:$0xff]
    %v2129 = vld [vmem:[#allocation10 + $0x88] sm:$0xff]
    %v2130 = vld [vmem:[#allocation10 + $0x90] sm:$0xff]
    %v2131 = vld [vmem:[#allocation10 + $0x98] sm:$0xff]
    %v2132 = vld [vmem:[#allocation10 + $0xa0] sm:$0xff]
    %v2133 = vld [vmem:[#allocation10 + $0xa8] sm:$0xff]
    %v2134 = vld [vmem:[#allocation10 + $0xb0] sm:$0xff]
    %v2135 = vld [vmem:[#allocation10 + $0xb8] sm:$0xff]
    %v2136 = vld [vmem:[#allocation10 + $0xc0] sm:$0xff]
    %v2137 = vld [vmem:[#allocation10 + $0xc8] sm:$0xff]
    %v2138 = vld [vmem:[#allocation10 + $0xd0] sm:$0xff]
    %v2139 = vld [vmem:[#allocation10 + $0xd8] sm:$0xff]
    %v2140 = vld [vmem:[#allocation10 + $0xe0] sm:$0xff]
    %v2141 = vld [vmem:[#allocation10 + $0xe8] sm:$0xff]
    %v2142 = vld [vmem:[#allocation10 + $0xf0] sm:$0xff]
    %v2143 = vld [vmem:[#allocation10 + $0xf8] sm:$0xff]
    %v2144 = vld [vmem:[#allocation10 + $0x100] sm:$0xff]
    %v2145 = vld [vmem:[#allocation10 + $0x108] sm:$0xff]
    %v2146 = vld [vmem:[#allocation10 + $0x110] sm:$0xff]
    %v2147 = vld [vmem:[#allocation10 + $0x118] sm:$0xff]
    %v2148 = vld [vmem:[#allocation10 + $0x120] sm:$0xff]
    %v2149 = vld [vmem:[#allocation10 + $0x128] sm:$0xff]
    %v2150 = vld [vmem:[#allocation10 + $0x130] sm:$0xff]
    %v2151 = vld [vmem:[#allocation10 + $0x138] sm:$0xff]
    %v2152 = vld [vmem:[#allocation10 + $0x140] sm:$0xff]
    %v2153 = vld [vmem:[#allocation10 + $0x148] sm:$0xff]
    %v2154 = vld [vmem:[#allocation10 + $0x150] sm:$0xff]
    %v2155 = vld [vmem:[#allocation10 + $0x158] sm:$0xff]
    %v2156 = vld [vmem:[#allocation10 + $0x160] sm:$0xff]
    %v2157 = vld [vmem:[#allocation10 + $0x168] sm:$0xff]
    %v2158 = vld [vmem:[#allocation10 + $0x170] sm:$0xff]
    %v2159 = vld [vmem:[#allocation10 + $0x178] sm:$0xff]
    %v2160 = vld [vmem:[#allocation10 + $0x180] sm:$0xff]
    %v2161 = vld [vmem:[#allocation10 + $0x188] sm:$0xff]
    %v2162 = vld [vmem:[#allocation10 + $0x190] sm:$0xff]
    %v2163 = vld [vmem:[#allocation10 + $0x198] sm:$0xff]
    %v2164 = vld [vmem:[#allocation10 + $0x1a0] sm:$0xff]
    %v2165 = vld [vmem:[#allocation10 + $0x1a8] sm:$0xff]
    %v2166 = vld [vmem:[#allocation10 + $0x1b0] sm:$0xff]
    %v2167 = vld [vmem:[#allocation10 + $0x1b8] sm:$0xff]
    %v2168 = vld [vmem:[#allocation10 + $0x1c0] sm:$0xff]
    %v2169 = vld [vmem:[#allocation10 + $0x1c8] sm:$0xff]
    %v2170 = vld [vmem:[#allocation10 + $0x1d0] sm:$0xff]
    %v2171 = vld [vmem:[#allocation10 + $0x1d8] sm:$0xff]
    %v2172 = vld [vmem:[#allocation10 + $0x1e0] sm:$0xff]
    %v2173 = vld [vmem:[#allocation10 + $0x1e8] sm:$0xff]
    %v2174 = vld [vmem:[#allocation10 + $0x1f0] sm:$0xff]
    %v2175 = vld [vmem:[#allocation10 + $0x1f8] sm:$0xff]
    %s2176 = scalar_lea.vmem [#allocation4], 224
    %v2177 = vld [vmem:[%s2176] sm:$0xff]
    %v2178 = vld [vmem:[%s2176 + $0x8] sm:$0xff]
    %v2179 = vld [vmem:[%s2176 + $0x10] sm:$0xff]
    %v2180 = vld [vmem:[%s2176 + $0x18] sm:$0xff]
    %2181 = vmatprep.subr.mxu0 %v2173
    %2182 = vmatpush1.msra.mxu0 %v2172
    %2183 = vmatprep.subr.mxu0 %v2169
    %2184 = vmatpush1.msra.mxu0 %v2168
    %2185 = vmatprep.subr.mxu0 %v2165
    %2186 = vmatpush1.msra.mxu0 %v2164
    %2187 = vmatprep.subr.mxu0 %v2161
    %2188 = vmatpush1.msra.mxu0 %v2160
    %2189 = vmatprep.subr.mxu0 %v2157
    %2190 = vmatpush1.msra.mxu0 %v2156
    %2191 = vmatprep.subr.mxu0 %v2153
    %2192 = vmatpush1.msra.mxu0 %v2152
    %2193 = vmatprep.subr.mxu0 %v2149
    %2194 = vmatpush1.msra.mxu0 %v2148
    %2195 = vmatprep.subr.mxu0 %v2145
    %2196 = vmatpush1.msra.mxu0 %v2144
    %2197 = vmatprep.subr.mxu0 %v2141
    %2198 = vmatpush1.msra.mxu0 %v2140
    %2199 = vmatprep.subr.mxu0 %v2137
    %2200 = vmatpush1.msra.mxu0 %v2136
    %2201 = vmatprep.subr.mxu0 %v2133
    %2202 = vmatpush1.msra.mxu0 %v2132
    %2203 = vmatprep.subr.mxu0 %v2129
    %2204 = vmatpush1.msra.mxu0 %v2128
    %2205 = vmatprep.subr.mxu0 %v2125
    %2206 = vmatpush1.msra.mxu0 %v2124
    %2207 = vmatprep.subr.mxu0 %v2121
    %2208 = vmatpush1.msra.mxu0 %v2120
    %2209 = vmatprep.subr.mxu0 %v2117
    %2210 = vmatpush1.msra.mxu0 %v2116
    %2211 = vmatprep.subr.mxu0 %v2113
    %2212 = vmatpush1.msra.mxu0 %v2112
    %2213 = vmatprep.subr.mxu0 0.0
    %2214 = vmatpush2.msra.mxu0 0.0
    %2215 = vmatprep.subr.mxu0 0.0
    %2216 = vmatpush2.msra.mxu0 0.0
    %2217 = vmatprep.subr.mxu0 0.0
    %2218 = vmatpush2.msra.mxu0 0.0
    %2219 = vmatprep.subr.mxu0 0.0
    %2220 = vmatpush2.msra.mxu0 0.0
    %2221 = vmatprep.subr.mxu0 0.0
    %2222 = vmatpush2.msra.mxu0 0.0
    %2223 = vmatprep.subr.mxu0 0.0
    %2224 = vmatpush2.msra.mxu0 0.0
    %2225 = vmatprep.subr.mxu0 0.0
    %2226 = vmatpush2.msra.mxu0 0.0
    %2227 = vmatprep.subr.mxu0 0.0
    %2228 = vmatpush2.msra.mxu0 0.0
    %2229 = vmatprep.subr.mxu0 0.0
    %2230 = vmatpush2.msra.mxu0 0.0
    %2231 = vmatprep.subr.mxu0 0.0
    %2232 = vmatpush2.msra.mxu0 0.0
    %2233 = vmatprep.subr.mxu0 0.0
    %2234 = vmatpush2.msra.mxu0 0.0
    %2235 = vmatprep.subr.mxu0 0.0
    %2236 = vmatpush2.msra.mxu0 0.0
    %2237 = vmatprep.subr.mxu0 0.0
    %2238 = vmatpush2.msra.mxu0 0.0
    %2239 = vmatprep.subr.mxu0 0.0
    %2240 = vmatpush2.msra.mxu0 0.0
    %2241 = vmatprep.subr.mxu0 0.0
    %2242 = vmatpush2.msra.mxu0 0.0
    %2243 = vmatprep.subr.mxu0 0.0
    %2244 = vmatpush2.msra.mxu0 0.0
    %2245 = vmatprep.mubr.f32.mxu0 0.0
    %2246 = vmatmul.mubr.f32.gmra.mxu0 %v2109
    %v2247 = vpop.f32.mrf.mxu0
    %v2248 = vadd.f32 %v2177, %v2247
    %v2249 = vpop.f32.mrf.mxu0
    %v2250 = vadd.f32 %v2178, %v2249
    %2251 = vdwg.mxu0
    %2252 = vmatprep.subr.mxu0 %v2175
    %2253 = vmatpush1.msra.mxu0 %v2174
    %2254 = vmatprep.subr.mxu0 %v2171
    %2255 = vmatpush1.msra.mxu0 %v2170
    %2256 = vmatprep.subr.mxu0 %v2167
    %2257 = vmatpush1.msra.mxu0 %v2166
    %2258 = vmatprep.subr.mxu0 %v2163
    %2259 = vmatpush1.msra.mxu0 %v2162
    %2260 = vmatprep.subr.mxu0 %v2159
    %2261 = vmatpush1.msra.mxu0 %v2158
    %2262 = vmatprep.subr.mxu0 %v2155
    %2263 = vmatpush1.msra.mxu0 %v2154
    %2264 = vmatprep.subr.mxu0 %v2151
    %2265 = vmatpush1.msra.mxu0 %v2150
    %2266 = vmatprep.subr.mxu0 %v2147
    %2267 = vmatpush1.msra.mxu0 %v2146
    %2268 = vmatprep.subr.mxu0 %v2143
    %2269 = vmatpush1.msra.mxu0 %v2142
    %2270 = vmatprep.subr.mxu0 %v2139
    %2271 = vmatpush1.msra.mxu0 %v2138
    %2272 = vmatprep.subr.mxu0 %v2135
    %2273 = vmatpush1.msra.mxu0 %v2134
    %2274 = vmatprep.subr.mxu0 %v2131
    %2275 = vmatpush1.msra.mxu0 %v2130
    %2276 = vmatprep.subr.mxu0 %v2127
    %2277 = vmatpush1.msra.mxu0 %v2126
    %2278 = vmatprep.subr.mxu0 %v2123
    %2279 = vmatpush1.msra.mxu0 %v2122
    %2280 = vmatprep.subr.mxu0 %v2119
    %2281 = vmatpush1.msra.mxu0 %v2118
    %2282 = vmatprep.subr.mxu0 %v2115
    %2283 = vmatpush1.msra.mxu0 %v2114
    %2284 = vmatprep.subr.mxu0 0.0
    %2285 = vmatpush2.msra.mxu0 0.0
    %2286 = vmatprep.subr.mxu0 0.0
    %2287 = vmatpush2.msra.mxu0 0.0
    %2288 = vmatprep.subr.mxu0 0.0
    %2289 = vmatpush2.msra.mxu0 0.0
    %2290 = vmatprep.subr.mxu0 0.0
    %2291 = vmatpush2.msra.mxu0 0.0
    %2292 = vmatprep.subr.mxu0 0.0
    %2293 = vmatpush2.msra.mxu0 0.0
    %2294 = vmatprep.subr.mxu0 0.0
    %2295 = vmatpush2.msra.mxu0 0.0
    %2296 = vmatprep.subr.mxu0 0.0
    %2297 = vmatpush2.msra.mxu0 0.0
    %2298 = vmatprep.subr.mxu0 0.0
    %2299 = vmatpush2.msra.mxu0 0.0
    %2300 = vmatprep.subr.mxu0 0.0
    %2301 = vmatpush2.msra.mxu0 0.0
    %2302 = vmatprep.subr.mxu0 0.0
    %2303 = vmatpush2.msra.mxu0 0.0
    %2304 = vmatprep.subr.mxu0 0.0
    %2305 = vmatpush2.msra.mxu0 0.0
    %2306 = vmatprep.subr.mxu0 0.0
    %2307 = vmatpush2.msra.mxu0 0.0
    %2308 = vmatprep.subr.mxu0 0.0
    %2309 = vmatpush2.msra.mxu0 0.0
    %2310 = vmatprep.subr.mxu0 0.0
    %2311 = vmatpush2.msra.mxu0 0.0
    %2312 = vmatprep.subr.mxu0 0.0
    %2313 = vmatpush2.msra.mxu0 0.0
    %2314 = vmatprep.subr.mxu0 0.0
    %2315 = vmatpush2.msra.mxu0 0.0
    %2316 = vmatprep.mubr.f32.mxu0 0.0
    %2317 = vmatmul.mubr.f32.gmra.mxu0 %v2109
    %v2318 = vpop.f32.mrf.mxu0
    %v2319 = vadd.f32 %v2179, %v2318
    %v2320 = vpop.f32.mrf.mxu0
    %v2321 = vadd.f32 %v2180, %v2320
    %2322 = vdwg.mxu0
    %v2323 = vxor.u32 %v2248, 2147483648
    %v2324 = vxor.u32 %v2250, 2147483648
    %v2325 = vxor.u32 %v2319, 2147483648
    %v2326 = vmul.f32 %v2323, 1.442695
    %v2327 = vpow.pop %v2326
    %v2328 = vmul.f32 %v2324, 1.442695
    %v2329 = vpow.pop %v2328
    %v2330 = vmul.f32 %v2325, 1.442695
    %v2331 = vpow.pop %v2330
    %v2332 = vadd.f32 %v2327, 1.0
    %v2333 = vadd.f32 %v2329, 1.0
    %v2334 = vadd.f32 %v2331, 1.0
    %v2335 = vrcp.pop %v2332
    %v2336 = vmul.f32 1.0, %v2335
    %v2337 = vrcp.pop %v2333
    %v2338 = vmul.f32 1.0, %v2337
    %v2339 = vrcp.pop %v2334
    %v2340 = vmul.f32 1.0, %v2339
    %v2341 = vtanh.pop %v2321
    %v2342 = vmul.f32 %v2338, %v2107
    %v2343 = vmul.f32 %v2336, %v2341
    %v2344 = vadd.f32 %v2342, %v2343
    %v2345 = vtanh.pop %v2344
    %v2346 = vmul.f32 %v2340, %v2345
    %s2347 = scalar_lea.vmem [#allocation11], 56
    %2348 = vst [vmem:[%s2347] sm:$0xff] %v2346
    %2349 = vst [vmem:[#allocation2] sm:$0xff] %v2346
    %2350 = vst [vmem:[#allocation3] sm:$0xff] %v2344
    // Predicated region
    $region34: #{tpu_custom_call.1} parent=1 // pred_check
      %p2351 = pneg %p63
    $region35: #{tpu_custom_call.1} parent=1 // pred_check_branch
      %2353 = sbr.rel (%p2351) target = $region37
    $region36: #{tpu_custom_call.1} parent=1 // pred_region
      %v2354 = vld [vmem:[#allocation2] sm:$0xff]
      %2355 = vst [vmem:[#allocation12] sm:$0xff] %v2354
      %v2356 = vld [vmem:[#allocation3] sm:$0xff]
      %2357 = vst [vmem:[#allocation14] sm:$0xff] %v2356
    $region37: #{tpu_custom_call.1} parent=1 // pred_fallthru
      _
    // Predicated region
    $region38: #{tpu_custom_call.1} parent=1 // pred_check
      _
    $region39: #{tpu_custom_call.1} parent=1 // pred_check_branch
      %2359 = sbr.rel (0) target = $region41
    $region40: #{tpu_custom_call.1} parent=1 // pred_region
      %s2361 = ssub.s32 1024, 1024
      %2362 = vsyncadd [#allocation7], %s2361
      %s2363 = sshll.u32 [#allocation11], 4
      %s2364 = int_to_ptr.vmem [resolvable:$true] %s2363
      %2369 = dma.vmem_to_hbm [thread:$0]  %s2364, 1024, %s4, [#allocation7], 128, 128, 8
    $region41: #{tpu_custom_call.1} parent=1 // pred_fallthru
      _
    // Predicated region
    $region42: #{tpu_custom_call.1} parent=1 // pred_check
      _
    $region43: #{tpu_custom_call.1} parent=1 // pred_check_branch
      %2371 = sbr.rel (0) target = $region45
    $region44: #{tpu_custom_call.1} parent=1 // pred_region
      %s2373 = ssub.s32 128, 128
      %2374 = vsyncadd [#allocation13], %s2373
      %s2376 = sshll.u32 [#allocation12], 4
      %s2377 = int_to_ptr.vmem [resolvable:$true] %s2376
      %2379 = dma.vmem_to_hbm [thread:$0]  %s2377, 128, %s5, [#allocation13]
    $region45: #{tpu_custom_call.1} parent=1 // pred_fallthru
      _
    // Predicated region
    $region46: #{tpu_custom_call.1} parent=1 // pred_check
      _
    $region47: #{tpu_custom_call.1} parent=1 // pred_check_branch
      %2381 = sbr.rel (0) target = $region49
    $region48: #{tpu_custom_call.1} parent=1 // pred_region
      %s2383 = ssub.s32 128, 128
      %2384 = vsyncadd [#allocation13], %s2383
      %s2386 = sshll.u32 [#allocation14], 4
      %s2387 = int_to_ptr.vmem [resolvable:$true] %s2386
      %2389 = dma.vmem_to_hbm [thread:$0]  %s2387, 128, %s6, [#allocation13]
    $region49: #{tpu_custom_call.1} parent=1 // pred_fallthru
      _
    // Predicated region
    $region50: #{tpu_custom_call.1} parent=1 // pred_check
      _
    $region51: #{tpu_custom_call.1} parent=1 // pred_check_branch
      %2391 = sbr.rel (0) target = $region53
    $region52: #{tpu_custom_call.1} parent=1 // pred_region
      %2392 = dma.done [#allocation7], 1024
    $region53: #{tpu_custom_call.1} parent=1 // pred_fallthru
      _
    // Predicated region
    $region54: #{tpu_custom_call.1} parent=1 // pred_check
      _
    $region55: #{tpu_custom_call.1} parent=1 // pred_check_branch
      %2394 = sbr.rel (0) target = $region57
    $region56: #{tpu_custom_call.1} parent=1 // pred_region
      %2395 = dma.done [#allocation13], 128
    $region57: #{tpu_custom_call.1} parent=1 // pred_fallthru
      _
    // Predicated region
    $region58: #{tpu_custom_call.1} parent=1 // pred_check
      _
    $region59: #{tpu_custom_call.1} parent=1 // pred_check_branch
      %2397 = sbr.rel (0) target = $region61
    $region60: #{tpu_custom_call.1} parent=1 // pred_region
      %2398 = dma.done [#allocation13], 128
    $region61: #{tpu_custom_call.1} parent=1 // pred_fallthru
      _
    %2399 = vsyncpa [#allocation6], 1
    %2400 = vsyncpa [#allocation9], 1
    %2401 = vsyncpa [#allocation7], 1
    %2402 = vsyncpa [#allocation13], 1

// kernel: tpu_custom_call.1
$region0: #{tpu_custom_call.1}
  #allocation0 [shape = 'u32[]', space=smem, size = 0x4, offset = 0x4, fixed_abs, tag = 'smem constant byte address 0x4 - core index']
  #allocation1 [shape = 'u32[144,128]{1,0:T(1,128)}', space=vmem, size = 0x12000, scoped, tag = 'internal scratch']
  #allocation2 [shape = 'f32[8,128]{1,0:T(8,128)}', space=vmem, size = 0x1000, scoped, tag = 'scratch operand']
  #allocation3 [shape = 'f32[8,128]{1,0:T(8,128)}', space=vmem, size = 0x1000, scoped, tag = 'scratch operand']
  #allocation4 [shape = 'f32[8,8,512]{2,1,0:T(8,128)}', space=vmem, size = 0x20000, scoped, tag = 'scratch operand']
  %s0 = inlined_call_operand.hbm [shape: f32[8,8,128], index: 0, kind: input, shape index: {}]
  %s1 = inlined_call_operand.hbm [shape: f32[128,512], index: 1, kind: input, shape index: {}]
  %s2 = inlined_call_operand.hbm [shape: f32[128,512], index: 2, kind: input, shape index: {}]
  %s3 = inlined_call_operand.vmem [shape: f32[1,512], index: 3, kind: input, shape index: {}]
  %s4 = inlined_call_operand.hbm [shape: f32[8,8,128], index: 4, kind: output, shape index: {0}]
  %s5 = inlined_call_operand.hbm [shape: f32[8,128], index: 5, kind: output, shape index: {1}]
  %s6 = inlined_call_operand.hbm [shape: f32[8,128], index: 6, kind: output, shape index: {2}]
  %7 = xla_tuple %s4, %s5, %s6
  %s8 = sld [smem:[#allocation0]]
  $region62: #{tpu_custom_call.1} parent=0
    _
  %s10 = ssub.s32 1, %s8
  %s11 = scalar_select 0, %s10, %s8
  $region1: #{tpu_custom_call.1} parent=0
    #allocation5 [shape = 'u8[32768]{0}', space=vmem, size = 0x8000, scoped, tag = 'input window, operand 0, single buffered']
    #allocation6 [shape = 's32[1]{0}', space=sflag, size = 0x4, scoped, tag = 'scoped memory for tpu_custom_call.1']
    #allocation7 [shape = 's32[1]{0}', space=sflag, size = 0x4, scoped, tag = 'scoped memory for tpu_custom_call.1']
    #allocation8 [shape = 'u8[262144]{0}', space=vmem, size = 0x40000, scoped, tag = 'input window, operand 1, single buffered']
    #allocation9 [shape = 's32[1]{0}', space=sflag, size = 0x4, scoped, tag = 'scoped memory for tpu_custom_call.1']
    #allocation10 [shape = 'u8[262144]{0}', space=vmem, size = 0x40000, scoped, tag = 'input window, operand 2, single buffered']
    #allocation11 [shape = 'u8[32768]{0}', space=vmem, size = 0x8000, scoped, tag = 'output window, operand 0, single buffered']
    #allocation12 [shape = 'u8[4096]{0}', space=vmem, size = 0x1000, scoped, tag = 'output window, operand 1, single buffered']
    #allocation13 [shape = 's32[1]{0}', space=sflag, size = 0x4, scoped, tag = 'scoped memory for tpu_custom_call.1']
    #allocation14 [shape = 'u8[4096]{0}', space=vmem, size = 0x1000, scoped, tag = 'output window, operand 2, single buffered']
    %12 = vsyncpa [#allocation6], 0
    %13 = vsyncpa [#allocation9], 0
    %14 = vsyncpa [#allocation7], 0
    %15 = vsyncpa [#allocation13], 0
    // Predicated region
    $region2: #{tpu_custom_call.1} parent=1 // pred_check
      _
    $region3: #{tpu_custom_call.1} parent=1 // pred_check_branch
      %17 = sbr.rel (0) target = $region5
    $region4: #{tpu_custom_call.1} parent=1 // pred_region
      %s19 = ssub.s32 1024, 1024
      %20 = vsyncadd [#allocation6], %s19
      %s21 = sshll.u32 [#allocation5], 4
      %s22 = int_to_ptr.vmem [resolvable:$true] %s21
      %27 = dma.hbm_to_vmem [thread:$0]  %s0, 1024, %s22, [#allocation6], 128, 128, 8
    $region5: #{tpu_custom_call.1} parent=1 // pred_fallthru
      _
    // Predicated region
    $region6: #{tpu_custom_call.1} parent=1 // pred_check
      _
    $region7: #{tpu_custom_call.1} parent=1 // pred_check_branch
      %29 = sbr.rel (0) target = $region9
    $region8: #{tpu_custom_call.1} parent=1 // pred_region
      %s31 = ssub.s32 8192, 8192
      %32 = vsyncadd [#allocation9], %s31
      %s33 = sshll.u32 [#allocation8], 4
      %s34 = int_to_ptr.vmem [resolvable:$true] %s33
      %39 = dma.hbm_to_vmem [thread:$0]  %s1, 8192, %s34, [#allocation9], 512, 512, 32
    $region9: #{tpu_custom_call.1} parent=1 // pred_fallthru
      _
    // Predicated region
    $region10: #{tpu_custom_call.1} parent=1 // pred_check
      _
    $region11: #{tpu_custom_call.1} parent=1 // pred_check_branch
      %41 = sbr.rel (0) target = $region13
    $region12: #{tpu_custom_call.1} parent=1 // pred_region
      %s43 = ssub.s32 8192, 8192
      %44 = vsyncadd [#allocation9], %s43
      %s45 = sshll.u32 [#allocation10], 4
      %s46 = int_to_ptr.vmem [resolvable:$true] %s45
      %51 = dma.hbm_to_vmem [thread:$0]  %s2, 8192, %s46, [#allocation9], 512, 512, 32
    $region13: #{tpu_custom_call.1} parent=1 // pred_fallthru
      _
    // Predicated region
    $region14: #{tpu_custom_call.1} parent=1 // pred_check
      _
    $region15: #{tpu_custom_call.1} parent=1 // pred_check_branch
      %53 = sbr.rel (0) target = $region17
    $region16: #{tpu_custom_call.1} parent=1 // pred_region
      _
    $region17: #{tpu_custom_call.1} parent=1 // pred_fallthru
      _
    // Predicated region
    $region18: #{tpu_custom_call.1} parent=1 // pred_check
      _
    $region19: #{tpu_custom_call.1} parent=1 // pred_check_branch
      %55 = sbr.rel (0) target = $region21
    $region20: #{tpu_custom_call.1} parent=1 // pred_region
      %56 = dma.done [#allocation6], 1024
    $region21: #{tpu_custom_call.1} parent=1 // pred_fallthru
      _
    // Predicated region
    $region22: #{tpu_custom_call.1} parent=1 // pred_check
      _
    $region23: #{tpu_custom_call.1} parent=1 // pred_check_branch
      %58 = sbr.rel (0) target = $region25
    $region24: #{tpu_custom_call.1} parent=1 // pred_region
      %59 = dma.done [#allocation9], 8192
    $region25: #{tpu_custom_call.1} parent=1 // pred_fallthru
      _
    // Predicated region
    $region26: #{tpu_custom_call.1} parent=1 // pred_check
      _
    $region27: #{tpu_custom_call.1} parent=1 // pred_check_branch
      %61 = sbr.rel (0) target = $region29
    $region28: #{tpu_custom_call.1} parent=1 // pred_region
      %62 = dma.done [#allocation9], 8192
    $region29: #{tpu_custom_call.1} parent=1 // pred_fallthru
      _
    %p63 = scmp.eq.s32.totalorder 0, 0
    // Predicated region
    $region30: #{tpu_custom_call.1} parent=1 // pred_check
      %p64 = pneg %p63
    $region31: #{tpu_custom_call.1} parent=1 // pred_check_branch
      %66 = sbr.rel (%p64) target = $region33
    $region32: #{tpu_custom_call.1} parent=1 // pred_region
      %67 = vst [vmem:[#allocation2] sm:$0xff] 0.0
      %68 = vst [vmem:[#allocation3] sm:$0xff] 0.0
    $region33: #{tpu_custom_call.1} parent=1 // pred_fallthru
      _
    %v69 = vld [vmem:[#allocation5] sm:$0xff]
    %v70 = vld [vmem:[#allocation5 + $0x8] sm:$0xff]
    %v71 = vld [vmem:[#allocation5 + $0x10] sm:$0xff]
    %v72 = vld [vmem:[#allocation5 + $0x18] sm:$0xff]
    %v73 = vld [vmem:[#allocation5 + $0x20] sm:$0xff]
    %v74 = vld [vmem:[#allocation5 + $0x28] sm:$0xff]
    %v75 = vld [vmem:[#allocation5 + $0x30] sm:$0xff]
    %v76 = vld [vmem:[#allocation5 + $0x38] sm:$0xff]
    %v77 = vld [vmem:[#allocation8] sm:$0xff]
    %v78 = vld [vmem:[#allocation8 + $0x8] sm:$0xff]
    %v79 = vld [vmem:[#allocation8 + $0x10] sm:$0xff]
    %v80 = vld [vmem:[#allocation8 + $0x18] sm:$0xff]
    %v81 = vld [vmem:[#allocation8 + $0x20] sm:$0xff]
    %v82 = vld [vmem:[#allocation8 + $0x28] sm:$0xff]
    %v83 = vld [vmem:[#allocation8 + $0x30] sm:$0xff]
    %v84 = vld [vmem:[#allocation8 + $0x38] sm:$0xff]
    %v85 = vld [vmem:[#allocation8 + $0x40] sm:$0xff]
    %v86 = vld [vmem:[#allocation8 + $0x48] sm:$0xff]
    %v87 = vld [vmem:[#allocation8 + $0x50] sm:$0xff]
    %v88 = vld [vmem:[#allocation8 + $0x58] sm:$0xff]
    %v89 = vld [vmem:[#allocation8 + $0x60] sm:$0xff]
    %v90 = vld [vmem:[#allocation8 + $0x68] sm:$0xff]
    %v91 = vld [vmem:[#allocation8 + $0x70] sm:$0xff]
    %v92 = vld [vmem:[#allocation8 + $0x78] sm:$0xff]
    %v93 = vld [vmem:[#allocation8 + $0x80] sm:$0xff]
    %v94 = vld [vmem:[#allocation8 + $0x88] sm:$0xff]
    %v95 = vld [vmem:[#allocation8 + $0x90] sm:$0xff]
    %v96 = vld [vmem:[#allocation8 + $0x98] sm:$0xff]
    %v97 = vld [vmem:[#allocation8 + $0xa0] sm:$0xff]
    %v98 = vld [vmem:[#allocation8 + $0xa8] sm:$0xff]
    %v99 = vld [vmem:[#allocation8 + $0xb0] sm:$0xff]
    %v100 = vld [vmem:[#allocation8 + $0xb8] sm:$0xff]
    %v101 = vld [vmem:[#allocation8 + $0xc0] sm:$0xff]
    %v102 = vld [vmem:[#allocation8 + $0xc8] sm:$0xff]
    %v103 = vld [vmem:[#allocation8 + $0xd0] sm:$0xff]
    %v104 = vld [vmem:[#allocation8 + $0xd8] sm:$0xff]
    %v105 = vld [vmem:[#allocation8 + $0xe0] sm:$0xff]
    %v106 = vld [vmem:[#allocation8 + $0xe8] sm:$0xff]
    %v107 = vld [vmem:[#allocation8 + $0xf0] sm:$0xff]
    %v108 = vld [vmem:[#allocation8 + $0xf8] sm:$0xff]
    %v109 = vld [vmem:[#allocation8 + $0x100] sm:$0xff]
    %v110 = vld [vmem:[#allocation8 + $0x108] sm:$0xff]
    %v111 = vld [vmem:[#allocation8 + $0x110] sm:$0xff]
    %v112 = vld [vmem:[#allocation8 + $0x118] sm:$0xff]
    %v113 = vld [vmem:[#allocation8 + $0x120] sm:$0xff]
    %v114 = vld [vmem:[#allocation8 + $0x128] sm:$0xff]
    %v115 = vld [vmem:[#allocation8 + $0x130] sm:$0xff]
    %v116 = vld [vmem:[#allocation8 + $0x138] sm:$0xff]
    %v117 = vld [vmem:[#allocation8 + $0x140] sm:$0xff]
    %v118 = vld [vmem:[#allocation8 + $0x148] sm:$0xff]
    %v119 = vld [vmem:[#allocation8 + $0x150] sm:$0xff]
    %v120 = vld [vmem:[#allocation8 + $0x158] sm:$0xff]
    %v121 = vld [vmem:[#allocation8 + $0x160] sm:$0xff]
    %v122 = vld [vmem:[#allocation8 + $0x168] sm:$0xff]
    %v123 = vld [vmem:[#allocation8 + $0x170] sm:$0xff]
    %v124 = vld [vmem:[#allocation8 + $0x178] sm:$0xff]
    %v125 = vld [vmem:[#allocation8 + $0x180] sm:$0xff]
    %v126 = vld [vmem:[#allocation8 + $0x188] sm:$0xff]
    %v127 = vld [vmem:[#allocation8 + $0x190] sm:$0xff]
    %v128 = vld [vmem:[#allocation8 + $0x198] sm:$0xff]
    %v129 = vld [vmem:[#allocation8 + $0x1a0] sm:$0xff]
    %v130 = vld [vmem:[#allocation8 + $0x1a8] sm:$0xff]
    %v131 = vld [vmem:[#allocation8 + $0x1b0] sm:$0xff]
    %v132 = vld [vmem:[#allocation8 + $0x1b8] sm:$0xff]
    %v133 = vld [vmem:[#allocation8 + $0x1c0] sm:$0xff]
    %v134 = vld [vmem:[#allocation8 + $0x1c8] sm:$0xff]
    %v135 = vld [vmem:[#allocation8 + $0x1d0] sm:$0xff]
    %v136 = vld [vmem:[#allocation8 + $0x1d8] sm:$0xff]
    %v137 = vld [vmem:[#allocation8 + $0x1e0] sm:$0xff]
    %v138 = vld [vmem:[#allocation8 + $0x1e8] sm:$0xff]
    %v139 = vld [vmem:[#allocation8 + $0x1f0] sm:$0xff]
    %v140 = vld [vmem:[#allocation8 + $0x1f8] sm:$0xff]
    %141 = vmatprep.subr.mxu0 %v138
    %142 = vmatpush1.msra.mxu0 %v137
    %143 = vmatprep.subr.mxu0 %v134
    %144 = vmatpush1.msra.mxu0 %v133
    %145 = vmatprep.subr.mxu0 %v130
    %146 = vmatpush1.msra.mxu0 %v129
    %147 = vmatprep.subr.mxu0 %v126
    %148 = vmatpush1.msra.mxu0 %v125
    %149 = vmatprep.subr.mxu0 %v122
    %150 = vmatpush1.msra.mxu0 %v121
    %151 = vmatprep.subr.mxu0 %v118
    %152 = vmatpush1.msra.mxu0 %v117
    %153 = vmatprep.subr.mxu0 %v114
    %154 = vmatpush1.msra.mxu0 %v113
    %155 = vmatprep.subr.mxu0 %v110
    %156 = vmatpush1.msra.mxu0 %v109
    %157 = vmatprep.subr.mxu0 %v106
    %158 = vmatpush1.msra.mxu0 %v105
    %159 = vmatprep.subr.mxu0 %v102
    %160 = vmatpush1.msra.mxu0 %v101
    %161 = vmatprep.subr.mxu0 %v98
    %162 = vmatpush1.msra.mxu0 %v97
    %163 = vmatprep.subr.mxu0 %v94
    %164 = vmatpush1.msra.mxu0 %v93
    %165 = vmatprep.subr.mxu0 %v90
    %166 = vmatpush1.msra.mxu0 %v89
    %167 = vmatprep.subr.mxu0 %v86
    %168 = vmatpush1.msra.mxu0 %v85
    %169 = vmatprep.subr.mxu0 %v82
    %170 = vmatpush1.msra.mxu0 %v81
    %171 = vmatprep.subr.mxu0 %v78
    %172 = vmatpush1.msra.mxu0 %v77
    %173 = vmatprep.subr.mxu0 0.0
    %174 = vmatpush2.msra.mxu0 0.0
    %175 = vmatprep.subr.mxu0 0.0
    %176 = vmatpush2.msra.mxu0 0.0
    %177 = vmatprep.subr.mxu0 0.0
    %178 = vmatpush2.msra.mxu0 0.0
    %179 = vmatprep.subr.mxu0 0.0
    %180 = vmatpush2.msra.mxu0 0.0
    %181 = vmatprep.subr.mxu0 0.0
    %182 = vmatpush2.msra.mxu0 0.0
    %183 = vmatprep.subr.mxu0 0.0
    %184 = vmatpush2.msra.mxu0 0.0
    %185 = vmatprep.subr.mxu0 0.0
    %186 = vmatpush2.msra.mxu0 0.0
    %187 = vmatprep.subr.mxu0 0.0
    %188 = vmatpush2.msra.mxu0 0.0
    %189 = vmatprep.subr.mxu0 0.0
    %190 = vmatpush2.msra.mxu0 0.0
    %191 = vmatprep.subr.mxu0 0.0
    %192 = vmatpush2.msra.mxu0 0.0
    %193 = vmatprep.subr.mxu0 0.0
    %194 = vmatpush2.msra.mxu0 0.0
    %195 = vmatprep.subr.mxu0 0.0
    %196 = vmatpush2.msra.mxu0 0.0
    %197 = vmatprep.subr.mxu0 0.0
    %198 = vmatpush2.msra.mxu0 0.0
    %199 = vmatprep.subr.mxu0 0.0
    %200 = vmatpush2.msra.mxu0 0.0
    %201 = vmatprep.subr.mxu0 0.0
    %202 = vmatpush2.msra.mxu0 0.0
    %203 = vmatprep.subr.mxu0 0.0
    %204 = vmatpush2.msra.mxu0 0.0
    %205 = vmatprep.mubr.f32.mxu0 0.0
    %206 = vmatmul.mubr.f32.gmra.mxu0 %v69
    %v207 = vpop.f32.mrf.mxu0
    %v208 = vadd.f32 0.0, %v207
    %v209 = vpop.f32.mrf.mxu0
    %v210 = vadd.f32 0.0, %v209
    %211 = vmatprep.mubr.f32.mxu0 0.0
    %212 = vmatmul.mubr.f32.gmra.mxu0 %v70
    %v213 = vpop.f32.mrf.mxu0
    %v214 = vadd.f32 0.0, %v213
    %v215 = vpop.f32.mrf.mxu0
    %v216 = vadd.f32 0.0, %v215
    %217 = vmatprep.mubr.f32.mxu0 0.0
    %218 = vmatmul.mubr.f32.gmra.mxu0 %v71
    %v219 = vpop.f32.mrf.mxu0
    %v220 = vadd.f32 0.0, %v219
    %v221 = vpop.f32.mrf.mxu0
    %v222 = vadd.f32 0.0, %v221
    %223 = vmatprep.mubr.f32.mxu0 0.0
    %224 = vmatmul.mubr.f32.gmra.mxu0 %v72
    %v225 = vpop.f32.mrf.mxu0
    %v226 = vadd.f32 0.0, %v225
    %v227 = vpop.f32.mrf.mxu0
    %v228 = vadd.f32 0.0, %v227
    %229 = vmatprep.mubr.f32.mxu0 0.0
    %230 = vmatmul.mubr.f32.gmra.mxu0 %v73
    %v231 = vpop.f32.mrf.mxu0
    %v232 = vadd.f32 0.0, %v231
    %v233 = vpop.f32.mrf.mxu0
    %v234 = vadd.f32 0.0, %v233
    %235 = vmatprep.mubr.f32.mxu0 0.0
    %236 = vmatmul.mubr.f32.gmra.mxu0 %v74
    %v237 = vpop.f32.mrf.mxu0
    %v238 = vadd.f32 0.0, %v237
    %v239 = vpop.f32.mrf.mxu0
    %v240 = vadd.f32 0.0, %v239
    %241 = vmatprep.mubr.f32.mxu0 0.0
    %242 = vmatmul.mubr.f32.gmra.mxu0 %v75
    %v243 = vpop.f32.mrf.mxu0
    %v244 = vadd.f32 0.0, %v243
    %v245 = vpop.f32.mrf.mxu0
    %v246 = vadd.f32 0.0, %v245
    %247 = vmatprep.mubr.f32.mxu0 0.0
    %248 = vmatmul.mubr.f32.gmra.mxu0 %v76
    %v249 = vpop.f32.mrf.mxu0
    %v250 = vadd.f32 0.0, %v249
    %v251 = vpop.f32.mrf.mxu0
    %v252 = vadd.f32 0.0, %v251
    %253 = vdwg.mxu0
    %254 = vmatprep.subr.mxu0 %v140
    %255 = vmatpush1.msra.mxu0 %v139
    %256 = vmatprep.subr.mxu0 %v136
    %257 = vmatpush1.msra.mxu0 %v135
    %258 = vmatprep.subr.mxu0 %v132
    %259 = vmatpush1.msra.mxu0 %v131
    %260 = vmatprep.subr.mxu0 %v128
    %261 = vmatpush1.msra.mxu0 %v127
    %262 = vmatprep.subr.mxu0 %v124
    %263 = vmatpush1.msra.mxu0 %v123
    %264 = vmatprep.subr.mxu0 %v120
    %265 = vmatpush1.msra.mxu0 %v119
    %266 = vmatprep.subr.mxu0 %v116
    %267 = vmatpush1.msra.mxu0 %v115
    %268 = vmatprep.subr.mxu0 %v112
    %269 = vmatpush1.msra.mxu0 %v111
    %270 = vmatprep.subr.mxu0 %v108
    %271 = vmatpush1.msra.mxu0 %v107
    %272 = vmatprep.subr.mxu0 %v104
    %273 = vmatpush1.msra.mxu0 %v103
    %274 = vmatprep.subr.mxu0 %v100
    %275 = vmatpush1.msra.mxu0 %v99
    %276 = vmatprep.subr.mxu0 %v96
    %277 = vmatpush1.msra.mxu0 %v95
    %278 = vmatprep.subr.mxu0 %v92
    %279 = vmatpush1.msra.mxu0 %v91
    %280 = vmatprep.subr.mxu0 %v88
    %281 = vmatpush1.msra.mxu0 %v87
    %282 = vmatprep.subr.mxu0 %v84
    %283 = vmatpush1.msra.mxu0 %v83
    %284 = vmatprep.subr.mxu0 %v80
    %285 = vmatpush1.msra.mxu0 %v79
    %286 = vmatprep.subr.mxu0 0.0
    %287 = vmatpush2.msra.mxu0 0.0
    %288 = vmatprep.subr.mxu0 0.0
    %289 = vmatpush2.msra.mxu0 0.0
    %290 = vmatprep.subr.mxu0 0.0
    %291 = vmatpush2.msra.mxu0 0.0
    %292 = vmatprep.subr.mxu0 0.0
    %293 = vmatpush2.msra.mxu0 0.0
    %294 = vmatprep.subr.mxu0 0.0
    %295 = vmatpush2.msra.mxu0 0.0
    %296 = vmatprep.subr.mxu0 0.0
    %297 = vmatpush2.msra.mxu0 0.0
    %298 = vmatprep.subr.mxu0 0.0
    %299 = vmatpush2.msra.mxu0 0.0
    %300 = vmatprep.subr.mxu0 0.0
    %301 = vmatpush2.msra.mxu0 0.0
    %302 = vmatprep.subr.mxu0 0.0
    %303 = vmatpush2.msra.mxu0 0.0
    %304 = vmatprep.subr.mxu0 0.0
    %305 = vmatpush2.msra.mxu0 0.0
    %306 = vmatprep.subr.mxu0 0.0
    %307 = vmatpush2.msra.mxu0 0.0
    %308 = vmatprep.subr.mxu0 0.0
    %309 = vmatpush2.msra.mxu0 0.0
    %310 = vmatprep.subr.mxu0 0.0
    %311 = vmatpush2.msra.mxu0 0.0
    %312 = vmatprep.subr.mxu0 0.0
    %313 = vmatpush2.msra.mxu0 0.0
    %314 = vmatprep.subr.mxu0 0.0
    %315 = vmatpush2.msra.mxu0 0.0
    %316 = vmatprep.subr.mxu0 0.0
    %317 = vmatpush2.msra.mxu0 0.0
    %318 = vmatprep.mubr.f32.mxu0 0.0
    %319 = vmatmul.mubr.f32.gmra.mxu0 %v69
    %v320 = vpop.f32.mrf.mxu0
    %v321 = vadd.f32 0.0, %v320
    %v322 = vpop.f32.mrf.mxu0
    %v323 = vadd.f32 0.0, %v322
    %324 = vmatprep.mubr.f32.mxu0 0.0
    %325 = vmatmul.mubr.f32.gmra.mxu0 %v70
    %v326 = vpop.f32.mrf.mxu0
    %v327 = vadd.f32 0.0, %v326
    %v328 = vpop.f32.mrf.mxu0
    %v329 = vadd.f32 0.0, %v328
    %330 = vmatprep.mubr.f32.mxu0 0.0
    %331 = vmatmul.mubr.f32.gmra.mxu0 %v71
    %v332 = vpop.f32.mrf.mxu0
    %v333 = vadd.f32 0.0, %v332
    %v334 = vpop.f32.mrf.mxu0
    %v335 = vadd.f32 0.0, %v334
    %336 = vmatprep.mubr.f32.mxu0 0.0
    %337 = vmatmul.mubr.f32.gmra.mxu0 %v72
    %v338 = vpop.f32.mrf.mxu0
    %v339 = vadd.f32 0.0, %v338
    %v340 = vpop.f32.mrf.mxu0
    %v341 = vadd.f32 0.0, %v340
    %342 = vmatprep.mubr.f32.mxu0 0.0
    %343 = vmatmul.mubr.f32.gmra.mxu0 %v73
    %v344 = vpop.f32.mrf.mxu0
    %v345 = vadd.f32 0.0, %v344
    %v346 = vpop.f32.mrf.mxu0
    %v347 = vadd.f32 0.0, %v346
    %348 = vmatprep.mubr.f32.mxu0 0.0
    %349 = vmatmul.mubr.f32.gmra.mxu0 %v74
    %v350 = vpop.f32.mrf.mxu0
    %v351 = vadd.f32 0.0, %v350
    %v352 = vpop.f32.mrf.mxu0
    %v353 = vadd.f32 0.0, %v352
    %354 = vmatprep.mubr.f32.mxu0 0.0
    %355 = vmatmul.mubr.f32.gmra.mxu0 %v75
    %v356 = vpop.f32.mrf.mxu0
    %v357 = vadd.f32 0.0, %v356
    %v358 = vpop.f32.mrf.mxu0
    %v359 = vadd.f32 0.0, %v358
    %360 = vmatprep.mubr.f32.mxu0 0.0
    %361 = vmatmul.mubr.f32.gmra.mxu0 %v76
    %v362 = vpop.f32.mrf.mxu0
    %v363 = vadd.f32 0.0, %v362
    %v364 = vpop.f32.mrf.mxu0
    %v365 = vadd.f32 0.0, %v364
    %366 = vdwg.mxu0
    %v367 = vld [vmem:[%s3] sm:$0xf]
    %v369 = vlaneseq
    %v370 = vshrl.u32 %v369, 7
    %v371 = vsub.s32 0, %v370
    %v372 = vrot.slane %v367, %v371
    %v373 = vlaneseq
    %v374 = vshrl.u32 %v373, 7
    %v375 = vsub.s32 1, %v374
    %v376 = vrot.slane %v367, %v375
    %v377 = vlaneseq
    %v378 = vshrl.u32 %v377, 7
    %v379 = vsub.s32 2, %v378
    %v380 = vrot.slane %v367, %v379
    %v381 = vlaneseq
    %v382 = vshrl.u32 %v381, 7
    %v383 = vsub.s32 3, %v382
    %v384 = vrot.slane %v367, %v383
    %v389 = vadd.f32 %v208, %v372
    %v390 = vadd.f32 %v210, %v376
    %v391 = vadd.f32 %v321, %v380
    %v392 = vadd.f32 %v323, %v384
    %v393 = vadd.f32 %v214, %v372
    %v394 = vadd.f32 %v216, %v376
    %v395 = vadd.f32 %v327, %v380
    %v396 = vadd.f32 %v329, %v384
    %v397 = vadd.f32 %v220, %v372
    %v398 = vadd.f32 %v222, %v376
    %v399 = vadd.f32 %v333, %v380
    %v400 = vadd.f32 %v335, %v384
    %v401 = vadd.f32 %v226, %v372
    %v402 = vadd.f32 %v228, %v376
    %v403 = vadd.f32 %v339, %v380
    %v404 = vadd.f32 %v341, %v384
    %v405 = vadd.f32 %v232, %v372
    %v406 = vadd.f32 %v234, %v376
    %v407 = vadd.f32 %v345, %v380
    %v408 = vadd.f32 %v347, %v384
    %v409 = vadd.f32 %v238, %v372
    %v410 = vadd.f32 %v240, %v376
    %v411 = vadd.f32 %v351, %v380
    %v412 = vadd.f32 %v353, %v384
    %v413 = vadd.f32 %v244, %v372
    %v414 = vadd.f32 %v246, %v376
    %v415 = vadd.f32 %v357, %v380
    %v416 = vadd.f32 %v359, %v384
    %v417 = vadd.f32 %v250, %v372
    %v418 = vadd.f32 %v252, %v376
    %v419 = vadd.f32 %v363, %v380
    %v420 = vadd.f32 %v365, %v384
    %421 = vst [vmem:[#allocation4] sm:$0xff] %v389
    %422 = vst [vmem:[#allocation4 + $0x8] sm:$0xff] %v390
    %423 = vst [vmem:[#allocation4 + $0x10] sm:$0xff] %v391
    %424 = vst [vmem:[#allocation4 + $0x18] sm:$0xff] %v392
    %425 = vst [vmem:[#allocation4 + $0x20] sm:$0xff] %v393
    %426 = vst [vmem:[#allocation4 + $0x28] sm:$0xff] %v394
    %427 = vst [vmem:[#allocation4 + $0x30] sm:$0xff] %v395
    %428 = vst [vmem:[#allocation4 + $0x38] sm:$0xff] %v396
    %429 = vst [vmem:[#allocation4 + $0x40] sm:$0xff] %v397
    %430 = vst [vmem:[#allocation4 + $0x48] sm:$0xff] %v398
    %431 = vst [vmem:[#allocation4 + $0x50] sm:$0xff] %v399
    %432 = vst [vmem:[#allocation4 + $0x58] sm:$0xff] %v400
    %433 = vst [vmem:[#allocation4 + $0x60] sm:$0xff] %v401
    %434 = vst [vmem:[#allocation4 + $0x68] sm:$0xff] %v402
    %435 = vst [vmem:[#allocation4 + $0x70] sm:$0xff] %v403
    %436 = vst [vmem:[#allocation4 + $0x78] sm:$0xff] %v404
    %437 = vst [vmem:[#allocation4 + $0x80] sm:$0xff] %v405
    %438 = vst [vmem:[#allocation4 + $0x88] sm:$0xff] %v406
    %439 = vst [vmem:[#allocation4 + $0x90] sm:$0xff] %v407
    %440 = vst [vmem:[#allocation4 + $0x98] sm:$0xff] %v408
    %441 = vst [vmem:[#allocation4 + $0xa0] sm:$0xff] %v409
    %442 = vst [vmem:[#allocation4 + $0xa8] sm:$0xff] %v410
    %443 = vst [vmem:[#allocation4 + $0xb0] sm:$0xff] %v411
    %444 = vst [vmem:[#allocation4 + $0xb8] sm:$0xff] %v412
    %445 = vst [vmem:[#allocation4 + $0xc0] sm:$0xff] %v413
    %446 = vst [vmem:[#allocation4 + $0xc8] sm:$0xff] %v414
    %447 = vst [vmem:[#allocation4 + $0xd0] sm:$0xff] %v415
    %448 = vst [vmem:[#allocation4 + $0xd8] sm:$0xff] %v416
    %449 = vst [vmem:[#allocation4 + $0xe0] sm:$0xff] %v417
    %450 = vst [vmem:[#allocation4 + $0xe8] sm:$0xff] %v418
    %451 = vst [vmem:[#allocation4 + $0xf0] sm:$0xff] %v419
    %452 = vst [vmem:[#allocation4 + $0xf8] sm:$0xff] %v420
    %v453 = vld [vmem:[#allocation2] sm:$0xff]
    %v454 = vld [vmem:[#allocation3] sm:$0xff]
    %v455 = vld [vmem:[#allocation10] sm:$0xff]
    %v456 = vld [vmem:[#allocation10 + $0x8] sm:$0xff]
    %v457 = vld [vmem:[#allocation10 + $0x10] sm:$0xff]
    %v458 = vld [vmem:[#allocation10 + $0x18] sm:$0xff]
    %v459 = vld [vmem:[#allocation10 + $0x20] sm:$0xff]
    %v460 = vld [vmem:[#allocation10 + $0x28] sm:$0xff]
    %v461 = vld [vmem:[#allocation10 + $0x30] sm:$0xff]
    %v462 = vld [vmem:[#allocation10 + $0x38] sm:$0xff]
    %v463 = vld [vmem:[#allocation10 + $0x40] sm:$0xff]
    %v464 = vld [vmem:[#allocation10 + $0x48] sm:$0xff]
    %v465 = vld [vmem:[#allocation10 + $0x50] sm:$0xff]
    %v466 = vld [vmem:[#allocation10 + $0x58] sm:$0xff]
    %v467 = vld [vmem:[#allocation10 + $0x60] sm:$0xff]
    %v468 = vld [vmem:[#allocation10 + $0x68] sm:$0xff]
    %v469 = vld [vmem:[#allocation10 + $0x70] sm:$0xff]
    %v470 = vld [vmem:[#allocation10 + $0x78] sm:$0xff]
    %v471 = vld [vmem:[#allocation10 + $0x80] sm:$0xff]
    %v472 = vld [vmem:[#allocation10 + $0x88] sm:$0xff]
    %v473 = vld [vmem:[#allocation10 + $0x90] sm:$0xff]
    %v474 = vld [vmem:[#allocation10 + $0x98] sm:$0xff]
    %v475 = vld [vmem:[#allocation10 + $0xa0] sm:$0xff]
    %v476 = vld [vmem:[#allocation10 + $0xa8] sm:$0xff]
    %v477 = vld [vmem:[#allocation10 + $0xb0] sm:$0xff]
    %v478 = vld [vmem:[#allocation10 + $0xb8] sm:$0xff]
    %v479 = vld [vmem:[#allocation10 + $0xc0] sm:$0xff]
    %v480 = vld [vmem:[#allocation10 + $0xc8] sm:$0xff]
    %v481 = vld [vmem:[#allocation10 + $0xd0] sm:$0xff]
    %v482 = vld [vmem:[#allocation10 + $0xd8] sm:$0xff]
    %v483 = vld [vmem:[#allocation10 + $0xe0] sm:$0xff]
    %v484 = vld [vmem:[#allocation10 + $0xe8] sm:$0xff]
    %v485 = vld [vmem:[#allocation10 + $0xf0] sm:$0xff]
    %v486 = vld [vmem:[#allocation10 + $0xf8] sm:$0xff]
    %v487 = vld [vmem:[#allocation10 + $0x100] sm:$0xff]
    %v488 = vld [vmem:[#allocation10 + $0x108] sm:$0xff]
    %v489 = vld [vmem:[#allocation10 + $0x110] sm:$0xff]
    %v490 = vld [vmem:[#allocation10 + $0x118] sm:$0xff]
    %v491 = vld [vmem:[#allocation10 + $0x120] sm:$0xff]
    %v492 = vld [vmem:[#allocation10 + $0x128] sm:$0xff]
    %v493 = vld [vmem:[#allocation10 + $0x130] sm:$0xff]
    %v494 = vld [vmem:[#allocation10 + $0x138] sm:$0xff]
    %v495 = vld [vmem:[#allocation10 + $0x140] sm:$0xff]
    %v496 = vld [vmem:[#allocation10 + $0x148] sm:$0xff]
    %v497 = vld [vmem:[#allocation10 + $0x150] sm:$0xff]
    %v498 = vld [vmem:[#allocation10 + $0x158] sm:$0xff]
    %v499 = vld [vmem:[#allocation10 + $0x160] sm:$0xff]
    %v500 = vld [vmem:[#allocation10 + $0x168] sm:$0xff]
    %v501 = vld [vmem:[#allocation10 + $0x170] sm:$0xff]
    %v502 = vld [vmem:[#allocation10 + $0x178] sm:$0xff]
    %v503 = vld [vmem:[#allocation10 + $0x180] sm:$0xff]
    %v504 = vld [vmem:[#allocation10 + $0x188] sm:$0xff]
    %v505 = vld [vmem:[#allocation10 + $0x190] sm:$0xff]
    %v506 = vld [vmem:[#allocation10 + $0x198] sm:$0xff]
    %v507 = vld [vmem:[#allocation10 + $0x1a0] sm:$0xff]
    %v508 = vld [vmem:[#allocation10 + $0x1a8] sm:$0xff]
    %v509 = vld [vmem:[#allocation10 + $0x1b0] sm:$0xff]
    %v510 = vld [vmem:[#allocation10 + $0x1b8] sm:$0xff]
    %v511 = vld [vmem:[#allocation10 + $0x1c0] sm:$0xff]
    %v512 = vld [vmem:[#allocation10 + $0x1c8] sm:$0xff]
    %v513 = vld [vmem:[#allocation10 + $0x1d0] sm:$0xff]
    %v514 = vld [vmem:[#allocation10 + $0x1d8] sm:$0xff]
    %v515 = vld [vmem:[#allocation10 + $0x1e0] sm:$0xff]
    %v516 = vld [vmem:[#allocation10 + $0x1e8] sm:$0xff]
    %v517 = vld [vmem:[#allocation10 + $0x1f0] sm:$0xff]
    %v518 = vld [vmem:[#allocation10 + $0x1f8] sm:$0xff]
    %v519 = vld [vmem:[#allocation4] sm:$0xff]
    %v520 = vld [vmem:[#allocation4 + $0x8] sm:$0xff]
    %v521 = vld [vmem:[#allocation4 + $0x10] sm:$0xff]
    %v522 = vld [vmem:[#allocation4 + $0x18] sm:$0xff]
    %523 = vmatprep.subr.mxu0 %v516
    %524 = vmatpush1.msra.mxu0 %v515
    %525 = vmatprep.subr.mxu0 %v512
    %526 = vmatpush1.msra.mxu0 %v511
    %527 = vmatprep.subr.mxu0 %v508
    %528 = vmatpush1.msra.mxu0 %v507
    %529 = vmatprep.subr.mxu0 %v504
    %530 = vmatpush1.msra.mxu0 %v503
    %531 = vmatprep.subr.mxu0 %v500
    %532 = vmatpush1.msra.mxu0 %v499
    %533 = vmatprep.subr.mxu0 %v496
    %534 = vmatpush1.msra.mxu0 %v495
    %535 = vmatprep.subr.mxu0 %v492
    %536 = vmatpush1.msra.mxu0 %v491
    %537 = vmatprep.subr.mxu0 %v488
    %538 = vmatpush1.msra.mxu0 %v487
    %539 = vmatprep.subr.mxu0 %v484
    %540 = vmatpush1.msra.mxu0 %v483
    %541 = vmatprep.subr.mxu0 %v480
    %542 = vmatpush1.msra.mxu0 %v479
    %543 = vmatprep.subr.mxu0 %v476
    %544 = vmatpush1.msra.mxu0 %v475
    %545 = vmatprep.subr.mxu0 %v472
    %546 = vmatpush1.msra.mxu0 %v471
    %547 = vmatprep.subr.mxu0 %v468
    %548 = vmatpush1.msra.mxu0 %v467
    %549 = vmatprep.subr.mxu0 %v464
    %550 = vmatpush1.msra.mxu0 %v463
    %551 = vmatprep.subr.mxu0 %v460
    %552 = vmatpush1.msra.mxu0 %v459
    %553 = vmatprep.subr.mxu0 %v456
    %554 = vmatpush1.msra.mxu0 %v455
    %555 = vmatprep.subr.mxu0 0.0
    %556 = vmatpush2.msra.mxu0 0.0
    %557 = vmatprep.subr.mxu0 0.0
    %558 = vmatpush2.msra.mxu0 0.0
    %559 = vmatprep.subr.mxu0 0.0
    %560 = vmatpush2.msra.mxu0 0.0
    %561 = vmatprep.subr.mxu0 0.0
    %562 = vmatpush2.msra.mxu0 0.0
    %563 = vmatprep.subr.mxu0 0.0
    %564 = vmatpush2.msra.mxu0 0.0
    %565 = vmatprep.subr.mxu0 0.0
    %566 = vmatpush2.msra.mxu0 0.0
    %567 = vmatprep.subr.mxu0 0.0
    %568 = vmatpush2.msra.mxu0 0.0
    %569 = vmatprep.subr.mxu0 0.0
    %570 = vmatpush2.msra.mxu0 0.0
    %571 = vmatprep.subr.mxu0 0.0
    %572 = vmatpush2.msra.mxu0 0.0
    %573 = vmatprep.subr.mxu0 0.0
    %574 = vmatpush2.msra.mxu0 0.0
    %575 = vmatprep.subr.mxu0 0.0
    %576 = vmatpush2.msra.mxu0 0.0
    %577 = vmatprep.subr.mxu0 0.0
    %578 = vmatpush2.msra.mxu0 0.0
    %579 = vmatprep.subr.mxu0 0.0
    %580 = vmatpush2.msra.mxu0 0.0
    %581 = vmatprep.subr.mxu0 0.0
    %582 = vmatpush2.msra.mxu0 0.0
    %583 = vmatprep.subr.mxu0 0.0
    %584 = vmatpush2.msra.mxu0 0.0
    %585 = vmatprep.subr.mxu0 0.0
    %586 = vmatpush2.msra.mxu0 0.0
    %587 = vmatprep.mubr.f32.mxu0 0.0
    %588 = vmatmul.mubr.f32.gmra.mxu0 %v453
    %v589 = vpop.f32.mrf.mxu0
    %v590 = vadd.f32 %v519, %v589
    %v591 = vpop.f32.mrf.mxu0
    %v592 = vadd.f32 %v520, %v591
    %593 = vdwg.mxu0
    %594 = vmatprep.subr.mxu0 %v518
    %595 = vmatpush1.msra.mxu0 %v517
    %596 = vmatprep.subr.mxu0 %v514
    %597 = vmatpush1.msra.mxu0 %v513
    %598 = vmatprep.subr.mxu0 %v510
    %599 = vmatpush1.msra.mxu0 %v509
    %600 = vmatprep.subr.mxu0 %v506
    %601 = vmatpush1.msra.mxu0 %v505
    %602 = vmatprep.subr.mxu0 %v502
    %603 = vmatpush1.msra.mxu0 %v501
    %604 = vmatprep.subr.mxu0 %v498
    %605 = vmatpush1.msra.mxu0 %v497
    %606 = vmatprep.subr.mxu0 %v494
    %607 = vmatpush1.msra.mxu0 %v493
    %608 = vmatprep.subr.mxu0 %v490
    %609 = vmatpush1.msra.mxu0 %v489
    %610 = vmatprep.subr.mxu0 %v486
    %611 = vmatpush1.msra.mxu0 %v485
    %612 = vmatprep.subr.mxu0 %v482
    %613 = vmatpush1.msra.mxu0 %v481
    %614 = vmatprep.subr.mxu0 %v478
    %615 = vmatpush1.msra.mxu0 %v477
    %616 = vmatprep.subr.mxu0 %v474
    %617 = vmatpush1.msra.mxu0 %v473
    %618 = vmatprep.subr.mxu0 %v470
    %619 = vmatpush1.msra.mxu0 %v469
    %620 = vmatprep.subr.mxu0 %v466
    %621 = vmatpush1.msra.mxu0 %v465
    %622 = vmatprep.subr.mxu0 %v462
    %623 = vmatpush1.msra.mxu0 %v461
    %624 = vmatprep.subr.mxu0 %v458
    %625 = vmatpush1.msra.mxu0 %v457
    %626 = vmatprep.subr.mxu0 0.0
    %627 = vmatpush2.msra.mxu0 0.0
    %628 = vmatprep.subr.mxu0 0.0
    %629 = vmatpush2.msra.mxu0 0.0
    %630 = vmatprep.subr.mxu0 0.0
    %631 = vmatpush2.msra.mxu0 0.0
    %632 = vmatprep.subr.mxu0 0.0
    %633 = vmatpush2.msra.mxu0 0.0
    %634 = vmatprep.subr.mxu0 0.0
    %635 = vmatpush2.msra.mxu0 0.0
    %636 = vmatprep.subr.mxu0 0.0
    %637 = vmatpush2.msra.mxu0 0.0
    %638 = vmatprep.subr.mxu0 0.0
    %639 = vmatpush2.msra.mxu0 0.0
    %640 = vmatprep.subr.mxu0 0.0
    %641 = vmatpush2.msra.mxu0 0.0
    %642 = vmatprep.subr.mxu0 0.0
    %643 = vmatpush2.msra.mxu0 0.0
    %644 = vmatprep.subr.mxu0 0.0
    %645 = vmatpush2.msra.mxu0 0.0
    %646 = vmatprep.subr.mxu0 0.0
    %647 = vmatpush2.msra.mxu0 0.0
    %648 = vmatprep.subr.mxu0 0.0
    %649 = vmatpush2.msra.mxu0 0.0
    %650 = vmatprep.subr.mxu0 0.0
    %651 = vmatpush2.msra.mxu0 0.0
    %652 = vmatprep.subr.mxu0 0.0
    %653 = vmatpush2.msra.mxu0 0.0
    %654 = vmatprep.subr.mxu0 0.0
    %655 = vmatpush2.msra.mxu0 0.0
    %656 = vmatprep.subr.mxu0 0.0
    %657 = vmatpush2.msra.mxu0 0.0
    %658 = vmatprep.mubr.f32.mxu0 0.0
    %659 = vmatmul.mubr.f32.gmra.mxu0 %v453
    %v660 = vpop.f32.mrf.mxu0
    %v661 = vadd.f32 %v521, %v660
    %v662 = vpop.f32.mrf.mxu0
    %v663 = vadd.f32 %v522, %v662
    %664 = vdwg.mxu0
    %v665 = vxor.u32 %v590, 2147483648
    %v666 = vxor.u32 %v592, 2147483648
    %v667 = vxor.u32 %v661, 2147483648
    %v668 = vmul.f32 %v665, 1.442695
    %v669 = vpow.pop %v668
    %v670 = vmul.f32 %v666, 1.442695
    %v671 = vpow.pop %v670
    %v672 = vmul.f32 %v667, 1.442695
    %v673 = vpow.pop %v672
    %v674 = vadd.f32 %v669, 1.0
    %v675 = vadd.f32 %v671, 1.0
    %v676 = vadd.f32 %v673, 1.0
    %v677 = vrcp.pop %v674
    %v678 = vmul.f32 1.0, %v677
    %v679 = vrcp.pop %v675
    %v680 = vmul.f32 1.0, %v679
    %v681 = vrcp.pop %v676
    %v682 = vmul.f32 1.0, %v681
    %v683 = vtanh.pop %v663
    %v684 = vmul.f32 %v680, %v454
    %v685 = vmul.f32 %v678, %v683
    %v686 = vadd.f32 %v684, %v685
    %v687 = vtanh.pop %v686
    %v688 = vmul.f32 %v682, %v687
    %689 = vst [vmem:[#allocation11] sm:$0xff] %v688
    %v690 = vld [vmem:[#allocation10] sm:$0xff]
    %v691 = vld [vmem:[#allocation10 + $0x8] sm:$0xff]
    %v692 = vld [vmem:[#allocation10 + $0x10] sm:$0xff]
    %v693 = vld [vmem:[#allocation10 + $0x18] sm:$0xff]
    %v694 = vld [vmem:[#allocation10 + $0x20] sm:$0xff]
    %v695 = vld [vmem:[#allocation10 + $0x28] sm:$0xff]
    %v696 = vld [vmem:[#allocation10 + $0x30] sm:$0xff]
    %v697 = vld [vmem:[#allocation10 + $0x38] sm:$0xff]
    %v698 = vld [vmem:[#allocation10 + $0x40] sm:$0xff]
    %v699 = vld [vmem:[#allocation10 + $0x48] sm:$0xff]
    %v700 = vld [vmem:[#allocation10 + $0x50] sm:$0xff]
    %v701 = vld [vmem:[#allocation10 + $0x58] sm:$0xff]
    %v702 = vld [vmem:[#allocation10 + $0x60] sm:$0xff]
    %v703 = vld [vmem:[#allocation10 + $0x68] sm:$0xff]
    %v704 = vld [vmem:[#allocation10 + $0x70] sm:$0xff]
    %v705 = vld [vmem:[#allocation10 + $0x78] sm:$0xff]
    %v706 = vld [vmem:[#allocation10 + $0x80] sm:$0xff]
    %v707 = vld [vmem:[#allocation10 + $0x88] sm:$0xff]
    %v708 = vld [vmem:[#allocation10 + $0x90] sm:$0xff]
    %v709 = vld [vmem:[#allocation10 + $0x98] sm:$0xff]
    %v710 = vld [vmem:[#allocation10 + $0xa0] sm:$0xff]
    %v711 = vld [vmem:[#allocation10 + $0xa8] sm:$0xff]
    %v712 = vld [vmem:[#allocation10 + $0xb0] sm:$0xff]
    %v713 = vld [vmem:[#allocation10 + $0xb8] sm:$0xff]
    %v714 = vld [vmem:[#allocation10 + $0xc0] sm:$0xff]
    %v715 = vld [vmem:[#allocation10 + $0xc8] sm:$0xff]
    %v716 = vld [vmem:[#allocation10 + $0xd0] sm:$0xff]
    %v717 = vld [vmem:[#allocation10 + $0xd8] sm:$0xff]
    %v718 = vld [vmem:[#allocation10 + $0xe0] sm:$0xff]
    %v719 = vld [vmem:[#allocation10 + $0xe8] sm:$0xff]
    %v720 = vld [vmem:[#allocation10 + $0xf0] sm:$0xff]
    %v721 = vld [vmem:[#allocation10 + $0xf8] sm:$0xff]
    %v722 = vld [vmem:[#allocation10 + $0x100] sm:$0xff]
    %v723 = vld [vmem:[#allocation10 + $0x108] sm:$0xff]
    %v724 = vld [vmem:[#allocation10 + $0x110] sm:$0xff]
    %v725 = vld [vmem:[#allocation10 + $0x118] sm:$0xff]
    %v726 = vld [vmem:[#allocation10 + $0x120] sm:$0xff]
    %v727 = vld [vmem:[#allocation10 + $0x128] sm:$0xff]
    %v728 = vld [vmem:[#allocation10 + $0x130] sm:$0xff]
    %v729 = vld [vmem:[#allocation10 + $0x138] sm:$0xff]
    %v730 = vld [vmem:[#allocation10 + $0x140] sm:$0xff]
    %v731 = vld [vmem:[#allocation10 + $0x148] sm:$0xff]
    %v732 = vld [vmem:[#allocation10 + $0x150] sm:$0xff]
    %v733 = vld [vmem:[#allocation10 + $0x158] sm:$0xff]
    %v734 = vld [vmem:[#allocation10 + $0x160] sm:$0xff]
    %v735 = vld [vmem:[#allocation10 + $0x168] sm:$0xff]
    %v736 = vld [vmem:[#allocation10 + $0x170] sm:$0xff]
    %v737 = vld [vmem:[#allocation10 + $0x178] sm:$0xff]
    %v738 = vld [vmem:[#allocation10 + $0x180] sm:$0xff]
    %v739 = vld [vmem:[#allocation10 + $0x188] sm:$0xff]
    %v740 = vld [vmem:[#allocation10 + $0x190] sm:$0xff]
    %v741 = vld [vmem:[#allocation10 + $0x198] sm:$0xff]
    %v742 = vld [vmem:[#allocation10 + $0x1a0] sm:$0xff]
    %v743 = vld [vmem:[#allocation10 + $0x1a8] sm:$0xff]
    %v744 = vld [vmem:[#allocation10 + $0x1b0] sm:$0xff]
    %v745 = vld [vmem:[#allocation10 + $0x1b8] sm:$0xff]
    %v746 = vld [vmem:[#allocation10 + $0x1c0] sm:$0xff]
    %v747 = vld [vmem:[#allocation10 + $0x1c8] sm:$0xff]
    %v748 = vld [vmem:[#allocation10 + $0x1d0] sm:$0xff]
    %v749 = vld [vmem:[#allocation10 + $0x1d8] sm:$0xff]
    %v750 = vld [vmem:[#allocation10 + $0x1e0] sm:$0xff]
    %v751 = vld [vmem:[#allocation10 + $0x1e8] sm:$0xff]
    %v752 = vld [vmem:[#allocation10 + $0x1f0] sm:$0xff]
    %v753 = vld [vmem:[#allocation10 + $0x1f8] sm:$0xff]
    %s754 = scalar_lea.vmem [#allocation4], 32
    %v755 = vld [vmem:[%s754] sm:$0xff]
    %v756 = vld [vmem:[%s754 + $0x8] sm:$0xff]
    %v757 = vld [vmem:[%s754 + $0x10] sm:$0xff]
    %v758 = vld [vmem:[%s754 + $0x18] sm:$0xff]
    %759 = vmatprep.subr.mxu0 %v751
    %760 = vmatpush1.msra.mxu0 %v750
    %761 = vmatprep.subr.mxu0 %v747
    %762 = vmatpush1.msra.mxu0 %v746
    %763 = vmatprep.subr.mxu0 %v743
    %764 = vmatpush1.msra.mxu0 %v742
    %765 = vmatprep.subr.mxu0 %v739
    %766 = vmatpush1.msra.mxu0 %v738
    %767 = vmatprep.subr.mxu0 %v735
    %768 = vmatpush1.msra.mxu0 %v734
    %769 = vmatprep.subr.mxu0 %v731
    %770 = vmatpush1.msra.mxu0 %v730
    %771 = vmatprep.subr.mxu0 %v727
    %772 = vmatpush1.msra.mxu0 %v726
    %773 = vmatprep.subr.mxu0 %v723
    %774 = vmatpush1.msra.mxu0 %v722
    %775 = vmatprep.subr.mxu0 %v719
    %776 = vmatpush1.msra.mxu0 %v718
    %777 = vmatprep.subr.mxu0 %v715
    %778 = vmatpush1.msra.mxu0 %v714
    %779 = vmatprep.subr.mxu0 %v711
    %780 = vmatpush1.msra.mxu0 %v710
    %781 = vmatprep.subr.mxu0 %v707
    %782 = vmatpush1.msra.mxu0 %v706
    %783 = vmatprep.subr.mxu0 %v703
    %784 = vmatpush1.msra.mxu0 %v702
    %785 = vmatprep.subr.mxu0 %v699
    %786 = vmatpush1.msra.mxu0 %v698
    %787 = vmatprep.subr.mxu0 %v695
    %788 = vmatpush1.msra.mxu0 %v694
    %789 = vmatprep.subr.mxu0 %v691
    %790 = vmatpush1.msra.mxu0 %v690
    %791 = vmatprep.subr.mxu0 0.0
    %792 = vmatpush2.msra.mxu0 0.0
    %793 = vmatprep.subr.mxu0 0.0
    %794 = vmatpush2.msra.mxu0 0.0
    %795 = vmatprep.subr.mxu0 0.0
    %796 = vmatpush2.msra.mxu0 0.0
    %797 = vmatprep.subr.mxu0 0.0
    %798 = vmatpush2.msra.mxu0 0.0
    %799 = vmatprep.subr.mxu0 0.0
    %800 = vmatpush2.msra.mxu0 0.0
    %801 = vmatprep.subr.mxu0 0.0
    %802 = vmatpush2.msra.mxu0 0.0
    %803 = vmatprep.subr.mxu0 0.0
    %804 = vmatpush2.msra.mxu0 0.0
    %805 = vmatprep.subr.mxu0 0.0
    %806 = vmatpush2.msra.mxu0 0.0
    %807 = vmatprep.subr.mxu0 0.0
    %808 = vmatpush2.msra.mxu0 0.0
    %809 = vmatprep.subr.mxu0 0.0
    %810 = vmatpush2.msra.mxu0 0.0
    %811 = vmatprep.subr.mxu0 0.0
    %812 = vmatpush2.msra.mxu0 0.0
    %813 = vmatprep.subr.mxu0 0.0
    %814 = vmatpush2.msra.mxu0 0.0
    %815 = vmatprep.subr.mxu0 0.0
    %816 = vmatpush2.msra.mxu0 0.0
    %817 = vmatprep.subr.mxu0 0.0
    %818 = vmatpush2.msra.mxu0 0.0
    %819 = vmatprep.subr.mxu0 0.0
    %820 = vmatpush2.msra.mxu0 0.0
    %821 = vmatprep.subr.mxu0 0.0
    %822 = vmatpush2.msra.mxu0 0.0
    %823 = vmatprep.mubr.f32.mxu0 0.0
    %824 = vmatmul.mubr.f32.gmra.mxu0 %v688
    %v825 = vpop.f32.mrf.mxu0
    %v826 = vadd.f32 %v755, %v825
    %v827 = vpop.f32.mrf.mxu0
    %v828 = vadd.f32 %v756, %v827
    %829 = vdwg.mxu0
    %830 = vmatprep.subr.mxu0 %v753
    %831 = vmatpush1.msra.mxu0 %v752
    %832 = vmatprep.subr.mxu0 %v749
    %833 = vmatpush1.msra.mxu0 %v748
    %834 = vmatprep.subr.mxu0 %v745
    %835 = vmatpush1.msra.mxu0 %v744
    %836 = vmatprep.subr.mxu0 %v741
    %837 = vmatpush1.msra.mxu0 %v740
    %838 = vmatprep.subr.mxu0 %v737
    %839 = vmatpush1.msra.mxu0 %v736
    %840 = vmatprep.subr.mxu0 %v733
    %841 = vmatpush1.msra.mxu0 %v732
    %842 = vmatprep.subr.mxu0 %v729
    %843 = vmatpush1.msra.mxu0 %v728
    %844 = vmatprep.subr.mxu0 %v725
    %845 = vmatpush1.msra.mxu0 %v724
    %846 = vmatprep.subr.mxu0 %v721
    %847 = vmatpush1.msra.mxu0 %v720
    %848 = vmatprep.subr.mxu0 %v717
    %849 = vmatpush1.msra.mxu0 %v716
    %850 = vmatprep.subr.mxu0 %v713
    %851 = vmatpush1.msra.mxu0 %v712
    %852 = vmatprep.subr.mxu0 %v709
    %853 = vmatpush1.msra.mxu0 %v708
    %854 = vmatprep.subr.mxu0 %v705
    %855 = vmatpush1.msra.mxu0 %v704
    %856 = vmatprep.subr.mxu0 %v701
    %857 = vmatpush1.msra.mxu0 %v700
    %858 = vmatprep.subr.mxu0 %v697
    %859 = vmatpush1.msra.mxu0 %v696
    %860 = vmatprep.subr.mxu0 %v693
    %861 = vmatpush1.msra.mxu0 %v692
    %862 = vmatprep.subr.mxu0 0.0
    %863 = vmatpush2.msra.mxu0 0.0
    %864 = vmatprep.subr.mxu0 0.0
    %865 = vmatpush2.msra.mxu0 0.0
    %866 = vmatprep.subr.mxu0 0.0
    %867 = vmatpush2.msra.mxu0 0.0
    %868 = vmatprep.subr.mxu0 0.0
    %869 = vmatpush2.msra.mxu0 0.0
    %870 = vmatprep.subr.mxu0 0.0
    %871 = vmatpush2.msra.mxu0 0.0
    %872 = vmatprep.subr.mxu0 0.0
    %873 = vmatpush2.msra.mxu0 0.0
    %874 = vmatprep.subr.mxu0 0.0
    %875 = vmatpush2.msra.mxu0 0.0
    %876 = vmatprep.subr.mxu0 0.0
    %877 = vmatpush2.msra.mxu0 0.0
    %878 = vmatprep.subr.mxu0 0.0
    %879 = vmatpush2.msra.mxu0 0.0
    %880 = vmatprep.subr.mxu0 0.0
    %881 = vmatpush2.msra.mxu0 0.0
    %882 = vmatprep.subr.mxu0 0.0
    %883 = vmatpush2.msra.mxu0 0.0
    %884 = vmatprep.subr.mxu0 0.0
    %885 = vmatpush2.msra.mxu0 0.0
    %886 = vmatprep.subr.mxu0 0.0
    %887 = vmatpush2.msra.mxu0 0.0
    %888 = vmatprep.subr.mxu0 0.0
    %889 = vmatpush2.msra.mxu0 0.0
    %890 = vmatprep.subr.mxu0 0.0
    %891 = vmatpush2.msra.mxu0 0.0
    %892 = vmatprep.subr.mxu0 0.0
    %893 = vmatpush2.msra.mxu0 0.0
    %894 = vmatprep.mubr.f32.mxu0 0.0
    %895 = vmatmul.mubr.f32.gmra.mxu0 %v688
    %v896 = vpop.f32.mrf.mxu0
    %v897 = vadd.f32 %v757, %v896
    %v898 = vpop.f32.mrf.mxu0
    %v899 = vadd.f32 %v758, %v898
    %900 = vdwg.mxu0
    %v901 = vxor.u32 %v826, 2147483648
    %v902 = vxor.u32 %v828, 2147483648
    %v903 = vxor.u32 %v897, 2147483648
    %v904 = vmul.f32 %v901, 1.442695
    %v905 = vpow.pop %v904
    %v906 = vmul.f32 %v902, 1.442695
    %v907 = vpow.pop %v906
    %v908 = vmul.f32 %v903, 1.442695
    %v909 = vpow.pop %v908
    %v910 = vadd.f32 %v905, 1.0
    %v911 = vadd.f32 %v907, 1.0
    %v912 = vadd.f32 %v909, 1.0
    %v913 = vrcp.pop %v910
    %v914 = vmul.f32 1.0, %v913
    %v915 = vrcp.pop %v911
    %v916 = vmul.f32 1.0, %v915
    %v917 = vrcp.pop %v912
    %v918 = vmul.f32 1.0, %v917
    %v919 = vtanh.pop %v899
    %v920 = vmul.f32 %v916, %v686
    %v921 = vmul.f32 %v914, %v919
    %v922 = vadd.f32 %v920, %v921
    %v923 = vtanh.pop %v922
    %v924 = vmul.f32 %v918, %v923
    %s925 = scalar_lea.vmem [#allocation11], 8
    %926 = vst [vmem:[%s925] sm:$0xff] %v924
    %v927 = vld [vmem:[#allocation10] sm:$0xff]
    %v928 = vld [vmem:[#allocation10 + $0x8] sm:$0xff]
    %v929 = vld [vmem:[#allocation10 + $0x10] sm:$0xff]
    %v930 = vld [vmem:[#allocation10 + $0x18] sm:$0xff]
    %v931 = vld [vmem:[#allocation10 + $0x20] sm:$0xff]
    %v932 = vld [vmem:[#allocation10 + $0x28] sm:$0xff]
    %v933 = vld [vmem:[#allocation10 + $0x30] sm:$0xff]
    %v934 = vld [vmem:[#allocation10 + $0x38] sm:$0xff]
    %v935 = vld [vmem:[#allocation10 + $0x40] sm:$0xff]
    %v936 = vld [vmem:[#allocation10 + $0x48] sm:$0xff]
    %v937 = vld [vmem:[#allocation10 + $0x50] sm:$0xff]
    %v938 = vld [vmem:[#allocation10 + $0x58] sm:$0xff]
    %v939 = vld [vmem:[#allocation10 + $0x60] sm:$0xff]
    %v940 = vld [vmem:[#allocation10 + $0x68] sm:$0xff]
    %v941 = vld [vmem:[#allocation10 + $0x70] sm:$0xff]
    %v942 = vld [vmem:[#allocation10 + $0x78] sm:$0xff]
    %v943 = vld [vmem:[#allocation10 + $0x80] sm:$0xff]
    %v944 = vld [vmem:[#allocation10 + $0x88] sm:$0xff]
    %v945 = vld [vmem:[#allocation10 + $0x90] sm:$0xff]
    %v946 = vld [vmem:[#allocation10 + $0x98] sm:$0xff]
    %v947 = vld [vmem:[#allocation10 + $0xa0] sm:$0xff]
    %v948 = vld [vmem:[#allocation10 + $0xa8] sm:$0xff]
    %v949 = vld [vmem:[#allocation10 + $0xb0] sm:$0xff]
    %v950 = vld [vmem:[#allocation10 + $0xb8] sm:$0xff]
    %v951 = vld [vmem:[#allocation10 + $0xc0] sm:$0xff]
    %v952 = vld [vmem:[#allocation10 + $0xc8] sm:$0xff]
    %v953 = vld [vmem:[#allocation10 + $0xd0] sm:$0xff]
    %v954 = vld [vmem:[#allocation10 + $0xd8] sm:$0xff]
    %v955 = vld [vmem:[#allocation10 + $0xe0] sm:$0xff]
    %v956 = vld [vmem:[#allocation10 + $0xe8] sm:$0xff]
    %v957 = vld [vmem:[#allocation10 + $0xf0] sm:$0xff]
    %v958 = vld [vmem:[#allocation10 + $0xf8] sm:$0xff]
    %v959 = vld [vmem:[#allocation10 + $0x100] sm:$0xff]
    %v960 = vld [vmem:[#allocation10 + $0x108] sm:$0xff]
    %v961 = vld [vmem:[#allocation10 + $0x110] sm:$0xff]
    %v962 = vld [vmem:[#allocation10 + $0x118] sm:$0xff]
    %v963 = vld [vmem:[#allocation10 + $0x120] sm:$0xff]
    %v964 = vld [vmem:[#allocation10 + $0x128] sm:$0xff]
    %v965 = vld [vmem:[#allocation10 + $0x130] sm:$0xff]
    %v966 = vld [vmem:[#allocation10 + $0x138] sm:$0xff]
    %v967 = vld [vmem:[#allocation10 + $0x140] sm:$0xff]
    %v968 = vld [vmem:[#allocation10 + $0x148] sm:$0xff]
    %v969 = vld [vmem:[#allocation10 + $0x150] sm:$0xff]
    %v970 = vld [vmem:[#allocation10 + $0x158] sm:$0xff]
    %v971 = vld [vmem:[#allocation10 + $0x160] sm:$0xff]
    %v972 = vld [vmem:[#allocation10 + $0x168] sm:$0xff]
    %v973 = vld [vmem:[#allocation10 + $0x170] sm:$0xff]
    %v974 = vld [vmem:[#allocation10 + $0x178] sm:$0xff]
    %v975 = vld [vmem:[#allocation10 + $0x180] sm:$0xff]
    %v976 = vld [vmem:[#allocation10 + $0x188] sm:$0xff]
    %v977 = vld [vmem:[#allocation10 + $0x190] sm:$0xff]
    %v978 = vld [vmem:[#allocation10 + $0x198] sm:$0xff]
    %v979 = vld [vmem:[#allocation10 + $0x1a0] sm:$0xff]
    %v980 = vld [vmem:[#allocation10 + $0x1a8] sm:$0xff]
    %v981 = vld [vmem:[#allocation10 + $0x1b0] sm:$0xff]
    %v982 = vld [vmem:[#allocation10 + $0x1b8] sm:$0xff]
    %v983 = vld [vmem:[#allocation10 + $0x1c0] sm:$0xff]
    %v984 = vld [vmem:[#allocation10 + $0x1c8] sm:$0xff]
    %v985 = vld [vmem:[#allocation10 + $0x1d0] sm:$0xff]
    %v986 = vld [vmem:[#allocation10 + $0x1d8] sm:$0xff]
    %v987 = vld [vmem:[#allocation10 + $0x1e0] sm:$0xff]
    %v988 = vld [vmem:[#allocation10 + $0x1e8] sm:$0xff]
    %v989 = vld [vmem:[#allocation10 + $0x1f0] sm:$0xff]
    %v990 = vld [vmem:[#allocation10 + $0x1f8] sm:$0xff]
    %s991 = scalar_lea.vmem [#allocation4], 64
    %v992 = vld [vmem:[%s991] sm:$0xff]
    %v993 = vld [vmem:[%s991 + $0x8] sm:$0xff]
    %v994 = vld [vmem:[%s991 + $0x10] sm:$0xff]
    %v995 = vld [vmem:[%s991 + $0x18] sm:$0xff]
    %996 = vmatprep.subr.mxu0 %v988
    %997 = vmatpush1.msra.mxu0 %v987
    %998 = vmatprep.subr.mxu0 %v984
    %999 = vmatpush1.msra.mxu0 %v983
    %1000 = vmatprep.subr.mxu0 %v980
    %1001 = vmatpush1.msra.mxu0 %v979
    %1002 = vmatprep.subr.mxu0 %v976
    %1003 = vmatpush1.msra.mxu0 %v975
    %1004 = vmatprep.subr.mxu0 %v972
    %1005 = vmatpush1.msra.mxu0 %v971
    %1006 = vmatprep.subr.mxu0 %v968
    %1007 = vmatpush1.msra.mxu0 %v967
    %1008 = vmatprep.subr.mxu0 %v964
    %1009 = vmatpush1.msra.mxu0 %v963
    %1010 = vmatprep.subr.mxu0 %v960
    %1011 = vmatpush1.msra.mxu0 %v959
    %1012 = vmatprep.subr.mxu0 %v956
    %1013 = vmatpush1.msra.mxu0 %v955
    %1014 = vmatprep.subr.mxu0 %v952
    %1015 = vmatpush1.msra.mxu0 %v951
    %1016 = vmatprep.subr.mxu0 %v948
    %1017 = vmatpush1.msra.mxu0 %v947
    %1018 = vmatprep.subr.mxu0 %v944
    %1019 = vmatpush1.msra.mxu0 %v943
    %1020 = vmatprep.subr.mxu0 %v940
    %1021 = vmatpush1.msra.mxu0 %v939
    %1022 = vmatprep.subr.mxu0 %v936
    %1023 = vmatpush1.msra.mxu0 %v935
    %1024 = vmatprep.subr.mxu0 %v932
    %1025 = vmatpush1.msra.mxu0 %v931
    %1026 = vmatprep.subr.mxu0 %v928
    %1027 = vmatpush1.msra.mxu0 %v927
    %1028 = vmatprep.subr.mxu0 0.0
    %1029 = vmatpush2.msra.mxu0 0.0
    %1030 = vmatprep.subr.mxu0 0.0
    %1031 = vmatpush2.msra.mxu0 0.0
    %1032 = vmatprep.subr.mxu0 0.0
    %1033 = vmatpush2.msra.mxu0 0.0
    %1034 = vmatprep.subr.mxu0 0.0
    %1035 = vmatpush2.msra.mxu0 0.0
    %1036 = vmatprep.subr.mxu0 0.0
    %1037 = vmatpush2.msra.mxu0 0.0
    %1038 = vmatprep.subr.mxu0 0.0
    %1039 = vmatpush2.msra.mxu0 0.0
    %1040 = vmatprep.subr.mxu0 0.0
    %1041 = vmatpush2.msra.mxu0 0.0
    %1042 = vmatprep.subr.mxu0 0.0
    %1043 = vmatpush2.msra.mxu0 0.0
    %1044 = vmatprep.subr.mxu0 0.0
    %1045 = vmatpush2.msra.mxu0 0.0
    %1046 = vmatprep.subr.mxu0 0.0
    %1047 = vmatpush2.msra.mxu0 0.0
    %1048 = vmatprep.subr.mxu0 0.0
    %1049 = vmatpush2.msra.mxu0 0.0
    %1050 = vmatprep.subr.mxu0 0.0
    %1051 = vmatpush2.msra.mxu0 0.0
    %1052 = vmatprep.subr.mxu0 0.0
    %1053 = vmatpush2.msra.mxu0 0.0
    %1054 = vmatprep.subr.mxu0 0.0
    %1055 = vmatpush2.msra.mxu0 0.0
    %1056 = vmatprep.subr.mxu0 0.0
    %1057 = vmatpush2.msra.mxu0 0.0
    %1058 = vmatprep.subr.mxu0 0.0
    %1059 = vmatpush2.msra.mxu0 0.0
    %1060 = vmatprep.mubr.f32.mxu0 0.0
    %1061 = vmatmul.mubr.f32.gmra.mxu0 %v924
    %v1062 = vpop.f32.mrf.mxu0
    %v1063 = vadd.f32 %v992, %v1062
    %v1064 = vpop.f32.mrf.mxu0
    %v1065 = vadd.f32 %v993, %v1064
    %1066 = vdwg.mxu0
    %1067 = vmatprep.subr.mxu0 %v990
    %1068 = vmatpush1.msra.mxu0 %v989
    %1069 = vmatprep.subr.mxu0 %v986
    %1070 = vmatpush1.msra.mxu0 %v985
    %1071 = vmatprep.subr.mxu0 %v982
    %1072 = vmatpush1.msra.mxu0 %v981
    %1073 = vmatprep.subr.mxu0 %v978
    %1074 = vmatpush1.msra.mxu0 %v977
    %1075 = vmatprep.subr.mxu0 %v974
    %1076 = vmatpush1.msra.mxu0 %v973
    %1077 = vmatprep.subr.mxu0 %v970
    %1078 = vmatpush1.msra.mxu0 %v969
    %1079 = vmatprep.subr.mxu0 %v966
    %1080 = vmatpush1.msra.mxu0 %v965
    %1081 = vmatprep.subr.mxu0 %v962
    %1082 = vmatpush1.msra.mxu0 %v961
    %1083 = vmatprep.subr.mxu0 %v958
    %1084 = vmatpush1.msra.mxu0 %v957
    %1085 = vmatprep.subr.mxu0 %v954
    %1086 = vmatpush1.msra.mxu0 %v953
    %1087 = vmatprep.subr.mxu0 %v950
    %1088 = vmatpush1.msra.mxu0 %v949
    %1089 = vmatprep.subr.mxu0 %v946
    %1090 = vmatpush1.msra.mxu0 %v945
    %1091 = vmatprep.subr.mxu0 %v942
    %1092 = vmatpush1.msra.mxu0 %v941
    %1093 = vmatprep.subr.mxu0 %v938
    %1094 = vmatpush1.msra.mxu0 %v937
    %1095 = vmatprep.subr.mxu0 %v934
    %1096 = vmatpush1.msra.mxu0 %v933
    %1097 = vmatprep.subr.mxu0 %v930
    %1098 = vmatpush1.msra.mxu0 %v929
    %1099 = vmatprep.subr.mxu0 0.0
    %1100 = vmatpush2.msra.mxu0 0.0
    %1101 = vmatprep.subr.mxu0 0.0
    %1102 = vmatpush2.msra.mxu0 0.0
    %1103 = vmatprep.subr.mxu0 0.0
    %1104 = vmatpush2.msra.mxu0 0.0
    %1105 = vmatprep.subr.mxu0 0.0
    %1106 = vmatpush2.msra.mxu0 0.0
    %1107 = vmatprep.subr.mxu0 0.0
    %1108 = vmatpush2.msra.mxu0 0.0
    %1109 = vmatprep.subr.mxu0 0.0
    %1110 = vmatpush2.msra.mxu0 0.0
    %1111 = vmatprep.subr.mxu0 0.0
    %1112 = vmatpush2.msra.mxu0 0.0
    %1113 = vmatprep.subr.mxu0 0.0
    %1114 = vmatpush2.msra.mxu0 0.0
    %1115 = vmatprep.subr.mxu0 0.0
    %1116 = vmatpush2.msra.mxu0 0.0
    %1117 = vmatprep.subr.mxu0 0.0
    %1118 = vmatpush2.msra.mxu0 0.0
    %1119 = vmatprep.subr.mxu0 0.0
    %1120 = vmatpush2.msra.mxu0 0.0
    %1121 = vmatprep.subr.mxu0 0.0
    %1122 = vmatpush2.msra.mxu0 0.0
    %1123 = vmatprep.subr.mxu0 0.0
    %1124 = vmatpush2.msra.mxu0 0.0
    %1125 = vmatprep.subr.mxu0 0.0
    %1126 = vmatpush2.msra.mxu0 0.0
    %1127 = vmatprep.subr.mxu0 0.0
    %1128 = vmatpush2.msra.mxu0 0.0
    %1129 = vmatprep.subr.mxu0 0.0
    %1130 = vmatpush2.msra.mxu0 0.0
    %1131 = vmatprep.mubr.f32.mxu0 0.0
    %1132 = vmatmul.mubr.f32.gmra.mxu0 %v924
    %v1133 = vpop.f32.mrf.mxu0
    %v1134 = vadd.f32 %v994, %v1133
    %v1135 = vpop.f32.mrf.mxu0
    %v1136 = vadd.f32 %v995, %v1135
    %1137 = vdwg.mxu0
    %v1138 = vxor.u32 %v1063, 2147483648
    %v1139 = vxor.u32 %v1065, 2147483648
    %v1140 = vxor.u32 %v1134, 2147483648
    %v1141 = vmul.f32 %v1138, 1.442695
    %v1142 = vpow.pop %v1141
    %v1143 = vmul.f32 %v1139, 1.442695
    %v1144 = vpow.pop %v1143
    %v1145 = vmul.f32 %v1140, 1.442695
    %v1146 = vpow.pop %v1145
    %v1147 = vadd.f32 %v1142, 1.0
    %v1148 = vadd.f32 %v1144, 1.0
    %v1149 = vadd.f32 %v1146, 1.0
    %v1150 = vrcp.pop %v1147
    %v1151 = vmul.f32 1.0, %v1150
    %v1152 = vrcp.pop %v1148
    %v1153 = vmul.f32 1.0, %v1152
    %v1154 = vrcp.pop %v1149
    %v1155 = vmul.f32 1.0, %v1154
    %v1156 = vtanh.pop %v1136
    %v1157 = vmul.f32 %v1153, %v922
    %v1158 = vmul.f32 %v1151, %v1156
    %v1159 = vadd.f32 %v1157, %v1158
    %v1160 = vtanh.pop %v1159
    %v1161 = vmul.f32 %v1155, %v1160
    %s1162 = scalar_lea.vmem [#allocation11], 16
    %1163 = vst [vmem:[%s1162] sm:$0xff] %v1161
    %v1164 = vld [vmem:[#allocation10] sm:$0xff]
    %v1165 = vld [vmem:[#allocation10 + $0x8] sm:$0xff]
    %v1166 = vld [vmem:[#allocation10 + $0x10] sm:$0xff]
    %v1167 = vld [vmem:[#allocation10 + $0x18] sm:$0xff]
    %v1168 = vld [vmem:[#allocation10 + $0x20] sm:$0xff]
    %v1169 = vld [vmem:[#allocation10 + $0x28] sm:$0xff]
    %v1170 = vld [vmem:[#allocation10 + $0x30] sm:$0xff]
    %v1171 = vld [vmem:[#allocation10 + $0x38] sm:$0xff]
    %v1172 = vld [vmem:[#allocation10 + $0x40] sm:$0xff]
    %v1173 = vld [vmem:[#allocation10 + $0x48] sm:$0xff]
    %v1174 = vld [vmem:[#allocation10 + $0x50] sm:$0xff]
    %v1175 = vld [vmem:[#allocation10 + $0x58] sm:$0xff]
    %v1176 = vld [vmem:[#allocation10 + $0x60] sm:$0xff]
    %v1177 = vld [vmem:[#allocation10 + $0x68] sm:$0xff]
    %v1178 = vld [vmem:[#allocation10 + $0x70] sm:$0xff]
    %v1179 = vld [vmem:[#allocation10 + $0x78] sm:$0xff]
    %v1180 = vld [vmem:[#allocation10 + $0x80] sm:$0xff]
    %v1181 = vld [vmem:[#allocation10 + $0x88] sm:$0xff]
    %v1182 = vld [vmem:[#allocation10 + $0x90] sm:$0xff]
    %v1183 = vld [vmem:[#allocation10 + $0x98] sm:$0xff]
    %v1184 = vld [vmem:[#allocation10 + $0xa0] sm:$0xff]
    %v1185 = vld [vmem:[#allocation10 + $0xa8] sm:$0xff]
    %v1186 = vld [vmem:[#allocation10 + $0xb0] sm:$0xff]
    %v1187 = vld [vmem:[#allocation10 + $0xb8] sm:$0xff]
    %v1188 = vld [vmem:[#allocation10 + $0xc0] sm:$0xff]
    %v1189 = vld [vmem:[#allocation10 + $0xc8] sm:$0xff]
    %v1190 = vld [vmem:[#allocation10 + $0xd0] sm:$0xff]
    %v1191 = vld [vmem:[#allocation10 + $0xd8] sm:$0xff]
    %v1192 = vld [vmem:[#allocation10 + $0xe0] sm:$0xff]
    %v1193 = vld [vmem:[#allocation10 + $0xe8] sm:$0xff]
    %v1194 = vld [vmem:[#allocation10 + $0xf0] sm:$0xff]
    %v1195 = vld [vmem:[#allocation10 + $0xf8] sm:$0xff]
    %v1196 = vld [vmem:[#allocation10 + $0x100] sm:$0xff]
    %v1197 = vld [vmem:[#allocation10 + $0x108] sm:$0xff]
    %v1198 = vld [vmem:[#allocation10 + $0x110] sm:$0xff]
    %v1199 = vld [vmem:[#allocation10 + $0x118] sm:$0xff]
    %v1200 = vld [vmem:[#allocation10 + $0x120] sm:$0xff]
    %v1201 = vld [vmem:[#allocation10 + $0x128] sm:$0xff]
    %v1202 = vld [vmem:[#allocation10 + $0x130] sm:$0xff]
    %v1203 = vld [vmem:[#allocation10 + $0x138] sm:$0xff]
    %v1204 = vld [vmem:[#allocation10 + $0x140] sm:$0xff]
    %v1205 = vld [vmem:[#allocation10 + $0x148] sm:$0xff]
    %v1206 = vld [vmem:[#allocation10 + $0x150] sm:$0xff]
    %v1207 = vld [vmem:[#allocation10 + $0x158] sm:$0xff]
    %v1208 = vld [vmem:[#allocation10 + $0x160] sm:$0xff]
    %v1209 = vld [vmem:[#allocation10 + $0x168] sm:$0xff]
    %v1210 = vld [vmem:[#allocation10 + $0x170] sm:$0xff]
    %v1211 = vld [vmem:[#allocation10 + $0x178] sm:$0xff]
    %v1212 = vld [vmem:[#allocation10 + $0x180] sm:$0xff]
    %v1213 = vld [vmem:[#allocation10 + $0x188] sm:$0xff]
    %v1214 = vld [vmem:[#allocation10 + $0x190] sm:$0xff]
    %v1215 = vld [vmem:[#allocation10 + $0x198] sm:$0xff]
    %v1216 = vld [vmem:[#allocation10 + $0x1a0] sm:$0xff]
    %v1217 = vld [vmem:[#allocation10 + $0x1a8] sm:$0xff]
    %v1218 = vld [vmem:[#allocation10 + $0x1b0] sm:$0xff]
    %v1219 = vld [vmem:[#allocation10 + $0x1b8] sm:$0xff]
    %v1220 = vld [vmem:[#allocation10 + $0x1c0] sm:$0xff]
    %v1221 = vld [vmem:[#allocation10 + $0x1c8] sm:$0xff]
    %v1222 = vld [vmem:[#allocation10 + $0x1d0] sm:$0xff]
    %v1223 = vld [vmem:[#allocation10 + $0x1d8] sm:$0xff]
    %v1224 = vld [vmem:[#allocation10 + $0x1e0] sm:$0xff]
    %v1225 = vld [vmem:[#allocation10 + $0x1e8] sm:$0xff]
    %v1226 = vld [vmem:[#allocation10 + $0x1f0] sm:$0xff]
    %v1227 = vld [vmem:[#allocation10 + $0x1f8] sm:$0xff]
    %s1228 = scalar_lea.vmem [#allocation4], 96
    %v1229 = vld [vmem:[%s1228] sm:$0xff]
    %v1230 = vld [vmem:[%s1228 + $0x8] sm:$0xff]
    %v1231 = vld [vmem:[%s1228 + $0x10] sm:$0xff]
    %v1232 = vld [vmem:[%s1228 + $0x18] sm:$0xff]
    %1233 = vmatprep.subr.mxu0 %v1225
    %1234 = vmatpush1.msra.mxu0 %v1224
    %1235 = vmatprep.subr.mxu0 %v1221
    %1236 = vmatpush1.msra.mxu0 %v1220
    %1237 = vmatprep.subr.mxu0 %v1217
    %1238 = vmatpush1.msra.mxu0 %v1216
    %1239 = vmatprep.subr.mxu0 %v1213
    %1240 = vmatpush1.msra.mxu0 %v1212
    %1241 = vmatprep.subr.mxu0 %v1209
    %1242 = vmatpush1.msra.mxu0 %v1208
    %1243 = vmatprep.subr.mxu0 %v1205
    %1244 = vmatpush1.msra.mxu0 %v1204
    %1245 = vmatprep.subr.mxu0 %v1201
    %1246 = vmatpush1.msra.mxu0 %v1200
    %1247 = vmatprep.subr.mxu0 %v1197
    %1248 = vmatpush1.msra.mxu0 %v1196
    %1249 = vmatprep.subr.mxu0 %v1193
    %1250 = vmatpush1.msra.mxu0 %v1192
    %1251 = vmatprep.subr.mxu0 %v1189
    %1252 = vmatpush1.msra.mxu0 %v1188
    %1253 = vmatprep.subr.mxu0 %v1185
    %1254 = vmatpush1.msra.mxu0 %v1184
    %1255 = vmatprep.subr.mxu0 %v1181
    %1256 = vmatpush1.msra.mxu0 %v1180
    %1257 = vmatprep.subr.mxu0 %v1177
    %1258 = vmatpush1.msra.mxu0 %v1176
    %1259 = vmatprep.subr.mxu0 %v1173
    %1260 = vmatpush1.msra.mxu0 %v1172
    %1261 = vmatprep.subr.mxu0 %v1169
    %1262 = vmatpush1.msra.mxu0 %v1168
    %1263 = vmatprep.subr.mxu0 %v1165
    %1264 = vmatpush1.msra.mxu0 %v1164
    %1265 = vmatprep.subr.mxu0 0.0
    %1266 = vmatpush2.msra.mxu0 0.0
    %1267 = vmatprep.subr.mxu0 0.0
    %1268 = vmatpush2.msra.mxu0 0.0
    %1269 = vmatprep.subr.mxu0 0.0
    %1270 = vmatpush2.msra.mxu0 0.0
    %1271 = vmatprep.subr.mxu0 0.0
    %1272 = vmatpush2.msra.mxu0 0.0
    %1273 = vmatprep.subr.mxu0 0.0
    %1274 = vmatpush2.msra.mxu0 0.0
    %1275 = vmatprep.subr.mxu0 0.0
    %1276 = vmatpush2.msra.mxu0 0.0
    %1277 = vmatprep.subr.mxu0 0.0
    %1278 = vmatpush2.msra.mxu0 0.0
    %1279 = vmatprep.subr.mxu0 0.0
    %1280 = vmatpush2.msra.mxu0 0.0
    %1281 = vmatprep.subr.mxu0 0.0
    %1282 = vmatpush2.msra.mxu0 0.0
    %1283 = vmatprep.subr.mxu0 0.0
    %1284 = vmatpush2.msra.mxu0 0.0
    %1285 = vmatprep.subr.mxu0 0.0
    %1286 = vmatpush2.msra.mxu0 0.0
    %1287 = vmatprep.subr.mxu0 0.0
    %1288 = vmatpush2.msra.mxu0 0.0
    %1289 = vmatprep.subr.mxu0 0.0
    %1290 = vmatpush2.msra.mxu0 0.0
    %1291 = vmatprep.subr.mxu0 0.0
    %1292 = vmatpush2.msra.mxu0 0.0
    %1293 = vmatprep.subr.mxu0 0.0
    %1294 = vmatpush2.msra.mxu0 0.0
    %1295 = vmatprep.subr.mxu0 0.0
    %1296 = vmatpush2.msra.mxu0 0.0
    %1297 = vmatprep.mubr.f32.mxu0 0.0
    %1298 = vmatmul.mubr.f32.gmra.mxu0 %v1161
    %v1299 = vpop.f32.mrf.mxu0
    %v1300 = vadd.f32 %v1229, %v1299
    %v1301 = vpop.f32.mrf.mxu0
    %v1302 = vadd.f32 %v1230, %v1301
    %1303 = vdwg.mxu0
    %1304 = vmatprep.subr.mxu0 %v1227
    %1305 = vmatpush1.msra.mxu0 %v1226
    %1306 = vmatprep.subr.mxu0 %v1223
    %1307 = vmatpush1.msra.mxu0 %v1222
    %1308 = vmatprep.subr.mxu0 %v1219
    %1309 = vmatpush1.msra.mxu0 %v1218
    %1310 = vmatprep.subr.mxu0 %v1215
    %1311 = vmatpush1.msra.mxu0 %v1214
    %1312 = vmatprep.subr.mxu0 %v1211
    %1313 = vmatpush1.msra.mxu0 %v1210
    %1314 = vmatprep.subr.mxu0 %v1207
    %1315 = vmatpush1.msra.mxu0 %v1206
    %1316 = vmatprep.subr.mxu0 %v1203
    %1317 = vmatpush1.msra.mxu0 %v1202
    %1318 = vmatprep.subr.mxu0 %v1199
    %1319 = vmatpush1.msra.mxu0 %v1198
    %1320 = vmatprep.subr.mxu0 %v1195
    %1321 = vmatpush1.msra.mxu0 %v1194
    %1322 = vmatprep.subr.mxu0 %v1191
    %1323 = vmatpush1.msra.mxu0 %v1190
    %1324 = vmatprep.subr.mxu0 %v1187
    %1325 = vmatpush1.msra.mxu0 %v1186
    %1326 = vmatprep.subr.mxu0 %v1183
    %1327 = vmatpush1.msra.mxu0 %v1182
    %1328 = vmatprep.subr.mxu0 %v1179
    %1329 = vmatpush1.msra.mxu0 %v1178
    %1330 = vmatprep.subr.mxu0 %v1175
    %1331 = vmatpush1.msra.mxu0 %v1174
    %1332 = vmatprep.subr.mxu0 %v1171
    %1333 = vmatpush1.msra.mxu0 %v1170
    %1334 = vmatprep.subr.mxu0 %v1167
    %1335 = vmatpush1.msra.mxu0 %v1166
    %1336 = vmatprep.subr.mxu0 0.0
    %1337 = vmatpush2.msra.mxu0 0.0
    %1338 = vmatprep.subr.mxu0 0.0
    %1339 = vmatpush2.msra.mxu0 0.0
    %1340 = vmatprep.subr.mxu0 0.0
    %1341 = vmatpush2.msra.mxu0 0.0
    %1342 = vmatprep.subr.mxu0 0.0
    %1343 = vmatpush2.msra.mxu0 0.0
    %1344 = vmatprep.subr.mxu0 0.0
    %1345 = vmatpush2.msra.mxu0 0.0
    %1346 = vmatprep.subr.mxu0 0.0
    %1347 = vmatpush2.msra.mxu0 0.0
    %1348 = vmatprep.subr.mxu0 0.0
    %1349 = vmatpush2.msra.mxu0 0.0
    %1350 = vmatprep.subr.mxu0 0.0
    %1351 = vmatpush2.msra.mxu0 0.0
    %1352 = vmatprep.subr.mxu0 0.0
    %1353 = vmatpush2.msra.mxu0 0.0
    %1354 = vmatprep.subr.mxu0 0.0
    %1355 = vmatpush2.msra.mxu0 0.0
    %1356 = vmatprep.subr.mxu0 0.0
    %1357 = vmatpush2.msra.mxu0 0.0
    %1358 = vmatprep.subr.mxu0 0.0
    %1359 = vmatpush2.msra.mxu0 0.0
    %1360 = vmatprep.subr.mxu0 0.0
    %1361 = vmatpush2.msra.mxu0 0.0
    %1362 = vmatprep.subr.mxu0 0.0
    %1363 = vmatpush2.msra.mxu0 0.0
    %1364 = vmatprep.subr.mxu0 0.0
    %1365 = vmatpush2.msra.mxu0 0.0
    %1366 = vmatprep.subr.mxu0 0.0
    %1367 = vmatpush2.msra.mxu0 0.0
    %1368 = vmatprep.mubr.f32.mxu0 0.0
    %1369 = vmatmul.mubr.f32.gmra.mxu0 %v1161
    %v1370 = vpop.f32.mrf.mxu0
    %v1371 = vadd.f32 %v1231, %v1370
    %v1372 = vpop.f32.mrf.mxu0
    %v1373 = vadd.f32 %v1232, %v1372
    %1374 = vdwg.mxu0
    %v1375 = vxor.u32 %v1300, 2147483648
    %v1376 = vxor.u32 %v1302, 2147483648
    %v1377 = vxor.u32 %v1371, 2147483648
    %v1378 = vmul.f32 %v1375, 1.442695
    %v1379 = vpow.pop %v1378
    %v1380 = vmul.f32 %v1376, 1.442695
    %v1381 = vpow.pop %v1380
    %v1382 = vmul.f32 %v1377, 1.442695
    %v1383 = vpow.pop %v1382
    %v1384 = vadd.f32 %v1379, 1.0
    %v1385 = vadd.f32 %v1381, 1.0
    %v1386 = vadd.f32 %v1383, 1.0
    %v1387 = vrcp.pop %v1384
    %v1388 = vmul.f32 1.0, %v1387
    %v1389 = vrcp.pop %v1385
    %v1390 = vmul.f32 1.0, %v1389
    %v1391 = vrcp.pop %v1386
    %v1392 = vmul.f32 1.0, %v1391
    %v1393 = vtanh.pop %v1373
    %v1394 = vmul.f32 %v1390, %v1159
    %v1395 = vmul.f32 %v1388, %v1393
    %v1396 = vadd.f32 %v1394, %v1395
    %v1397 = vtanh.pop %v1396
    %v1398 = vmul.f32 %v1392, %v1397
    %s1399 = scalar_lea.vmem [#allocation11], 24
    %1400 = vst [vmem:[%s1399] sm:$0xff] %v1398
    %v1401 = vld [vmem:[#allocation10] sm:$0xff]
    %v1402 = vld [vmem:[#allocation10 + $0x8] sm:$0xff]
    %v1403 = vld [vmem:[#allocation10 + $0x10] sm:$0xff]
    %v1404 = vld [vmem:[#allocation10 + $0x18] sm:$0xff]
    %v1405 = vld [vmem:[#allocation10 + $0x20] sm:$0xff]
    %v1406 = vld [vmem:[#allocation10 + $0x28] sm:$0xff]
    %v1407 = vld [vmem:[#allocation10 + $0x30] sm:$0xff]
    %v1408 = vld [vmem:[#allocation10 + $0x38] sm:$0xff]
    %v1409 = vld [vmem:[#allocation10 + $0x40] sm:$0xff]
    %v1410 = vld [vmem:[#allocation10 + $0x48] sm:$0xff]
    %v1411 = vld [vmem:[#allocation10 + $0x50] sm:$0xff]
    %v1412 = vld [vmem:[#allocation10 + $0x58] sm:$0xff]
    %v1413 = vld [vmem:[#allocation10 + $0x60] sm:$0xff]
    %v1414 = vld [vmem:[#allocation10 + $0x68] sm:$0xff]
    %v1415 = vld [vmem:[#allocation10 + $0x70] sm:$0xff]
    %v1416 = vld [vmem:[#allocation10 + $0x78] sm:$0xff]
    %v1417 = vld [vmem:[#allocation10 + $0x80] sm:$0xff]
    %v1418 = vld [vmem:[#allocation10 + $0x88] sm:$0xff]
    %v1419 = vld [vmem:[#allocation10 + $0x90] sm:$0xff]
    %v1420 = vld [vmem:[#allocation10 + $0x98] sm:$0xff]
    %v1421 = vld [vmem:[#allocation10 + $0xa0] sm:$0xff]
    %v1422 = vld [vmem:[#allocation10 + $0xa8] sm:$0xff]
    %v1423 = vld [vmem:[#allocation10 + $0xb0] sm:$0xff]
    %v1424 = vld [vmem:[#allocation10 + $0xb8] sm:$0xff]
    %v1425 = vld [vmem:[#allocation10 + $0xc0] sm:$0xff]
    %v1426 = vld [vmem:[#allocation10 + $0xc8] sm:$0xff]
    %v1427 = vld [vmem:[#allocation10 + $0xd0] sm:$0xff]
    %v1428 = vld [vmem:[#allocation10 + $0xd8] sm:$0xff]
    %v1429 = vld [vmem:[#allocation10 + $0xe0] sm:$0xff]
    %v1430 = vld [vmem:[#allocation10 + $0xe8] sm:$0xff]
    %v1431 = vld [vmem:[#allocation10 + $0xf0] sm:$0xff]
    %v1432 = vld [vmem:[#allocation10 + $0xf8] sm:$0xff]
    %v1433 = vld [vmem:[#allocation10 + $0x100] sm:$0xff]
    %v1434 = vld [vmem:[#allocation10 + $0x108] sm:$0xff]
    %v1435 = vld [vmem:[#allocation10 + $0x110] sm:$0xff]
    %v1436 = vld [vmem:[#allocation10 + $0x118] sm:$0xff]
    %v1437 = vld [vmem:[#allocation10 + $0x120] sm:$0xff]
    %v1438 = vld [vmem:[#allocation10 + $0x128] sm:$0xff]
    %v1439 = vld [vmem:[#allocation10 + $0x130] sm:$0xff]
    %v1440 = vld [vmem:[#allocation10 + $0x138] sm:$0xff]
    %v1441 = vld [vmem:[#allocation10 + $0x140] sm:$0xff]
    %v1442 = vld [vmem:[#allocation10 + $0x148] sm:$0xff]
    %v1443 = vld [vmem:[#allocation10 + $0x150] sm:$0xff]
    %v1444 = vld [vmem:[#allocation10 + $0x158] sm:$0xff]
    %v1445 = vld [vmem:[#allocation10 + $0x160] sm:$0xff]
    %v1446 = vld [vmem:[#allocation10 + $0x168] sm:$0xff]
    %v1447 = vld [vmem:[#allocation10 + $0x170] sm:$0xff]
    %v1448 = vld [vmem:[#allocation10 + $0x178] sm:$0xff]
    %v1449 = vld [vmem:[#allocation10 + $0x180] sm:$0xff]
    %v1450 = vld [vmem:[#allocation10 + $0x188] sm:$0xff]
    %v1451 = vld [vmem:[#allocation10 + $0x190] sm:$0xff]
    %v1452 = vld [vmem:[#allocation10 + $0x198] sm:$0xff]
    %v1453 = vld [vmem:[#allocation10 + $0x1a0] sm:$0xff]
    %v1454 = vld [vmem:[#allocation10 + $0x1a8] sm:$0xff]
    %v1455 = vld [vmem:[#allocation10 + $0x1b0] sm:$0xff]
    %v1456 = vld [vmem:[#allocation10 + $0x1b8] sm:$0xff]
    %v1457 = vld [vmem:[#allocation10 + $0x1c0] sm:$0xff]
    %v1458 = vld [vmem:[#allocation10 + $0x1c8] sm:$0xff]
    %v1459 = vld [vmem:[#allocation10 + $0x1d0] sm:$0xff]
    %v1460 = vld [vmem:[#allocation10 + $0x1d8] sm:$0xff]
    %v1461 = vld [vmem:[#allocation10 + $0x1e0] sm:$0xff]
    %v1462 = vld [vmem:[#allocation10 + $0x1e8] sm:$0xff]
    %v1463 = vld [vmem:[#allocation10 + $0x1f0] sm:$0xff]
    %v1464 = vld [vmem:[#allocation10 + $0x1f8] sm:$0xff]
    %s1465 = scalar_lea.vmem [#allocation4], 128
    %v1466 = vld [vmem:[%s1465] sm:$0xff]
    %v1467 = vld [vmem:[%s1465 + $0x8] sm:$0xff]
    %v1468 = vld [vmem:[%s1465 + $0x10] sm:$0xff]
    %v1469 = vld [vmem:[%s1465 + $0x18] sm:$0xff]
    %1470 = vmatprep.subr.mxu0 %v1462
    %1471 = vmatpush1.msra.mxu0 %v1461
    %1472 = vmatprep.subr.mxu0 %v1458
    %1473 = vmatpush1.msra.mxu0 %v1457
    %1474 = vmatprep.subr.mxu0 %v1454
    %1475 = vmatpush1.msra.mxu0 %v1453
    %1476 = vmatprep.subr.mxu0 %v1450
    %1477 = vmatpush1.msra.mxu0 %v1449
    %1478 = vmatprep.subr.mxu0 %v1446
    %1479 = vmatpush1.msra.mxu0 %v1445
    %1480 = vmatprep.subr.mxu0 %v1442
    %1481 = vmatpush1.msra.mxu0 %v1441
    %1482 = vmatprep.subr.mxu0 %v1438
    %1483 = vmatpush1.msra.mxu0 %v1437
    %1484 = vmatprep.subr.mxu0 %v1434
    %1485 = vmatpush1.msra.mxu0 %v1433
    %1486 = vmatprep.subr.mxu0 %v1430
    %1487 = vmatpush1.msra.mxu0 %v1429
    %1488 = vmatprep.subr.mxu0 %v1426
    %1489 = vmatpush1.msra.mxu0 %v1425
    %1490 = vmatprep.subr.mxu0 %v1422
    %1491 = vmatpush1.msra.mxu0 %v1421
    %1492 = vmatprep.subr.mxu0 %v1418
    %1493 = vmatpush1.msra.mxu0 %v1417
    %1494 = vmatprep.subr.mxu0 %v1414
    %1495 = vmatpush1.msra.mxu0 %v1413
    %1496 = vmatprep.subr.mxu0 %v1410
    %1497 = vmatpush1.msra.mxu0 %v1409
    %1498 = vmatprep.subr.mxu0 %v1406
    %1499 = vmatpush1.msra.mxu0 %v1405
    %1500 = vmatprep.subr.mxu0 %v1402
    %1501 = vmatpush1.msra.mxu0 %v1401
    %1502 = vmatprep.subr.mxu0 0.0
    %1503 = vmatpush2.msra.mxu0 0.0
    %1504 = vmatprep.subr.mxu0 0.0
    %1505 = vmatpush2.msra.mxu0 0.0
    %1506 = vmatprep.subr.mxu0 0.0
    %1507 = vmatpush2.msra.mxu0 0.0
    %1508 = vmatprep.subr.mxu0 0.0
    %1509 = vmatpush2.msra.mxu0 0.0
    %1510 = vmatprep.subr.mxu0 0.0
    %1511 = vmatpush2.msra.mxu0 0.0
    %1512 = vmatprep.subr.mxu0 0.0
    %1513 = vmatpush2.msra.mxu0 0.0
    %1514 = vmatprep.subr.mxu0 0.0
    %1515 = vmatpush2.msra.mxu0 0.0
    %1516 = vmatprep.subr.mxu0 0.0
    %1517 = vmatpush2.msra.mxu0 0.0
    %1518 = vmatprep.subr.mxu0 0.0
    %1519 = vmatpush2.msra.mxu0 0.0
    %1520 = vmatprep.subr.mxu0 0.0
    %1521 = vmatpush2.msra.mxu0 0.0
    %1522 = vmatprep.subr.mxu0 0.0
    %1523 = vmatpush2.msra.mxu0 0.0
    %1524 = vmatprep.subr.mxu0 0.0
    %1525 = vmatpush2.msra.mxu0 0.0
    %1526 = vmatprep.subr.mxu0 0.0
    %1527 = vmatpush2.msra.mxu0 0.0
    %1528 = vmatprep.subr.mxu0 0.0
    %1529 = vmatpush2.msra.mxu0 0.0
    %1530 = vmatprep.subr.mxu0 0.0
    %1531 = vmatpush2.msra.mxu0 0.0
    %1532 = vmatprep.subr.mxu0 0.0
    %1533 = vmatpush2.msra.mxu0 0.0
    %1534 = vmatprep.mubr.f32.mxu0 0.0
    %1535 = vmatmul.mubr.f32.gmra.mxu0 %v1398
    %v1536 = vpop.f32.mrf.mxu0
    %v1537 = vadd.f32 %v1466, %v1536
    %v1538 = vpop.f32.mrf.mxu0
    %v1539 = vadd.f32 %v1467, %v1538
    %1540 = vdwg.mxu0
    %1541 = vmatprep.subr.mxu0 %v1464
    %1542 = vmatpush1.msra.mxu0 %v1463
    %1543 = vmatprep.subr.mxu0 %v1460
    %1544 = vmatpush1.msra.mxu0 %v1459
    %1545 = vmatprep.subr.mxu0 %v1456
    %1546 = vmatpush1.msra.mxu0 %v1455
    %1547 = vmatprep.subr.mxu0 %v1452
    %1548 = vmatpush1.msra.mxu0 %v1451
    %1549 = vmatprep.subr.mxu0 %v1448
    %1550 = vmatpush1.msra.mxu0 %v1447
    %1551 = vmatprep.subr.mxu0 %v1444
    %1552 = vmatpush1.msra.mxu0 %v1443
    %1553 = vmatprep.subr.mxu0 %v1440
    %1554 = vmatpush1.msra.mxu0 %v1439
    %1555 = vmatprep.subr.mxu0 %v1436
    %1556 = vmatpush1.msra.mxu0 %v1435
    %1557 = vmatprep.subr.mxu0 %v1432
    %1558 = vmatpush1.msra.mxu0 %v1431
    %1559 = vmatprep.subr.mxu0 %v1428
    %1560 = vmatpush1.msra.mxu0 %v1427
    %1561 = vmatprep.subr.mxu0 %v1424
    %1562 = vmatpush1.msra.mxu0 %v1423
    %1563 = vmatprep.subr.mxu0 %v1420
    %1564 = vmatpush1.msra.mxu0 %v1419
    %1565 = vmatprep.subr.mxu0 %v1416
    %1566 = vmatpush1.msra.mxu0 %v1415
    %1567 = vmatprep.subr.mxu0 %v1412
    %1568 = vmatpush1.msra.mxu0 %v1411
    %1569 = vmatprep.subr.mxu0 %v1408
    %1570 = vmatpush1.msra.mxu0 %v1407
    %1571 = vmatprep.subr.mxu0 %v1404
    %1572 = vmatpush1.msra.mxu0 %v1403
    %1573 = vmatprep.subr.mxu0 0.0
    %1574 = vmatpush2.msra.mxu0 0.0
    %1575 = vmatprep.subr.mxu0 0.0
    %1576 = vmatpush2.msra.mxu0 0.0
    %1577 = vmatprep.subr.mxu0 0.0
    %1578 = vmatpush2.msra.mxu0 0.0
    %1579 = vmatprep.subr.mxu0 0.0
    %1580 = vmatpush2.msra.mxu0 0.0
    %1581 = vmatprep.subr.mxu0 0.0
    %1582 = vmatpush2.msra.mxu0 0.0
    %1583 = vmatprep.subr.mxu0 0.0
    %1584 = vmatpush2.msra.mxu0 0.0
    %1585 = vmatprep.subr.mxu0 0.0
    %1586 = vmatpush2.msra.mxu0 0.0
    %1587 = vmatprep.subr.mxu0 0.0
    %1588 = vmatpush2.msra.mxu0 0.0
    %1589 = vmatprep.subr.mxu0 0.0
    %1590 = vmatpush2.msra.mxu0 0.0
    %1591 = vmatprep.subr.mxu0 0.0
    %1592 = vmatpush2.msra.mxu0 0.0
    %1593 = vmatprep.subr.mxu0 0.0
    %1594 = vmatpush2.msra.mxu0 0.0
    %1595 = vmatprep.subr.mxu0 0.0
    %1596 = vmatpush2.msra.mxu0 0.0
    %1597 = vmatprep.subr.mxu0 0.0
    %1598 = vmatpush2.msra.mxu0 0.0
    %1599 = vmatprep.subr.mxu0 0.0
    %1600 = vmatpush2.msra.mxu0 0.0
    %1601 = vmatprep.subr.mxu0 0.0
    %1602 = vmatpush2.msra.mxu0 0.0
    %1603 = vmatprep.subr.mxu0 0.0
    %1604 = vmatpush2.msra.mxu0 0.0
    %1605 = vmatprep.mubr.f32.mxu0 0.0
    %1606 = vmatmul.mubr.f32.gmra.mxu0 %v1398
    %v1607 = vpop.f32.mrf.mxu0
    %v1608 = vadd.f32 %v1468, %v1607
    %v1609 = vpop.f32.mrf.mxu0
    %v1610 = vadd.f32 %v1469, %v1609
    %1611 = vdwg.mxu0
    %v1612 = vxor.u32 %v1537, 2147483648
    %v1613 = vxor.u32 %v1539, 2147483648
    %v1614 = vxor.u32 %v1608, 2147483648
    %v1615 = vmul.f32 %v1612, 1.442695
    %v1616 = vpow.pop %v1615
    %v1617 = vmul.f32 %v1613, 1.442695
    %v1618 = vpow.pop %v1617
    %v1619 = vmul.f32 %v1614, 1.442695
    %v1620 = vpow.pop %v1619
    %v1621 = vadd.f32 %v1616, 1.0
    %v1622 = vadd.f32 %v1618, 1.0
    %v1623 = vadd.f32 %v1620, 1.0
    %v1624 = vrcp.pop %v1621
    %v1625 = vmul.f32 1.0, %v1624
    %v1626 = vrcp.pop %v1622
    %v1627 = vmul.f32 1.0, %v1626
    %v1628 = vrcp.pop %v1623
    %v1629 = vmul.f32 1.0, %v1628
    %v1630 = vtanh.pop %v1610
    %v1631 = vmul.f32 %v1627, %v1396
    %v1632 = vmul.f32 %v1625, %v1630
    %v1633 = vadd.f32 %v1631, %v1632
    %v1634 = vtanh.pop %v1633
    %v1635 = vmul.f32 %v1629, %v1634
    %s1636 = scalar_lea.vmem [#allocation11], 32
    %1637 = vst [vmem:[%s1636] sm:$0xff] %v1635
    %v1638 = vld [vmem:[#allocation10] sm:$0xff]
    %v1639 = vld [vmem:[#allocation10 + $0x8] sm:$0xff]
    %v1640 = vld [vmem:[#allocation10 + $0x10] sm:$0xff]
    %v1641 = vld [vmem:[#allocation10 + $0x18] sm:$0xff]
    %v1642 = vld [vmem:[#allocation10 + $0x20] sm:$0xff]
    %v1643 = vld [vmem:[#allocation10 + $0x28] sm:$0xff]
    %v1644 = vld [vmem:[#allocation10 + $0x30] sm:$0xff]
    %v1645 = vld [vmem:[#allocation10 + $0x38] sm:$0xff]
    %v1646 = vld [vmem:[#allocation10 + $0x40] sm:$0xff]
    %v1647 = vld [vmem:[#allocation10 + $0x48] sm:$0xff]
    %v1648 = vld [vmem:[#allocation10 + $0x50] sm:$0xff]
    %v1649 = vld [vmem:[#allocation10 + $0x58] sm:$0xff]
    %v1650 = vld [vmem:[#allocation10 + $0x60] sm:$0xff]
    %v1651 = vld [vmem:[#allocation10 + $0x68] sm:$0xff]
    %v1652 = vld [vmem:[#allocation10 + $0x70] sm:$0xff]
    %v1653 = vld [vmem:[#allocation10 + $0x78] sm:$0xff]
    %v1654 = vld [vmem:[#allocation10 + $0x80] sm:$0xff]
    %v1655 = vld [vmem:[#allocation10 + $0x88] sm:$0xff]
    %v1656 = vld [vmem:[#allocation10 + $0x90] sm:$0xff]
    %v1657 = vld [vmem:[#allocation10 + $0x98] sm:$0xff]
    %v1658 = vld [vmem:[#allocation10 + $0xa0] sm:$0xff]
    %v1659 = vld [vmem:[#allocation10 + $0xa8] sm:$0xff]
    %v1660 = vld [vmem:[#allocation10 + $0xb0] sm:$0xff]
    %v1661 = vld [vmem:[#allocation10 + $0xb8] sm:$0xff]
    %v1662 = vld [vmem:[#allocation10 + $0xc0] sm:$0xff]
    %v1663 = vld [vmem:[#allocation10 + $0xc8] sm:$0xff]
    %v1664 = vld [vmem:[#allocation10 + $0xd0] sm:$0xff]
    %v1665 = vld [vmem:[#allocation10 + $0xd8] sm:$0xff]
    %v1666 = vld [vmem:[#allocation10 + $0xe0] sm:$0xff]
    %v1667 = vld [vmem:[#allocation10 + $0xe8] sm:$0xff]
    %v1668 = vld [vmem:[#allocation10 + $0xf0] sm:$0xff]
    %v1669 = vld [vmem:[#allocation10 + $0xf8] sm:$0xff]
    %v1670 = vld [vmem:[#allocation10 + $0x100] sm:$0xff]
    %v1671 = vld [vmem:[#allocation10 + $0x108] sm:$0xff]
    %v1672 = vld [vmem:[#allocation10 + $0x110] sm:$0xff]
    %v1673 = vld [vmem:[#allocation10 + $0x118] sm:$0xff]
    %v1674 = vld [vmem:[#allocation10 + $0x120] sm:$0xff]
    %v1675 = vld [vmem:[#allocation10 + $0x128] sm:$0xff]
    %v1676 = vld [vmem:[#allocation10 + $0x130] sm:$0xff]
    %v1677 = vld [vmem:[#allocation10 + $0x138] sm:$0xff]
    %v1678 = vld [vmem:[#allocation10 + $0x140] sm:$0xff]
    %v1679 = vld [vmem:[#allocation10 + $0x148] sm:$0xff]
    %v1680 = vld [vmem:[#allocation10 + $0x150] sm:$0xff]
    %v1681 = vld [vmem:[#allocation10 + $0x158] sm:$0xff]
    %v1682 = vld [vmem:[#allocation10 + $0x160] sm:$0xff]
    %v1683 = vld [vmem:[#allocation10 + $0x168] sm:$0xff]
    %v1684 = vld [vmem:[#allocation10 + $0x170] sm:$0xff]
    %v1685 = vld [vmem:[#allocation10 + $0x178] sm:$0xff]
    %v1686 = vld [vmem:[#allocation10 + $0x180] sm:$0xff]
    %v1687 = vld [vmem:[#allocation10 + $0x188] sm:$0xff]
    %v1688 = vld [vmem:[#allocation10 + $0x190] sm:$0xff]
    %v1689 = vld [vmem:[#allocation10 + $0x198] sm:$0xff]
    %v1690 = vld [vmem:[#allocation10 + $0x1a0] sm:$0xff]
    %v1691 = vld [vmem:[#allocation10 + $0x1a8] sm:$0xff]
    %v1692 = vld [vmem:[#allocation10 + $0x1b0] sm:$0xff]
    %v1693 = vld [vmem:[#allocation10 + $0x1b8] sm:$0xff]
    %v1694 = vld [vmem:[#allocation10 + $0x1c0] sm:$0xff]
    %v1695 = vld [vmem:[#allocation10 + $0x1c8] sm:$0xff]
    %v1696 = vld [vmem:[#allocation10 + $0x1d0] sm:$0xff]
    %v1697 = vld [vmem:[#allocation10 + $0x1d8] sm:$0xff]
    %v1698 = vld [vmem:[#allocation10 + $0x1e0] sm:$0xff]
    %v1699 = vld [vmem:[#allocation10 + $0x1e8] sm:$0xff]
    %v1700 = vld [vmem:[#allocation10 + $0x1f0] sm:$0xff]
    %v1701 = vld [vmem:[#allocation10 + $0x1f8] sm:$0xff]
    %s1702 = scalar_lea.vmem [#allocation4], 160
    %v1703 = vld [vmem:[%s1702] sm:$0xff]
    %v1704 = vld [vmem:[%s1702 + $0x8] sm:$0xff]
    %v1705 = vld [vmem:[%s1702 + $0x10] sm:$0xff]
    %v1706 = vld [vmem:[%s1702 + $0x18] sm:$0xff]
    %1707 = vmatprep.subr.mxu0 %v1699
    %1708 = vmatpush1.msra.mxu0 %v1698
    %1709 = vmatprep.subr.mxu0 %v1695
    %1710 = vmatpush1.msra.mxu0 %v1694
    %1711 = vmatprep.subr.mxu0 %v1691
    %1712 = vmatpush1.msra.mxu0 %v1690
    %1713 = vmatprep.subr.mxu0 %v1687
    %1714 = vmatpush1.msra.mxu0 %v1686
    %1715 = vmatprep.subr.mxu0 %v1683
    %1716 = vmatpush1.msra.mxu0 %v1682
    %1717 = vmatprep.subr.mxu0 %v1679
    %1718 = vmatpush1.msra.mxu0 %v1678
    %1719 = vmatprep.subr.mxu0 %v1675
    %1720 = vmatpush1.msra.mxu0 %v1674
    %1721 = vmatprep.subr.mxu0 %v1671
    %1722 = vmatpush1.msra.mxu0 %v1670
    %1723 = vmatprep.subr.mxu0 %v1667
    %1724 = vmatpush1.msra.mxu0 %v1666
    %1725 = vmatprep.subr.mxu0 %v1663
    %1726 = vmatpush1.msra.mxu0 %v1662
    %1727 = vmatprep.subr.mxu0 %v1659
    %1728 = vmatpush1.msra.mxu0 %v1658
    %1729 = vmatprep.subr.mxu0 %v1655
    %1730 = vmatpush1.msra.mxu0 %v1654
    %1731 = vmatprep.subr.mxu0 %v1651
    %1732 = vmatpush1.msra.mxu0 %v1650
    %1733 = vmatprep.subr.mxu0 %v1647
    %1734 = vmatpush1.msra.mxu0 %v1646
    %1735 = vmatprep.subr.mxu0 %v1643
    %1736 = vmatpush1.msra.mxu0 %v1642
    %1737 = vmatprep.subr.mxu0 %v1639
    %1738 = vmatpush1.msra.mxu0 %v1638
    %1739 = vmatprep.subr.mxu0 0.0
    %1740 = vmatpush2.msra.mxu0 0.0
    %1741 = vmatprep.subr.mxu0 0.0
    %1742 = vmatpush2.msra.mxu0 0.0
    %1743 = vmatprep.subr.mxu0 0.0
    %1744 = vmatpush2.msra.mxu0 0.0
    %1745 = vmatprep.subr.mxu0 0.0
    %1746 = vmatpush2.msra.mxu0 0.0
    %1747 = vmatprep.subr.mxu0 0.0
    %1748 = vmatpush2.msra.mxu0 0.0
    %1749 = vmatprep.subr.mxu0 0.0
    %1750 = vmatpush2.msra.mxu0 0.0
    %1751 = vmatprep.subr.mxu0 0.0
    %1752 = vmatpush2.msra.mxu0 0.0
    %1753 = vmatprep.subr.mxu0 0.0
    %1754 = vmatpush2.msra.mxu0 0.0
    %1755 = vmatprep.subr.mxu0 0.0
    %1756 = vmatpush2.msra.mxu0 0.0
    %1757 = vmatprep.subr.mxu0 0.0
    %1758 = vmatpush2.msra.mxu0 0.0
    %1759 = vmatprep.subr.mxu0 0.0
    %1760 = vmatpush2.msra.mxu0 0.0
    %1761 = vmatprep.subr.mxu0 0.0
    %1762 = vmatpush2.msra.mxu0 0.0
    %1763 = vmatprep.subr.mxu0 0.0
    %1764 = vmatpush2.msra.mxu0 0.0
    %1765 = vmatprep.subr.mxu0 0.0
    %1766 = vmatpush2.msra.mxu0 0.0
    %1767 = vmatprep.subr.mxu0 0.0
    %1768 = vmatpush2.msra.mxu0 0.0
    %1769 = vmatprep.subr.mxu0 0.0
    %1770 = vmatpush2.msra.mxu0 0.0
    %1771 = vmatprep.mubr.f32.mxu0 0.0
    %1772 = vmatmul.mubr.f32.gmra.mxu0 %v1635
    %v1773 = vpop.f32.mrf.mxu0
    %v1774 = vadd.f32 %v1703, %v1773
    %v1775 = vpop.f32.mrf.mxu0
    %v1776 = vadd.f32 %v1704, %v1775
    %1777 = vdwg.mxu0
    %1778 = vmatprep.subr.mxu0 %v1701
    %1779 = vmatpush1.msra.mxu0 %v1700
    %1780 = vmatprep.subr.mxu0 %v1697
    %1781 = vmatpush1.msra.mxu0 %v1696
    %1782 = vmatprep.subr.mxu0 %v1693
    %1783 = vmatpush1.msra.mxu0 %v1692
    %1784 = vmatprep.subr.mxu0 %v1689
    %1785 = vmatpush1.msra.mxu0 %v1688
    %1786 = vmatprep.subr.mxu0 %v1685
    %1787 = vmatpush1.msra.mxu0 %v1684
    %1788 = vmatprep.subr.mxu0 %v1681
    %1789 = vmatpush1.msra.mxu0 %v1680
    %1790 = vmatprep.subr.mxu0 %v1677
    %1791 = vmatpush1.msra.mxu0 %v1676
    %1792 = vmatprep.subr.mxu0 %v1673
    %1793 = vmatpush1.msra.mxu0 %v1672
    %1794 = vmatprep.subr.mxu0 %v1669
    %1795 = vmatpush1.msra.mxu0 %v1668
    %1796 = vmatprep.subr.mxu0 %v1665
    %1797 = vmatpush1.msra.mxu0 %v1664
    %1798 = vmatprep.subr.mxu0 %v1661
    %1799 = vmatpush1.msra.mxu0 %v1660
    %1800 = vmatprep.subr.mxu0 %v1657
    %1801 = vmatpush1.msra.mxu0 %v1656
    %1802 = vmatprep.subr.mxu0 %v1653
    %1803 = vmatpush1.msra.mxu0 %v1652
    %1804 = vmatprep.subr.mxu0 %v1649
    %1805 = vmatpush1.msra.mxu0 %v1648
    %1806 = vmatprep.subr.mxu0 %v1645
    %1807 = vmatpush1.msra.mxu0 %v1644
    %1808 = vmatprep.subr.mxu0 %v1641
    %1809 = vmatpush1.msra.mxu0 %v1640
    %1810 = vmatprep.subr.mxu0 0.0
    %1811 = vmatpush2.msra.mxu0 0.0
    %1812 = vmatprep.subr.mxu0 0.0
    %1813 = vmatpush2.msra.mxu0 0.0
    %1814 = vmatprep.subr.mxu0 0.0
    %1815 = vmatpush2.msra.mxu0 0.0
    %1816 = vmatprep.subr.mxu0 0.0
    %1817 = vmatpush2.msra.mxu0 0.0
    %1818 = vmatprep.subr.mxu0 0.0
    %1819 = vmatpush2.msra.mxu0 0.0
    %1820 = vmatprep.subr.mxu0 0.0
    %1821 = vmatpush2.msra.mxu0 0.0
    %1822 = vmatprep.subr.mxu0 0.0
    %1823 = vmatpush2.msra.mxu0 0.0
    %1824 = vmatprep.subr.mxu0 0.0
    %1825 = vmatpush2.msra.mxu0 0.0
    %1826 = vmatprep.subr.mxu0 0.0
    %1827 = vmatpush2.msra.mxu0 0.0
    %1828 = vmatprep.subr.mxu0 0.0
    %1829 = vmatpush2.msra.mxu0 0.0
    %1830 = vmatprep.subr.mxu0 0.0
    %1831 = vmatpush2.msra.mxu0 0.0
    %1832 = vmatprep.subr.mxu0 0.0
    %1833 = vmatpush2.msra.mxu0 0.0
    %1834 = vmatprep.subr.mxu0 0.0
    %1835 = vmatpush2.msra.mxu0 0.0
    %1836 = vmatprep.subr.mxu0 0.0
    %1837 = vmatpush2.msra.mxu0 0.0
    %1838 = vmatprep.subr.mxu0 0.0
    %1839 = vmatpush2.msra.mxu0 0.0
    %1840 = vmatprep.subr.mxu0 0.0
    %1841 = vmatpush2.msra.mxu0 0.0
    %1842 = vmatprep.mubr.f32.mxu0 0.0
    %1843 = vmatmul.mubr.f32.gmra.mxu0 %v1635
    %v1844 = vpop.f32.mrf.mxu0
    %v1845 = vadd.f32 %v1705, %v1844
    %v1846 = vpop.f32.mrf.mxu0
    %v1847 = vadd.f32 %v1706, %v1846
    %1848 = vdwg.mxu0
    %v1849 = vxor.u32 %v1774, 2147483648
    %v1850 = vxor.u32 %v1776, 2147483648
    %v1851 = vxor.u32 %v1845, 2147483648
    %v1852 = vmul.f32 %v1849, 1.442695
    %v1853 = vpow.pop %v1852
    %v1854 = vmul.f32 %v1850, 1.442695
    %v1855 = vpow.pop %v1854
    %v1856 = vmul.f32 %v1851, 1.442695
    %v1857 = vpow.pop %v1856
    %v1858 = vadd.f32 %v1853, 1.0
    %v1859 = vadd.f32 %v1855, 1.0
    %v1860 = vadd.f32 %v1857, 1.0
    %v1861 = vrcp.pop %v1858
    %v1862 = vmul.f32 1.0, %v1861
    %v1863 = vrcp.pop %v1859
    %v1864 = vmul.f32 1.0, %v1863
    %v1865 = vrcp.pop %v1860
    %v1866 = vmul.f32 1.0, %v1865
    %v1867 = vtanh.pop %v1847
    %v1868 = vmul.f32 %v1864, %v1633
    %v1869 = vmul.f32 %v1862, %v1867
    %v1870 = vadd.f32 %v1868, %v1869
    %v1871 = vtanh.pop %v1870
    %v1872 = vmul.f32 %v1866, %v1871
    %s1873 = scalar_lea.vmem [#allocation11], 40
    %1874 = vst [vmem:[%s1873] sm:$0xff] %v1872
    %v1875 = vld [vmem:[#allocation10] sm:$0xff]
    %v1876 = vld [vmem:[#allocation10 + $0x8] sm:$0xff]
    %v1877 = vld [vmem:[#allocation10 + $0x10] sm:$0xff]
    %v1878 = vld [vmem:[#allocation10 + $0x18] sm:$0xff]
    %v1879 = vld [vmem:[#allocation10 + $0x20] sm:$0xff]
    %v1880 = vld [vmem:[#allocation10 + $0x28] sm:$0xff]
    %v1881 = vld [vmem:[#allocation10 + $0x30] sm:$0xff]
    %v1882 = vld [vmem:[#allocation10 + $0x38] sm:$0xff]
    %v1883 = vld [vmem:[#allocation10 + $0x40] sm:$0xff]
    %v1884 = vld [vmem:[#allocation10 + $0x48] sm:$0xff]
    %v1885 = vld [vmem:[#allocation10 + $0x50] sm:$0xff]
    %v1886 = vld [vmem:[#allocation10 + $0x58] sm:$0xff]
    %v1887 = vld [vmem:[#allocation10 + $0x60] sm:$0xff]
    %v1888 = vld [vmem:[#allocation10 + $0x68] sm:$0xff]
    %v1889 = vld [vmem:[#allocation10 + $0x70] sm:$0xff]
    %v1890 = vld [vmem:[#allocation10 + $0x78] sm:$0xff]
    %v1891 = vld [vmem:[#allocation10 + $0x80] sm:$0xff]
    %v1892 = vld [vmem:[#allocation10 + $0x88] sm:$0xff]
    %v1893 = vld [vmem:[#allocation10 + $0x90] sm:$0xff]
    %v1894 = vld [vmem:[#allocation10 + $0x98] sm:$0xff]
    %v1895 = vld [vmem:[#allocation10 + $0xa0] sm:$0xff]
    %v1896 = vld [vmem:[#allocation10 + $0xa8] sm:$0xff]
    %v1897 = vld [vmem:[#allocation10 + $0xb0] sm:$0xff]
    %v1898 = vld [vmem:[#allocation10 + $0xb8] sm:$0xff]
    %v1899 = vld [vmem:[#allocation10 + $0xc0] sm:$0xff]
    %v1900 = vld [vmem:[#allocation10 + $0xc8] sm:$0xff]
    %v1901 = vld [vmem:[#allocation10 + $0xd0] sm:$0xff]
    %v1902 = vld [vmem:[#allocation10 + $0xd8] sm:$0xff]
    %v1903 = vld [vmem:[#allocation10 + $0xe0] sm:$0xff]
    %v1904 = vld [vmem:[#allocation10 + $0xe8] sm:$0xff]
    %v1905 = vld [vmem:[#allocation10 + $0xf0] sm:$0xff]
    %v1906 = vld [vmem:[#allocation10 + $0xf8] sm:$0xff]
    %v1907 = vld [vmem:[#allocation10 + $0x100] sm:$0xff]
    %v1908 = vld [vmem:[#allocation10 + $0x108] sm:$0xff]
    %v1909 = vld [vmem:[#allocation10 + $0x110] sm:$0xff]
    %v1910 = vld [vmem:[#allocation10 + $0x118] sm:$0xff]
    %v1911 = vld [vmem:[#allocation10 + $0x120] sm:$0xff]
    %v1912 = vld [vmem:[#allocation10 + $0x128] sm:$0xff]
    %v1913 = vld [vmem:[#allocation10 + $0x130] sm:$0xff]
    %v1914 = vld [vmem:[#allocation10 + $0x138] sm:$0xff]
    %v1915 = vld [vmem:[#allocation10 + $0x140] sm:$0xff]
    %v1916 = vld [vmem:[#allocation10 + $0x148] sm:$0xff]
    %v1917 = vld [vmem:[#allocation10 + $0x150] sm:$0xff]
    %v1918 = vld [vmem:[#allocation10 + $0x158] sm:$0xff]
    %v1919 = vld [vmem:[#allocation10 + $0x160] sm:$0xff]
    %v1920 = vld [vmem:[#allocation10 + $0x168] sm:$0xff]
    %v1921 = vld [vmem:[#allocation10 + $0x170] sm:$0xff]
    %v1922 = vld [vmem:[#allocation10 + $0x178] sm:$0xff]
    %v1923 = vld [vmem:[#allocation10 + $0x180] sm:$0xff]
    %v1924 = vld [vmem:[#allocation10 + $0x188] sm:$0xff]
    %v1925 = vld [vmem:[#allocation10 + $0x190] sm:$0xff]
    %v1926 = vld [vmem:[#allocation10 + $0x198] sm:$0xff]
    %v1927 = vld [vmem:[#allocation10 + $0x1a0] sm:$0xff]
    %v1928 = vld [vmem:[#allocation10 + $0x1a8] sm:$0xff]
    %v1929 = vld [vmem:[#allocation10 + $0x1b0] sm:$0xff]
    %v1930 = vld [vmem:[#allocation10 + $0x1b8] sm:$0xff]
    %v1931 = vld [vmem:[#allocation10 + $0x1c0] sm:$0xff]
    %v1932 = vld [vmem:[#allocation10 + $0x1c8] sm:$0xff]
    %v1933 = vld [vmem:[#allocation10 + $0x1d0] sm:$0xff]
    %v1934 = vld [vmem:[#allocation10 + $0x1d8] sm:$0xff]
    %v1935 = vld [vmem:[#allocation10 + $0x1e0] sm:$0xff]
    %v1936 = vld [vmem:[#allocation10 + $0x1e8] sm:$0xff]
    %v1937 = vld [vmem:[#allocation10 + $0x1f0] sm:$0xff]
    %v1938 = vld [vmem:[#allocation10 + $0x1f8] sm:$0xff]
    %s1939 = scalar_lea.vmem [#allocation4], 192
    %v1940 = vld [vmem:[%s1939] sm:$0xff]
    %v1941 = vld [vmem:[%s1939 + $0x8] sm:$0xff]
    %v1942 = vld [vmem:[%s1939 + $0x10] sm:$0xff]
    %v1943 = vld [vmem:[%s1939 + $0x18] sm:$0xff]
    %1944 = vmatprep.subr.mxu0 %v1936
    %1945 = vmatpush1.msra.mxu0 %v1935
    %1946 = vmatprep.subr.mxu0 %v1932
    %1947 = vmatpush1.msra.mxu0 %v1931
    %1948 = vmatprep.subr.mxu0 %v1928
    %1949 = vmatpush1.msra.mxu0 %v1927
    %1950 = vmatprep.subr.mxu0 %v1924
    %1951 = vmatpush1.msra.mxu0 %v1923
    %1952 = vmatprep.subr.mxu0 %v1920
    %1953 = vmatpush1.msra.mxu0 %v1919
    %1954 = vmatprep.subr.mxu0 %v1916
    %1955 = vmatpush1.msra.mxu0 %v1915
    %1956 = vmatprep.subr.mxu0 %v1912
    %1957 = vmatpush1.msra.mxu0 %v1911
    %1958 = vmatprep.subr.mxu0 %v1908
    %1959 = vmatpush1.msra.mxu0 %v1907
    %1960 = vmatprep.subr.mxu0 %v1904
    %1961 = vmatpush1.msra.mxu0 %v1903
    %1962 = vmatprep.subr.mxu0 %v1900
    %1963 = vmatpush1.msra.mxu0 %v1899
    %1964 = vmatprep.subr.mxu0 %v1896
    %1965 = vmatpush1.msra.mxu0 %v1895
    %1966 = vmatprep.subr.mxu0 %v1892
    %1967 = vmatpush1.msra.mxu0 %v1891
    %1968 = vmatprep.subr.mxu0 %v1888
    %1969 = vmatpush1.msra.mxu0 %v1887
    %1970 = vmatprep.subr.mxu0 %v1884
    %1971 = vmatpush1.msra.mxu0 %v1883
    %1972 = vmatprep.subr.mxu0 %v1880
    %1973 = vmatpush1.msra.mxu0 %v1879
    %1974 = vmatprep.subr.mxu0 %v1876
    %1975 = vmatpush1.msra.mxu0 %v1875
    %1976 = vmatprep.subr.mxu0 0.0
    %1977 = vmatpush2.msra.mxu0 0.0
    %1978 = vmatprep.subr.mxu0 0.0
    %1979 = vmatpush2.msra.mxu0 0.0
    %1980 = vmatprep.subr.mxu0 0.0
    %1981 = vmatpush2.msra.mxu0 0.0
    %1982 = vmatprep.subr.mxu0 0.0
    %1983 = vmatpush2.msra.mxu0 0.0
    %1984 = vmatprep.subr.mxu0 0.0
    %1985 = vmatpush2.msra.mxu0 0.0
    %1986 = vmatprep.subr.mxu0 0.0
    %1987 = vmatpush2.msra.mxu0 0.0
    %1988 = vmatprep.subr.mxu0 0.0
    %1989 = vmatpush2.msra.mxu0 0.0
    %1990 = vmatprep.subr.mxu0 0.0
    %1991 = vmatpush2.msra.mxu0 0.0
    %1992 = vmatprep.subr.mxu0 0.0
    %1993 = vmatpush2.msra.mxu0 0.0
    %1994 = vmatprep.subr.mxu0 0.0
    %1995 = vmatpush2.msra.mxu0 0.0
    %1996 = vmatprep.subr.mxu0 0.0
    %1997 = vmatpush2.msra.mxu0 0.0
    %1998 = vmatprep.subr.mxu0 0.0
    %1999 = vmatpush2.msra.mxu0 0.0
    %2000 = vmatprep.subr.mxu0 0.0
    %2001 = vmatpush2.msra.mxu0 0.0
    %2002 = vmatprep.subr.mxu0 0.0
    %2003 = vmatpush2.msra.mxu0 0.0
    %2004 = vmatprep.subr.mxu0 0.0
    %2005 = vmatpush2.msra.mxu0 0.0
    %2006 = vmatprep.subr.mxu0 0.0
    %2007 = vmatpush2.msra.mxu0 0.0
    %2008 = vmatprep.mubr.f32.mxu0 0.0
    %2009 = vmatmul.mubr.f32.gmra.mxu0 %v1872
    %v2010 = vpop.f32.mrf.mxu0
    %v2011 = vadd.f32 %v1940, %v2010
    %v2012 = vpop.f32.mrf.mxu0
    %v2013 = vadd.f32 %v1941, %v2012
    %2014 = vdwg.mxu0
    %2015 = vmatprep.subr.mxu0 %v1938
    %2016 = vmatpush1.msra.mxu0 %v1937
    %2017 = vmatprep.subr.mxu0 %v1934
    %2018 = vmatpush1.msra.mxu0 %v1933
    %2019 = vmatprep.subr.mxu0 %v1930
    %2020 = vmatpush1.msra.mxu0 %v1929
    %2021 = vmatprep.subr.mxu0 %v1926
    %2022 = vmatpush1.msra.mxu0 %v1925
    %2023 = vmatprep.subr.mxu0 %v1922
    %2024 = vmatpush1.msra.mxu0 %v1921
    %2025 = vmatprep.subr.mxu0 %v1918
    %2026 = vmatpush1.msra.mxu0 %v1917
    %2027 = vmatprep.subr.mxu0 %v1914
    %2028 = vmatpush1.msra.mxu0 %v1913
    %2029 = vmatprep.subr.mxu0 %v1910
    %2030 = vmatpush1.msra.mxu0 %v1909
    %2031 = vmatprep.subr.mxu0 %v1906
    %2032 = vmatpush1.msra.mxu0 %v1905
    %2033 = vmatprep.subr.mxu0 %v1902
    %2034 = vmatpush1.msra.mxu0 %v1901
    %2035 = vmatprep.subr.mxu0 %v1898
    %2036 = vmatpush1.msra.mxu0 %v1897
    %2037 = vmatprep.subr.mxu0 %v1894
    %2038 = vmatpush1.msra.mxu0 %v1893
    %2039 = vmatprep.subr.mxu0 %v1890
    %2040 = vmatpush1.msra.mxu0 %v1889
    %2041 = vmatprep.subr.mxu0 %v1886
    %2042 = vmatpush1.msra.mxu0 %v1885
    %2043 = vmatprep.subr.mxu0 %v1882
    %2044 = vmatpush1.msra.mxu0 %v1881
    %2045 = vmatprep.subr.mxu0 %v1878
    %2046 = vmatpush1.msra.mxu0 %v1877
    %2047 = vmatprep.subr.mxu0 0.0
    %2048 = vmatpush2.msra.mxu0 0.0
    %2049 = vmatprep.subr.mxu0 0.0
    %2050 = vmatpush2.msra.mxu0 0.0
    %2051 = vmatprep.subr.mxu0 0.0
    %2052 = vmatpush2.msra.mxu0 0.0
    %2053 = vmatprep.subr.mxu0 0.0
    %2054 = vmatpush2.msra.mxu0 0.0
    %2055 = vmatprep.subr.mxu0 0.0
    %2056 = vmatpush2.msra.mxu0 0.0
    %2057 = vmatprep.subr.mxu0 0.0
    %2058 = vmatpush2.msra.mxu0 0.0
    %2059 = vmatprep.subr.mxu0 0.0
    %2060 = vmatpush2.msra.mxu0 0.0
    %2061 = vmatprep.subr.mxu0 0.0
    %2062 = vmatpush2.msra.mxu0 0.0
    %2063 = vmatprep.subr.mxu0 0.0
    %2064 = vmatpush2.msra.mxu0 0.0
    %2065 = vmatprep.subr.mxu0 0.0
    %2066 = vmatpush2.msra.mxu0 0.0
    %2067 = vmatprep.subr.mxu0 0.0
    %2068 = vmatpush2.msra.mxu0 0.0
    %2069 = vmatprep.subr.mxu0 0.0
    %2070 = vmatpush2.msra.mxu0 0.0
    %2071 = vmatprep.subr.mxu0 0.0
    %2072 = vmatpush2.msra.mxu0 0.0
    %2073 = vmatprep.subr.mxu0 0.0
    %2074 = vmatpush2.msra.mxu0 0.0
    %2075 = vmatprep.subr.mxu0 0.0
    %2076 = vmatpush2.msra.mxu0 0.0
    %2077 = vmatprep.subr.mxu0 0.0
    %2078 = vmatpush2.msra.mxu0 0.0
    %2079 = vmatprep.mubr.f32.mxu0 0.0
    %2080 = vmatmul.mubr.f32.gmra.mxu0 %v1872
    %v2081 = vpop.f32.mrf.mxu0
    %v2082 = vadd.f32 %v1942, %v2081
    %v2083 = vpop.f32.mrf.mxu0
    %v2084 = vadd.f32 %v1943, %v2083
    %2085 = vdwg.mxu0
    %v2086 = vxor.u32 %v2011, 2147483648
    %v2087 = vxor.u32 %v2013, 2147483648
    %v2088 = vxor.u32 %v2082, 2147483648
    %v2089 = vmul.f32 %v2086, 1.442695
    %v2090 = vpow.pop %v2089
    %v2091 = vmul.f32 %v2087, 1.442695
    %v2092 = vpow.pop %v2091
    %v2093 = vmul.f32 %v2088, 1.442695
    %v2094 = vpow.pop %v2093
    %v2095 = vadd.f32 %v2090, 1.0
    %v2096 = vadd.f32 %v2092, 1.0
    %v2097 = vadd.f32 %v2094, 1.0
    %v2098 = vrcp.pop %v2095
    %v2099 = vmul.f32 1.0, %v2098
    %v2100 = vrcp.pop %v2096
    %v2101 = vmul.f32 1.0, %v2100
    %v2102 = vrcp.pop %v2097
    %v2103 = vmul.f32 1.0, %v2102
    %v2104 = vtanh.pop %v2084
    %v2105 = vmul.f32 %v2101, %v1870
    %v2106 = vmul.f32 %v2099, %v2104
    %v2107 = vadd.f32 %v2105, %v2106
    %v2108 = vtanh.pop %v2107
    %v2109 = vmul.f32 %v2103, %v2108
    %s2110 = scalar_lea.vmem [#allocation11], 48
    %2111 = vst [vmem:[%s2110] sm:$0xff] %v2109
    %v2112 = vld [vmem:[#allocation10] sm:$0xff]
    %v2113 = vld [vmem:[#allocation10 + $0x8] sm:$0xff]
    %v2114 = vld [vmem:[#allocation10 + $0x10] sm:$0xff]
    %v2115 = vld [vmem:[#allocation10 + $0x18] sm:$0xff]
    %v2116 = vld [vmem:[#allocation10 + $0x20] sm:$0xff]
    %v2117 = vld [vmem:[#allocation10 + $0x28] sm:$0xff]
    %v2118 = vld [vmem:[#allocation10 + $0x30] sm:$0xff]
    %v2119 = vld [vmem:[#allocation10 + $0x38] sm:$0xff]
    %v2120 = vld [vmem:[#allocation10 + $0x40] sm:$0xff]
    %v2121 = vld [vmem:[#allocation10 + $0x48] sm:$0xff]
    %v2122 = vld [vmem:[#allocation10 + $0x50] sm:$0xff]
    %v2123 = vld [vmem:[#allocation10 + $0x58] sm:$0xff]
    %v2124 = vld [vmem:[#allocation10 + $0x60] sm:$0xff]
    %v2125 = vld [vmem:[#allocation10 + $0x68] sm:$0xff]
    %v2126 = vld [vmem:[#allocation10 + $0x70] sm:$0xff]
    %v2127 = vld [vmem:[#allocation10 + $0x78] sm:$0xff]
    %v2128 = vld [vmem:[#allocation10 + $0x80] sm:$0xff]
    %v2129 = vld [vmem:[#allocation10 + $0x88] sm:$0xff]
    %v2130 = vld [vmem:[#allocation10 + $0x90] sm:$0xff]
    %v2131 = vld [vmem:[#allocation10 + $0x98] sm:$0xff]
    %v2132 = vld [vmem:[#allocation10 + $0xa0] sm:$0xff]
    %v2133 = vld [vmem:[#allocation10 + $0xa8] sm:$0xff]
    %v2134 = vld [vmem:[#allocation10 + $0xb0] sm:$0xff]
    %v2135 = vld [vmem:[#allocation10 + $0xb8] sm:$0xff]
    %v2136 = vld [vmem:[#allocation10 + $0xc0] sm:$0xff]
    %v2137 = vld [vmem:[#allocation10 + $0xc8] sm:$0xff]
    %v2138 = vld [vmem:[#allocation10 + $0xd0] sm:$0xff]
    %v2139 = vld [vmem:[#allocation10 + $0xd8] sm:$0xff]
    %v2140 = vld [vmem:[#allocation10 + $0xe0] sm:$0xff]
    %v2141 = vld [vmem:[#allocation10 + $0xe8] sm:$0xff]
    %v2142 = vld [vmem:[#allocation10 + $0xf0] sm:$0xff]
    %v2143 = vld [vmem:[#allocation10 + $0xf8] sm:$0xff]
    %v2144 = vld [vmem:[#allocation10 + $0x100] sm:$0xff]
    %v2145 = vld [vmem:[#allocation10 + $0x108] sm:$0xff]
    %v2146 = vld [vmem:[#allocation10 + $0x110] sm:$0xff]
    %v2147 = vld [vmem:[#allocation10 + $0x118] sm:$0xff]
    %v2148 = vld [vmem:[#allocation10 + $0x120] sm:$0xff]
    %v2149 = vld [vmem:[#allocation10 + $0x128] sm:$0xff]
    %v2150 = vld [vmem:[#allocation10 + $0x130] sm:$0xff]
    %v2151 = vld [vmem:[#allocation10 + $0x138] sm:$0xff]
    %v2152 = vld [vmem:[#allocation10 + $0x140] sm:$0xff]
    %v2153 = vld [vmem:[#allocation10 + $0x148] sm:$0xff]
    %v2154 = vld [vmem:[#allocation10 + $0x150] sm:$0xff]
    %v2155 = vld [vmem:[#allocation10 + $0x158] sm:$0xff]
    %v2156 = vld [vmem:[#allocation10 + $0x160] sm:$0xff]
    %v2157 = vld [vmem:[#allocation10 + $0x168] sm:$0xff]
    %v2158 = vld [vmem:[#allocation10 + $0x170] sm:$0xff]
    %v2159 = vld [vmem:[#allocation10 + $0x178] sm:$0xff]
    %v2160 = vld [vmem:[#allocation10 + $0x180] sm:$0xff]
    %v2161 = vld [vmem:[#allocation10 + $0x188] sm:$0xff]
    %v2162 = vld [vmem:[#allocation10 + $0x190] sm:$0xff]
    %v2163 = vld [vmem:[#allocation10 + $0x198] sm:$0xff]
    %v2164 = vld [vmem:[#allocation10 + $0x1a0] sm:$0xff]
    %v2165 = vld [vmem:[#allocation10 + $0x1a8] sm:$0xff]
    %v2166 = vld [vmem:[#allocation10 + $0x1b0] sm:$0xff]
    %v2167 = vld [vmem:[#allocation10 + $0x1b8] sm:$0xff]
    %v2168 = vld [vmem:[#allocation10 + $0x1c0] sm:$0xff]
    %v2169 = vld [vmem:[#allocation10 + $0x1c8] sm:$0xff]
    %v2170 = vld [vmem:[#allocation10 + $0x1d0] sm:$0xff]
    %v2171 = vld [vmem:[#allocation10 + $0x1d8] sm:$0xff]
    %v2172 = vld [vmem:[#allocation10 + $0x1e0] sm:$0xff]
    %v2173 = vld [vmem:[#allocation10 + $0x1e8] sm:$0xff]
    %v2174 = vld [vmem:[#allocation10 + $0x1f0] sm:$0xff]
    %v2175 = vld [vmem:[#allocation10 + $0x1f8] sm:$0xff]
    %s2176 = scalar_lea.vmem [#allocation4], 224
    %v2177 = vld [vmem:[%s2176] sm:$0xff]
    %v2178 = vld [vmem:[%s2176 + $0x8] sm:$0xff]
    %v2179 = vld [vmem:[%s2176 + $0x10] sm:$0xff]
    %v2180 = vld [vmem:[%s2176 + $0x18] sm:$0xff]
    %2181 = vmatprep.subr.mxu0 %v2173
    %2182 = vmatpush1.msra.mxu0 %v2172
    %2183 = vmatprep.subr.mxu0 %v2169
    %2184 = vmatpush1.msra.mxu0 %v2168
    %2185 = vmatprep.subr.mxu0 %v2165
    %2186 = vmatpush1.msra.mxu0 %v2164
    %2187 = vmatprep.subr.mxu0 %v2161
    %2188 = vmatpush1.msra.mxu0 %v2160
    %2189 = vmatprep.subr.mxu0 %v2157
    %2190 = vmatpush1.msra.mxu0 %v2156
    %2191 = vmatprep.subr.mxu0 %v2153
    %2192 = vmatpush1.msra.mxu0 %v2152
    %2193 = vmatprep.subr.mxu0 %v2149
    %2194 = vmatpush1.msra.mxu0 %v2148
    %2195 = vmatprep.subr.mxu0 %v2145
    %2196 = vmatpush1.msra.mxu0 %v2144
    %2197 = vmatprep.subr.mxu0 %v2141
    %2198 = vmatpush1.msra.mxu0 %v2140
    %2199 = vmatprep.subr.mxu0 %v2137
    %2200 = vmatpush1.msra.mxu0 %v2136
    %2201 = vmatprep.subr.mxu0 %v2133
    %2202 = vmatpush1.msra.mxu0 %v2132
    %2203 = vmatprep.subr.mxu0 %v2129
    %2204 = vmatpush1.msra.mxu0 %v2128
    %2205 = vmatprep.subr.mxu0 %v2125
    %2206 = vmatpush1.msra.mxu0 %v2124
    %2207 = vmatprep.subr.mxu0 %v2121
    %2208 = vmatpush1.msra.mxu0 %v2120
    %2209 = vmatprep.subr.mxu0 %v2117
    %2210 = vmatpush1.msra.mxu0 %v2116
    %2211 = vmatprep.subr.mxu0 %v2113
    %2212 = vmatpush1.msra.mxu0 %v2112
    %2213 = vmatprep.subr.mxu0 0.0
    %2214 = vmatpush2.msra.mxu0 0.0
    %2215 = vmatprep.subr.mxu0 0.0
    %2216 = vmatpush2.msra.mxu0 0.0
    %2217 = vmatprep.subr.mxu0 0.0
    %2218 = vmatpush2.msra.mxu0 0.0
    %2219 = vmatprep.subr.mxu0 0.0
    %2220 = vmatpush2.msra.mxu0 0.0
    %2221 = vmatprep.subr.mxu0 0.0
    %2222 = vmatpush2.msra.mxu0 0.0
    %2223 = vmatprep.subr.mxu0 0.0
    %2224 = vmatpush2.msra.mxu0 0.0
    %2225 = vmatprep.subr.mxu0 0.0
    %2226 = vmatpush2.msra.mxu0 0.0
    %2227 = vmatprep.subr.mxu0 0.0
    %2228 = vmatpush2.msra.mxu0 0.0
    %2229 = vmatprep.subr.mxu0 0.0
    %2230 = vmatpush2.msra.mxu0 0.0
    %2231 = vmatprep.subr.mxu0 0.0
    %2232 = vmatpush2.msra.mxu0 0.0
    %2233 = vmatprep.subr.mxu0 0.0
    %2234 = vmatpush2.msra.mxu0 0.0
    %2235 = vmatprep.subr.mxu0 0.0
    %2236 = vmatpush2.msra.mxu0 0.0
    %2237 = vmatprep.subr.mxu0 0.0
    %2238 = vmatpush2.msra.mxu0 0.0
    %2239 = vmatprep.subr.mxu0 0.0
    %2240 = vmatpush2.msra.mxu0 0.0
    %2241 = vmatprep.subr.mxu0 0.0
    %2242 = vmatpush2.msra.mxu0 0.0
    %2243 = vmatprep.subr.mxu0 0.0
    %2244 = vmatpush2.msra.mxu0 0.0
    %2245 = vmatprep.mubr.f32.mxu0 0.0
    %2246 = vmatmul.mubr.f32.gmra.mxu0 %v2109
    %v2247 = vpop.f32.mrf.mxu0
    %v2248 = vadd.f32 %v2177, %v2247
    %v2249 = vpop.f32.mrf.mxu0
    %v2250 = vadd.f32 %v2178, %v2249
    %2251 = vdwg.mxu0
    %2252 = vmatprep.subr.mxu0 %v2175
    %2253 = vmatpush1.msra.mxu0 %v2174
    %2254 = vmatprep.subr.mxu0 %v2171
    %2255 = vmatpush1.msra.mxu0 %v2170
    %2256 = vmatprep.subr.mxu0 %v2167
    %2257 = vmatpush1.msra.mxu0 %v2166
    %2258 = vmatprep.subr.mxu0 %v2163
    %2259 = vmatpush1.msra.mxu0 %v2162
    %2260 = vmatprep.subr.mxu0 %v2159
    %2261 = vmatpush1.msra.mxu0 %v2158
    %2262 = vmatprep.subr.mxu0 %v2155
    %2263 = vmatpush1.msra.mxu0 %v2154
    %2264 = vmatprep.subr.mxu0 %v2151
    %2265 = vmatpush1.msra.mxu0 %v2150
    %2266 = vmatprep.subr.mxu0 %v2147
    %2267 = vmatpush1.msra.mxu0 %v2146
    %2268 = vmatprep.subr.mxu0 %v2143
    %2269 = vmatpush1.msra.mxu0 %v2142
    %2270 = vmatprep.subr.mxu0 %v2139
    %2271 = vmatpush1.msra.mxu0 %v2138
    %2272 = vmatprep.subr.mxu0 %v2135
    %2273 = vmatpush1.msra.mxu0 %v2134
    %2274 = vmatprep.subr.mxu0 %v2131
    %2275 = vmatpush1.msra.mxu0 %v2130
    %2276 = vmatprep.subr.mxu0 %v2127
    %2277 = vmatpush1.msra.mxu0 %v2126
    %2278 = vmatprep.subr.mxu0 %v2123
    %2279 = vmatpush1.msra.mxu0 %v2122
    %2280 = vmatprep.subr.mxu0 %v2119
    %2281 = vmatpush1.msra.mxu0 %v2118
    %2282 = vmatprep.subr.mxu0 %v2115
    %2283 = vmatpush1.msra.mxu0 %v2114
    %2284 = vmatprep.subr.mxu0 0.0
    %2285 = vmatpush2.msra.mxu0 0.0
    %2286 = vmatprep.subr.mxu0 0.0
    %2287 = vmatpush2.msra.mxu0 0.0
    %2288 = vmatprep.subr.mxu0 0.0
    %2289 = vmatpush2.msra.mxu0 0.0
    %2290 = vmatprep.subr.mxu0 0.0
    %2291 = vmatpush2.msra.mxu0 0.0
    %2292 = vmatprep.subr.mxu0 0.0
    %2293 = vmatpush2.msra.mxu0 0.0
    %2294 = vmatprep.subr.mxu0 0.0
    %2295 = vmatpush2.msra.mxu0 0.0
    %2296 = vmatprep.subr.mxu0 0.0
    %2297 = vmatpush2.msra.mxu0 0.0
    %2298 = vmatprep.subr.mxu0 0.0
    %2299 = vmatpush2.msra.mxu0 0.0
    %2300 = vmatprep.subr.mxu0 0.0
    %2301 = vmatpush2.msra.mxu0 0.0
    %2302 = vmatprep.subr.mxu0 0.0
    %2303 = vmatpush2.msra.mxu0 0.0
    %2304 = vmatprep.subr.mxu0 0.0
    %2305 = vmatpush2.msra.mxu0 0.0
    %2306 = vmatprep.subr.mxu0 0.0
    %2307 = vmatpush2.msra.mxu0 0.0
    %2308 = vmatprep.subr.mxu0 0.0
    %2309 = vmatpush2.msra.mxu0 0.0
    %2310 = vmatprep.subr.mxu0 0.0
    %2311 = vmatpush2.msra.mxu0 0.0
    %2312 = vmatprep.subr.mxu0 0.0
    %2313 = vmatpush2.msra.mxu0 0.0
    %2314 = vmatprep.subr.mxu0 0.0
    %2315 = vmatpush2.msra.mxu0 0.0
    %2316 = vmatprep.mubr.f32.mxu0 0.0
    %2317 = vmatmul.mubr.f32.gmra.mxu0 %v2109
    %v2318 = vpop.f32.mrf.mxu0
    %v2319 = vadd.f32 %v2179, %v2318
    %v2320 = vpop.f32.mrf.mxu0
    %v2321 = vadd.f32 %v2180, %v2320
    %2322 = vdwg.mxu0
    %v2323 = vxor.u32 %v2248, 2147483648
    %v2324 = vxor.u32 %v2250, 2147483648
    %v2325 = vxor.u32 %v2319, 2147483648
    %v2326 = vmul.f32 %v2323, 1.442695
    %v2327 = vpow.pop %v2326
    %v2328 = vmul.f32 %v2324, 1.442695
    %v2329 = vpow.pop %v2328
    %v2330 = vmul.f32 %v2325, 1.442695
    %v2331 = vpow.pop %v2330
    %v2332 = vadd.f32 %v2327, 1.0
    %v2333 = vadd.f32 %v2329, 1.0
    %v2334 = vadd.f32 %v2331, 1.0
    %v2335 = vrcp.pop %v2332
    %v2336 = vmul.f32 1.0, %v2335
    %v2337 = vrcp.pop %v2333
    %v2338 = vmul.f32 1.0, %v2337
    %v2339 = vrcp.pop %v2334
    %v2340 = vmul.f32 1.0, %v2339
    %v2341 = vtanh.pop %v2321
    %v2342 = vmul.f32 %v2338, %v2107
    %v2343 = vmul.f32 %v2336, %v2341
    %v2344 = vadd.f32 %v2342, %v2343
    %v2345 = vtanh.pop %v2344
    %v2346 = vmul.f32 %v2340, %v2345
    %s2347 = scalar_lea.vmem [#allocation11], 56
    %2348 = vst [vmem:[%s2347] sm:$0xff] %v2346
    %2349 = vst [vmem:[#allocation2] sm:$0xff] %v2346
    %2350 = vst [vmem:[#allocation3] sm:$0xff] %v2344
    // Predicated region
    $region34: #{tpu_custom_call.1} parent=1 // pred_check
      %p2351 = pneg %p63
    $region35: #{tpu_custom_call.1} parent=1 // pred_check_branch
      %2353 = sbr.rel (%p2351) target = $region37
    $region36: #{tpu_custom_call.1} parent=1 // pred_region
      %v2354 = vld [vmem:[#allocation2] sm:$0xff]
      %2355 = vst [vmem:[#allocation12] sm:$0xff] %v2354
      %v2356 = vld [vmem:[#allocation3] sm:$0xff]
      %2357 = vst [vmem:[#allocation14] sm:$0xff] %v2356
    $region37: #{tpu_custom_call.1} parent=1 // pred_fallthru
      _
    // Predicated region
    $region38: #{tpu_custom_call.1} parent=1 // pred_check
      _
    $region39: #{tpu_custom_call.1} parent=1 // pred_check_branch
      %2359 = sbr.rel (0) target = $region41
    $region40: #{tpu_custom_call.1} parent=1 // pred_region
      %s2361 = ssub.s32 1024, 1024
      %2362 = vsyncadd [#allocation7], %s2361
      %s2363 = sshll.u32 [#allocation11], 4
      %s2364 = int_to_ptr.vmem [resolvable:$true] %s2363
      %2369 = dma.vmem_to_hbm [thread:$0]  %s2364, 1024, %s4, [#allocation7], 128, 128, 8
    $region41: #{tpu_custom_call.1} parent=1 // pred_fallthru
      _
    // Predicated region
    $region42: #{tpu_custom_call.1} parent=1 // pred_check
      _
    $region43: #{tpu_custom_call.1} parent=1 // pred_check_branch
      %2371 = sbr.rel (0) target = $region45
    $region44: #{tpu_custom_call.1} parent=1 // pred_region
      %s2373 = ssub.s32 128, 128
      %2374 = vsyncadd [#allocation13], %s2373
      %s2376 = sshll.u32 [#allocation12], 4
      %s2377 = int_to_ptr.vmem [resolvable:$true] %s2376
      %2379 = dma.vmem_to_hbm [thread:$0]  %s2377, 128, %s5, [#allocation13]
    $region45: #{tpu_custom_call.1} parent=1 // pred_fallthru
      _
    // Predicated region
    $region46: #{tpu_custom_call.1} parent=1 // pred_check
      _
    $region47: #{tpu_custom_call.1} parent=1 // pred_check_branch
      %2381 = sbr.rel (0) target = $region49
    $region48: #{tpu_custom_call.1} parent=1 // pred_region
      %s2383 = ssub.s32 128, 128
      %2384 = vsyncadd [#allocation13], %s2383
      %s2386 = sshll.u32 [#allocation14], 4
      %s2387 = int_to_ptr.vmem [resolvable:$true] %s2386
      %2389 = dma.vmem_to_hbm [thread:$0]  %s2387, 128, %s6, [#allocation13]
    $region49: #{tpu_custom_call.1} parent=1 // pred_fallthru
      _
    // Predicated region
    $region50: #{tpu_custom_call.1} parent=1 // pred_check
      _
    $region51: #{tpu_custom_call.1} parent=1 // pred_check_branch
      %2391 = sbr.rel (0) target = $region53
    $region52: #{tpu_custom_call.1} parent=1 // pred_region
      %2392 = dma.done [#allocation7], 1024
    $region53: #{tpu_custom_call.1} parent=1 // pred_fallthru
      _
    // Predicated region
    $region54: #{tpu_custom_call.1} parent=1 // pred_check
      _
    $region55: #{tpu_custom_call.1} parent=1 // pred_check_branch
      %2394 = sbr.rel (0) target = $region57
    $region56: #{tpu_custom_call.1} parent=1 // pred_region
      %2395 = dma.done [#allocation13], 128
    $region57: #{tpu_custom_call.1} parent=1 // pred_fallthru
      _
    // Predicated region
    $region58: #{tpu_custom_call.1} parent=1 // pred_check
      _
    $region59: #{tpu_custom_call.1} parent=1 // pred_check_branch
      %2397 = sbr.rel (0) target = $region61
    $region60: #{tpu_custom_call.1} parent=1 // pred_region
      %2398 = dma.done [#allocation13], 128
    $region61: #{tpu_custom_call.1} parent=1 // pred_fallthru
      _
    %2399 = vsyncpa [#allocation6], 1
    %2400 = vsyncpa [#allocation9], 1
    %2401 = vsyncpa [#allocation7], 1
    %2402 = vsyncpa [#allocation13], 1

</llo_original>
